<compile_context>
chip_gen: v7x
topology: tpu7x:2x2x1
jax: 0.10.0
libtpu: 0.0.40
codegen_flags: <defaults>
</compile_context>

<pallas_src>
import functools

import jax
import jax.numpy as jnp
import numpy as np
from jax.experimental import pallas as pl
from jax.experimental.pallas import tpu as pltpu


# ---------------------------------------------------------------------------
# Host-side packing (runs once).  Column halos are dropped entirely: a tap
# that falls on the zero padding simply has no entry in the packed matrix.
# ---------------------------------------------------------------------------

def _pack_conv(w, b, w_in, stride):
    """Conv2d weight (KH,KW,Cin,Cout) HWIO, padding=1, given stride.

    Returns (M: (KH, w_in*Cin, w_out*Cout), bias_row: (1, w_out*Cout)) so that
    out_row[ho] = sum_kh  padded_row[stride*ho + kh] @ M[kh]  + bias_row.
    """
    w = np.asarray(w, np.float32)
    b = np.asarray(b, np.float32)
    kh_n, kw_n, cin, cout = w.shape
    w_out = (w_in + 2 - kh_n) // stride + 1
    m = np.zeros((kh_n, w_in * cin, w_out * cout), np.float32)
    for kh in range(kh_n):
        for kw in range(kw_n):
            for wo in range(w_out):
                col = stride * wo + kw - 1          # unpadded input column
                if 0 <= col < w_in:
                    m[kh, col * cin:(col + 1) * cin,
                      wo * cout:(wo + 1) * cout] += w[kh, kw]
    bias_row = np.tile(b, w_out)[None, :]
    return m, bias_row


def _pack_deconv(w_eq, b, w_in):
    """ConvTranspose2d(k=4, s=2, p=1) as a 4-phase polyphase conv.

    `w_eq` is the equivalent *forward* conv weight in HWIO layout
    (4, 4, Cin, Cout).  Output-column interleaving is folded into the
    matrices so the two column phases can simply be summed.
    Returns (M: (8, w_in*Cin, 2*w_in*Cout), bias_row), M index = 4*ph+2*pw+dh:
      out_row[2r+ph] = sum_{pw,dh} padded_row[r+ph+dh] @ M[4ph+2pw+dh] + bias.
    """
    w = np.asarray(w_eq, np.float32)
    b = np.asarray(b, np.float32)
    _, _, cin, cout = w.shape
    w_out = 2 * w_in
    m = np.zeros((2, 2, 2, w_in * cin, w_out * cout), np.float32)
    for ph in range(2):
        for pw in range(2):
            for dh in range(2):
                for dw in range(2):
                    for c in range(w_in):
                        col = c + pw + dw - 1        # unpadded input column
                        if not 0 <= col < w_in:
                            continue
                        ocol = 2 * c + pw
                        m[ph, pw, dh,
                          col * cin:(col + 1) * cin,
                          ocol * cout:(ocol + 1) * cout] += w[2 * dh + ph,
                                                              2 * dw + pw]
    bias_row = np.tile(b, w_out)[None, :]
    return m.reshape(8, w_in * cin, w_out * cout), bias_row


def init_params(key, c=32):
    """Deterministic synthetic parameters (same shapes as the torch module)."""
    def conv_init(k, kh, kw, cin, cout):
        kw_, kb_ = jax.random.split(k)
        scale = 1.0 / np.sqrt(kh * kw * cin)
        w = jax.random.normal(kw_, (kh, kw, cin, cout), jnp.float32) * scale
        b = jax.random.normal(kb_, (cout,), jnp.float32) * scale
        return w, b

    keys = jax.random.split(key, 12)
    p = {}
    p["enc1_w"], p["enc1_b"] = conv_init(keys[0], 3, 3, 3, c // 2)
    p["enc2_w"], p["enc2_b"] = conv_init(keys[1], 3, 3, c // 2, c)
    p["res"] = []
    for i in range(8):
        w, b = conv_init(keys[2 + i], 3, 3, c, c)
        beta = jnp.ones((1, c), jnp.float32)       # torch init: ones((1,c,1,1))
        p["res"].append((w, b, beta))
    # TODO(synk): real torch ConvTranspose2d weights would need a spatial flip
    # + in/out transpose to form these equivalent-forward-conv HWIO weights;
    # the synthetic weights here are initialized directly in that layout.
    p["up1_w"], p["up1_b"] = conv_init(keys[10], 4, 4, c, c // 2)
    p["up2_w"], p["up2_b"] = conv_init(keys[11], 4, 4, c // 2, 1)
    return p


def pack_params(p, H=16, W=16, c=32):
    m1, b1 = _pack_conv(p["enc1_w"], p["enc1_b"], W, stride=2)
    m2, b2 = _pack_conv(p["enc2_w"], p["enc2_b"], W // 2, stride=2)
    mr_l, br_l = [], []
    for (w, b, beta) in p["res"]:
        beta = np.asarray(beta, np.float32).reshape(-1)
        # ResConv: Mish(conv(x)*beta + x) == Mish((w*beta) x + b*beta + x)
        mi, bi = _pack_conv(np.asarray(w, np.float32) * beta[None, None, None, :],
                            np.asarray(b, np.float32) * beta, W // 4, stride=1)
        mr_l.append(mi)
        br_l.append(bi)
    mr = np.concatenate(mr_l, axis=0)               # (24, W/4*c, W/4*c)
    br = np.concatenate(br_l, axis=0)               # (8,  W/4*c)
    mu1, bu1 = _pack_deconv(p["up1_w"], p["up1_b"], W // 4)
    mu2, bu2 = _pack_deconv(p["up2_w"], p["up2_b"], W // 2)
    j = lambda a: jnp.asarray(a, jnp.float32)
    return tuple(j(a) for a in (m1, b1, m2, b2, mr, br, mu1, bu1, mu2, bu2))


# ---------------------------------------------------------------------------
# The fused kernel: one batch element per grid step, everything in VMEM.
# ---------------------------------------------------------------------------

def _mynet_kernel(x_ref, m1_ref, b1_ref, m2_ref, b2_ref, mr_ref, br_ref,
                  mu1_ref, bu1_ref, mu2_ref, bu2_ref, o_ref,
                  buf1, buf2, *, H, W, c):
    f32 = jnp.float32
    c2 = c // 2
    H1, W1 = H // 2, W // 2        # after encode conv 1
    H2, W2 = H // 4, W // 4        # after encode conv 2 / res blocks

    def mish(v):
        # Mish(x) = x * tanh(softplus(x));  tanh(softplus(x)) = u/(u+2),
        # u = e^x (e^x + 2).  For x >= 20, u/(u+2) == 1 exactly in f32.
        t = jnp.exp(jnp.minimum(v, 20.0))
        u = t * (t + 2.0)
        return v * (u / (u + 2.0))

    # ---- encode[0]: Conv(3 -> c/2, 3x3, s=2, p=1) + Mish --------------------
    buf1[...] = jnp.zeros_like(buf1)            # (H1+2, W1*c2); rows 0/H1+1 = halo
    for h in range(H1):
        acc = b1_ref[...]                                          # (1, W1*c2)
        for kh in range(3):
            acc = acc + jnp.dot(x_ref[0, 2 * h + kh:2 * h + kh + 1, :],
                                m1_ref[kh], preferred_element_type=f32)
        buf1[h + 1:h + 2, :] = mish(acc)

    # ---- encode[2]: Conv(c/2 -> c, 3x3, s=2, p=1) + Mish --------------------
    buf2[...] = jnp.zeros_like(buf2)            # (H2+2, W2*c)
    for h in range(H2):
        acc = b2_ref[...]                                          # (1, W2*c)
        for kh in range(3):
            acc = acc + jnp.dot(buf1[2 * h + kh:2 * h + kh + 1, :],
                                m2_ref[kh], preferred_element_type=f32)
        buf2[h + 1:h + 2, :] = mish(acc)

    # ---- convblock: 8 x ResConv,  out = Mish(conv(x)*beta + x) --------------
    # (beta folded into mr/br host-side; activation never leaves VMEM.)
    for i in range(8):
        resid = buf2[1:H2 + 1, :]                                  # (H2, W2*c)
        acc = jnp.zeros((H2, W2 * c), f32) + br_ref[i:i + 1, :]
        for kh in range(3):
            acc = acc + jnp.dot(buf2[kh:kh + H2, :], mr_ref[3 * i + kh],
                                preferred_element_type=f32)
        buf2[1:H2 + 1, :] = mish(acc + resid)

    # ---- lastconv[0]: ConvT(c -> c/2, 4x4, s=2, p=1) + Mish, polyphase ------
    # buf1's halo rows are still zero; its interior is fully overwritten.
    for ph in range(2):
        acc = jnp.zeros((H2, W1 * c2), f32) + bu1_ref[...]
        for pw in range(2):
            for dh in range(2):
                acc = acc + jnp.dot(buf2[ph + dh:ph + dh + H2, :],
                                    mu1_ref[4 * ph + 2 * pw + dh],
                                    preferred_element_type=f32)
        acc = mish(acc)
        for r in range(H2):                    # interleave rows 2r+ph
            buf1[1 + 2 * r + ph:2 + 2 * r + ph, :] = acc[r:r + 1, :]

    # ---- lastconv[2]: ConvT(c/2 -> 1, 4x4, s=2, p=1), no activation ---------
    for ph in range(2):
        acc = jnp.zeros((H1, W), f32) + bu2_ref[...]
        for pw in range(2):
            for dh in range(2):
                acc = acc + jnp.dot(buf1[ph + dh:ph + dh + H1, :],
                                    mu2_ref[4 * ph + 2 * pw + dh],
                                    preferred_element_type=f32)
        for r in range(H1):
            o_ref[0, 2 * r + ph:2 * r + ph + 1, :] = acc[r:r + 1, :]


def my_net_forward(packed, x_nchw, *, c=32):
    (m1, b1, m2, b2, mr, br, mu1, bu1, mu2, bu2) = packed
    N, Cin, H, W = x_nchw.shape
    H1, W1, H2, W2 = H // 2, W // 2, H // 4, W // 4
    c2 = c // 2

    # NCHW -> row-major slab (N, H+2, W*Cin) with a zero ROW halo only; the
    # column halo is folded into the packed matrices (one-time cheap prep op).
    x = jnp.transpose(x_nchw, (0, 2, 3, 1)).astype(jnp.float32)
    x = x.reshape(N, H, W * Cin)
    x = jnp.pad(x, ((0, 0), (1, 1), (0, 0)))

    kernel = functools.partial(_mynet_kernel, H=H, W=W, c=c)
    out = pl.pallas_call(
        kernel,
        out_shape=jax.ShapeDtypeStruct((N, H, W), jnp.float32),
        grid_spec=pltpu.PrefetchScalarGridSpec(
            num_scalar_prefetch=0,
            grid=(N,),
            in_specs=[
                pl.BlockSpec((1, H + 2, W * Cin), lambda n: (n, 0, 0)),
                pl.BlockSpec((3, W * Cin, W1 * c2), lambda n: (0, 0, 0)),
                pl.BlockSpec((1, W1 * c2), lambda n: (0, 0)),
                pl.BlockSpec((3, W1 * c2, W2 * c), lambda n: (0, 0, 0)),
                pl.BlockSpec((1, W2 * c), lambda n: (0, 0)),
                pl.BlockSpec((24, W2 * c, W2 * c), lambda n: (0, 0, 0)),
                pl.BlockSpec((8, W2 * c), lambda n: (0, 0)),
                pl.BlockSpec((8, W2 * c, W1 * c2), lambda n: (0, 0, 0)),
                pl.BlockSpec((1, W1 * c2), lambda n: (0, 0)),
                pl.BlockSpec((8, W1 * c2, W), lambda n: (0, 0, 0)),
                pl.BlockSpec((1, W), lambda n: (0, 0)),
            ],
            out_specs=pl.BlockSpec((1, H, W), lambda n: (n, 0, 0)),
            scratch_shapes=[
                pltpu.VMEM((H1 + 2, W1 * c2), jnp.float32),   # enc1 / up1 slab
                pltpu.VMEM((H2 + 2, W2 * c), jnp.float32),    # enc2 / res slab
            ],
        ),
        compiler_params=pltpu.CompilerParams(
            dimension_semantics=("parallel",)),
    )(x, m1, b1, m2, b2, mr, br, mu1, bu1, mu2, bu2)

    return out.reshape(N, 1, H, W)


if __name__ == "__main__":
    key = jax.random.PRNGKey(0)
    k_param, k_x = jax.random.split(key)

    C = 32                                  # small "c" consistent with myNet(c)
    params = init_params(k_param, c=C)
    packed = pack_params(params, H=16, W=16, c=C)
    x = jax.random.normal(k_x, (2, 3, 16, 16), jnp.float32)   # NCHW like torch

    fwd = jax.jit(functools.partial(my_net_forward, c=C))
    y = jax.block_until_ready(fwd(packed, x))

    assert y.shape == (2, 1, 16, 16), y.shape
    assert bool(jnp.all(jnp.isfinite(y)))
    print("KERNEL_OK")
</pallas_src>

<mosaic_0001>
module attributes {stable_mosaic.version = 11 : i64} {
  func.func @_mynet_kernel(%arg0: i32, %arg1: memref<1x18x48xf32, #tpu.memory_space<vmem>>, %arg2: memref<3x48x128xf32, #tpu.memory_space<vmem>>, %arg3: memref<1x128xf32, #tpu.memory_space<vmem>>, %arg4: memref<3x128x128xf32, #tpu.memory_space<vmem>>, %arg5: memref<1x128xf32, #tpu.memory_space<vmem>>, %arg6: memref<24x128x128xf32, #tpu.memory_space<vmem>>, %arg7: memref<8x128xf32, #tpu.memory_space<vmem>>, %arg8: memref<8x128x128xf32, #tpu.memory_space<vmem>>, %arg9: memref<1x128xf32, #tpu.memory_space<vmem>>, %arg10: memref<8x128x16xf32, #tpu.memory_space<vmem>>, %arg11: memref<1x16xf32, #tpu.memory_space<vmem>>, %arg12: memref<1x16x16xf32, #tpu.memory_space<vmem>>, %arg13: memref<10x128xf32, #tpu.memory_space<vmem>>, %arg14: memref<6x128xf32, #tpu.memory_space<vmem>>) attributes {dimension_semantics = [#tpu.dimension_semantics<parallel>], iteration_bounds = array<i64: 2>, scalar_prefetch = 0 : i64, scratch_operands = 2 : i64, tpu.core_type = #tpu.core_type<tc>, window_params = [{transform_indices = @transform_0, window_bounds = array<i64: 1, 18, 48>}, {pipeline_mode = #tpu.pipeline_mode<synchronous>, transform_indices = @transform_1, window_bounds = array<i64: 3, 48, 128>}, {pipeline_mode = #tpu.pipeline_mode<synchronous>, transform_indices = @transform_2, window_bounds = array<i64: 1, 128>}, {pipeline_mode = #tpu.pipeline_mode<synchronous>, transform_indices = @transform_3, window_bounds = array<i64: 3, 128, 128>}, {pipeline_mode = #tpu.pipeline_mode<synchronous>, transform_indices = @transform_4, window_bounds = array<i64: 1, 128>}, {pipeline_mode = #tpu.pipeline_mode<synchronous>, transform_indices = @transform_5, window_bounds = array<i64: 24, 128, 128>}, {pipeline_mode = #tpu.pipeline_mode<synchronous>, transform_indices = @transform_6, window_bounds = array<i64: 8, 128>}, {pipeline_mode = #tpu.pipeline_mode<synchronous>, transform_indices = @transform_7, window_bounds = array<i64: 8, 128, 128>}, {pipeline_mode = #tpu.pipeline_mode<synchronous>, transform_indices = @transform_8, window_bounds = array<i64: 1, 128>}, {pipeline_mode = #tpu.pipeline_mode<synchronous>, transform_indices = @transform_9, window_bounds = array<i64: 8, 128, 16>}, {pipeline_mode = #tpu.pipeline_mode<synchronous>, transform_indices = @transform_10, window_bounds = array<i64: 1, 16>}, {transform_indices = @transform_11, window_bounds = array<i64: 1, 16, 16>}]} {
    %cst = arith.constant 0.000000e+00 : f32
    %0 = vector.broadcast %cst : f32 to vector<10x128xf32>
    %c0 = arith.constant 0 : index
    %c0_0 = arith.constant 0 : index
    %1 = vector.load %arg13[%c0, %c0_0] : memref<10x128xf32, #tpu.memory_space<vmem>>, vector<10x128xf32>
    tpu.vector_store %arg13[%c0, %c0_0], %0 {strides = array<i32>} : memref<10x128xf32, #tpu.memory_space<vmem>>, vector<10x128xf32>,
    %c0_1 = arith.constant 0 : index
    %c0_2 = arith.constant 0 : index
    %2 = vector.load %arg3[%c0_1, %c0_2] : memref<1x128xf32, #tpu.memory_space<vmem>>, vector<1x128xf32>
    %c0_3 = arith.constant 0 : index
    %c0_4 = arith.constant 0 : index
    %c0_5 = arith.constant 0 : index
    %3 = vector.load %arg1[%c0_3, %c0_4, %c0_5] : memref<1x18x48xf32, #tpu.memory_space<vmem>>, vector<1x1x48xf32>
    %4 = vector.shape_cast %3 : vector<1x1x48xf32> to vector<1x48xf32>
    %c0_6 = arith.constant 0 : index
    %c0_7 = arith.constant 0 : index
    %c0_8 = arith.constant 0 : index
    %5 = vector.load %arg2[%c0_6, %c0_7, %c0_8] : memref<3x48x128xf32, #tpu.memory_space<vmem>>, vector<1x48x128xf32>
    %6 = vector.shape_cast %5 : vector<1x48x128xf32> to vector<48x128xf32>
    %cst_9 = arith.constant dense<0.000000e+00> : vector<1x128xf32>
    %7 = tpu.matmul %4, %6, %cst_9 {dimension_numbers = #tpu.dot_dimension_numbers<[1], [0], [0], [1], [0, 0, 1, 1], [], []>} : vector<1x48xf32>, vector<48x128xf32>, vector<1x128xf32> -> vector<1x128xf32>
    %8 = arith.addf %2, %7 : vector<1x128xf32>
    %c0_10 = arith.constant 0 : index
    %c1 = arith.constant 1 : index
    %c0_11 = arith.constant 0 : index
    %9 = vector.load %arg1[%c0_10, %c1, %c0_11] : memref<1x18x48xf32, #tpu.memory_space<vmem>>, vector<1x1x48xf32>
    %10 = vector.shape_cast %9 : vector<1x1x48xf32> to vector<1x48xf32>
    %c1_12 = arith.constant 1 : index
    %c0_13 = arith.constant 0 : index
    %c0_14 = arith.constant 0 : index
    %11 = vector.load %arg2[%c1_12, %c0_13, %c0_14] : memref<3x48x128xf32, #tpu.memory_space<vmem>>, vector<1x48x128xf32>
    %12 = vector.shape_cast %11 : vector<1x48x128xf32> to vector<48x128xf32>
    %cst_15 = arith.constant dense<0.000000e+00> : vector<1x128xf32>
    %13 = tpu.matmul %10, %12, %cst_15 {dimension_numbers = #tpu.dot_dimension_numbers<[1], [0], [0], [1], [0, 0, 1, 1], [], []>} : vector<1x48xf32>, vector<48x128xf32>, vector<1x128xf32> -> vector<1x128xf32>
    %14 = arith.addf %8, %13 : vector<1x128xf32>
    %c0_16 = arith.constant 0 : index
    %c2 = arith.constant 2 : index
    %c0_17 = arith.constant 0 : index
    %15 = vector.load %arg1[%c0_16, %c2, %c0_17] : memref<1x18x48xf32, #tpu.memory_space<vmem>>, vector<1x1x48xf32>
    %16 = vector.shape_cast %15 : vector<1x1x48xf32> to vector<1x48xf32>
    %c2_18 = arith.constant 2 : index
    %c0_19 = arith.constant 0 : index
    %c0_20 = arith.constant 0 : index
    %17 = vector.load %arg2[%c2_18, %c0_19, %c0_20] : memref<3x48x128xf32, #tpu.memory_space<vmem>>, vector<1x48x128xf32>
    %18 = vector.shape_cast %17 : vector<1x48x128xf32> to vector<48x128xf32>
    %cst_21 = arith.constant dense<0.000000e+00> : vector<1x128xf32>
    %19 = tpu.matmul %16, %18, %cst_21 {dimension_numbers = #tpu.dot_dimension_numbers<[1], [0], [0], [1], [0, 0, 1, 1], [], []>} : vector<1x48xf32>, vector<48x128xf32>, vector<1x128xf32> -> vector<1x128xf32>
    %20 = arith.addf %14, %19 : vector<1x128xf32>
    %cst_22 = arith.constant 2.000000e+01 : f32
    %21 = vector.broadcast %cst_22 : f32 to vector<1x128xf32>
    %22 = arith.minimumf %20, %21 : vector<1x128xf32>
    %23 = math.exp %22 : vector<1x128xf32>
    %cst_23 = arith.constant 2.000000e+00 : f32
    %24 = vector.broadcast %cst_23 : f32 to vector<1x128xf32>
    %25 = arith.addf %23, %24 : vector<1x128xf32>
    %26 = arith.mulf %23, %25 : vector<1x128xf32>
    %cst_24 = arith.constant 2.000000e+00 : f32
    %27 = vector.broadcast %cst_24 : f32 to vector<1x128xf32>
    %28 = arith.addf %26, %27 : vector<1x128xf32>
    %29 = arith.divf %26, %28 : vector<1x128xf32>
    %30 = arith.mulf %20, %29 : vector<1x128xf32>
    %c1_25 = arith.constant 1 : index
    %c0_26 = arith.constant 0 : index
    %31 = vector.load %arg13[%c1_25, %c0_26] : memref<10x128xf32, #tpu.memory_space<vmem>>, vector<1x128xf32>
    tpu.vector_store %arg13[%c1_25, %c0_26], %30 {strides = array<i32>} : memref<10x128xf32, #tpu.memory_space<vmem>>, vector<1x128xf32>,
    %c0_27 = arith.constant 0 : index
    %c0_28 = arith.constant 0 : index
    %32 = vector.load %arg3[%c0_27, %c0_28] : memref<1x128xf32, #tpu.memory_space<vmem>>, vector<1x128xf32>
    %c0_29 = arith.constant 0 : index
    %c2_30 = arith.constant 2 : index
    %c0_31 = arith.constant 0 : index
    %33 = vector.load %arg1[%c0_29, %c2_30, %c0_31] : memref<1x18x48xf32, #tpu.memory_space<vmem>>, vector<1x1x48xf32>
    %34 = vector.shape_cast %33 : vector<1x1x48xf32> to vector<1x48xf32>
    %c0_32 = arith.constant 0 : index
    %c0_33 = arith.constant 0 : index
    %c0_34 = arith.constant 0 : index
    %35 = vector.load %arg2[%c0_32, %c0_33, %c0_34] : memref<3x48x128xf32, #tpu.memory_space<vmem>>, vector<1x48x128xf32>
    %36 = vector.shape_cast %35 : vector<1x48x128xf32> to vector<48x128xf32>
    %cst_35 = arith.constant dense<0.000000e+00> : vector<1x128xf32>
    %37 = tpu.matmul %34, %36, %cst_35 {dimension_numbers = #tpu.dot_dimension_numbers<[1], [0], [0], [1], [0, 0, 1, 1], [], []>} : vector<1x48xf32>, vector<48x128xf32>, vector<1x128xf32> -> vector<1x128xf32>
    %38 = arith.addf %32, %37 : vector<1x128xf32>
    %c0_36 = arith.constant 0 : index
    %c3 = arith.constant 3 : index
    %c0_37 = arith.constant 0 : index
    %39 = vector.load %arg1[%c0_36, %c3, %c0_37] : memref<1x18x48xf32, #tpu.memory_space<vmem>>, vector<1x1x48xf32>
    %40 = vector.shape_cast %39 : vector<1x1x48xf32> to vector<1x48xf32>
    %c1_38 = arith.constant 1 : index
    %c0_39 = arith.constant 0 : index
    %c0_40 = arith.constant 0 : index
    %41 = vector.load %arg2[%c1_38, %c0_39, %c0_40] : memref<3x48x128xf32, #tpu.memory_space<vmem>>, vector<1x48x128xf32>
    %42 = vector.shape_cast %41 : vector<1x48x128xf32> to vector<48x128xf32>
    %cst_41 = arith.constant dense<0.000000e+00> : vector<1x128xf32>
    %43 = tpu.matmul %40, %42, %cst_41 {dimension_numbers = #tpu.dot_dimension_numbers<[1], [0], [0], [1], [0, 0, 1, 1], [], []>} : vector<1x48xf32>, vector<48x128xf32>, vector<1x128xf32> -> vector<1x128xf32>
    %44 = arith.addf %38, %43 : vector<1x128xf32>
    %c0_42 = arith.constant 0 : index
    %c4 = arith.constant 4 : index
    %c0_43 = arith.constant 0 : index
    %45 = vector.load %arg1[%c0_42, %c4, %c0_43] : memref<1x18x48xf32, #tpu.memory_space<vmem>>, vector<1x1x48xf32>
    %46 = vector.shape_cast %45 : vector<1x1x48xf32> to vector<1x48xf32>
    %c2_44 = arith.constant 2 : index
    %c0_45 = arith.constant 0 : index
    %c0_46 = arith.constant 0 : index
    %47 = vector.load %arg2[%c2_44, %c0_45, %c0_46] : memref<3x48x128xf32, #tpu.memory_space<vmem>>, vector<1x48x128xf32>
    %48 = vector.shape_cast %47 : vector<1x48x128xf32> to vector<48x128xf32>
    %cst_47 = arith.constant dense<0.000000e+00> : vector<1x128xf32>
    %49 = tpu.matmul %46, %48, %cst_47 {dimension_numbers = #tpu.dot_dimension_numbers<[1], [0], [0], [1], [0, 0, 1, 1], [], []>} : vector<1x48xf32>, vector<48x128xf32>, vector<1x128xf32> -> vector<1x128xf32>
    %50 = arith.addf %44, %49 : vector<1x128xf32>
    %cst_48 = arith.constant 2.000000e+01 : f32
    %51 = vector.broadcast %cst_48 : f32 to vector<1x128xf32>
    %52 = arith.minimumf %50, %51 : vector<1x128xf32>
    %53 = math.exp %52 : vector<1x128xf32>
    %cst_49 = arith.constant 2.000000e+00 : f32
    %54 = vector.broadcast %cst_49 : f32 to vector<1x128xf32>
    %55 = arith.addf %53, %54 : vector<1x128xf32>
    %56 = arith.mulf %53, %55 : vector<1x128xf32>
    %cst_50 = arith.constant 2.000000e+00 : f32
    %57 = vector.broadcast %cst_50 : f32 to vector<1x128xf32>
    %58 = arith.addf %56, %57 : vector<1x128xf32>
    %59 = arith.divf %56, %58 : vector<1x128xf32>
    %60 = arith.mulf %50, %59 : vector<1x128xf32>
    %c2_51 = arith.constant 2 : index
    %c0_52 = arith.constant 0 : index
    %61 = vector.load %arg13[%c2_51, %c0_52] : memref<10x128xf32, #tpu.memory_space<vmem>>, vector<1x128xf32>
    tpu.vector_store %arg13[%c2_51, %c0_52], %60 {strides = array<i32>} : memref<10x128xf32, #tpu.memory_space<vmem>>, vector<1x128xf32>,
    %c0_53 = arith.constant 0 : index
    %c0_54 = arith.constant 0 : index
    %62 = vector.load %arg3[%c0_53, %c0_54] : memref<1x128xf32, #tpu.memory_space<vmem>>, vector<1x128xf32>
    %c0_55 = arith.constant 0 : index
    %c4_56 = arith.constant 4 : index
    %c0_57 = arith.constant 0 : index
    %63 = vector.load %arg1[%c0_55, %c4_56, %c0_57] : memref<1x18x48xf32, #tpu.memory_space<vmem>>, vector<1x1x48xf32>
    %64 = vector.shape_cast %63 : vector<1x1x48xf32> to vector<1x48xf32>
    %c0_58 = arith.constant 0 : index
    %c0_59 = arith.constant 0 : index
    %c0_60 = arith.constant 0 : index
    %65 = vector.load %arg2[%c0_58, %c0_59, %c0_60] : memref<3x48x128xf32, #tpu.memory_space<vmem>>, vector<1x48x128xf32>
    %66 = vector.shape_cast %65 : vector<1x48x128xf32> to vector<48x128xf32>
    %cst_61 = arith.constant dense<0.000000e+00> : vector<1x128xf32>
    %67 = tpu.matmul %64, %66, %cst_61 {dimension_numbers = #tpu.dot_dimension_numbers<[1], [0], [0], [1], [0, 0, 1, 1], [], []>} : vector<1x48xf32>, vector<48x128xf32>, vector<1x128xf32> -> vector<1x128xf32>
    %68 = arith.addf %62, %67 : vector<1x128xf32>
    %c0_62 = arith.constant 0 : index
    %c5 = arith.constant 5 : index
    %c0_63 = arith.constant 0 : index
    %69 = vector.load %arg1[%c0_62, %c5, %c0_63] : memref<1x18x48xf32, #tpu.memory_space<vmem>>, vector<1x1x48xf32>
    %70 = vector.shape_cast %69 : vector<1x1x48xf32> to vector<1x48xf32>
    %c1_64 = arith.constant 1 : index
    %c0_65 = arith.constant 0 : index
    %c0_66 = arith.constant 0 : index
    %71 = vector.load %arg2[%c1_64, %c0_65, %c0_66] : memref<3x48x128xf32, #tpu.memory_space<vmem>>, vector<1x48x128xf32>
    %72 = vector.shape_cast %71 : vector<1x48x128xf32> to vector<48x128xf32>
    %cst_67 = arith.constant dense<0.000000e+00> : vector<1x128xf32>
    %73 = tpu.matmul %70, %72, %cst_67 {dimension_numbers = #tpu.dot_dimension_numbers<[1], [0], [0], [1], [0, 0, 1, 1], [], []>} : vector<1x48xf32>, vector<48x128xf32>, vector<1x128xf32> -> vector<1x128xf32>
    %74 = arith.addf %68, %73 : vector<1x128xf32>
    %c0_68 = arith.constant 0 : index
    %c6 = arith.constant 6 : index
    %c0_69 = arith.constant 0 : index
    %75 = vector.load %arg1[%c0_68, %c6, %c0_69] : memref<1x18x48xf32, #tpu.memory_space<vmem>>, vector<1x1x48xf32>
    %76 = vector.shape_cast %75 : vector<1x1x48xf32> to vector<1x48xf32>
    %c2_70 = arith.constant 2 : index
    %c0_71 = arith.constant 0 : index
    %c0_72 = arith.constant 0 : index
    %77 = vector.load %arg2[%c2_70, %c0_71, %c0_72] : memref<3x48x128xf32, #tpu.memory_space<vmem>>, vector<1x48x128xf32>
    %78 = vector.shape_cast %77 : vector<1x48x128xf32> to vector<48x128xf32>
    %cst_73 = arith.constant dense<0.000000e+00> : vector<1x128xf32>
    %79 = tpu.matmul %76, %78, %cst_73 {dimension_numbers = #tpu.dot_dimension_numbers<[1], [0], [0], [1], [0, 0, 1, 1], [], []>} : vector<1x48xf32>, vector<48x128xf32>, vector<1x128xf32> -> vector<1x128xf32>
    %80 = arith.addf %74, %79 : vector<1x128xf32>
    %cst_74 = arith.constant 2.000000e+01 : f32
    %81 = vector.broadcast %cst_74 : f32 to vector<1x128xf32>
    %82 = arith.minimumf %80, %81 : vector<1x128xf32>
    %83 = math.exp %82 : vector<1x128xf32>
    %cst_75 = arith.constant 2.000000e+00 : f32
    %84 = vector.broadcast %cst_75 : f32 to vector<1x128xf32>
    %85 = arith.addf %83, %84 : vector<1x128xf32>
    %86 = arith.mulf %83, %85 : vector<1x128xf32>
    %cst_76 = arith.constant 2.000000e+00 : f32
    %87 = vector.broadcast %cst_76 : f32 to vector<1x128xf32>
    %88 = arith.addf %86, %87 : vector<1x128xf32>
    %89 = arith.divf %86, %88 : vector<1x128xf32>
    %90 = arith.mulf %80, %89 : vector<1x128xf32>
    %c3_77 = arith.constant 3 : index
    %c0_78 = arith.constant 0 : index
    %91 = vector.load %arg13[%c3_77, %c0_78] : memref<10x128xf32, #tpu.memory_space<vmem>>, vector<1x128xf32>
    tpu.vector_store %arg13[%c3_77, %c0_78], %90 {strides = array<i32>} : memref<10x128xf32, #tpu.memory_space<vmem>>, vector<1x128xf32>,
    %c0_79 = arith.constant 0 : index
    %c0_80 = arith.constant 0 : index
    %92 = vector.load %arg3[%c0_79, %c0_80] : memref<1x128xf32, #tpu.memory_space<vmem>>, vector<1x128xf32>
    %c0_81 = arith.constant 0 : index
    %c6_82 = arith.constant 6 : index
    %c0_83 = arith.constant 0 : index
    %93 = vector.load %arg1[%c0_81, %c6_82, %c0_83] : memref<1x18x48xf32, #tpu.memory_space<vmem>>, vector<1x1x48xf32>
    %94 = vector.shape_cast %93 : vector<1x1x48xf32> to vector<1x48xf32>
    %c0_84 = arith.constant 0 : index
    %c0_85 = arith.constant 0 : index
    %c0_86 = arith.constant 0 : index
    %95 = vector.load %arg2[%c0_84, %c0_85, %c0_86] : memref<3x48x128xf32, #tpu.memory_space<vmem>>, vector<1x48x128xf32>
    %96 = vector.shape_cast %95 : vector<1x48x128xf32> to vector<48x128xf32>
    %cst_87 = arith.constant dense<0.000000e+00> : vector<1x128xf32>
    %97 = tpu.matmul %94, %96, %cst_87 {dimension_numbers = #tpu.dot_dimension_numbers<[1], [0], [0], [1], [0, 0, 1, 1], [], []>} : vector<1x48xf32>, vector<48x128xf32>, vector<1x128xf32> -> vector<1x128xf32>
    %98 = arith.addf %92, %97 : vector<1x128xf32>
    %c0_88 = arith.constant 0 : index
    %c7 = arith.constant 7 : index
    %c0_89 = arith.constant 0 : index
    %99 = vector.load %arg1[%c0_88, %c7, %c0_89] : memref<1x18x48xf32, #tpu.memory_space<vmem>>, vector<1x1x48xf32>
    %100 = vector.shape_cast %99 : vector<1x1x48xf32> to vector<1x48xf32>
    %c1_90 = arith.constant 1 : index
    %c0_91 = arith.constant 0 : index
    %c0_92 = arith.constant 0 : index
    %101 = vector.load %arg2[%c1_90, %c0_91, %c0_92] : memref<3x48x128xf32, #tpu.memory_space<vmem>>, vector<1x48x128xf32>
    %102 = vector.shape_cast %101 : vector<1x48x128xf32> to vector<48x128xf32>
    %cst_93 = arith.constant dense<0.000000e+00> : vector<1x128xf32>
    %103 = tpu.matmul %100, %102, %cst_93 {dimension_numbers = #tpu.dot_dimension_numbers<[1], [0], [0], [1], [0, 0, 1, 1], [], []>} : vector<1x48xf32>, vector<48x128xf32>, vector<1x128xf32> -> vector<1x128xf32>
    %104 = arith.addf %98, %103 : vector<1x128xf32>
    %c0_94 = arith.constant 0 : index
    %c8 = arith.constant 8 : index
    %c0_95 = arith.constant 0 : index
    %105 = vector.load %arg1[%c0_94, %c8, %c0_95] : memref<1x18x48xf32, #tpu.memory_space<vmem>>, vector<1x1x48xf32>
    %106 = vector.shape_cast %105 : vector<1x1x48xf32> to vector<1x48xf32>
    %c2_96 = arith.constant 2 : index
    %c0_97 = arith.constant 0 : index
    %c0_98 = arith.constant 0 : index
    %107 = vector.load %arg2[%c2_96, %c0_97, %c0_98] : memref<3x48x128xf32, #tpu.memory_space<vmem>>, vector<1x48x128xf32>
    %108 = vector.shape_cast %107 : vector<1x48x128xf32> to vector<48x128xf32>
    %cst_99 = arith.constant dense<0.000000e+00> : vector<1x128xf32>
    %109 = tpu.matmul %106, %108, %cst_99 {dimension_numbers = #tpu.dot_dimension_numbers<[1], [0], [0], [1], [0, 0, 1, 1], [], []>} : vector<1x48xf32>, vector<48x128xf32>, vector<1x128xf32> -> vector<1x128xf32>
    %110 = arith.addf %104, %109 : vector<1x128xf32>
    %cst_100 = arith.constant 2.000000e+01 : f32
    %111 = vector.broadcast %cst_100 : f32 to vector<1x128xf32>
    %112 = arith.minimumf %110, %111 : vector<1x128xf32>
    %113 = math.exp %112 : vector<1x128xf32>
    %cst_101 = arith.constant 2.000000e+00 : f32
    %114 = vector.broadcast %cst_101 : f32 to vector<1x128xf32>
    %115 = arith.addf %113, %114 : vector<1x128xf32>
    %116 = arith.mulf %113, %115 : vector<1x128xf32>
    %cst_102 = arith.constant 2.000000e+00 : f32
    %117 = vector.broadcast %cst_102 : f32 to vector<1x128xf32>
    %118 = arith.addf %116, %117 : vector<1x128xf32>
    %119 = arith.divf %116, %118 : vector<1x128xf32>
    %120 = arith.mulf %110, %119 : vector<1x128xf32>
    %c4_103 = arith.constant 4 : index
    %c0_104 = arith.constant 0 : index
    %121 = vector.load %arg13[%c4_103, %c0_104] : memref<10x128xf32, #tpu.memory_space<vmem>>, vector<1x128xf32>
    tpu.vector_store %arg13[%c4_103, %c0_104], %120 {strides = array<i32>} : memref<10x128xf32, #tpu.memory_space<vmem>>, vector<1x128xf32>,
    %c0_105 = arith.constant 0 : index
    %c0_106 = arith.constant 0 : index
    %122 = vector.load %arg3[%c0_105, %c0_106] : memref<1x128xf32, #tpu.memory_space<vmem>>, vector<1x128xf32>
    %c0_107 = arith.constant 0 : index
    %c8_108 = arith.constant 8 : index
    %c0_109 = arith.constant 0 : index
    %123 = vector.load %arg1[%c0_107, %c8_108, %c0_109] : memref<1x18x48xf32, #tpu.memory_space<vmem>>, vector<1x1x48xf32>
    %124 = vector.shape_cast %123 : vector<1x1x48xf32> to vector<1x48xf32>
    %c0_110 = arith.constant 0 : index
    %c0_111 = arith.constant 0 : index
    %c0_112 = arith.constant 0 : index
    %125 = vector.load %arg2[%c0_110, %c0_111, %c0_112] : memref<3x48x128xf32, #tpu.memory_space<vmem>>, vector<1x48x128xf32>
    %126 = vector.shape_cast %125 : vector<1x48x128xf32> to vector<48x128xf32>
    %cst_113 = arith.constant dense<0.000000e+00> : vector<1x128xf32>
    %127 = tpu.matmul %124, %126, %cst_113 {dimension_numbers = #tpu.dot_dimension_numbers<[1], [0], [0], [1], [0, 0, 1, 1], [], []>} : vector<1x48xf32>, vector<48x128xf32>, vector<1x128xf32> -> vector<1x128xf32>
    %128 = arith.addf %122, %127 : vector<1x128xf32>
    %c0_114 = arith.constant 0 : index
    %c9 = arith.constant 9 : index
    %c0_115 = arith.constant 0 : index
    %129 = vector.load %arg1[%c0_114, %c9, %c0_115] : memref<1x18x48xf32, #tpu.memory_space<vmem>>, vector<1x1x48xf32>
    %130 = vector.shape_cast %129 : vector<1x1x48xf32> to vector<1x48xf32>
    %c1_116 = arith.constant 1 : index
    %c0_117 = arith.constant 0 : index
    %c0_118 = arith.constant 0 : index
    %131 = vector.load %arg2[%c1_116, %c0_117, %c0_118] : memref<3x48x128xf32, #tpu.memory_space<vmem>>, vector<1x48x128xf32>
    %132 = vector.shape_cast %131 : vector<1x48x128xf32> to vector<48x128xf32>
    %cst_119 = arith.constant dense<0.000000e+00> : vector<1x128xf32>
    %133 = tpu.matmul %130, %132, %cst_119 {dimension_numbers = #tpu.dot_dimension_numbers<[1], [0], [0], [1], [0, 0, 1, 1], [], []>} : vector<1x48xf32>, vector<48x128xf32>, vector<1x128xf32> -> vector<1x128xf32>
    %134 = arith.addf %128, %133 : vector<1x128xf32>
    %c0_120 = arith.constant 0 : index
    %c10 = arith.constant 10 : index
    %c0_121 = arith.constant 0 : index
    %135 = vector.load %arg1[%c0_120, %c10, %c0_121] : memref<1x18x48xf32, #tpu.memory_space<vmem>>, vector<1x1x48xf32>
    %136 = vector.shape_cast %135 : vector<1x1x48xf32> to vector<1x48xf32>
    %c2_122 = arith.constant 2 : index
    %c0_123 = arith.constant 0 : index
    %c0_124 = arith.constant 0 : index
    %137 = vector.load %arg2[%c2_122, %c0_123, %c0_124] : memref<3x48x128xf32, #tpu.memory_space<vmem>>, vector<1x48x128xf32>
    %138 = vector.shape_cast %137 : vector<1x48x128xf32> to vector<48x128xf32>
    %cst_125 = arith.constant dense<0.000000e+00> : vector<1x128xf32>
    %139 = tpu.matmul %136, %138, %cst_125 {dimension_numbers = #tpu.dot_dimension_numbers<[1], [0], [0], [1], [0, 0, 1, 1], [], []>} : vector<1x48xf32>, vector<48x128xf32>, vector<1x128xf32> -> vector<1x128xf32>
    %140 = arith.addf %134, %139 : vector<1x128xf32>
    %cst_126 = arith.constant 2.000000e+01 : f32
    %141 = vector.broadcast %cst_126 : f32 to vector<1x128xf32>
    %142 = arith.minimumf %140, %141 : vector<1x128xf32>
    %143 = math.exp %142 : vector<1x128xf32>
    %cst_127 = arith.constant 2.000000e+00 : f32
    %144 = vector.broadcast %cst_127 : f32 to vector<1x128xf32>
    %145 = arith.addf %143, %144 : vector<1x128xf32>
    %146 = arith.mulf %143, %145 : vector<1x128xf32>
    %cst_128 = arith.constant 2.000000e+00 : f32
    %147 = vector.broadcast %cst_128 : f32 to vector<1x128xf32>
    %148 = arith.addf %146, %147 : vector<1x128xf32>
    %149 = arith.divf %146, %148 : vector<1x128xf32>
    %150 = arith.mulf %140, %149 : vector<1x128xf32>
    %c5_129 = arith.constant 5 : index
    %c0_130 = arith.constant 0 : index
    %151 = vector.load %arg13[%c5_129, %c0_130] : memref<10x128xf32, #tpu.memory_space<vmem>>, vector<1x128xf32>
    tpu.vector_store %arg13[%c5_129, %c0_130], %150 {strides = array<i32>} : memref<10x128xf32, #tpu.memory_space<vmem>>, vector<1x128xf32>,
    %c0_131 = arith.constant 0 : index
    %c0_132 = arith.constant 0 : index
    %152 = vector.load %arg3[%c0_131, %c0_132] : memref<1x128xf32, #tpu.memory_space<vmem>>, vector<1x128xf32>
    %c0_133 = arith.constant 0 : index
    %c10_134 = arith.constant 10 : index
    %c0_135 = arith.constant 0 : index
    %153 = vector.load %arg1[%c0_133, %c10_134, %c0_135] : memref<1x18x48xf32, #tpu.memory_space<vmem>>, vector<1x1x48xf32>
    %154 = vector.shape_cast %153 : vector<1x1x48xf32> to vector<1x48xf32>
    %c0_136 = arith.constant 0 : index
    %c0_137 = arith.constant 0 : index
    %c0_138 = arith.constant 0 : index
    %155 = vector.load %arg2[%c0_136, %c0_137, %c0_138] : memref<3x48x128xf32, #tpu.memory_space<vmem>>, vector<1x48x128xf32>
    %156 = vector.shape_cast %155 : vector<1x48x128xf32> to vector<48x128xf32>
    %cst_139 = arith.constant dense<0.000000e+00> : vector<1x128xf32>
    %157 = tpu.matmul %154, %156, %cst_139 {dimension_numbers = #tpu.dot_dimension_numbers<[1], [0], [0], [1], [0, 0, 1, 1], [], []>} : vector<1x48xf32>, vector<48x128xf32>, vector<1x128xf32> -> vector<1x128xf32>
    %158 = arith.addf %152, %157 : vector<1x128xf32>
    %c0_140 = arith.constant 0 : index
    %c11 = arith.constant 11 : index
    %c0_141 = arith.constant 0 : index
    %159 = vector.load %arg1[%c0_140, %c11, %c0_141] : memref<1x18x48xf32, #tpu.memory_space<vmem>>, vector<1x1x48xf32>
    %160 = vector.shape_cast %159 : vector<1x1x48xf32> to vector<1x48xf32>
    %c1_142 = arith.constant 1 : index
    %c0_143 = arith.constant 0 : index
    %c0_144 = arith.constant 0 : index
    %161 = vector.load %arg2[%c1_142, %c0_143, %c0_144] : memref<3x48x128xf32, #tpu.memory_space<vmem>>, vector<1x48x128xf32>
    %162 = vector.shape_cast %161 : vector<1x48x128xf32> to vector<48x128xf32>
    %cst_145 = arith.constant dense<0.000000e+00> : vector<1x128xf32>
    %163 = tpu.matmul %160, %162, %cst_145 {dimension_numbers = #tpu.dot_dimension_numbers<[1], [0], [0], [1], [0, 0, 1, 1], [], []>} : vector<1x48xf32>, vector<48x128xf32>, vector<1x128xf32> -> vector<1x128xf32>
    %164 = arith.addf %158, %163 : vector<1x128xf32>
    %c0_146 = arith.constant 0 : index
    %c12 = arith.constant 12 : index
    %c0_147 = arith.constant 0 : index
    %165 = vector.load %arg1[%c0_146, %c12, %c0_147] : memref<1x18x48xf32, #tpu.memory_space<vmem>>, vector<1x1x48xf32>
    %166 = vector.shape_cast %165 : vector<1x1x48xf32> to vector<1x48xf32>
    %c2_148 = arith.constant 2 : index
    %c0_149 = arith.constant 0 : index
    %c0_150 = arith.constant 0 : index
    %167 = vector.load %arg2[%c2_148, %c0_149, %c0_150] : memref<3x48x128xf32, #tpu.memory_space<vmem>>, vector<1x48x128xf32>
    %168 = vector.shape_cast %167 : vector<1x48x128xf32> to vector<48x128xf32>
    %cst_151 = arith.constant dense<0.000000e+00> : vector<1x128xf32>
    %169 = tpu.matmul %166, %168, %cst_151 {dimension_numbers = #tpu.dot_dimension_numbers<[1], [0], [0], [1], [0, 0, 1, 1], [], []>} : vector<1x48xf32>, vector<48x128xf32>, vector<1x128xf32> -> vector<1x128xf32>
    %170 = arith.addf %164, %169 : vector<1x128xf32>
    %cst_152 = arith.constant 2.000000e+01 : f32
    %171 = vector.broadcast %cst_152 : f32 to vector<1x128xf32>
    %172 = arith.minimumf %170, %171 : vector<1x128xf32>
    %173 = math.exp %172 : vector<1x128xf32>
    %cst_153 = arith.constant 2.000000e+00 : f32
    %174 = vector.broadcast %cst_153 : f32 to vector<1x128xf32>
    %175 = arith.addf %173, %174 : vector<1x128xf32>
    %176 = arith.mulf %173, %175 : vector<1x128xf32>
    %cst_154 = arith.constant 2.000000e+00 : f32
    %177 = vector.broadcast %cst_154 : f32 to vector<1x128xf32>
    %178 = arith.addf %176, %177 : vector<1x128xf32>
    %179 = arith.divf %176, %178 : vector<1x128xf32>
    %180 = arith.mulf %170, %179 : vector<1x128xf32>
    %c6_155 = arith.constant 6 : index
    %c0_156 = arith.constant 0 : index
    %181 = vector.load %arg13[%c6_155, %c0_156] : memref<10x128xf32, #tpu.memory_space<vmem>>, vector<1x128xf32>
    tpu.vector_store %arg13[%c6_155, %c0_156], %180 {strides = array<i32>} : memref<10x128xf32, #tpu.memory_space<vmem>>, vector<1x128xf32>,
    %c0_157 = arith.constant 0 : index
    %c0_158 = arith.constant 0 : index
    %182 = vector.load %arg3[%c0_157, %c0_158] : memref<1x128xf32, #tpu.memory_space<vmem>>, vector<1x128xf32>
    %c0_159 = arith.constant 0 : index
    %c12_160 = arith.constant 12 : index
    %c0_161 = arith.constant 0 : index
    %183 = vector.load %arg1[%c0_159, %c12_160, %c0_161] : memref<1x18x48xf32, #tpu.memory_space<vmem>>, vector<1x1x48xf32>
    %184 = vector.shape_cast %183 : vector<1x1x48xf32> to vector<1x48xf32>
    %c0_162 = arith.constant 0 : index
    %c0_163 = arith.constant 0 : index
    %c0_164 = arith.constant 0 : index
    %185 = vector.load %arg2[%c0_162, %c0_163, %c0_164] : memref<3x48x128xf32, #tpu.memory_space<vmem>>, vector<1x48x128xf32>
    %186 = vector.shape_cast %185 : vector<1x48x128xf32> to vector<48x128xf32>
    %cst_165 = arith.constant dense<0.000000e+00> : vector<1x128xf32>
    %187 = tpu.matmul %184, %186, %cst_165 {dimension_numbers = #tpu.dot_dimension_numbers<[1], [0], [0], [1], [0, 0, 1, 1], [], []>} : vector<1x48xf32>, vector<48x128xf32>, vector<1x128xf32> -> vector<1x128xf32>
    %188 = arith.addf %182, %187 : vector<1x128xf32>
    %c0_166 = arith.constant 0 : index
    %c13 = arith.constant 13 : index
    %c0_167 = arith.constant 0 : index
    %189 = vector.load %arg1[%c0_166, %c13, %c0_167] : memref<1x18x48xf32, #tpu.memory_space<vmem>>, vector<1x1x48xf32>
    %190 = vector.shape_cast %189 : vector<1x1x48xf32> to vector<1x48xf32>
    %c1_168 = arith.constant 1 : index
    %c0_169 = arith.constant 0 : index
    %c0_170 = arith.constant 0 : index
    %191 = vector.load %arg2[%c1_168, %c0_169, %c0_170] : memref<3x48x128xf32, #tpu.memory_space<vmem>>, vector<1x48x128xf32>
    %192 = vector.shape_cast %191 : vector<1x48x128xf32> to vector<48x128xf32>
    %cst_171 = arith.constant dense<0.000000e+00> : vector<1x128xf32>
    %193 = tpu.matmul %190, %192, %cst_171 {dimension_numbers = #tpu.dot_dimension_numbers<[1], [0], [0], [1], [0, 0, 1, 1], [], []>} : vector<1x48xf32>, vector<48x128xf32>, vector<1x128xf32> -> vector<1x128xf32>
    %194 = arith.addf %188, %193 : vector<1x128xf32>
    %c0_172 = arith.constant 0 : index
    %c14 = arith.constant 14 : index
    %c0_173 = arith.constant 0 : index
    %195 = vector.load %arg1[%c0_172, %c14, %c0_173] : memref<1x18x48xf32, #tpu.memory_space<vmem>>, vector<1x1x48xf32>
    %196 = vector.shape_cast %195 : vector<1x1x48xf32> to vector<1x48xf32>
    %c2_174 = arith.constant 2 : index
    %c0_175 = arith.constant 0 : index
    %c0_176 = arith.constant 0 : index
    %197 = vector.load %arg2[%c2_174, %c0_175, %c0_176] : memref<3x48x128xf32, #tpu.memory_space<vmem>>, vector<1x48x128xf32>
    %198 = vector.shape_cast %197 : vector<1x48x128xf32> to vector<48x128xf32>
    %cst_177 = arith.constant dense<0.000000e+00> : vector<1x128xf32>
    %199 = tpu.matmul %196, %198, %cst_177 {dimension_numbers = #tpu.dot_dimension_numbers<[1], [0], [0], [1], [0, 0, 1, 1], [], []>} : vector<1x48xf32>, vector<48x128xf32>, vector<1x128xf32> -> vector<1x128xf32>
    %200 = arith.addf %194, %199 : vector<1x128xf32>
    %cst_178 = arith.constant 2.000000e+01 : f32
    %201 = vector.broadcast %cst_178 : f32 to vector<1x128xf32>
    %202 = arith.minimumf %200, %201 : vector<1x128xf32>
    %203 = math.exp %202 : vector<1x128xf32>
    %cst_179 = arith.constant 2.000000e+00 : f32
    %204 = vector.broadcast %cst_179 : f32 to vector<1x128xf32>
    %205 = arith.addf %203, %204 : vector<1x128xf32>
    %206 = arith.mulf %203, %205 : vector<1x128xf32>
    %cst_180 = arith.constant 2.000000e+00 : f32
    %207 = vector.broadcast %cst_180 : f32 to vector<1x128xf32>
    %208 = arith.addf %206, %207 : vector<1x128xf32>
    %209 = arith.divf %206, %208 : vector<1x128xf32>
    %210 = arith.mulf %200, %209 : vector<1x128xf32>
    %c7_181 = arith.constant 7 : index
    %c0_182 = arith.constant 0 : index
    %211 = vector.load %arg13[%c7_181, %c0_182] : memref<10x128xf32, #tpu.memory_space<vmem>>, vector<1x128xf32>
    tpu.vector_store %arg13[%c7_181, %c0_182], %210 {strides = array<i32>} : memref<10x128xf32, #tpu.memory_space<vmem>>, vector<1x128xf32>,
    %c0_183 = arith.constant 0 : index
    %c0_184 = arith.constant 0 : index
    %212 = vector.load %arg3[%c0_183, %c0_184] : memref<1x128xf32, #tpu.memory_space<vmem>>, vector<1x128xf32>
    %c0_185 = arith.constant 0 : index
    %c14_186 = arith.constant 14 : index
    %c0_187 = arith.constant 0 : index
    %213 = vector.load %arg1[%c0_185, %c14_186, %c0_187] : memref<1x18x48xf32, #tpu.memory_space<vmem>>, vector<1x1x48xf32>
    %214 = vector.shape_cast %213 : vector<1x1x48xf32> to vector<1x48xf32>
    %c0_188 = arith.constant 0 : index
    %c0_189 = arith.constant 0 : index
    %c0_190 = arith.constant 0 : index
    %215 = vector.load %arg2[%c0_188, %c0_189, %c0_190] : memref<3x48x128xf32, #tpu.memory_space<vmem>>, vector<1x48x128xf32>
    %216 = vector.shape_cast %215 : vector<1x48x128xf32> to vector<48x128xf32>
    %cst_191 = arith.constant dense<0.000000e+00> : vector<1x128xf32>
    %217 = tpu.matmul %214, %216, %cst_191 {dimension_numbers = #tpu.dot_dimension_numbers<[1], [0], [0], [1], [0, 0, 1, 1], [], []>} : vector<1x48xf32>, vector<48x128xf32>, vector<1x128xf32> -> vector<1x128xf32>
    %218 = arith.addf %212, %217 : vector<1x128xf32>
    %c0_192 = arith.constant 0 : index
    %c15 = arith.constant 15 : index
    %c0_193 = arith.constant 0 : index
    %219 = vector.load %arg1[%c0_192, %c15, %c0_193] : memref<1x18x48xf32, #tpu.memory_space<vmem>>, vector<1x1x48xf32>
    %220 = vector.shape_cast %219 : vector<1x1x48xf32> to vector<1x48xf32>
    %c1_194 = arith.constant 1 : index
    %c0_195 = arith.constant 0 : index
    %c0_196 = arith.constant 0 : index
    %221 = vector.load %arg2[%c1_194, %c0_195, %c0_196] : memref<3x48x128xf32, #tpu.memory_space<vmem>>, vector<1x48x128xf32>
    %222 = vector.shape_cast %221 : vector<1x48x128xf32> to vector<48x128xf32>
    %cst_197 = arith.constant dense<0.000000e+00> : vector<1x128xf32>
    %223 = tpu.matmul %220, %222, %cst_197 {dimension_numbers = #tpu.dot_dimension_numbers<[1], [0], [0], [1], [0, 0, 1, 1], [], []>} : vector<1x48xf32>, vector<48x128xf32>, vector<1x128xf32> -> vector<1x128xf32>
    %224 = arith.addf %218, %223 : vector<1x128xf32>
    %c0_198 = arith.constant 0 : index
    %c16 = arith.constant 16 : index
    %c0_199 = arith.constant 0 : index
    %225 = vector.load %arg1[%c0_198, %c16, %c0_199] : memref<1x18x48xf32, #tpu.memory_space<vmem>>, vector<1x1x48xf32>
    %226 = vector.shape_cast %225 : vector<1x1x48xf32> to vector<1x48xf32>
    %c2_200 = arith.constant 2 : index
    %c0_201 = arith.constant 0 : index
    %c0_202 = arith.constant 0 : index
    %227 = vector.load %arg2[%c2_200, %c0_201, %c0_202] : memref<3x48x128xf32, #tpu.memory_space<vmem>>, vector<1x48x128xf32>
    %228 = vector.shape_cast %227 : vector<1x48x128xf32> to vector<48x128xf32>
    %cst_203 = arith.constant dense<0.000000e+00> : vector<1x128xf32>
    %229 = tpu.matmul %226, %228, %cst_203 {dimension_numbers = #tpu.dot_dimension_numbers<[1], [0], [0], [1], [0, 0, 1, 1], [], []>} : vector<1x48xf32>, vector<48x128xf32>, vector<1x128xf32> -> vector<1x128xf32>
    %230 = arith.addf %224, %229 : vector<1x128xf32>
    %cst_204 = arith.constant 2.000000e+01 : f32
    %231 = vector.broadcast %cst_204 : f32 to vector<1x128xf32>
    %232 = arith.minimumf %230, %231 : vector<1x128xf32>
    %233 = math.exp %232 : vector<1x128xf32>
    %cst_205 = arith.constant 2.000000e+00 : f32
    %234 = vector.broadcast %cst_205 : f32 to vector<1x128xf32>
    %235 = arith.addf %233, %234 : vector<1x128xf32>
    %236 = arith.mulf %233, %235 : vector<1x128xf32>
    %cst_206 = arith.constant 2.000000e+00 : f32
    %237 = vector.broadcast %cst_206 : f32 to vector<1x128xf32>
    %238 = arith.addf %236, %237 : vector<1x128xf32>
    %239 = arith.divf %236, %238 : vector<1x128xf32>
    %240 = arith.mulf %230, %239 : vector<1x128xf32>
    %c8_207 = arith.constant 8 : index
    %c0_208 = arith.constant 0 : index
    %241 = vector.load %arg13[%c8_207, %c0_208] : memref<10x128xf32, #tpu.memory_space<vmem>>, vector<1x128xf32>
    tpu.vector_store %arg13[%c8_207, %c0_208], %240 {strides = array<i32>} : memref<10x128xf32, #tpu.memory_space<vmem>>, vector<1x128xf32>,
    %cst_209 = arith.constant 0.000000e+00 : f32
    %242 = vector.broadcast %cst_209 : f32 to vector<6x128xf32>
    %c0_210 = arith.constant 0 : index
    %c0_211 = arith.constant 0 : index
    %243 = vector.load %arg14[%c0_210, %c0_211] : memref<6x128xf32, #tpu.memory_space<vmem>>, vector<6x128xf32>
    tpu.vector_store %arg14[%c0_210, %c0_211], %242 {strides = array<i32>} : memref<6x128xf32, #tpu.memory_space<vmem>>, vector<6x128xf32>,
    %c0_212 = arith.constant 0 : index
    %c0_213 = arith.constant 0 : index
    %244 = vector.load %arg5[%c0_212, %c0_213] : memref<1x128xf32, #tpu.memory_space<vmem>>, vector<1x128xf32>
    %c0_214 = arith.constant 0 : index
    %c0_215 = arith.constant 0 : index
    %245 = vector.load %arg13[%c0_214, %c0_215] : memref<10x128xf32, #tpu.memory_space<vmem>>, vector<1x128xf32>
    %c0_216 = arith.constant 0 : index
    %c0_217 = arith.constant 0 : index
    %c0_218 = arith.constant 0 : index
    %246 = vector.load %arg4[%c0_216, %c0_217, %c0_218] : memref<3x128x128xf32, #tpu.memory_space<vmem>>, vector<1x128x128xf32>
    %247 = vector.shape_cast %246 : vector<1x128x128xf32> to vector<128x128xf32>
    %cst_219 = arith.constant dense<0.000000e+00> : vector<1x128xf32>
    %248 = tpu.matmul %245, %247, %cst_219 {dimension_numbers = #tpu.dot_dimension_numbers<[1], [0], [0], [1], [0, 0, 1, 1], [], []>} : vector<1x128xf32>, vector<128x128xf32>, vector<1x128xf32> -> vector<1x128xf32>
    %249 = arith.addf %244, %248 : vector<1x128xf32>
    %c1_220 = arith.constant 1 : index
    %c0_221 = arith.constant 0 : index
    %250 = vector.load %arg13[%c1_220, %c0_221] : memref<10x128xf32, #tpu.memory_space<vmem>>, vector<1x128xf32>
    %c1_222 = arith.constant 1 : index
    %c0_223 = arith.constant 0 : index
    %c0_224 = arith.constant 0 : index
    %251 = vector.load %arg4[%c1_222, %c0_223, %c0_224] : memref<3x128x128xf32, #tpu.memory_space<vmem>>, vector<1x128x128xf32>
    %252 = vector.shape_cast %251 : vector<1x128x128xf32> to vector<128x128xf32>
    %cst_225 = arith.constant dense<0.000000e+00> : vector<1x128xf32>
    %253 = tpu.matmul %250, %252, %cst_225 {dimension_numbers = #tpu.dot_dimension_numbers<[1], [0], [0], [1], [0, 0, 1, 1], [], []>} : vector<1x128xf32>, vector<128x128xf32>, vector<1x128xf32> -> vector<1x128xf32>
    %254 = arith.addf %249, %253 : vector<1x128xf32>
    %c2_226 = arith.constant 2 : index
    %c0_227 = arith.constant 0 : index
    %255 = vector.load %arg13[%c2_226, %c0_227] : memref<10x128xf32, #tpu.memory_space<vmem>>, vector<1x128xf32>
    %c2_228 = arith.constant 2 : index
    %c0_229 = arith.constant 0 : index
    %c0_230 = arith.constant 0 : index
    %256 = vector.load %arg4[%c2_228, %c0_229, %c0_230] : memref<3x128x128xf32, #tpu.memory_space<vmem>>, vector<1x128x128xf32>
    %257 = vector.shape_cast %256 : vector<1x128x128xf32> to vector<128x128xf32>
    %cst_231 = arith.constant dense<0.000000e+00> : vector<1x128xf32>
    %258 = tpu.matmul %255, %257, %cst_231 {dimension_numbers = #tpu.dot_dimension_numbers<[1], [0], [0], [1], [0, 0, 1, 1], [], []>} : vector<1x128xf32>, vector<128x128xf32>, vector<1x128xf32> -> vector<1x128xf32>
    %259 = arith.addf %254, %258 : vector<1x128xf32>
    %cst_232 = arith.constant 2.000000e+01 : f32
    %260 = vector.broadcast %cst_232 : f32 to vector<1x128xf32>
    %261 = arith.minimumf %259, %260 : vector<1x128xf32>
    %262 = math.exp %261 : vector<1x128xf32>
    %cst_233 = arith.constant 2.000000e+00 : f32
    %263 = vector.broadcast %cst_233 : f32 to vector<1x128xf32>
    %264 = arith.addf %262, %263 : vector<1x128xf32>
    %265 = arith.mulf %262, %264 : vector<1x128xf32>
    %cst_234 = arith.constant 2.000000e+00 : f32
    %266 = vector.broadcast %cst_234 : f32 to vector<1x128xf32>
    %267 = arith.addf %265, %266 : vector<1x128xf32>
    %268 = arith.divf %265, %267 : vector<1x128xf32>
    %269 = arith.mulf %259, %268 : vector<1x128xf32>
    %c1_235 = arith.constant 1 : index
    %c0_236 = arith.constant 0 : index
    %270 = vector.load %arg14[%c1_235, %c0_236] : memref<6x128xf32, #tpu.memory_space<vmem>>, vector<1x128xf32>
    tpu.vector_store %arg14[%c1_235, %c0_236], %269 {strides = array<i32>} : memref<6x128xf32, #tpu.memory_space<vmem>>, vector<1x128xf32>,
    %c0_237 = arith.constant 0 : index
    %c0_238 = arith.constant 0 : index
    %271 = vector.load %arg5[%c0_237, %c0_238] : memref<1x128xf32, #tpu.memory_space<vmem>>, vector<1x128xf32>
    %c2_239 = arith.constant 2 : index
    %c0_240 = arith.constant 0 : index
    %272 = vector.load %arg13[%c2_239, %c0_240] : memref<10x128xf32, #tpu.memory_space<vmem>>, vector<1x128xf32>
    %c0_241 = arith.constant 0 : index
    %c0_242 = arith.constant 0 : index
    %c0_243 = arith.constant 0 : index
    %273 = vector.load %arg4[%c0_241, %c0_242, %c0_243] : memref<3x128x128xf32, #tpu.memory_space<vmem>>, vector<1x128x128xf32>
    %274 = vector.shape_cast %273 : vector<1x128x128xf32> to vector<128x128xf32>
    %cst_244 = arith.constant dense<0.000000e+00> : vector<1x128xf32>
    %275 = tpu.matmul %272, %274, %cst_244 {dimension_numbers = #tpu.dot_dimension_numbers<[1], [0], [0], [1], [0, 0, 1, 1], [], []>} : vector<1x128xf32>, vector<128x128xf32>, vector<1x128xf32> -> vector<1x128xf32>
    %276 = arith.addf %271, %275 : vector<1x128xf32>
    %c3_245 = arith.constant 3 : index
    %c0_246 = arith.constant 0 : index
    %277 = vector.load %arg13[%c3_245, %c0_246] : memref<10x128xf32, #tpu.memory_space<vmem>>, vector<1x128xf32>
    %c1_247 = arith.constant 1 : index
    %c0_248 = arith.constant 0 : index
    %c0_249 = arith.constant 0 : index
    %278 = vector.load %arg4[%c1_247, %c0_248, %c0_249] : memref<3x128x128xf32, #tpu.memory_space<vmem>>, vector<1x128x128xf32>
    %279 = vector.shape_cast %278 : vector<1x128x128xf32> to vector<128x128xf32>
    %cst_250 = arith.constant dense<0.000000e+00> : vector<1x128xf32>
    %280 = tpu.matmul %277, %279, %cst_250 {dimension_numbers = #tpu.dot_dimension_numbers<[1], [0], [0], [1], [0, 0, 1, 1], [], []>} : vector<1x128xf32>, vector<128x128xf32>, vector<1x128xf32> -> vector<1x128xf32>
    %281 = arith.addf %276, %280 : vector<1x128xf32>
    %c4_251 = arith.constant 4 : index
    %c0_252 = arith.constant 0 : index
    %282 = vector.load %arg13[%c4_251, %c0_252] : memref<10x128xf32, #tpu.memory_space<vmem>>, vector<1x128xf32>
    %c2_253 = arith.constant 2 : index
    %c0_254 = arith.constant 0 : index
    %c0_255 = arith.constant 0 : index
    %283 = vector.load %arg4[%c2_253, %c0_254, %c0_255] : memref<3x128x128xf32, #tpu.memory_space<vmem>>, vector<1x128x128xf32>
    %284 = vector.shape_cast %283 : vector<1x128x128xf32> to vector<128x128xf32>
    %cst_256 = arith.constant dense<0.000000e+00> : vector<1x128xf32>
    %285 = tpu.matmul %282, %284, %cst_256 {dimension_numbers = #tpu.dot_dimension_numbers<[1], [0], [0], [1], [0, 0, 1, 1], [], []>} : vector<1x128xf32>, vector<128x128xf32>, vector<1x128xf32> -> vector<1x128xf32>
    %286 = arith.addf %281, %285 : vector<1x128xf32>
    %cst_257 = arith.constant 2.000000e+01 : f32
    %287 = vector.broadcast %cst_257 : f32 to vector<1x128xf32>
    %288 = arith.minimumf %286, %287 : vector<1x128xf32>
    %289 = math.exp %288 : vector<1x128xf32>
    %cst_258 = arith.constant 2.000000e+00 : f32
    %290 = vector.broadcast %cst_258 : f32 to vector<1x128xf32>
    %291 = arith.addf %289, %290 : vector<1x128xf32>
    %292 = arith.mulf %289, %291 : vector<1x128xf32>
    %cst_259 = arith.constant 2.000000e+00 : f32
    %293 = vector.broadcast %cst_259 : f32 to vector<1x128xf32>
    %294 = arith.addf %292, %293 : vector<1x128xf32>
    %295 = arith.divf %292, %294 : vector<1x128xf32>
    %296 = arith.mulf %286, %295 : vector<1x128xf32>
    %c2_260 = arith.constant 2 : index
    %c0_261 = arith.constant 0 : index
    %297 = vector.load %arg14[%c2_260, %c0_261] : memref<6x128xf32, #tpu.memory_space<vmem>>, vector<1x128xf32>
    tpu.vector_store %arg14[%c2_260, %c0_261], %296 {strides = array<i32>} : memref<6x128xf32, #tpu.memory_space<vmem>>, vector<1x128xf32>,
    %c0_262 = arith.constant 0 : index
    %c0_263 = arith.constant 0 : index
    %298 = vector.load %arg5[%c0_262, %c0_263] : memref<1x128xf32, #tpu.memory_space<vmem>>, vector<1x128xf32>
    %c4_264 = arith.constant 4 : index
    %c0_265 = arith.constant 0 : index
    %299 = vector.load %arg13[%c4_264, %c0_265] : memref<10x128xf32, #tpu.memory_space<vmem>>, vector<1x128xf32>
    %c0_266 = arith.constant 0 : index
    %c0_267 = arith.constant 0 : index
    %c0_268 = arith.constant 0 : index
    %300 = vector.load %arg4[%c0_266, %c0_267, %c0_268] : memref<3x128x128xf32, #tpu.memory_space<vmem>>, vector<1x128x128xf32>
    %301 = vector.shape_cast %300 : vector<1x128x128xf32> to vector<128x128xf32>
    %cst_269 = arith.constant dense<0.000000e+00> : vector<1x128xf32>
    %302 = tpu.matmul %299, %301, %cst_269 {dimension_numbers = #tpu.dot_dimension_numbers<[1], [0], [0], [1], [0, 0, 1, 1], [], []>} : vector<1x128xf32>, vector<128x128xf32>, vector<1x128xf32> -> vector<1x128xf32>
    %303 = arith.addf %298, %302 : vector<1x128xf32>
    %c5_270 = arith.constant 5 : index
    %c0_271 = arith.constant 0 : index
    %304 = vector.load %arg13[%c5_270, %c0_271] : memref<10x128xf32, #tpu.memory_space<vmem>>, vector<1x128xf32>
    %c1_272 = arith.constant 1 : index
    %c0_273 = arith.constant 0 : index
    %c0_274 = arith.constant 0 : index
    %305 = vector.load %arg4[%c1_272, %c0_273, %c0_274] : memref<3x128x128xf32, #tpu.memory_space<vmem>>, vector<1x128x128xf32>
    %306 = vector.shape_cast %305 : vector<1x128x128xf32> to vector<128x128xf32>
    %cst_275 = arith.constant dense<0.000000e+00> : vector<1x128xf32>
    %307 = tpu.matmul %304, %306, %cst_275 {dimension_numbers = #tpu.dot_dimension_numbers<[1], [0], [0], [1], [0, 0, 1, 1], [], []>} : vector<1x128xf32>, vector<128x128xf32>, vector<1x128xf32> -> vector<1x128xf32>
    %308 = arith.addf %303, %307 : vector<1x128xf32>
    %c6_276 = arith.constant 6 : index
    %c0_277 = arith.constant 0 : index
    %309 = vector.load %arg13[%c6_276, %c0_277] : memref<10x128xf32, #tpu.memory_space<vmem>>, vector<1x128xf32>
    %c2_278 = arith.constant 2 : index
    %c0_279 = arith.constant 0 : index
    %c0_280 = arith.constant 0 : index
    %310 = vector.load %arg4[%c2_278, %c0_279, %c0_280] : memref<3x128x128xf32, #tpu.memory_space<vmem>>, vector<1x128x128xf32>
    %311 = vector.shape_cast %310 : vector<1x128x128xf32> to vector<128x128xf32>
    %cst_281 = arith.constant dense<0.000000e+00> : vector<1x128xf32>
    %312 = tpu.matmul %309, %311, %cst_281 {dimension_numbers = #tpu.dot_dimension_numbers<[1], [0], [0], [1], [0, 0, 1, 1], [], []>} : vector<1x128xf32>, vector<128x128xf32>, vector<1x128xf32> -> vector<1x128xf32>
    %313 = arith.addf %308, %312 : vector<1x128xf32>
    %cst_282 = arith.constant 2.000000e+01 : f32
    %314 = vector.broadcast %cst_282 : f32 to vector<1x128xf32>
    %315 = arith.minimumf %313, %314 : vector<1x128xf32>
    %316 = math.exp %315 : vector<1x128xf32>
    %cst_283 = arith.constant 2.000000e+00 : f32
    %317 = vector.broadcast %cst_283 : f32 to vector<1x128xf32>
    %318 = arith.addf %316, %317 : vector<1x128xf32>
    %319 = arith.mulf %316, %318 : vector<1x128xf32>
    %cst_284 = arith.constant 2.000000e+00 : f32
    %320 = vector.broadcast %cst_284 : f32 to vector<1x128xf32>
    %321 = arith.addf %319, %320 : vector<1x128xf32>
    %322 = arith.divf %319, %321 : vector<1x128xf32>
    %323 = arith.mulf %313, %322 : vector<1x128xf32>
    %c3_285 = arith.constant 3 : index
    %c0_286 = arith.constant 0 : index
    %324 = vector.load %arg14[%c3_285, %c0_286] : memref<6x128xf32, #tpu.memory_space<vmem>>, vector<1x128xf32>
    tpu.vector_store %arg14[%c3_285, %c0_286], %323 {strides = array<i32>} : memref<6x128xf32, #tpu.memory_space<vmem>>, vector<1x128xf32>,
    %c0_287 = arith.constant 0 : index
    %c0_288 = arith.constant 0 : index
    %325 = vector.load %arg5[%c0_287, %c0_288] : memref<1x128xf32, #tpu.memory_space<vmem>>, vector<1x128xf32>
    %c6_289 = arith.constant 6 : index
    %c0_290 = arith.constant 0 : index
    %326 = vector.load %arg13[%c6_289, %c0_290] : memref<10x128xf32, #tpu.memory_space<vmem>>, vector<1x128xf32>
    %c0_291 = arith.constant 0 : index
    %c0_292 = arith.constant 0 : index
    %c0_293 = arith.constant 0 : index
    %327 = vector.load %arg4[%c0_291, %c0_292, %c0_293] : memref<3x128x128xf32, #tpu.memory_space<vmem>>, vector<1x128x128xf32>
    %328 = vector.shape_cast %327 : vector<1x128x128xf32> to vector<128x128xf32>
    %cst_294 = arith.constant dense<0.000000e+00> : vector<1x128xf32>
    %329 = tpu.matmul %326, %328, %cst_294 {dimension_numbers = #tpu.dot_dimension_numbers<[1], [0], [0], [1], [0, 0, 1, 1], [], []>} : vector<1x128xf32>, vector<128x128xf32>, vector<1x128xf32> -> vector<1x128xf32>
    %330 = arith.addf %325, %329 : vector<1x128xf32>
    %c7_295 = arith.constant 7 : index
    %c0_296 = arith.constant 0 : index
    %331 = vector.load %arg13[%c7_295, %c0_296] : memref<10x128xf32, #tpu.memory_space<vmem>>, vector<1x128xf32>
    %c1_297 = arith.constant 1 : index
    %c0_298 = arith.constant 0 : index
    %c0_299 = arith.constant 0 : index
    %332 = vector.load %arg4[%c1_297, %c0_298, %c0_299] : memref<3x128x128xf32, #tpu.memory_space<vmem>>, vector<1x128x128xf32>
    %333 = vector.shape_cast %332 : vector<1x128x128xf32> to vector<128x128xf32>
    %cst_300 = arith.constant dense<0.000000e+00> : vector<1x128xf32>
    %334 = tpu.matmul %331, %333, %cst_300 {dimension_numbers = #tpu.dot_dimension_numbers<[1], [0], [0], [1], [0, 0, 1, 1], [], []>} : vector<1x128xf32>, vector<128x128xf32>, vector<1x128xf32> -> vector<1x128xf32>
    %335 = arith.addf %330, %334 : vector<1x128xf32>
    %c8_301 = arith.constant 8 : index
    %c0_302 = arith.constant 0 : index
    %336 = vector.load %arg13[%c8_301, %c0_302] : memref<10x128xf32, #tpu.memory_space<vmem>>, vector<1x128xf32>
    %c2_303 = arith.constant 2 : index
    %c0_304 = arith.constant 0 : index
    %c0_305 = arith.constant 0 : index
    %337 = vector.load %arg4[%c2_303, %c0_304, %c0_305] : memref<3x128x128xf32, #tpu.memory_space<vmem>>, vector<1x128x128xf32>
    %338 = vector.shape_cast %337 : vector<1x128x128xf32> to vector<128x128xf32>
    %cst_306 = arith.constant dense<0.000000e+00> : vector<1x128xf32>
    %339 = tpu.matmul %336, %338, %cst_306 {dimension_numbers = #tpu.dot_dimension_numbers<[1], [0], [0], [1], [0, 0, 1, 1], [], []>} : vector<1x128xf32>, vector<128x128xf32>, vector<1x128xf32> -> vector<1x128xf32>
    %340 = arith.addf %335, %339 : vector<1x128xf32>
    %cst_307 = arith.constant 2.000000e+01 : f32
    %341 = vector.broadcast %cst_307 : f32 to vector<1x128xf32>
    %342 = arith.minimumf %340, %341 : vector<1x128xf32>
    %343 = math.exp %342 : vector<1x128xf32>
    %cst_308 = arith.constant 2.000000e+00 : f32
    %344 = vector.broadcast %cst_308 : f32 to vector<1x128xf32>
    %345 = arith.addf %343, %344 : vector<1x128xf32>
    %346 = arith.mulf %343, %345 : vector<1x128xf32>
    %cst_309 = arith.constant 2.000000e+00 : f32
    %347 = vector.broadcast %cst_309 : f32 to vector<1x128xf32>
    %348 = arith.addf %346, %347 : vector<1x128xf32>
    %349 = arith.divf %346, %348 : vector<1x128xf32>
    %350 = arith.mulf %340, %349 : vector<1x128xf32>
    %c4_310 = arith.constant 4 : index
    %c0_311 = arith.constant 0 : index
    %351 = vector.load %arg14[%c4_310, %c0_311] : memref<6x128xf32, #tpu.memory_space<vmem>>, vector<1x128xf32>
    tpu.vector_store %arg14[%c4_310, %c0_311], %350 {strides = array<i32>} : memref<6x128xf32, #tpu.memory_space<vmem>>, vector<1x128xf32>,
    %c1_312 = arith.constant 1 : index
    %c0_313 = arith.constant 0 : index
    %352 = vector.load %arg14[%c1_312, %c0_313] : memref<6x128xf32, #tpu.memory_space<vmem>>, vector<4x128xf32>
    %cst_314 = arith.constant 0.000000e+00 : f32
    %353 = vector.broadcast %cst_314 : f32 to vector<4x128xf32>
    %c0_315 = arith.constant 0 : index
    %c0_316 = arith.constant 0 : index
    %354 = vector.load %arg7[%c0_315, %c0_316] : memref<8x128xf32, #tpu.memory_space<vmem>>, vector<1x128xf32>
    %355 = vector.broadcast %354 : vector<1x128xf32> to vector<4x128xf32>
    %356 = arith.addf %353, %355 : vector<4x128xf32>
    %c0_317 = arith.constant 0 : index
    %c0_318 = arith.constant 0 : index
    %357 = vector.load %arg14[%c0_317, %c0_318] : memref<6x128xf32, #tpu.memory_space<vmem>>, vector<4x128xf32>
    %c0_319 = arith.constant 0 : index
    %c0_320 = arith.constant 0 : index
    %c0_321 = arith.constant 0 : index
    %358 = vector.load %arg6[%c0_319, %c0_320, %c0_321] : memref<24x128x128xf32, #tpu.memory_space<vmem>>, vector<1x128x128xf32>
    %359 = vector.shape_cast %358 : vector<1x128x128xf32> to vector<128x128xf32>
    %cst_322 = arith.constant dense<0.000000e+00> : vector<4x128xf32>
    %360 = tpu.matmul %357, %359, %cst_322 {dimension_numbers = #tpu.dot_dimension_numbers<[1], [0], [0], [1], [0, 0, 1, 1], [], []>} : vector<4x128xf32>, vector<128x128xf32>, vector<4x128xf32> -> vector<4x128xf32>
    %361 = arith.addf %356, %360 : vector<4x128xf32>
    %c1_323 = arith.constant 1 : index
    %c0_324 = arith.constant 0 : index
    %362 = vector.load %arg14[%c1_323, %c0_324] : memref<6x128xf32, #tpu.memory_space<vmem>>, vector<4x128xf32>
    %c1_325 = arith.constant 1 : index
    %c0_326 = arith.constant 0 : index
    %c0_327 = arith.constant 0 : index
    %363 = vector.load %arg6[%c1_325, %c0_326, %c0_327] : memref<24x128x128xf32, #tpu.memory_space<vmem>>, vector<1x128x128xf32>
    %364 = vector.shape_cast %363 : vector<1x128x128xf32> to vector<128x128xf32>
    %cst_328 = arith.constant dense<0.000000e+00> : vector<4x128xf32>
    %365 = tpu.matmul %362, %364, %cst_328 {dimension_numbers = #tpu.dot_dimension_numbers<[1], [0], [0], [1], [0, 0, 1, 1], [], []>} : vector<4x128xf32>, vector<128x128xf32>, vector<4x128xf32> -> vector<4x128xf32>
    %366 = arith.addf %361, %365 : vector<4x128xf32>
    %c2_329 = arith.constant 2 : index
    %c0_330 = arith.constant 0 : index
    %367 = vector.load %arg14[%c2_329, %c0_330] : memref<6x128xf32, #tpu.memory_space<vmem>>, vector<4x128xf32>
    %c2_331 = arith.constant 2 : index
    %c0_332 = arith.constant 0 : index
    %c0_333 = arith.constant 0 : index
    %368 = vector.load %arg6[%c2_331, %c0_332, %c0_333] : memref<24x128x128xf32, #tpu.memory_space<vmem>>, vector<1x128x128xf32>
    %369 = vector.shape_cast %368 : vector<1x128x128xf32> to vector<128x128xf32>
    %cst_334 = arith.constant dense<0.000000e+00> : vector<4x128xf32>
    %370 = tpu.matmul %367, %369, %cst_334 {dimension_numbers = #tpu.dot_dimension_numbers<[1], [0], [0], [1], [0, 0, 1, 1], [], []>} : vector<4x128xf32>, vector<128x128xf32>, vector<4x128xf32> -> vector<4x128xf32>
    %371 = arith.addf %366, %370 : vector<4x128xf32>
    %372 = arith.addf %371, %352 : vector<4x128xf32>
    %cst_335 = arith.constant 2.000000e+01 : f32
    %373 = vector.broadcast %cst_335 : f32 to vector<4x128xf32>
    %374 = arith.minimumf %372, %373 : vector<4x128xf32>
    %375 = math.exp %374 : vector<4x128xf32>
    %cst_336 = arith.constant 2.000000e+00 : f32
    %376 = vector.broadcast %cst_336 : f32 to vector<4x128xf32>
    %377 = arith.addf %375, %376 : vector<4x128xf32>
    %378 = arith.mulf %375, %377 : vector<4x128xf32>
    %cst_337 = arith.constant 2.000000e+00 : f32
    %379 = vector.broadcast %cst_337 : f32 to vector<4x128xf32>
    %380 = arith.addf %378, %379 : vector<4x128xf32>
    %381 = arith.divf %378, %380 : vector<4x128xf32>
    %382 = arith.mulf %372, %381 : vector<4x128xf32>
    %c1_338 = arith.constant 1 : index
    %c0_339 = arith.constant 0 : index
    %383 = vector.load %arg14[%c1_338, %c0_339] : memref<6x128xf32, #tpu.memory_space<vmem>>, vector<4x128xf32>
    tpu.vector_store %arg14[%c1_338, %c0_339], %382 {strides = array<i32>} : memref<6x128xf32, #tpu.memory_space<vmem>>, vector<4x128xf32>,
    %c1_340 = arith.constant 1 : index
    %c0_341 = arith.constant 0 : index
    %384 = vector.load %arg14[%c1_340, %c0_341] : memref<6x128xf32, #tpu.memory_space<vmem>>, vector<4x128xf32>
    %cst_342 = arith.constant 0.000000e+00 : f32
    %385 = vector.broadcast %cst_342 : f32 to vector<4x128xf32>
    %c1_343 = arith.constant 1 : index
    %c0_344 = arith.constant 0 : index
    %386 = vector.load %arg7[%c1_343, %c0_344] : memref<8x128xf32, #tpu.memory_space<vmem>>, vector<1x128xf32>
    %387 = vector.broadcast %386 : vector<1x128xf32> to vector<4x128xf32>
    %388 = arith.addf %385, %387 : vector<4x128xf32>
    %c0_345 = arith.constant 0 : index
    %c0_346 = arith.constant 0 : index
    %389 = vector.load %arg14[%c0_345, %c0_346] : memref<6x128xf32, #tpu.memory_space<vmem>>, vector<4x128xf32>
    %c3_347 = arith.constant 3 : index
    %c0_348 = arith.constant 0 : index
    %c0_349 = arith.constant 0 : index
    %390 = vector.load %arg6[%c3_347, %c0_348, %c0_349] : memref<24x128x128xf32, #tpu.memory_space<vmem>>, vector<1x128x128xf32>
    %391 = vector.shape_cast %390 : vector<1x128x128xf32> to vector<128x128xf32>
    %cst_350 = arith.constant dense<0.000000e+00> : vector<4x128xf32>
    %392 = tpu.matmul %389, %391, %cst_350 {dimension_numbers = #tpu.dot_dimension_numbers<[1], [0], [0], [1], [0, 0, 1, 1], [], []>} : vector<4x128xf32>, vector<128x128xf32>, vector<4x128xf32> -> vector<4x128xf32>
    %393 = arith.addf %388, %392 : vector<4x128xf32>
    %c1_351 = arith.constant 1 : index
    %c0_352 = arith.constant 0 : index
    %394 = vector.load %arg14[%c1_351, %c0_352] : memref<6x128xf32, #tpu.memory_space<vmem>>, vector<4x128xf32>
    %c4_353 = arith.constant 4 : index
    %c0_354 = arith.constant 0 : index
    %c0_355 = arith.constant 0 : index
    %395 = vector.load %arg6[%c4_353, %c0_354, %c0_355] : memref<24x128x128xf32, #tpu.memory_space<vmem>>, vector<1x128x128xf32>
    %396 = vector.shape_cast %395 : vector<1x128x128xf32> to vector<128x128xf32>
    %cst_356 = arith.constant dense<0.000000e+00> : vector<4x128xf32>
    %397 = tpu.matmul %394, %396, %cst_356 {dimension_numbers = #tpu.dot_dimension_numbers<[1], [0], [0], [1], [0, 0, 1, 1], [], []>} : vector<4x128xf32>, vector<128x128xf32>, vector<4x128xf32> -> vector<4x128xf32>
    %398 = arith.addf %393, %397 : vector<4x128xf32>
    %c2_357 = arith.constant 2 : index
    %c0_358 = arith.constant 0 : index
    %399 = vector.load %arg14[%c2_357, %c0_358] : memref<6x128xf32, #tpu.memory_space<vmem>>, vector<4x128xf32>
    %c5_359 = arith.constant 5 : index
    %c0_360 = arith.constant 0 : index
    %c0_361 = arith.constant 0 : index
    %400 = vector.load %arg6[%c5_359, %c0_360, %c0_361] : memref<24x128x128xf32, #tpu.memory_space<vmem>>, vector<1x128x128xf32>
    %401 = vector.shape_cast %400 : vector<1x128x128xf32> to vector<128x128xf32>
    %cst_362 = arith.constant dense<0.000000e+00> : vector<4x128xf32>
    %402 = tpu.matmul %399, %401, %cst_362 {dimension_numbers = #tpu.dot_dimension_numbers<[1], [0], [0], [1], [0, 0, 1, 1], [], []>} : vector<4x128xf32>, vector<128x128xf32>, vector<4x128xf32> -> vector<4x128xf32>
    %403 = arith.addf %398, %402 : vector<4x128xf32>
    %404 = arith.addf %403, %384 : vector<4x128xf32>
    %cst_363 = arith.constant 2.000000e+01 : f32
    %405 = vector.broadcast %cst_363 : f32 to vector<4x128xf32>
    %406 = arith.minimumf %404, %405 : vector<4x128xf32>
    %407 = math.exp %406 : vector<4x128xf32>
    %cst_364 = arith.constant 2.000000e+00 : f32
    %408 = vector.broadcast %cst_364 : f32 to vector<4x128xf32>
    %409 = arith.addf %407, %408 : vector<4x128xf32>
    %410 = arith.mulf %407, %409 : vector<4x128xf32>
    %cst_365 = arith.constant 2.000000e+00 : f32
    %411 = vector.broadcast %cst_365 : f32 to vector<4x128xf32>
    %412 = arith.addf %410, %411 : vector<4x128xf32>
    %413 = arith.divf %410, %412 : vector<4x128xf32>
    %414 = arith.mulf %404, %413 : vector<4x128xf32>
    %c1_366 = arith.constant 1 : index
    %c0_367 = arith.constant 0 : index
    %415 = vector.load %arg14[%c1_366, %c0_367] : memref<6x128xf32, #tpu.memory_space<vmem>>, vector<4x128xf32>
    tpu.vector_store %arg14[%c1_366, %c0_367], %414 {strides = array<i32>} : memref<6x128xf32, #tpu.memory_space<vmem>>, vector<4x128xf32>,
    %c1_368 = arith.constant 1 : index
    %c0_369 = arith.constant 0 : index
    %416 = vector.load %arg14[%c1_368, %c0_369] : memref<6x128xf32, #tpu.memory_space<vmem>>, vector<4x128xf32>
    %cst_370 = arith.constant 0.000000e+00 : f32
    %417 = vector.broadcast %cst_370 : f32 to vector<4x128xf32>
    %c2_371 = arith.constant 2 : index
    %c0_372 = arith.constant 0 : index
    %418 = vector.load %arg7[%c2_371, %c0_372] : memref<8x128xf32, #tpu.memory_space<vmem>>, vector<1x128xf32>
    %419 = vector.broadcast %418 : vector<1x128xf32> to vector<4x128xf32>
    %420 = arith.addf %417, %419 : vector<4x128xf32>
    %c0_373 = arith.constant 0 : index
    %c0_374 = arith.constant 0 : index
    %421 = vector.load %arg14[%c0_373, %c0_374] : memref<6x128xf32, #tpu.memory_space<vmem>>, vector<4x128xf32>
    %c6_375 = arith.constant 6 : index
    %c0_376 = arith.constant 0 : index
    %c0_377 = arith.constant 0 : index
    %422 = vector.load %arg6[%c6_375, %c0_376, %c0_377] : memref<24x128x128xf32, #tpu.memory_space<vmem>>, vector<1x128x128xf32>
    %423 = vector.shape_cast %422 : vector<1x128x128xf32> to vector<128x128xf32>
    %cst_378 = arith.constant dense<0.000000e+00> : vector<4x128xf32>
    %424 = tpu.matmul %421, %423, %cst_378 {dimension_numbers = #tpu.dot_dimension_numbers<[1], [0], [0], [1], [0, 0, 1, 1], [], []>} : vector<4x128xf32>, vector<128x128xf32>, vector<4x128xf32> -> vector<4x128xf32>
    %425 = arith.addf %420, %424 : vector<4x128xf32>
    %c1_379 = arith.constant 1 : index
    %c0_380 = arith.constant 0 : index
    %426 = vector.load %arg14[%c1_379, %c0_380] : memref<6x128xf32, #tpu.memory_space<vmem>>, vector<4x128xf32>
    %c7_381 = arith.constant 7 : index
    %c0_382 = arith.constant 0 : index
    %c0_383 = arith.constant 0 : index
    %427 = vector.load %arg6[%c7_381, %c0_382, %c0_383] : memref<24x128x128xf32, #tpu.memory_space<vmem>>, vector<1x128x128xf32>
    %428 = vector.shape_cast %427 : vector<1x128x128xf32> to vector<128x128xf32>
    %cst_384 = arith.constant dense<0.000000e+00> : vector<4x128xf32>
    %429 = tpu.matmul %426, %428, %cst_384 {dimension_numbers = #tpu.dot_dimension_numbers<[1], [0], [0], [1], [0, 0, 1, 1], [], []>} : vector<4x128xf32>, vector<128x128xf32>, vector<4x128xf32> -> vector<4x128xf32>
    %430 = arith.addf %425, %429 : vector<4x128xf32>
    %c2_385 = arith.constant 2 : index
    %c0_386 = arith.constant 0 : index
    %431 = vector.load %arg14[%c2_385, %c0_386] : memref<6x128xf32, #tpu.memory_space<vmem>>, vector<4x128xf32>
    %c8_387 = arith.constant 8 : index
    %c0_388 = arith.constant 0 : index
    %c0_389 = arith.constant 0 : index
    %432 = vector.load %arg6[%c8_387, %c0_388, %c0_389] : memref<24x128x128xf32, #tpu.memory_space<vmem>>, vector<1x128x128xf32>
    %433 = vector.shape_cast %432 : vector<1x128x128xf32> to vector<128x128xf32>
    %cst_390 = arith.constant dense<0.000000e+00> : vector<4x128xf32>
    %434 = tpu.matmul %431, %433, %cst_390 {dimension_numbers = #tpu.dot_dimension_numbers<[1], [0], [0], [1], [0, 0, 1, 1], [], []>} : vector<4x128xf32>, vector<128x128xf32>, vector<4x128xf32> -> vector<4x128xf32>
    %435 = arith.addf %430, %434 : vector<4x128xf32>
    %436 = arith.addf %435, %416 : vector<4x128xf32>
    %cst_391 = arith.constant 2.000000e+01 : f32
    %437 = vector.broadcast %cst_391 : f32 to vector<4x128xf32>
    %438 = arith.minimumf %436, %437 : vector<4x128xf32>
    %439 = math.exp %438 : vector<4x128xf32>
    %cst_392 = arith.constant 2.000000e+00 : f32
    %440 = vector.broadcast %cst_392 : f32 to vector<4x128xf32>
    %441 = arith.addf %439, %440 : vector<4x128xf32>
    %442 = arith.mulf %439, %441 : vector<4x128xf32>
    %cst_393 = arith.constant 2.000000e+00 : f32
    %443 = vector.broadcast %cst_393 : f32 to vector<4x128xf32>
    %444 = arith.addf %442, %443 : vector<4x128xf32>
    %445 = arith.divf %442, %444 : vector<4x128xf32>
    %446 = arith.mulf %436, %445 : vector<4x128xf32>
    %c1_394 = arith.constant 1 : index
    %c0_395 = arith.constant 0 : index
    %447 = vector.load %arg14[%c1_394, %c0_395] : memref<6x128xf32, #tpu.memory_space<vmem>>, vector<4x128xf32>
    tpu.vector_store %arg14[%c1_394, %c0_395], %446 {strides = array<i32>} : memref<6x128xf32, #tpu.memory_space<vmem>>, vector<4x128xf32>,
    %c1_396 = arith.constant 1 : index
    %c0_397 = arith.constant 0 : index
    %448 = vector.load %arg14[%c1_396, %c0_397] : memref<6x128xf32, #tpu.memory_space<vmem>>, vector<4x128xf32>
    %cst_398 = arith.constant 0.000000e+00 : f32
    %449 = vector.broadcast %cst_398 : f32 to vector<4x128xf32>
    %c3_399 = arith.constant 3 : index
    %c0_400 = arith.constant 0 : index
    %450 = vector.load %arg7[%c3_399, %c0_400] : memref<8x128xf32, #tpu.memory_space<vmem>>, vector<1x128xf32>
    %451 = vector.broadcast %450 : vector<1x128xf32> to vector<4x128xf32>
    %452 = arith.addf %449, %451 : vector<4x128xf32>
    %c0_401 = arith.constant 0 : index
    %c0_402 = arith.constant 0 : index
    %453 = vector.load %arg14[%c0_401, %c0_402] : memref<6x128xf32, #tpu.memory_space<vmem>>, vector<4x128xf32>
    %c9_403 = arith.constant 9 : index
    %c0_404 = arith.constant 0 : index
    %c0_405 = arith.constant 0 : index
    %454 = vector.load %arg6[%c9_403, %c0_404, %c0_405] : memref<24x128x128xf32, #tpu.memory_space<vmem>>, vector<1x128x128xf32>
    %455 = vector.shape_cast %454 : vector<1x128x128xf32> to vector<128x128xf32>
    %cst_406 = arith.constant dense<0.000000e+00> : vector<4x128xf32>
    %456 = tpu.matmul %453, %455, %cst_406 {dimension_numbers = #tpu.dot_dimension_numbers<[1], [0], [0], [1], [0, 0, 1, 1], [], []>} : vector<4x128xf32>, vector<128x128xf32>, vector<4x128xf32> -> vector<4x128xf32>
    %457 = arith.addf %452, %456 : vector<4x128xf32>
    %c1_407 = arith.constant 1 : index
    %c0_408 = arith.constant 0 : index
    %458 = vector.load %arg14[%c1_407, %c0_408] : memref<6x128xf32, #tpu.memory_space<vmem>>, vector<4x128xf32>
    %c10_409 = arith.constant 10 : index
    %c0_410 = arith.constant 0 : index
    %c0_411 = arith.constant 0 : index
    %459 = vector.load %arg6[%c10_409, %c0_410, %c0_411] : memref<24x128x128xf32, #tpu.memory_space<vmem>>, vector<1x128x128xf32>
    %460 = vector.shape_cast %459 : vector<1x128x128xf32> to vector<128x128xf32>
    %cst_412 = arith.constant dense<0.000000e+00> : vector<4x128xf32>
    %461 = tpu.matmul %458, %460, %cst_412 {dimension_numbers = #tpu.dot_dimension_numbers<[1], [0], [0], [1], [0, 0, 1, 1], [], []>} : vector<4x128xf32>, vector<128x128xf32>, vector<4x128xf32> -> vector<4x128xf32>
    %462 = arith.addf %457, %461 : vector<4x128xf32>
    %c2_413 = arith.constant 2 : index
    %c0_414 = arith.constant 0 : index
    %463 = vector.load %arg14[%c2_413, %c0_414] : memref<6x128xf32, #tpu.memory_space<vmem>>, vector<4x128xf32>
    %c11_415 = arith.constant 11 : index
    %c0_416 = arith.constant 0 : index
    %c0_417 = arith.constant 0 : index
    %464 = vector.load %arg6[%c11_415, %c0_416, %c0_417] : memref<24x128x128xf32, #tpu.memory_space<vmem>>, vector<1x128x128xf32>
    %465 = vector.shape_cast %464 : vector<1x128x128xf32> to vector<128x128xf32>
    %cst_418 = arith.constant dense<0.000000e+00> : vector<4x128xf32>
    %466 = tpu.matmul %463, %465, %cst_418 {dimension_numbers = #tpu.dot_dimension_numbers<[1], [0], [0], [1], [0, 0, 1, 1], [], []>} : vector<4x128xf32>, vector<128x128xf32>, vector<4x128xf32> -> vector<4x128xf32>
    %467 = arith.addf %462, %466 : vector<4x128xf32>
    %468 = arith.addf %467, %448 : vector<4x128xf32>
    %cst_419 = arith.constant 2.000000e+01 : f32
    %469 = vector.broadcast %cst_419 : f32 to vector<4x128xf32>
    %470 = arith.minimumf %468, %469 : vector<4x128xf32>
    %471 = math.exp %470 : vector<4x128xf32>
    %cst_420 = arith.constant 2.000000e+00 : f32
    %472 = vector.broadcast %cst_420 : f32 to vector<4x128xf32>
    %473 = arith.addf %471, %472 : vector<4x128xf32>
    %474 = arith.mulf %471, %473 : vector<4x128xf32>
    %cst_421 = arith.constant 2.000000e+00 : f32
    %475 = vector.broadcast %cst_421 : f32 to vector<4x128xf32>
    %476 = arith.addf %474, %475 : vector<4x128xf32>
    %477 = arith.divf %474, %476 : vector<4x128xf32>
    %478 = arith.mulf %468, %477 : vector<4x128xf32>
    %c1_422 = arith.constant 1 : index
    %c0_423 = arith.constant 0 : index
    %479 = vector.load %arg14[%c1_422, %c0_423] : memref<6x128xf32, #tpu.memory_space<vmem>>, vector<4x128xf32>
    tpu.vector_store %arg14[%c1_422, %c0_423], %478 {strides = array<i32>} : memref<6x128xf32, #tpu.memory_space<vmem>>, vector<4x128xf32>,
    %c1_424 = arith.constant 1 : index
    %c0_425 = arith.constant 0 : index
    %480 = vector.load %arg14[%c1_424, %c0_425] : memref<6x128xf32, #tpu.memory_space<vmem>>, vector<4x128xf32>
    %cst_426 = arith.constant 0.000000e+00 : f32
    %481 = vector.broadcast %cst_426 : f32 to vector<4x128xf32>
    %c4_427 = arith.constant 4 : index
    %c0_428 = arith.constant 0 : index
    %482 = vector.load %arg7[%c4_427, %c0_428] : memref<8x128xf32, #tpu.memory_space<vmem>>, vector<1x128xf32>
    %483 = vector.broadcast %482 : vector<1x128xf32> to vector<4x128xf32>
    %484 = arith.addf %481, %483 : vector<4x128xf32>
    %c0_429 = arith.constant 0 : index
    %c0_430 = arith.constant 0 : index
    %485 = vector.load %arg14[%c0_429, %c0_430] : memref<6x128xf32, #tpu.memory_space<vmem>>, vector<4x128xf32>
    %c12_431 = arith.constant 12 : index
    %c0_432 = arith.constant 0 : index
    %c0_433 = arith.constant 0 : index
    %486 = vector.load %arg6[%c12_431, %c0_432, %c0_433] : memref<24x128x128xf32, #tpu.memory_space<vmem>>, vector<1x128x128xf32>
    %487 = vector.shape_cast %486 : vector<1x128x128xf32> to vector<128x128xf32>
    %cst_434 = arith.constant dense<0.000000e+00> : vector<4x128xf32>
    %488 = tpu.matmul %485, %487, %cst_434 {dimension_numbers = #tpu.dot_dimension_numbers<[1], [0], [0], [1], [0, 0, 1, 1], [], []>} : vector<4x128xf32>, vector<128x128xf32>, vector<4x128xf32> -> vector<4x128xf32>
    %489 = arith.addf %484, %488 : vector<4x128xf32>
    %c1_435 = arith.constant 1 : index
    %c0_436 = arith.constant 0 : index
    %490 = vector.load %arg14[%c1_435, %c0_436] : memref<6x128xf32, #tpu.memory_space<vmem>>, vector<4x128xf32>
    %c13_437 = arith.constant 13 : index
    %c0_438 = arith.constant 0 : index
    %c0_439 = arith.constant 0 : index
    %491 = vector.load %arg6[%c13_437, %c0_438, %c0_439] : memref<24x128x128xf32, #tpu.memory_space<vmem>>, vector<1x128x128xf32>
    %492 = vector.shape_cast %491 : vector<1x128x128xf32> to vector<128x128xf32>
    %cst_440 = arith.constant dense<0.000000e+00> : vector<4x128xf32>
    %493 = tpu.matmul %490, %492, %cst_440 {dimension_numbers = #tpu.dot_dimension_numbers<[1], [0], [0], [1], [0, 0, 1, 1], [], []>} : vector<4x128xf32>, vector<128x128xf32>, vector<4x128xf32> -> vector<4x128xf32>
    %494 = arith.addf %489, %493 : vector<4x128xf32>
    %c2_441 = arith.constant 2 : index
    %c0_442 = arith.constant 0 : index
    %495 = vector.load %arg14[%c2_441, %c0_442] : memref<6x128xf32, #tpu.memory_space<vmem>>, vector<4x128xf32>
    %c14_443 = arith.constant 14 : index
    %c0_444 = arith.constant 0 : index
    %c0_445 = arith.constant 0 : index
    %496 = vector.load %arg6[%c14_443, %c0_444, %c0_445] : memref<24x128x128xf32, #tpu.memory_space<vmem>>, vector<1x128x128xf32>
    %497 = vector.shape_cast %496 : vector<1x128x128xf32> to vector<128x128xf32>
    %cst_446 = arith.constant dense<0.000000e+00> : vector<4x128xf32>
    %498 = tpu.matmul %495, %497, %cst_446 {dimension_numbers = #tpu.dot_dimension_numbers<[1], [0], [0], [1], [0, 0, 1, 1], [], []>} : vector<4x128xf32>, vector<128x128xf32>, vector<4x128xf32> -> vector<4x128xf32>
    %499 = arith.addf %494, %498 : vector<4x128xf32>
    %500 = arith.addf %499, %480 : vector<4x128xf32>
    %cst_447 = arith.constant 2.000000e+01 : f32
    %501 = vector.broadcast %cst_447 : f32 to vector<4x128xf32>
    %502 = arith.minimumf %500, %501 : vector<4x128xf32>
    %503 = math.exp %502 : vector<4x128xf32>
    %cst_448 = arith.constant 2.000000e+00 : f32
    %504 = vector.broadcast %cst_448 : f32 to vector<4x128xf32>
    %505 = arith.addf %503, %504 : vector<4x128xf32>
    %506 = arith.mulf %503, %505 : vector<4x128xf32>
    %cst_449 = arith.constant 2.000000e+00 : f32
    %507 = vector.broadcast %cst_449 : f32 to vector<4x128xf32>
    %508 = arith.addf %506, %507 : vector<4x128xf32>
    %509 = arith.divf %506, %508 : vector<4x128xf32>
    %510 = arith.mulf %500, %509 : vector<4x128xf32>
    %c1_450 = arith.constant 1 : index
    %c0_451 = arith.constant 0 : index
    %511 = vector.load %arg14[%c1_450, %c0_451] : memref<6x128xf32, #tpu.memory_space<vmem>>, vector<4x128xf32>
    tpu.vector_store %arg14[%c1_450, %c0_451], %510 {strides = array<i32>} : memref<6x128xf32, #tpu.memory_space<vmem>>, vector<4x128xf32>,
    %c1_452 = arith.constant 1 : index
    %c0_453 = arith.constant 0 : index
    %512 = vector.load %arg14[%c1_452, %c0_453] : memref<6x128xf32, #tpu.memory_space<vmem>>, vector<4x128xf32>
    %cst_454 = arith.constant 0.000000e+00 : f32
    %513 = vector.broadcast %cst_454 : f32 to vector<4x128xf32>
    %c5_455 = arith.constant 5 : index
    %c0_456 = arith.constant 0 : index
    %514 = vector.load %arg7[%c5_455, %c0_456] : memref<8x128xf32, #tpu.memory_space<vmem>>, vector<1x128xf32>
    %515 = vector.broadcast %514 : vector<1x128xf32> to vector<4x128xf32>
    %516 = arith.addf %513, %515 : vector<4x128xf32>
    %c0_457 = arith.constant 0 : index
    %c0_458 = arith.constant 0 : index
    %517 = vector.load %arg14[%c0_457, %c0_458] : memref<6x128xf32, #tpu.memory_space<vmem>>, vector<4x128xf32>
    %c15_459 = arith.constant 15 : index
    %c0_460 = arith.constant 0 : index
    %c0_461 = arith.constant 0 : index
    %518 = vector.load %arg6[%c15_459, %c0_460, %c0_461] : memref<24x128x128xf32, #tpu.memory_space<vmem>>, vector<1x128x128xf32>
    %519 = vector.shape_cast %518 : vector<1x128x128xf32> to vector<128x128xf32>
    %cst_462 = arith.constant dense<0.000000e+00> : vector<4x128xf32>
    %520 = tpu.matmul %517, %519, %cst_462 {dimension_numbers = #tpu.dot_dimension_numbers<[1], [0], [0], [1], [0, 0, 1, 1], [], []>} : vector<4x128xf32>, vector<128x128xf32>, vector<4x128xf32> -> vector<4x128xf32>
    %521 = arith.addf %516, %520 : vector<4x128xf32>
    %c1_463 = arith.constant 1 : index
    %c0_464 = arith.constant 0 : index
    %522 = vector.load %arg14[%c1_463, %c0_464] : memref<6x128xf32, #tpu.memory_space<vmem>>, vector<4x128xf32>
    %c16_465 = arith.constant 16 : index
    %c0_466 = arith.constant 0 : index
    %c0_467 = arith.constant 0 : index
    %523 = vector.load %arg6[%c16_465, %c0_466, %c0_467] : memref<24x128x128xf32, #tpu.memory_space<vmem>>, vector<1x128x128xf32>
    %524 = vector.shape_cast %523 : vector<1x128x128xf32> to vector<128x128xf32>
    %cst_468 = arith.constant dense<0.000000e+00> : vector<4x128xf32>
    %525 = tpu.matmul %522, %524, %cst_468 {dimension_numbers = #tpu.dot_dimension_numbers<[1], [0], [0], [1], [0, 0, 1, 1], [], []>} : vector<4x128xf32>, vector<128x128xf32>, vector<4x128xf32> -> vector<4x128xf32>
    %526 = arith.addf %521, %525 : vector<4x128xf32>
    %c2_469 = arith.constant 2 : index
    %c0_470 = arith.constant 0 : index
    %527 = vector.load %arg14[%c2_469, %c0_470] : memref<6x128xf32, #tpu.memory_space<vmem>>, vector<4x128xf32>
    %c17 = arith.constant 17 : index
    %c0_471 = arith.constant 0 : index
    %c0_472 = arith.constant 0 : index
    %528 = vector.load %arg6[%c17, %c0_471, %c0_472] : memref<24x128x128xf32, #tpu.memory_space<vmem>>, vector<1x128x128xf32>
    %529 = vector.shape_cast %528 : vector<1x128x128xf32> to vector<128x128xf32>
    %cst_473 = arith.constant dense<0.000000e+00> : vector<4x128xf32>
    %530 = tpu.matmul %527, %529, %cst_473 {dimension_numbers = #tpu.dot_dimension_numbers<[1], [0], [0], [1], [0, 0, 1, 1], [], []>} : vector<4x128xf32>, vector<128x128xf32>, vector<4x128xf32> -> vector<4x128xf32>
    %531 = arith.addf %526, %530 : vector<4x128xf32>
    %532 = arith.addf %531, %512 : vector<4x128xf32>
    %cst_474 = arith.constant 2.000000e+01 : f32
    %533 = vector.broadcast %cst_474 : f32 to vector<4x128xf32>
    %534 = arith.minimumf %532, %533 : vector<4x128xf32>
    %535 = math.exp %534 : vector<4x128xf32>
    %cst_475 = arith.constant 2.000000e+00 : f32
    %536 = vector.broadcast %cst_475 : f32 to vector<4x128xf32>
    %537 = arith.addf %535, %536 : vector<4x128xf32>
    %538 = arith.mulf %535, %537 : vector<4x128xf32>
    %cst_476 = arith.constant 2.000000e+00 : f32
    %539 = vector.broadcast %cst_476 : f32 to vector<4x128xf32>
    %540 = arith.addf %538, %539 : vector<4x128xf32>
    %541 = arith.divf %538, %540 : vector<4x128xf32>
    %542 = arith.mulf %532, %541 : vector<4x128xf32>
    %c1_477 = arith.constant 1 : index
    %c0_478 = arith.constant 0 : index
    %543 = vector.load %arg14[%c1_477, %c0_478] : memref<6x128xf32, #tpu.memory_space<vmem>>, vector<4x128xf32>
    tpu.vector_store %arg14[%c1_477, %c0_478], %542 {strides = array<i32>} : memref<6x128xf32, #tpu.memory_space<vmem>>, vector<4x128xf32>,
    %c1_479 = arith.constant 1 : index
    %c0_480 = arith.constant 0 : index
    %544 = vector.load %arg14[%c1_479, %c0_480] : memref<6x128xf32, #tpu.memory_space<vmem>>, vector<4x128xf32>
    %cst_481 = arith.constant 0.000000e+00 : f32
    %545 = vector.broadcast %cst_481 : f32 to vector<4x128xf32>
    %c6_482 = arith.constant 6 : index
    %c0_483 = arith.constant 0 : index
    %546 = vector.load %arg7[%c6_482, %c0_483] : memref<8x128xf32, #tpu.memory_space<vmem>>, vector<1x128xf32>
    %547 = vector.broadcast %546 : vector<1x128xf32> to vector<4x128xf32>
    %548 = arith.addf %545, %547 : vector<4x128xf32>
    %c0_484 = arith.constant 0 : index
    %c0_485 = arith.constant 0 : index
    %549 = vector.load %arg14[%c0_484, %c0_485] : memref<6x128xf32, #tpu.memory_space<vmem>>, vector<4x128xf32>
    %c18 = arith.constant 18 : index
    %c0_486 = arith.constant 0 : index
    %c0_487 = arith.constant 0 : index
    %550 = vector.load %arg6[%c18, %c0_486, %c0_487] : memref<24x128x128xf32, #tpu.memory_space<vmem>>, vector<1x128x128xf32>
    %551 = vector.shape_cast %550 : vector<1x128x128xf32> to vector<128x128xf32>
    %cst_488 = arith.constant dense<0.000000e+00> : vector<4x128xf32>
    %552 = tpu.matmul %549, %551, %cst_488 {dimension_numbers = #tpu.dot_dimension_numbers<[1], [0], [0], [1], [0, 0, 1, 1], [], []>} : vector<4x128xf32>, vector<128x128xf32>, vector<4x128xf32> -> vector<4x128xf32>
    %553 = arith.addf %548, %552 : vector<4x128xf32>
    %c1_489 = arith.constant 1 : index
    %c0_490 = arith.constant 0 : index
    %554 = vector.load %arg14[%c1_489, %c0_490] : memref<6x128xf32, #tpu.memory_space<vmem>>, vector<4x128xf32>
    %c19 = arith.constant 19 : index
    %c0_491 = arith.constant 0 : index
    %c0_492 = arith.constant 0 : index
    %555 = vector.load %arg6[%c19, %c0_491, %c0_492] : memref<24x128x128xf32, #tpu.memory_space<vmem>>, vector<1x128x128xf32>
    %556 = vector.shape_cast %555 : vector<1x128x128xf32> to vector<128x128xf32>
    %cst_493 = arith.constant dense<0.000000e+00> : vector<4x128xf32>
    %557 = tpu.matmul %554, %556, %cst_493 {dimension_numbers = #tpu.dot_dimension_numbers<[1], [0], [0], [1], [0, 0, 1, 1], [], []>} : vector<4x128xf32>, vector<128x128xf32>, vector<4x128xf32> -> vector<4x128xf32>
    %558 = arith.addf %553, %557 : vector<4x128xf32>
    %c2_494 = arith.constant 2 : index
    %c0_495 = arith.constant 0 : index
    %559 = vector.load %arg14[%c2_494, %c0_495] : memref<6x128xf32, #tpu.memory_space<vmem>>, vector<4x128xf32>
    %c20 = arith.constant 20 : index
    %c0_496 = arith.constant 0 : index
    %c0_497 = arith.constant 0 : index
    %560 = vector.load %arg6[%c20, %c0_496, %c0_497] : memref<24x128x128xf32, #tpu.memory_space<vmem>>, vector<1x128x128xf32>
    %561 = vector.shape_cast %560 : vector<1x128x128xf32> to vector<128x128xf32>
    %cst_498 = arith.constant dense<0.000000e+00> : vector<4x128xf32>
    %562 = tpu.matmul %559, %561, %cst_498 {dimension_numbers = #tpu.dot_dimension_numbers<[1], [0], [0], [1], [0, 0, 1, 1], [], []>} : vector<4x128xf32>, vector<128x128xf32>, vector<4x128xf32> -> vector<4x128xf32>
    %563 = arith.addf %558, %562 : vector<4x128xf32>
    %564 = arith.addf %563, %544 : vector<4x128xf32>
    %cst_499 = arith.constant 2.000000e+01 : f32
    %565 = vector.broadcast %cst_499 : f32 to vector<4x128xf32>
    %566 = arith.minimumf %564, %565 : vector<4x128xf32>
    %567 = math.exp %566 : vector<4x128xf32>
    %cst_500 = arith.constant 2.000000e+00 : f32
    %568 = vector.broadcast %cst_500 : f32 to vector<4x128xf32>
    %569 = arith.addf %567, %568 : vector<4x128xf32>
    %570 = arith.mulf %567, %569 : vector<4x128xf32>
    %cst_501 = arith.constant 2.000000e+00 : f32
    %571 = vector.broadcast %cst_501 : f32 to vector<4x128xf32>
    %572 = arith.addf %570, %571 : vector<4x128xf32>
    %573 = arith.divf %570, %572 : vector<4x128xf32>
    %574 = arith.mulf %564, %573 : vector<4x128xf32>
    %c1_502 = arith.constant 1 : index
    %c0_503 = arith.constant 0 : index
    %575 = vector.load %arg14[%c1_502, %c0_503] : memref<6x128xf32, #tpu.memory_space<vmem>>, vector<4x128xf32>
    tpu.vector_store %arg14[%c1_502, %c0_503], %574 {strides = array<i32>} : memref<6x128xf32, #tpu.memory_space<vmem>>, vector<4x128xf32>,
    %c1_504 = arith.constant 1 : index
    %c0_505 = arith.constant 0 : index
    %576 = vector.load %arg14[%c1_504, %c0_505] : memref<6x128xf32, #tpu.memory_space<vmem>>, vector<4x128xf32>
    %cst_506 = arith.constant 0.000000e+00 : f32
    %577 = vector.broadcast %cst_506 : f32 to vector<4x128xf32>
    %c7_507 = arith.constant 7 : index
    %c0_508 = arith.constant 0 : index
    %578 = vector.load %arg7[%c7_507, %c0_508] : memref<8x128xf32, #tpu.memory_space<vmem>>, vector<1x128xf32>
    %579 = vector.broadcast %578 : vector<1x128xf32> to vector<4x128xf32>
    %580 = arith.addf %577, %579 : vector<4x128xf32>
    %c0_509 = arith.constant 0 : index
    %c0_510 = arith.constant 0 : index
    %581 = vector.load %arg14[%c0_509, %c0_510] : memref<6x128xf32, #tpu.memory_space<vmem>>, vector<4x128xf32>
    %c21 = arith.constant 21 : index
    %c0_511 = arith.constant 0 : index
    %c0_512 = arith.constant 0 : index
    %582 = vector.load %arg6[%c21, %c0_511, %c0_512] : memref<24x128x128xf32, #tpu.memory_space<vmem>>, vector<1x128x128xf32>
    %583 = vector.shape_cast %582 : vector<1x128x128xf32> to vector<128x128xf32>
    %cst_513 = arith.constant dense<0.000000e+00> : vector<4x128xf32>
    %584 = tpu.matmul %581, %583, %cst_513 {dimension_numbers = #tpu.dot_dimension_numbers<[1], [0], [0], [1], [0, 0, 1, 1], [], []>} : vector<4x128xf32>, vector<128x128xf32>, vector<4x128xf32> -> vector<4x128xf32>
    %585 = arith.addf %580, %584 : vector<4x128xf32>
    %c1_514 = arith.constant 1 : index
    %c0_515 = arith.constant 0 : index
    %586 = vector.load %arg14[%c1_514, %c0_515] : memref<6x128xf32, #tpu.memory_space<vmem>>, vector<4x128xf32>
    %c22 = arith.constant 22 : index
    %c0_516 = arith.constant 0 : index
    %c0_517 = arith.constant 0 : index
    %587 = vector.load %arg6[%c22, %c0_516, %c0_517] : memref<24x128x128xf32, #tpu.memory_space<vmem>>, vector<1x128x128xf32>
    %588 = vector.shape_cast %587 : vector<1x128x128xf32> to vector<128x128xf32>
    %cst_518 = arith.constant dense<0.000000e+00> : vector<4x128xf32>
    %589 = tpu.matmul %586, %588, %cst_518 {dimension_numbers = #tpu.dot_dimension_numbers<[1], [0], [0], [1], [0, 0, 1, 1], [], []>} : vector<4x128xf32>, vector<128x128xf32>, vector<4x128xf32> -> vector<4x128xf32>
    %590 = arith.addf %585, %589 : vector<4x128xf32>
    %c2_519 = arith.constant 2 : index
    %c0_520 = arith.constant 0 : index
    %591 = vector.load %arg14[%c2_519, %c0_520] : memref<6x128xf32, #tpu.memory_space<vmem>>, vector<4x128xf32>
    %c23 = arith.constant 23 : index
    %c0_521 = arith.constant 0 : index
    %c0_522 = arith.constant 0 : index
    %592 = vector.load %arg6[%c23, %c0_521, %c0_522] : memref<24x128x128xf32, #tpu.memory_space<vmem>>, vector<1x128x128xf32>
    %593 = vector.shape_cast %592 : vector<1x128x128xf32> to vector<128x128xf32>
    %cst_523 = arith.constant dense<0.000000e+00> : vector<4x128xf32>
    %594 = tpu.matmul %591, %593, %cst_523 {dimension_numbers = #tpu.dot_dimension_numbers<[1], [0], [0], [1], [0, 0, 1, 1], [], []>} : vector<4x128xf32>, vector<128x128xf32>, vector<4x128xf32> -> vector<4x128xf32>
    %595 = arith.addf %590, %594 : vector<4x128xf32>
    %596 = arith.addf %595, %576 : vector<4x128xf32>
    %cst_524 = arith.constant 2.000000e+01 : f32
    %597 = vector.broadcast %cst_524 : f32 to vector<4x128xf32>
    %598 = arith.minimumf %596, %597 : vector<4x128xf32>
    %599 = math.exp %598 : vector<4x128xf32>
    %cst_525 = arith.constant 2.000000e+00 : f32
    %600 = vector.broadcast %cst_525 : f32 to vector<4x128xf32>
    %601 = arith.addf %599, %600 : vector<4x128xf32>
    %602 = arith.mulf %599, %601 : vector<4x128xf32>
    %cst_526 = arith.constant 2.000000e+00 : f32
    %603 = vector.broadcast %cst_526 : f32 to vector<4x128xf32>
    %604 = arith.addf %602, %603 : vector<4x128xf32>
    %605 = arith.divf %602, %604 : vector<4x128xf32>
    %606 = arith.mulf %596, %605 : vector<4x128xf32>
    %c1_527 = arith.constant 1 : index
    %c0_528 = arith.constant 0 : index
    %607 = vector.load %arg14[%c1_527, %c0_528] : memref<6x128xf32, #tpu.memory_space<vmem>>, vector<4x128xf32>
    tpu.vector_store %arg14[%c1_527, %c0_528], %606 {strides = array<i32>} : memref<6x128xf32, #tpu.memory_space<vmem>>, vector<4x128xf32>,
    %cst_529 = arith.constant 0.000000e+00 : f32
    %608 = vector.broadcast %cst_529 : f32 to vector<4x128xf32>
    %c0_530 = arith.constant 0 : index
    %c0_531 = arith.constant 0 : index
    %609 = vector.load %arg9[%c0_530, %c0_531] : memref<1x128xf32, #tpu.memory_space<vmem>>, vector<1x128xf32>
    %610 = vector.broadcast %609 : vector<1x128xf32> to vector<4x128xf32>
    %611 = arith.addf %608, %610 : vector<4x128xf32>
    %c0_532 = arith.constant 0 : index
    %c0_533 = arith.constant 0 : index
    %612 = vector.load %arg14[%c0_532, %c0_533] : memref<6x128xf32, #tpu.memory_space<vmem>>, vector<4x128xf32>
    %c0_534 = arith.constant 0 : index
    %c0_535 = arith.constant 0 : index
    %c0_536 = arith.constant 0 : index
    %613 = vector.load %arg8[%c0_534, %c0_535, %c0_536] : memref<8x128x128xf32, #tpu.memory_space<vmem>>, vector<1x128x128xf32>
    %614 = vector.shape_cast %613 : vector<1x128x128xf32> to vector<128x128xf32>
    %cst_537 = arith.constant dense<0.000000e+00> : vector<4x128xf32>
    %615 = tpu.matmul %612, %614, %cst_537 {dimension_numbers = #tpu.dot_dimension_numbers<[1], [0], [0], [1], [0, 0, 1, 1], [], []>} : vector<4x128xf32>, vector<128x128xf32>, vector<4x128xf32> -> vector<4x128xf32>
    %616 = arith.addf %611, %615 : vector<4x128xf32>
    %c1_538 = arith.constant 1 : index
    %c0_539 = arith.constant 0 : index
    %617 = vector.load %arg14[%c1_538, %c0_539] : memref<6x128xf32, #tpu.memory_space<vmem>>, vector<4x128xf32>
    %c1_540 = arith.constant 1 : index
    %c0_541 = arith.constant 0 : index
    %c0_542 = arith.constant 0 : index
    %618 = vector.load %arg8[%c1_540, %c0_541, %c0_542] : memref<8x128x128xf32, #tpu.memory_space<vmem>>, vector<1x128x128xf32>
    %619 = vector.shape_cast %618 : vector<1x128x128xf32> to vector<128x128xf32>
    %cst_543 = arith.constant dense<0.000000e+00> : vector<4x128xf32>
    %620 = tpu.matmul %617, %619, %cst_543 {dimension_numbers = #tpu.dot_dimension_numbers<[1], [0], [0], [1], [0, 0, 1, 1], [], []>} : vector<4x128xf32>, vector<128x128xf32>, vector<4x128xf32> -> vector<4x128xf32>
    %621 = arith.addf %616, %620 : vector<4x128xf32>
    %c0_544 = arith.constant 0 : index
    %c0_545 = arith.constant 0 : index
    %622 = vector.load %arg14[%c0_544, %c0_545] : memref<6x128xf32, #tpu.memory_space<vmem>>, vector<4x128xf32>
    %c2_546 = arith.constant 2 : index
    %c0_547 = arith.constant 0 : index
    %c0_548 = arith.constant 0 : index
    %623 = vector.load %arg8[%c2_546, %c0_547, %c0_548] : memref<8x128x128xf32, #tpu.memory_space<vmem>>, vector<1x128x128xf32>
    %624 = vector.shape_cast %623 : vector<1x128x128xf32> to vector<128x128xf32>
    %cst_549 = arith.constant dense<0.000000e+00> : vector<4x128xf32>
    %625 = tpu.matmul %622, %624, %cst_549 {dimension_numbers = #tpu.dot_dimension_numbers<[1], [0], [0], [1], [0, 0, 1, 1], [], []>} : vector<4x128xf32>, vector<128x128xf32>, vector<4x128xf32> -> vector<4x128xf32>
    %626 = arith.addf %621, %625 : vector<4x128xf32>
    %c1_550 = arith.constant 1 : index
    %c0_551 = arith.constant 0 : index
    %627 = vector.load %arg14[%c1_550, %c0_551] : memref<6x128xf32, #tpu.memory_space<vmem>>, vector<4x128xf32>
    %c3_552 = arith.constant 3 : index
    %c0_553 = arith.constant 0 : index
    %c0_554 = arith.constant 0 : index
    %628 = vector.load %arg8[%c3_552, %c0_553, %c0_554] : memref<8x128x128xf32, #tpu.memory_space<vmem>>, vector<1x128x128xf32>
    %629 = vector.shape_cast %628 : vector<1x128x128xf32> to vector<128x128xf32>
    %cst_555 = arith.constant dense<0.000000e+00> : vector<4x128xf32>
    %630 = tpu.matmul %627, %629, %cst_555 {dimension_numbers = #tpu.dot_dimension_numbers<[1], [0], [0], [1], [0, 0, 1, 1], [], []>} : vector<4x128xf32>, vector<128x128xf32>, vector<4x128xf32> -> vector<4x128xf32>
    %631 = arith.addf %626, %630 : vector<4x128xf32>
    %cst_556 = arith.constant 2.000000e+01 : f32
    %632 = vector.broadcast %cst_556 : f32 to vector<4x128xf32>
    %633 = arith.minimumf %631, %632 : vector<4x128xf32>
    %634 = math.exp %633 : vector<4x128xf32>
    %cst_557 = arith.constant 2.000000e+00 : f32
    %635 = vector.broadcast %cst_557 : f32 to vector<4x128xf32>
    %636 = arith.addf %634, %635 : vector<4x128xf32>
    %637 = arith.mulf %634, %636 : vector<4x128xf32>
    %cst_558 = arith.constant 2.000000e+00 : f32
    %638 = vector.broadcast %cst_558 : f32 to vector<4x128xf32>
    %639 = arith.addf %637, %638 : vector<4x128xf32>
    %640 = arith.divf %637, %639 : vector<4x128xf32>
    %641 = arith.mulf %631, %640 : vector<4x128xf32>
    %642 = vector.extract_strided_slice %641 {offsets = [0, 0], sizes = [1, 128], strides = [1, 1]} : vector<4x128xf32> to vector<1x128xf32>
    %c1_559 = arith.constant 1 : index
    %c0_560 = arith.constant 0 : index
    %643 = vector.load %arg13[%c1_559, %c0_560] : memref<10x128xf32, #tpu.memory_space<vmem>>, vector<1x128xf32>
    tpu.vector_store %arg13[%c1_559, %c0_560], %642 {strides = array<i32>} : memref<10x128xf32, #tpu.memory_space<vmem>>, vector<1x128xf32>,
    %644 = vector.extract_strided_slice %641 {offsets = [1, 0], sizes = [1, 128], strides = [1, 1]} : vector<4x128xf32> to vector<1x128xf32>
    %c3_561 = arith.constant 3 : index
    %c0_562 = arith.constant 0 : index
    %645 = vector.load %arg13[%c3_561, %c0_562] : memref<10x128xf32, #tpu.memory_space<vmem>>, vector<1x128xf32>
    tpu.vector_store %arg13[%c3_561, %c0_562], %644 {strides = array<i32>} : memref<10x128xf32, #tpu.memory_space<vmem>>, vector<1x128xf32>,
    %646 = vector.extract_strided_slice %641 {offsets = [2, 0], sizes = [1, 128], strides = [1, 1]} : vector<4x128xf32> to vector<1x128xf32>
    %c5_563 = arith.constant 5 : index
    %c0_564 = arith.constant 0 : index
    %647 = vector.load %arg13[%c5_563, %c0_564] : memref<10x128xf32, #tpu.memory_space<vmem>>, vector<1x128xf32>
    tpu.vector_store %arg13[%c5_563, %c0_564], %646 {strides = array<i32>} : memref<10x128xf32, #tpu.memory_space<vmem>>, vector<1x128xf32>,
    %648 = vector.extract_strided_slice %641 {offsets = [3, 0], sizes = [1, 128], strides = [1, 1]} : vector<4x128xf32> to vector<1x128xf32>
    %c7_565 = arith.constant 7 : index
    %c0_566 = arith.constant 0 : index
    %649 = vector.load %arg13[%c7_565, %c0_566] : memref<10x128xf32, #tpu.memory_space<vmem>>, vector<1x128xf32>
    tpu.vector_store %arg13[%c7_565, %c0_566], %648 {strides = array<i32>} : memref<10x128xf32, #tpu.memory_space<vmem>>, vector<1x128xf32>,
    %cst_567 = arith.constant 0.000000e+00 : f32
    %650 = vector.broadcast %cst_567 : f32 to vector<4x128xf32>
    %c0_568 = arith.constant 0 : index
    %c0_569 = arith.constant 0 : index
    %651 = vector.load %arg9[%c0_568, %c0_569] : memref<1x128xf32, #tpu.memory_space<vmem>>, vector<1x128xf32>
    %652 = vector.broadcast %651 : vector<1x128xf32> to vector<4x128xf32>
    %653 = arith.addf %650, %652 : vector<4x128xf32>
    %c1_570 = arith.constant 1 : index
    %c0_571 = arith.constant 0 : index
    %654 = vector.load %arg14[%c1_570, %c0_571] : memref<6x128xf32, #tpu.memory_space<vmem>>, vector<4x128xf32>
    %c4_572 = arith.constant 4 : index
    %c0_573 = arith.constant 0 : index
    %c0_574 = arith.constant 0 : index
    %655 = vector.load %arg8[%c4_572, %c0_573, %c0_574] : memref<8x128x128xf32, #tpu.memory_space<vmem>>, vector<1x128x128xf32>
    %656 = vector.shape_cast %655 : vector<1x128x128xf32> to vector<128x128xf32>
    %cst_575 = arith.constant dense<0.000000e+00> : vector<4x128xf32>
    %657 = tpu.matmul %654, %656, %cst_575 {dimension_numbers = #tpu.dot_dimension_numbers<[1], [0], [0], [1], [0, 0, 1, 1], [], []>} : vector<4x128xf32>, vector<128x128xf32>, vector<4x128xf32> -> vector<4x128xf32>
    %658 = arith.addf %653, %657 : vector<4x128xf32>
    %c2_576 = arith.constant 2 : index
    %c0_577 = arith.constant 0 : index
    %659 = vector.load %arg14[%c2_576, %c0_577] : memref<6x128xf32, #tpu.memory_space<vmem>>, vector<4x128xf32>
    %c5_578 = arith.constant 5 : index
    %c0_579 = arith.constant 0 : index
    %c0_580 = arith.constant 0 : index
    %660 = vector.load %arg8[%c5_578, %c0_579, %c0_580] : memref<8x128x128xf32, #tpu.memory_space<vmem>>, vector<1x128x128xf32>
    %661 = vector.shape_cast %660 : vector<1x128x128xf32> to vector<128x128xf32>
    %cst_581 = arith.constant dense<0.000000e+00> : vector<4x128xf32>
    %662 = tpu.matmul %659, %661, %cst_581 {dimension_numbers = #tpu.dot_dimension_numbers<[1], [0], [0], [1], [0, 0, 1, 1], [], []>} : vector<4x128xf32>, vector<128x128xf32>, vector<4x128xf32> -> vector<4x128xf32>
    %663 = arith.addf %658, %662 : vector<4x128xf32>
    %c1_582 = arith.constant 1 : index
    %c0_583 = arith.constant 0 : index
    %664 = vector.load %arg14[%c1_582, %c0_583] : memref<6x128xf32, #tpu.memory_space<vmem>>, vector<4x128xf32>
    %c6_584 = arith.constant 6 : index
    %c0_585 = arith.constant 0 : index
    %c0_586 = arith.constant 0 : index
    %665 = vector.load %arg8[%c6_584, %c0_585, %c0_586] : memref<8x128x128xf32, #tpu.memory_space<vmem>>, vector<1x128x128xf32>
    %666 = vector.shape_cast %665 : vector<1x128x128xf32> to vector<128x128xf32>
    %cst_587 = arith.constant dense<0.000000e+00> : vector<4x128xf32>
    %667 = tpu.matmul %664, %666, %cst_587 {dimension_numbers = #tpu.dot_dimension_numbers<[1], [0], [0], [1], [0, 0, 1, 1], [], []>} : vector<4x128xf32>, vector<128x128xf32>, vector<4x128xf32> -> vector<4x128xf32>
    %668 = arith.addf %663, %667 : vector<4x128xf32>
    %c2_588 = arith.constant 2 : index
    %c0_589 = arith.constant 0 : index
    %669 = vector.load %arg14[%c2_588, %c0_589] : memref<6x128xf32, #tpu.memory_space<vmem>>, vector<4x128xf32>
    %c7_590 = arith.constant 7 : index
    %c0_591 = arith.constant 0 : index
    %c0_592 = arith.constant 0 : index
    %670 = vector.load %arg8[%c7_590, %c0_591, %c0_592] : memref<8x128x128xf32, #tpu.memory_space<vmem>>, vector<1x128x128xf32>
    %671 = vector.shape_cast %670 : vector<1x128x128xf32> to vector<128x128xf32>
    %cst_593 = arith.constant dense<0.000000e+00> : vector<4x128xf32>
    %672 = tpu.matmul %669, %671, %cst_593 {dimension_numbers = #tpu.dot_dimension_numbers<[1], [0], [0], [1], [0, 0, 1, 1], [], []>} : vector<4x128xf32>, vector<128x128xf32>, vector<4x128xf32> -> vector<4x128xf32>
    %673 = arith.addf %668, %672 : vector<4x128xf32>
    %cst_594 = arith.constant 2.000000e+01 : f32
    %674 = vector.broadcast %cst_594 : f32 to vector<4x128xf32>
    %675 = arith.minimumf %673, %674 : vector<4x128xf32>
    %676 = math.exp %675 : vector<4x128xf32>
    %cst_595 = arith.constant 2.000000e+00 : f32
    %677 = vector.broadcast %cst_595 : f32 to vector<4x128xf32>
    %678 = arith.addf %676, %677 : vector<4x128xf32>
    %679 = arith.mulf %676, %678 : vector<4x128xf32>
    %cst_596 = arith.constant 2.000000e+00 : f32
    %680 = vector.broadcast %cst_596 : f32 to vector<4x128xf32>
    %681 = arith.addf %679, %680 : vector<4x128xf32>
    %682 = arith.divf %679, %681 : vector<4x128xf32>
    %683 = arith.mulf %673, %682 : vector<4x128xf32>
    %684 = vector.extract_strided_slice %683 {offsets = [0, 0], sizes = [1, 128], strides = [1, 1]} : vector<4x128xf32> to vector<1x128xf32>
    %c2_597 = arith.constant 2 : index
    %c0_598 = arith.constant 0 : index
    %685 = vector.load %arg13[%c2_597, %c0_598] : memref<10x128xf32, #tpu.memory_space<vmem>>, vector<1x128xf32>
    tpu.vector_store %arg13[%c2_597, %c0_598], %684 {strides = array<i32>} : memref<10x128xf32, #tpu.memory_space<vmem>>, vector<1x128xf32>,
    %686 = vector.extract_strided_slice %683 {offsets = [1, 0], sizes = [1, 128], strides = [1, 1]} : vector<4x128xf32> to vector<1x128xf32>
    %c4_599 = arith.constant 4 : index
    %c0_600 = arith.constant 0 : index
    %687 = vector.load %arg13[%c4_599, %c0_600] : memref<10x128xf32, #tpu.memory_space<vmem>>, vector<1x128xf32>
    tpu.vector_store %arg13[%c4_599, %c0_600], %686 {strides = array<i32>} : memref<10x128xf32, #tpu.memory_space<vmem>>, vector<1x128xf32>,
    %688 = vector.extract_strided_slice %683 {offsets = [2, 0], sizes = [1, 128], strides = [1, 1]} : vector<4x128xf32> to vector<1x128xf32>
    %c6_601 = arith.constant 6 : index
    %c0_602 = arith.constant 0 : index
    %689 = vector.load %arg13[%c6_601, %c0_602] : memref<10x128xf32, #tpu.memory_space<vmem>>, vector<1x128xf32>
    tpu.vector_store %arg13[%c6_601, %c0_602], %688 {strides = array<i32>} : memref<10x128xf32, #tpu.memory_space<vmem>>, vector<1x128xf32>,
    %690 = vector.extract_strided_slice %683 {offsets = [3, 0], sizes = [1, 128], strides = [1, 1]} : vector<4x128xf32> to vector<1x128xf32>
    %c8_603 = arith.constant 8 : index
    %c0_604 = arith.constant 0 : index
    %691 = vector.load %arg13[%c8_603, %c0_604] : memref<10x128xf32, #tpu.memory_space<vmem>>, vector<1x128xf32>
    tpu.vector_store %arg13[%c8_603, %c0_604], %690 {strides = array<i32>} : memref<10x128xf32, #tpu.memory_space<vmem>>, vector<1x128xf32>,
    %cst_605 = arith.constant 0.000000e+00 : f32
    %692 = vector.broadcast %cst_605 : f32 to vector<8x16xf32>
    %c0_606 = arith.constant 0 : index
    %c0_607 = arith.constant 0 : index
    %693 = vector.load %arg11[%c0_606, %c0_607] : memref<1x16xf32, #tpu.memory_space<vmem>>, vector<1x16xf32>
    %694 = vector.broadcast %693 : vector<1x16xf32> to vector<8x16xf32>
    %695 = arith.addf %692, %694 : vector<8x16xf32>
    %c0_608 = arith.constant 0 : index
    %c0_609 = arith.constant 0 : index
    %696 = vector.load %arg13[%c0_608, %c0_609] : memref<10x128xf32, #tpu.memory_space<vmem>>, vector<8x128xf32>
    %c0_610 = arith.constant 0 : index
    %c0_611 = arith.constant 0 : index
    %c0_612 = arith.constant 0 : index
    %697 = vector.load %arg10[%c0_610, %c0_611, %c0_612] : memref<8x128x16xf32, #tpu.memory_space<vmem>>, vector<1x128x16xf32>
    %698 = vector.shape_cast %697 : vector<1x128x16xf32> to vector<128x16xf32>
    %cst_613 = arith.constant dense<0.000000e+00> : vector<8x16xf32>
    %699 = tpu.matmul %696, %698, %cst_613 {dimension_numbers = #tpu.dot_dimension_numbers<[1], [0], [0], [1], [0, 0, 1, 1], [], []>} : vector<8x128xf32>, vector<128x16xf32>, vector<8x16xf32> -> vector<8x16xf32>
    %700 = arith.addf %695, %699 : vector<8x16xf32>
    %c1_614 = arith.constant 1 : index
    %c0_615 = arith.constant 0 : index
    %701 = vector.load %arg13[%c1_614, %c0_615] : memref<10x128xf32, #tpu.memory_space<vmem>>, vector<8x128xf32>
    %c1_616 = arith.constant 1 : index
    %c0_617 = arith.constant 0 : index
    %c0_618 = arith.constant 0 : index
    %702 = vector.load %arg10[%c1_616, %c0_617, %c0_618] : memref<8x128x16xf32, #tpu.memory_space<vmem>>, vector<1x128x16xf32>
    %703 = vector.shape_cast %702 : vector<1x128x16xf32> to vector<128x16xf32>
    %cst_619 = arith.constant dense<0.000000e+00> : vector<8x16xf32>
    %704 = tpu.matmul %701, %703, %cst_619 {dimension_numbers = #tpu.dot_dimension_numbers<[1], [0], [0], [1], [0, 0, 1, 1], [], []>} : vector<8x128xf32>, vector<128x16xf32>, vector<8x16xf32> -> vector<8x16xf32>
    %705 = arith.addf %700, %704 : vector<8x16xf32>
    %c0_620 = arith.constant 0 : index
    %c0_621 = arith.constant 0 : index
    %706 = vector.load %arg13[%c0_620, %c0_621] : memref<10x128xf32, #tpu.memory_space<vmem>>, vector<8x128xf32>
    %c2_622 = arith.constant 2 : index
    %c0_623 = arith.constant 0 : index
    %c0_624 = arith.constant 0 : index
    %707 = vector.load %arg10[%c2_622, %c0_623, %c0_624] : memref<8x128x16xf32, #tpu.memory_space<vmem>>, vector<1x128x16xf32>
    %708 = vector.shape_cast %707 : vector<1x128x16xf32> to vector<128x16xf32>
    %cst_625 = arith.constant dense<0.000000e+00> : vector<8x16xf32>
    %709 = tpu.matmul %706, %708, %cst_625 {dimension_numbers = #tpu.dot_dimension_numbers<[1], [0], [0], [1], [0, 0, 1, 1], [], []>} : vector<8x128xf32>, vector<128x16xf32>, vector<8x16xf32> -> vector<8x16xf32>
    %710 = arith.addf %705, %709 : vector<8x16xf32>
    %c1_626 = arith.constant 1 : index
    %c0_627 = arith.constant 0 : index
    %711 = vector.load %arg13[%c1_626, %c0_627] : memref<10x128xf32, #tpu.memory_space<vmem>>, vector<8x128xf32>
    %c3_628 = arith.constant 3 : index
    %c0_629 = arith.constant 0 : index
    %c0_630 = arith.constant 0 : index
    %712 = vector.load %arg10[%c3_628, %c0_629, %c0_630] : memref<8x128x16xf32, #tpu.memory_space<vmem>>, vector<1x128x16xf32>
    %713 = vector.shape_cast %712 : vector<1x128x16xf32> to vector<128x16xf32>
    %cst_631 = arith.constant dense<0.000000e+00> : vector<8x16xf32>
    %714 = tpu.matmul %711, %713, %cst_631 {dimension_numbers = #tpu.dot_dimension_numbers<[1], [0], [0], [1], [0, 0, 1, 1], [], []>} : vector<8x128xf32>, vector<128x16xf32>, vector<8x16xf32> -> vector<8x16xf32>
    %715 = arith.addf %710, %714 : vector<8x16xf32>
    %716 = vector.extract_strided_slice %715 {offsets = [0, 0], sizes = [1, 16], strides = [1, 1]} : vector<8x16xf32> to vector<1x16xf32>
    %c0_632 = arith.constant 0 : index
    %c0_633 = arith.constant 0 : index
    %c0_634 = arith.constant 0 : index
    %717 = vector.load %arg12[%c0_632, %c0_633, %c0_634] : memref<1x16x16xf32, #tpu.memory_space<vmem>>, vector<1x1x16xf32>
    %718 = vector.shape_cast %717 : vector<1x1x16xf32> to vector<1x16xf32>
    %719 = vector.shape_cast %716 : vector<1x16xf32> to vector<1x1x16xf32>
    tpu.vector_store %arg12[%c0_632, %c0_633, %c0_634], %719 {strides = array<i32>} : memref<1x16x16xf32, #tpu.memory_space<vmem>>, vector<1x1x16xf32>,
    %720 = vector.extract_strided_slice %715 {offsets = [1, 0], sizes = [1, 16], strides = [1, 1]} : vector<8x16xf32> to vector<1x16xf32>
    %c0_635 = arith.constant 0 : index
    %c2_636 = arith.constant 2 : index
    %c0_637 = arith.constant 0 : index
    %721 = vector.load %arg12[%c0_635, %c2_636, %c0_637] : memref<1x16x16xf32, #tpu.memory_space<vmem>>, vector<1x1x16xf32>
    %722 = vector.shape_cast %721 : vector<1x1x16xf32> to vector<1x16xf32>
    %723 = vector.shape_cast %720 : vector<1x16xf32> to vector<1x1x16xf32>
    tpu.vector_store %arg12[%c0_635, %c2_636, %c0_637], %723 {strides = array<i32>} : memref<1x16x16xf32, #tpu.memory_space<vmem>>, vector<1x1x16xf32>,
    %724 = vector.extract_strided_slice %715 {offsets = [2, 0], sizes = [1, 16], strides = [1, 1]} : vector<8x16xf32> to vector<1x16xf32>
    %c0_638 = arith.constant 0 : index
    %c4_639 = arith.constant 4 : index
    %c0_640 = arith.constant 0 : index
    %725 = vector.load %arg12[%c0_638, %c4_639, %c0_640] : memref<1x16x16xf32, #tpu.memory_space<vmem>>, vector<1x1x16xf32>
    %726 = vector.shape_cast %725 : vector<1x1x16xf32> to vector<1x16xf32>
    %727 = vector.shape_cast %724 : vector<1x16xf32> to vector<1x1x16xf32>
    tpu.vector_store %arg12[%c0_638, %c4_639, %c0_640], %727 {strides = array<i32>} : memref<1x16x16xf32, #tpu.memory_space<vmem>>, vector<1x1x16xf32>,
    %728 = vector.extract_strided_slice %715 {offsets = [3, 0], sizes = [1, 16], strides = [1, 1]} : vector<8x16xf32> to vector<1x16xf32>
    %c0_641 = arith.constant 0 : index
    %c6_642 = arith.constant 6 : index
    %c0_643 = arith.constant 0 : index
    %729 = vector.load %arg12[%c0_641, %c6_642, %c0_643] : memref<1x16x16xf32, #tpu.memory_space<vmem>>, vector<1x1x16xf32>
    %730 = vector.shape_cast %729 : vector<1x1x16xf32> to vector<1x16xf32>
    %731 = vector.shape_cast %728 : vector<1x16xf32> to vector<1x1x16xf32>
    tpu.vector_store %arg12[%c0_641, %c6_642, %c0_643], %731 {strides = array<i32>} : memref<1x16x16xf32, #tpu.memory_space<vmem>>, vector<1x1x16xf32>,
    %732 = vector.extract_strided_slice %715 {offsets = [4, 0], sizes = [1, 16], strides = [1, 1]} : vector<8x16xf32> to vector<1x16xf32>
    %c0_644 = arith.constant 0 : index
    %c8_645 = arith.constant 8 : index
    %c0_646 = arith.constant 0 : index
    %733 = vector.load %arg12[%c0_644, %c8_645, %c0_646] : memref<1x16x16xf32, #tpu.memory_space<vmem>>, vector<1x1x16xf32>
    %734 = vector.shape_cast %733 : vector<1x1x16xf32> to vector<1x16xf32>
    %735 = vector.shape_cast %732 : vector<1x16xf32> to vector<1x1x16xf32>
    tpu.vector_store %arg12[%c0_644, %c8_645, %c0_646], %735 {strides = array<i32>} : memref<1x16x16xf32, #tpu.memory_space<vmem>>, vector<1x1x16xf32>,
    %736 = vector.extract_strided_slice %715 {offsets = [5, 0], sizes = [1, 16], strides = [1, 1]} : vector<8x16xf32> to vector<1x16xf32>
    %c0_647 = arith.constant 0 : index
    %c10_648 = arith.constant 10 : index
    %c0_649 = arith.constant 0 : index
    %737 = vector.load %arg12[%c0_647, %c10_648, %c0_649] : memref<1x16x16xf32, #tpu.memory_space<vmem>>, vector<1x1x16xf32>
    %738 = vector.shape_cast %737 : vector<1x1x16xf32> to vector<1x16xf32>
    %739 = vector.shape_cast %736 : vector<1x16xf32> to vector<1x1x16xf32>
    tpu.vector_store %arg12[%c0_647, %c10_648, %c0_649], %739 {strides = array<i32>} : memref<1x16x16xf32, #tpu.memory_space<vmem>>, vector<1x1x16xf32>,
    %740 = vector.extract_strided_slice %715 {offsets = [6, 0], sizes = [1, 16], strides = [1, 1]} : vector<8x16xf32> to vector<1x16xf32>
    %c0_650 = arith.constant 0 : index
    %c12_651 = arith.constant 12 : index
    %c0_652 = arith.constant 0 : index
    %741 = vector.load %arg12[%c0_650, %c12_651, %c0_652] : memref<1x16x16xf32, #tpu.memory_space<vmem>>, vector<1x1x16xf32>
    %742 = vector.shape_cast %741 : vector<1x1x16xf32> to vector<1x16xf32>
    %743 = vector.shape_cast %740 : vector<1x16xf32> to vector<1x1x16xf32>
    tpu.vector_store %arg12[%c0_650, %c12_651, %c0_652], %743 {strides = array<i32>} : memref<1x16x16xf32, #tpu.memory_space<vmem>>, vector<1x1x16xf32>,
    %744 = vector.extract_strided_slice %715 {offsets = [7, 0], sizes = [1, 16], strides = [1, 1]} : vector<8x16xf32> to vector<1x16xf32>
    %c0_653 = arith.constant 0 : index
    %c14_654 = arith.constant 14 : index
    %c0_655 = arith.constant 0 : index
    %745 = vector.load %arg12[%c0_653, %c14_654, %c0_655] : memref<1x16x16xf32, #tpu.memory_space<vmem>>, vector<1x1x16xf32>
    %746 = vector.shape_cast %745 : vector<1x1x16xf32> to vector<1x16xf32>
    %747 = vector.shape_cast %744 : vector<1x16xf32> to vector<1x1x16xf32>
    tpu.vector_store %arg12[%c0_653, %c14_654, %c0_655], %747 {strides = array<i32>} : memref<1x16x16xf32, #tpu.memory_space<vmem>>, vector<1x1x16xf32>,
    %cst_656 = arith.constant 0.000000e+00 : f32
    %748 = vector.broadcast %cst_656 : f32 to vector<8x16xf32>
    %c0_657 = arith.constant 0 : index
    %c0_658 = arith.constant 0 : index
    %749 = vector.load %arg11[%c0_657, %c0_658] : memref<1x16xf32, #tpu.memory_space<vmem>>, vector<1x16xf32>
    %750 = vector.broadcast %749 : vector<1x16xf32> to vector<8x16xf32>
    %751 = arith.addf %748, %750 : vector<8x16xf32>
    %c1_659 = arith.constant 1 : index
    %c0_660 = arith.constant 0 : index
    %752 = vector.load %arg13[%c1_659, %c0_660] : memref<10x128xf32, #tpu.memory_space<vmem>>, vector<8x128xf32>
    %c4_661 = arith.constant 4 : index
    %c0_662 = arith.constant 0 : index
    %c0_663 = arith.constant 0 : index
    %753 = vector.load %arg10[%c4_661, %c0_662, %c0_663] : memref<8x128x16xf32, #tpu.memory_space<vmem>>, vector<1x128x16xf32>
    %754 = vector.shape_cast %753 : vector<1x128x16xf32> to vector<128x16xf32>
    %cst_664 = arith.constant dense<0.000000e+00> : vector<8x16xf32>
    %755 = tpu.matmul %752, %754, %cst_664 {dimension_numbers = #tpu.dot_dimension_numbers<[1], [0], [0], [1], [0, 0, 1, 1], [], []>} : vector<8x128xf32>, vector<128x16xf32>, vector<8x16xf32> -> vector<8x16xf32>
    %756 = arith.addf %751, %755 : vector<8x16xf32>
    %c2_665 = arith.constant 2 : index
    %c0_666 = arith.constant 0 : index
    %757 = vector.load %arg13[%c2_665, %c0_666] : memref<10x128xf32, #tpu.memory_space<vmem>>, vector<8x128xf32>
    %c5_667 = arith.constant 5 : index
    %c0_668 = arith.constant 0 : index
    %c0_669 = arith.constant 0 : index
    %758 = vector.load %arg10[%c5_667, %c0_668, %c0_669] : memref<8x128x16xf32, #tpu.memory_space<vmem>>, vector<1x128x16xf32>
    %759 = vector.shape_cast %758 : vector<1x128x16xf32> to vector<128x16xf32>
    %cst_670 = arith.constant dense<0.000000e+00> : vector<8x16xf32>
    %760 = tpu.matmul %757, %759, %cst_670 {dimension_numbers = #tpu.dot_dimension_numbers<[1], [0], [0], [1], [0, 0, 1, 1], [], []>} : vector<8x128xf32>, vector<128x16xf32>, vector<8x16xf32> -> vector<8x16xf32>
    %761 = arith.addf %756, %760 : vector<8x16xf32>
    %c1_671 = arith.constant 1 : index
    %c0_672 = arith.constant 0 : index
    %762 = vector.load %arg13[%c1_671, %c0_672] : memref<10x128xf32, #tpu.memory_space<vmem>>, vector<8x128xf32>
    %c6_673 = arith.constant 6 : index
    %c0_674 = arith.constant 0 : index
    %c0_675 = arith.constant 0 : index
    %763 = vector.load %arg10[%c6_673, %c0_674, %c0_675] : memref<8x128x16xf32, #tpu.memory_space<vmem>>, vector<1x128x16xf32>
    %764 = vector.shape_cast %763 : vector<1x128x16xf32> to vector<128x16xf32>
    %cst_676 = arith.constant dense<0.000000e+00> : vector<8x16xf32>
    %765 = tpu.matmul %762, %764, %cst_676 {dimension_numbers = #tpu.dot_dimension_numbers<[1], [0], [0], [1], [0, 0, 1, 1], [], []>} : vector<8x128xf32>, vector<128x16xf32>, vector<8x16xf32> -> vector<8x16xf32>
    %766 = arith.addf %761, %765 : vector<8x16xf32>
    %c2_677 = arith.constant 2 : index
    %c0_678 = arith.constant 0 : index
    %767 = vector.load %arg13[%c2_677, %c0_678] : memref<10x128xf32, #tpu.memory_space<vmem>>, vector<8x128xf32>
    %c7_679 = arith.constant 7 : index
    %c0_680 = arith.constant 0 : index
    %c0_681 = arith.constant 0 : index
    %768 = vector.load %arg10[%c7_679, %c0_680, %c0_681] : memref<8x128x16xf32, #tpu.memory_space<vmem>>, vector<1x128x16xf32>
    %769 = vector.shape_cast %768 : vector<1x128x16xf32> to vector<128x16xf32>
    %cst_682 = arith.constant dense<0.000000e+00> : vector<8x16xf32>
    %770 = tpu.matmul %767, %769, %cst_682 {dimension_numbers = #tpu.dot_dimension_numbers<[1], [0], [0], [1], [0, 0, 1, 1], [], []>} : vector<8x128xf32>, vector<128x16xf32>, vector<8x16xf32> -> vector<8x16xf32>
    %771 = arith.addf %766, %770 : vector<8x16xf32>
    %772 = vector.extract_strided_slice %771 {offsets = [0, 0], sizes = [1, 16], strides = [1, 1]} : vector<8x16xf32> to vector<1x16xf32>
    %c0_683 = arith.constant 0 : index
    %c1_684 = arith.constant 1 : index
    %c0_685 = arith.constant 0 : index
    %773 = vector.load %arg12[%c0_683, %c1_684, %c0_685] : memref<1x16x16xf32, #tpu.memory_space<vmem>>, vector<1x1x16xf32>
    %774 = vector.shape_cast %773 : vector<1x1x16xf32> to vector<1x16xf32>
    %775 = vector.shape_cast %772 : vector<1x16xf32> to vector<1x1x16xf32>
    tpu.vector_store %arg12[%c0_683, %c1_684, %c0_685], %775 {strides = array<i32>} : memref<1x16x16xf32, #tpu.memory_space<vmem>>, vector<1x1x16xf32>,
    %776 = vector.extract_strided_slice %771 {offsets = [1, 0], sizes = [1, 16], strides = [1, 1]} : vector<8x16xf32> to vector<1x16xf32>
    %c0_686 = arith.constant 0 : index
    %c3_687 = arith.constant 3 : index
    %c0_688 = arith.constant 0 : index
    %777 = vector.load %arg12[%c0_686, %c3_687, %c0_688] : memref<1x16x16xf32, #tpu.memory_space<vmem>>, vector<1x1x16xf32>
    %778 = vector.shape_cast %777 : vector<1x1x16xf32> to vector<1x16xf32>
    %779 = vector.shape_cast %776 : vector<1x16xf32> to vector<1x1x16xf32>
    tpu.vector_store %arg12[%c0_686, %c3_687, %c0_688], %779 {strides = array<i32>} : memref<1x16x16xf32, #tpu.memory_space<vmem>>, vector<1x1x16xf32>,
    %780 = vector.extract_strided_slice %771 {offsets = [2, 0], sizes = [1, 16], strides = [1, 1]} : vector<8x16xf32> to vector<1x16xf32>
    %c0_689 = arith.constant 0 : index
    %c5_690 = arith.constant 5 : index
    %c0_691 = arith.constant 0 : index
    %781 = vector.load %arg12[%c0_689, %c5_690, %c0_691] : memref<1x16x16xf32, #tpu.memory_space<vmem>>, vector<1x1x16xf32>
    %782 = vector.shape_cast %781 : vector<1x1x16xf32> to vector<1x16xf32>
    %783 = vector.shape_cast %780 : vector<1x16xf32> to vector<1x1x16xf32>
    tpu.vector_store %arg12[%c0_689, %c5_690, %c0_691], %783 {strides = array<i32>} : memref<1x16x16xf32, #tpu.memory_space<vmem>>, vector<1x1x16xf32>,
    %784 = vector.extract_strided_slice %771 {offsets = [3, 0], sizes = [1, 16], strides = [1, 1]} : vector<8x16xf32> to vector<1x16xf32>
    %c0_692 = arith.constant 0 : index
    %c7_693 = arith.constant 7 : index
    %c0_694 = arith.constant 0 : index
    %785 = vector.load %arg12[%c0_692, %c7_693, %c0_694] : memref<1x16x16xf32, #tpu.memory_space<vmem>>, vector<1x1x16xf32>
    %786 = vector.shape_cast %785 : vector<1x1x16xf32> to vector<1x16xf32>
    %787 = vector.shape_cast %784 : vector<1x16xf32> to vector<1x1x16xf32>
    tpu.vector_store %arg12[%c0_692, %c7_693, %c0_694], %787 {strides = array<i32>} : memref<1x16x16xf32, #tpu.memory_space<vmem>>, vector<1x1x16xf32>,
    %788 = vector.extract_strided_slice %771 {offsets = [4, 0], sizes = [1, 16], strides = [1, 1]} : vector<8x16xf32> to vector<1x16xf32>
    %c0_695 = arith.constant 0 : index
    %c9_696 = arith.constant 9 : index
    %c0_697 = arith.constant 0 : index
    %789 = vector.load %arg12[%c0_695, %c9_696, %c0_697] : memref<1x16x16xf32, #tpu.memory_space<vmem>>, vector<1x1x16xf32>
    %790 = vector.shape_cast %789 : vector<1x1x16xf32> to vector<1x16xf32>
    %791 = vector.shape_cast %788 : vector<1x16xf32> to vector<1x1x16xf32>
    tpu.vector_store %arg12[%c0_695, %c9_696, %c0_697], %791 {strides = array<i32>} : memref<1x16x16xf32, #tpu.memory_space<vmem>>, vector<1x1x16xf32>,
    %792 = vector.extract_strided_slice %771 {offsets = [5, 0], sizes = [1, 16], strides = [1, 1]} : vector<8x16xf32> to vector<1x16xf32>
    %c0_698 = arith.constant 0 : index
    %c11_699 = arith.constant 11 : index
    %c0_700 = arith.constant 0 : index
    %793 = vector.load %arg12[%c0_698, %c11_699, %c0_700] : memref<1x16x16xf32, #tpu.memory_space<vmem>>, vector<1x1x16xf32>
    %794 = vector.shape_cast %793 : vector<1x1x16xf32> to vector<1x16xf32>
    %795 = vector.shape_cast %792 : vector<1x16xf32> to vector<1x1x16xf32>
    tpu.vector_store %arg12[%c0_698, %c11_699, %c0_700], %795 {strides = array<i32>} : memref<1x16x16xf32, #tpu.memory_space<vmem>>, vector<1x1x16xf32>,
    %796 = vector.extract_strided_slice %771 {offsets = [6, 0], sizes = [1, 16], strides = [1, 1]} : vector<8x16xf32> to vector<1x16xf32>
    %c0_701 = arith.constant 0 : index
    %c13_702 = arith.constant 13 : index
    %c0_703 = arith.constant 0 : index
    %797 = vector.load %arg12[%c0_701, %c13_702, %c0_703] : memref<1x16x16xf32, #tpu.memory_space<vmem>>, vector<1x1x16xf32>
    %798 = vector.shape_cast %797 : vector<1x1x16xf32> to vector<1x16xf32>
    %799 = vector.shape_cast %796 : vector<1x16xf32> to vector<1x1x16xf32>
    tpu.vector_store %arg12[%c0_701, %c13_702, %c0_703], %799 {strides = array<i32>} : memref<1x16x16xf32, #tpu.memory_space<vmem>>, vector<1x1x16xf32>,
    %800 = vector.extract_strided_slice %771 {offsets = [7, 0], sizes = [1, 16], strides = [1, 1]} : vector<8x16xf32> to vector<1x16xf32>
    %c0_704 = arith.constant 0 : index
    %c15_705 = arith.constant 15 : index
    %c0_706 = arith.constant 0 : index
    %801 = vector.load %arg12[%c0_704, %c15_705, %c0_706] : memref<1x16x16xf32, #tpu.memory_space<vmem>>, vector<1x1x16xf32>
    %802 = vector.shape_cast %801 : vector<1x1x16xf32> to vector<1x16xf32>
    %803 = vector.shape_cast %800 : vector<1x16xf32> to vector<1x1x16xf32>
    tpu.vector_store %arg12[%c0_704, %c15_705, %c0_706], %803 {strides = array<i32>} : memref<1x16x16xf32, #tpu.memory_space<vmem>>, vector<1x1x16xf32>,
    return
  }
  func.func @transform_0(%arg0: i32) -> (i32, i32, i32) {
    %c0_i32 = arith.constant 0 : i32
    %c0_i32_0 = arith.constant 0 : i32
    %c0_i32_1 = arith.constant 0 : i32
    return %arg0, %c0_i32, %c0_i32_0 : i32, i32, i32
  }
  func.func @transform_1(%arg0: i32) -> (i32, i32, i32) {
    %c0_i32 = arith.constant 0 : i32
    %c0_i32_0 = arith.constant 0 : i32
    %c0_i32_1 = arith.constant 0 : i32
    %c0_i32_2 = arith.constant 0 : i32
    return %c0_i32, %c0_i32_0, %c0_i32_1 : i32, i32, i32
  }
  func.func @transform_2(%arg0: i32) -> (i32, i32) {
    %c0_i32 = arith.constant 0 : i32
    %c0_i32_0 = arith.constant 0 : i32
    %c0_i32_1 = arith.constant 0 : i32
    return %c0_i32, %c0_i32_0 : i32, i32
  }
  func.func @transform_3(%arg0: i32) -> (i32, i32, i32) {
    %c0_i32 = arith.constant 0 : i32
    %c0_i32_0 = arith.constant 0 : i32
    %c0_i32_1 = arith.constant 0 : i32
    %c0_i32_2 = arith.constant 0 : i32
    return %c0_i32, %c0_i32_0, %c0_i32_1 : i32, i32, i32
  }
  func.func @transform_4(%arg0: i32) -> (i32, i32) {
    %c0_i32 = arith.constant 0 : i32
    %c0_i32_0 = arith.constant 0 : i32
    %c0_i32_1 = arith.constant 0 : i32
    return %c0_i32, %c0_i32_0 : i32, i32
  }
  func.func @transform_5(%arg0: i32) -> (i32, i32, i32) {
    %c0_i32 = arith.constant 0 : i32
    %c0_i32_0 = arith.constant 0 : i32
    %c0_i32_1 = arith.constant 0 : i32
    %c0_i32_2 = arith.constant 0 : i32
    return %c0_i32, %c0_i32_0, %c0_i32_1 : i32, i32, i32
  }
  func.func @transform_6(%arg0: i32) -> (i32, i32) {
    %c0_i32 = arith.constant 0 : i32
    %c0_i32_0 = arith.constant 0 : i32
    %c0_i32_1 = arith.constant 0 : i32
    return %c0_i32, %c0_i32_0 : i32, i32
  }
  func.func @transform_7(%arg0: i32) -> (i32, i32, i32) {
    %c0_i32 = arith.constant 0 : i32
    %c0_i32_0 = arith.constant 0 : i32
    %c0_i32_1 = arith.constant 0 : i32
    %c0_i32_2 = arith.constant 0 : i32
    return %c0_i32, %c0_i32_0, %c0_i32_1 : i32, i32, i32
  }
  func.func @transform_8(%arg0: i32) -> (i32, i32) {
    %c0_i32 = arith.constant 0 : i32
    %c0_i32_0 = arith.constant 0 : i32
    %c0_i32_1 = arith.constant 0 : i32
    return %c0_i32, %c0_i32_0 : i32, i32
  }
  func.func @transform_9(%arg0: i32) -> (i32, i32, i32) {
    %c0_i32 = arith.constant 0 : i32
    %c0_i32_0 = arith.constant 0 : i32
    %c0_i32_1 = arith.constant 0 : i32
    %c0_i32_2 = arith.constant 0 : i32
    return %c0_i32, %c0_i32_0, %c0_i32_1 : i32, i32, i32
  }
  func.func @transform_10(%arg0: i32) -> (i32, i32) {
    %c0_i32 = arith.constant 0 : i32
    %c0_i32_0 = arith.constant 0 : i32
    %c0_i32_1 = arith.constant 0 : i32
    return %c0_i32, %c0_i32_0 : i32, i32
  }
  func.func @transform_11(%arg0: i32) -> (i32, i32, i32) {
    %c0_i32 = arith.constant 0 : i32
    %c0_i32_0 = arith.constant 0 : i32
    %c0_i32_1 = arith.constant 0 : i32
    return %arg0, %c0_i32, %c0_i32_0 : i32, i32, i32
  }
}

</mosaic_0001>

<llo_original>
// kernel: my_net_forward.1
$region0: #{my_net_forward.1}
  #allocation0 [shape = 'u32[]', space=smem, size = 0x4, offset = 0x4, fixed_abs, tag = 'smem constant byte address 0x4 - core index']
  #allocation1 [shape = 'u32[144,128]{1,0:T(1,128)}', space=vmem, size = 0x12000, scoped, tag = 'internal scratch']
  #allocation2 [shape = 'f32[10,128]{1,0:T(8,128)}', space=vmem, size = 0x2000, scoped, tag = 'scratch operand']
  #allocation3 [shape = 'f32[6,128]{1,0:T(8,128)}', space=vmem, size = 0x1000, scoped, tag = 'scratch operand']
  %s0 = inlined_call_operand.vmem [shape: f32[2,18,48], index: 0, kind: input, shape index: {}]
  %s1 = inlined_call_operand.hbm [shape: f32[3,48,128], index: 1, kind: input, shape index: {}]
  %s2 = inlined_call_operand.hbm [shape: f32[1,128], index: 2, kind: input, shape index: {}]
  %s3 = inlined_call_operand.hbm [shape: f32[3,128,128], index: 3, kind: input, shape index: {}]
  %s4 = inlined_call_operand.hbm [shape: f32[1,128], index: 4, kind: input, shape index: {}]
  %s5 = inlined_call_operand.hbm [shape: f32[24,128,128], index: 5, kind: input, shape index: {}]
  %s6 = inlined_call_operand.hbm [shape: f32[8,128], index: 6, kind: input, shape index: {}]
  %s7 = inlined_call_operand.hbm [shape: f32[8,128,128], index: 7, kind: input, shape index: {}]
  %s8 = inlined_call_operand.hbm [shape: f32[1,128], index: 8, kind: input, shape index: {}]
  %s9 = inlined_call_operand.vmem [shape: f32[8,128,16], index: 9, kind: input, shape index: {}]
  %s10 = inlined_call_operand.hbm [shape: f32[1,16], index: 10, kind: input, shape index: {}]
  %s11 = inlined_call_operand.hbm [shape: f32[2,16,16], index: 11, kind: output, shape index: {}]
  %s12 = sld [smem:[#allocation0]]
  $region113: #{my_net_forward.1} parent=0
    _
  %s14 = ssub.s32 1, %s12
  %s15 = scalar_select 0, %s14, %s12
  $region1: #{my_net_forward.1} parent=0
    #allocation4 [shape = 'u8[73728]{0}', space=vmem, size = 0x12000, scoped, tag = 'input window, operand 1, single buffered']
    #allocation5 [shape = 's32[2]{0}', space=sflag, size = 0x8, scoped, tag = 'scoped memory for my_net_forward.1']
    #allocation6 [shape = 's32[2]{0}', space=sflag, size = 0x8, scoped, tag = 'scoped memory for my_net_forward.1']
    #allocation7 [shape = 'u8[512]{0}', space=vmem, size = 0x400, scoped, tag = 'input window, operand 2, single buffered']
    #allocation8 [shape = 's32[1]{0}', space=sflag, size = 0x4, scoped, tag = 'scoped memory for my_net_forward.1']
    #allocation9 [shape = 'u8[196608]{0}', space=vmem, size = 0x30000, scoped, tag = 'input window, operand 3, single buffered']
    #allocation10 [shape = 'u8[512]{0}', space=vmem, size = 0x400, scoped, tag = 'input window, operand 4, single buffered']
    #allocation11 [shape = 's32[1]{0}', space=sflag, size = 0x4, scoped, tag = 'scoped memory for my_net_forward.1']
    #allocation12 [shape = 'u8[1572864]{0}', space=vmem, size = 0x180000, scoped, tag = 'input window, operand 5, single buffered']
    #allocation13 [shape = 'u8[4096]{0}', space=vmem, size = 0x1000, scoped, tag = 'input window, operand 6, single buffered']
    #allocation14 [shape = 's32[1]{0}', space=sflag, size = 0x4, scoped, tag = 'scoped memory for my_net_forward.1']
    #allocation15 [shape = 'u8[524288]{0}', space=vmem, size = 0x80000, scoped, tag = 'input window, operand 7, single buffered']
    #allocation16 [shape = 'u8[512]{0}', space=vmem, size = 0x400, scoped, tag = 'input window, operand 8, single buffered']
    #allocation17 [shape = 's32[1]{0}', space=sflag, size = 0x4, scoped, tag = 'scoped memory for my_net_forward.1']
    #allocation18 [shape = 'u8[512]{0}', space=vmem, size = 0x400, scoped, tag = 'input window, operand 10, single buffered']
    #allocation19 [shape = 'u8[16384]{0}', space=vmem, size = 0x4000, scoped, tag = 'output window, operand 0']
    %16 = vsyncpa [#allocation5], 0
    %17 = vsyncpa [#allocation8], 0
    %18 = vsyncpa [#allocation11], 0
    %19 = vsyncpa [#allocation14], 0
    %20 = vsyncpa [#allocation17], 0
    %21 = vsyncpa [#allocation6], 0
    %s22 = scalar_lea.sflag [#allocation6], 1
    %23 = vsyncpa %s22, 0
    loop: start=0, step=1, limit=4
    $region2: #{my_net_forward.1} parent=1 // loop_pre_header
      _
    $region3: #{my_net_forward.1} parent=1 // loop_header
      %s25 = sphi 0, %s29
      %p26 = scmp.ge.s32.totalorder %s25, 4
      %s35 = sphi 0, %s37
      %s38 = sphi 0, %s35
      %s39 = sphi 0, %s38
      %s55 = sphi 0, %s39
      %s59 = sphi 0, %s59
      %s61 = sphi 0, %s59
      %s62 = sphi 0, %s61
      %s76 = sphi 0, %s62
      %s80 = sphi 0, %s80
      %s82 = sphi 0, %s80
      %s83 = sphi 0, %s82
      %s97 = sphi 0, %s83
      %s101 = sphi 0, %s101
      %s103 = sphi 0, %s101
      %s104 = sphi 0, %s103
      %s118 = sphi 0, %s104
      %s122 = sphi 0, %s122
      %s124 = sphi 0, %s122
      %s125 = sphi 0, %s124
      %s139 = sphi 0, %s125
      %s143 = sphi 0, %s143
      %s145 = sphi 0, %s143
      %s146 = sphi 0, %s145
      %s160 = sphi 0, %s146
      %s164 = sphi 0, %s164
      %s166 = sphi 0, %s164
      %s167 = sphi 0, %s166
      %s181 = sphi 0, %s167
      %s185 = sphi 0, %s185
      %s187 = sphi 0, %s185
      %s188 = sphi 0, %s187
      %s202 = sphi 0, %s188
      %s206 = sphi 0, %s206
      %s208 = sphi 0, %s206
      %s209 = sphi 0, %s208
      %s223 = sphi 0, %s209
      %s227 = sphi 0, %s227
      %s229 = sphi 0, %s227
      %s230 = sphi 0, %s229
      %s244 = sphi 0, %s230
      %s248 = sphi 0, %s248
      %s250 = sphi 0, %s248
      %s251 = sphi 0, %s250
      %s265 = sphi 0, %s251
      %s271 = sphi 0, %s273
      %s274 = sphi 0, %s271
      %s275 = sphi 0, %s274
      %s291 = sphi 0, %s275
    $region4: #{my_net_forward.1} parent=1 // loop_header_branch
      %28 = sbr.rel (%p26) target = $region8
    $region5: #{my_net_forward.1} parent=1 // loop_body
      %s30 = ssub.s32 %s25, 1
      %s31 = ssub.s32 %s25, 2
      %s32 = sadd.s32 %s25, 1
      %s33 = ssub.s32 %s25, %s32
      %p34 = scmp.eq.s32.totalorder %s33, 0
      %s36 = sadd.s32 %s35, 1
      %s37 = scalar_select %p34, %s35, %s36
      %p40 = pneg %p34
      %p41 = scmp.eq.s32.totalorder %s25, 1
      %p42 = por %p40, %p41
      %p43 = scmp.ne.s32.totalorder %s35, %s38
      %p44 = scmp.eq.s32.totalorder %s25, 0
      %p45 = por %p43, %p44
      %p46 = scmp.ne.s32.totalorder %s35, %s38
      %p47 = scmp.eq.s32.totalorder %s30, 1
      %p48 = por %p46, %p47
      %p49 = scmp.ne.s32.totalorder %s38, %s39
      %p50 = scmp.eq.s32.totalorder %s30, 0
      %p51 = por %p49, %p50
      %p52 = scmp.ne.s32.totalorder %s38, %s39
      %p53 = scmp.eq.s32.totalorder %s31, 1
      %p54 = por %p52, %p53
      %p56 = scmp.ne.s32.totalorder %s39, %s55
      %p57 = scmp.eq.s32.totalorder %s31, 0
      %p58 = por %p56, %p57
      %s60 = sadd.s32 %s59, 1
      %p63 = scmp.eq.s32.totalorder %s25, 1
      %p64 = scmp.ne.s32.totalorder %s59, %s61
      %p65 = scmp.eq.s32.totalorder %s25, 0
      %p66 = por %p64, %p65
      %p67 = scmp.ne.s32.totalorder %s59, %s61
      %p68 = scmp.eq.s32.totalorder %s30, 1
      %p69 = por %p67, %p68
      %p70 = scmp.ne.s32.totalorder %s61, %s62
      %p71 = scmp.eq.s32.totalorder %s30, 0
      %p72 = por %p70, %p71
      %p73 = scmp.ne.s32.totalorder %s61, %s62
      %p74 = scmp.eq.s32.totalorder %s31, 1
      %p75 = por %p73, %p74
      %p77 = scmp.ne.s32.totalorder %s62, %s76
      %p78 = scmp.eq.s32.totalorder %s31, 0
      %p79 = por %p77, %p78
      %s81 = sadd.s32 %s80, 1
      %p84 = scmp.eq.s32.totalorder %s25, 1
      %p85 = scmp.ne.s32.totalorder %s80, %s82
      %p86 = scmp.eq.s32.totalorder %s25, 0
      %p87 = por %p85, %p86
      %p88 = scmp.ne.s32.totalorder %s80, %s82
      %p89 = scmp.eq.s32.totalorder %s30, 1
      %p90 = por %p88, %p89
      %p91 = scmp.ne.s32.totalorder %s82, %s83
      %p92 = scmp.eq.s32.totalorder %s30, 0
      %p93 = por %p91, %p92
      %p94 = scmp.ne.s32.totalorder %s82, %s83
      %p95 = scmp.eq.s32.totalorder %s31, 1
      %p96 = por %p94, %p95
      %p98 = scmp.ne.s32.totalorder %s83, %s97
      %p99 = scmp.eq.s32.totalorder %s31, 0
      %p100 = por %p98, %p99
      %s102 = sadd.s32 %s101, 1
      %p105 = scmp.eq.s32.totalorder %s25, 1
      %p106 = scmp.ne.s32.totalorder %s101, %s103
      %p107 = scmp.eq.s32.totalorder %s25, 0
      %p108 = por %p106, %p107
      %p109 = scmp.ne.s32.totalorder %s101, %s103
      %p110 = scmp.eq.s32.totalorder %s30, 1
      %p111 = por %p109, %p110
      %p112 = scmp.ne.s32.totalorder %s103, %s104
      %p113 = scmp.eq.s32.totalorder %s30, 0
      %p114 = por %p112, %p113
      %p115 = scmp.ne.s32.totalorder %s103, %s104
      %p116 = scmp.eq.s32.totalorder %s31, 1
      %p117 = por %p115, %p116
      %p119 = scmp.ne.s32.totalorder %s104, %s118
      %p120 = scmp.eq.s32.totalorder %s31, 0
      %p121 = por %p119, %p120
      %s123 = sadd.s32 %s122, 1
      %p126 = scmp.eq.s32.totalorder %s25, 1
      %p127 = scmp.ne.s32.totalorder %s122, %s124
      %p128 = scmp.eq.s32.totalorder %s25, 0
      %p129 = por %p127, %p128
      %p130 = scmp.ne.s32.totalorder %s122, %s124
      %p131 = scmp.eq.s32.totalorder %s30, 1
      %p132 = por %p130, %p131
      %p133 = scmp.ne.s32.totalorder %s124, %s125
      %p134 = scmp.eq.s32.totalorder %s30, 0
      %p135 = por %p133, %p134
      %p136 = scmp.ne.s32.totalorder %s124, %s125
      %p137 = scmp.eq.s32.totalorder %s31, 1
      %p138 = por %p136, %p137
      %p140 = scmp.ne.s32.totalorder %s125, %s139
      %p141 = scmp.eq.s32.totalorder %s31, 0
      %p142 = por %p140, %p141
      %s144 = sadd.s32 %s143, 1
      %p147 = scmp.eq.s32.totalorder %s25, 1
      %p148 = scmp.ne.s32.totalorder %s143, %s145
      %p149 = scmp.eq.s32.totalorder %s25, 0
      %p150 = por %p148, %p149
      %p151 = scmp.ne.s32.totalorder %s143, %s145
      %p152 = scmp.eq.s32.totalorder %s30, 1
      %p153 = por %p151, %p152
      %p154 = scmp.ne.s32.totalorder %s145, %s146
      %p155 = scmp.eq.s32.totalorder %s30, 0
      %p156 = por %p154, %p155
      %p157 = scmp.ne.s32.totalorder %s145, %s146
      %p158 = scmp.eq.s32.totalorder %s31, 1
      %p159 = por %p157, %p158
      %p161 = scmp.ne.s32.totalorder %s146, %s160
      %p162 = scmp.eq.s32.totalorder %s31, 0
      %p163 = por %p161, %p162
      %s165 = sadd.s32 %s164, 1
      %p168 = scmp.eq.s32.totalorder %s25, 1
      %p169 = scmp.ne.s32.totalorder %s164, %s166
      %p170 = scmp.eq.s32.totalorder %s25, 0
      %p171 = por %p169, %p170
      %p172 = scmp.ne.s32.totalorder %s164, %s166
      %p173 = scmp.eq.s32.totalorder %s30, 1
      %p174 = por %p172, %p173
      %p175 = scmp.ne.s32.totalorder %s166, %s167
      %p176 = scmp.eq.s32.totalorder %s30, 0
      %p177 = por %p175, %p176
      %p178 = scmp.ne.s32.totalorder %s166, %s167
      %p179 = scmp.eq.s32.totalorder %s31, 1
      %p180 = por %p178, %p179
      %p182 = scmp.ne.s32.totalorder %s167, %s181
      %p183 = scmp.eq.s32.totalorder %s31, 0
      %p184 = por %p182, %p183
      %s186 = sadd.s32 %s185, 1
      %p189 = scmp.eq.s32.totalorder %s25, 1
      %p190 = scmp.ne.s32.totalorder %s185, %s187
      %p191 = scmp.eq.s32.totalorder %s25, 0
      %p192 = por %p190, %p191
      %p193 = scmp.ne.s32.totalorder %s185, %s187
      %p194 = scmp.eq.s32.totalorder %s30, 1
      %p195 = por %p193, %p194
      %p196 = scmp.ne.s32.totalorder %s187, %s188
      %p197 = scmp.eq.s32.totalorder %s30, 0
      %p198 = por %p196, %p197
      %p199 = scmp.ne.s32.totalorder %s187, %s188
      %p200 = scmp.eq.s32.totalorder %s31, 1
      %p201 = por %p199, %p200
      %p203 = scmp.ne.s32.totalorder %s188, %s202
      %p204 = scmp.eq.s32.totalorder %s31, 0
      %p205 = por %p203, %p204
      %s207 = sadd.s32 %s206, 1
      %p210 = scmp.eq.s32.totalorder %s25, 1
      %p211 = scmp.ne.s32.totalorder %s206, %s208
      %p212 = scmp.eq.s32.totalorder %s25, 0
      %p213 = por %p211, %p212
      %p214 = scmp.ne.s32.totalorder %s206, %s208
      %p215 = scmp.eq.s32.totalorder %s30, 1
      %p216 = por %p214, %p215
      %p217 = scmp.ne.s32.totalorder %s208, %s209
      %p218 = scmp.eq.s32.totalorder %s30, 0
      %p219 = por %p217, %p218
      %p220 = scmp.ne.s32.totalorder %s208, %s209
      %p221 = scmp.eq.s32.totalorder %s31, 1
      %p222 = por %p220, %p221
      %p224 = scmp.ne.s32.totalorder %s209, %s223
      %p225 = scmp.eq.s32.totalorder %s31, 0
      %p226 = por %p224, %p225
      %s228 = sadd.s32 %s227, 1
      %p231 = scmp.eq.s32.totalorder %s25, 1
      %p232 = scmp.ne.s32.totalorder %s227, %s229
      %p233 = scmp.eq.s32.totalorder %s25, 0
      %p234 = por %p232, %p233
      %p235 = scmp.ne.s32.totalorder %s227, %s229
      %p236 = scmp.eq.s32.totalorder %s30, 1
      %p237 = por %p235, %p236
      %p238 = scmp.ne.s32.totalorder %s229, %s230
      %p239 = scmp.eq.s32.totalorder %s30, 0
      %p240 = por %p238, %p239
      %p241 = scmp.ne.s32.totalorder %s229, %s230
      %p242 = scmp.eq.s32.totalorder %s31, 1
      %p243 = por %p241, %p242
      %p245 = scmp.ne.s32.totalorder %s230, %s244
      %p246 = scmp.eq.s32.totalorder %s31, 0
      %p247 = por %p245, %p246
      %s249 = sadd.s32 %s248, 1
      %p252 = scmp.eq.s32.totalorder %s25, 1
      %p253 = scmp.ne.s32.totalorder %s248, %s250
      %p254 = scmp.eq.s32.totalorder %s25, 0
      %p255 = por %p253, %p254
      %p256 = scmp.ne.s32.totalorder %s248, %s250
      %p257 = scmp.eq.s32.totalorder %s30, 1
      %p258 = por %p256, %p257
      %p259 = scmp.ne.s32.totalorder %s250, %s251
      %p260 = scmp.eq.s32.totalorder %s30, 0
      %p261 = por %p259, %p260
      %p262 = scmp.ne.s32.totalorder %s250, %s251
      %p263 = scmp.eq.s32.totalorder %s31, 1
      %p264 = por %p262, %p263
      %p266 = scmp.ne.s32.totalorder %s251, %s265
      %p267 = scmp.eq.s32.totalorder %s31, 0
      %p268 = por %p266, %p267
      %s269 = ssub.s32 %s25, %s32
      %p270 = scmp.eq.s32.totalorder %s269, 0
      %s272 = sadd.s32 %s271, 1
      %s273 = scalar_select %p270, %s271, %s272
      %p276 = pneg %p270
      %p277 = scmp.eq.s32.totalorder %s25, 1
      %p278 = por %p276, %p277
      %p279 = scmp.ne.s32.totalorder %s271, %s274
      %p280 = scmp.eq.s32.totalorder %s25, 0
      %p281 = por %p279, %p280
      %p282 = scmp.ne.s32.totalorder %s271, %s274
      %p283 = scmp.eq.s32.totalorder %s30, 1
      %p284 = por %p282, %p283
      %p285 = scmp.ne.s32.totalorder %s274, %s275
      %p286 = scmp.eq.s32.totalorder %s30, 0
      %p287 = por %p285, %p286
      %p288 = scmp.ne.s32.totalorder %s274, %s275
      %p289 = scmp.eq.s32.totalorder %s31, 1
      %p290 = por %p288, %p289
      %p292 = scmp.ne.s32.totalorder %s275, %s291
      %p293 = scmp.eq.s32.totalorder %s31, 0
      %p294 = por %p292, %p293
      %p295 = scmp.le.s32.totalorder 1, %s25
      %p296 = scmp.lt.s32.totalorder %s25, 3
      %p297 = pnand %p295, %p296
      %p298 = pneg %p297
      // Predicated region
      $region9: #{my_net_forward.1} parent=5 // pred_check
        _
      $region10: #{my_net_forward.1} parent=5 // pred_check_branch
        %300 = sbr.rel (%p297) target = $region12
      $region11: #{my_net_forward.1} parent=5 // pred_region
        %s301 = ssub.s32 %s25, 1
        // Predicated region
        $region13: #{my_net_forward.1} parent=11 // pred_check
          %p302 = pneg %p72
        $region14: #{my_net_forward.1} parent=11 // pred_check_branch
          %304 = sbr.rel (%p302) target = $region16
        $region15: #{my_net_forward.1} parent=11 // pred_region
          %s306 = ssub.s32 2304, 2304
          %307 = vsyncadd [#allocation5], %s306
          %s308 = sshll.u32 [#allocation4], 4
          %s309 = int_to_ptr.vmem [resolvable:$true] %s308
          %314 = dma.hbm_to_vmem [thread:$0]  %s1, 2304, %s309, [#allocation5], 128, 128, 8
        $region16: #{my_net_forward.1} parent=11 // pred_fallthru
          _
        // Predicated region
        $region17: #{my_net_forward.1} parent=11 // pred_check
          %p315 = pneg %p93
        $region18: #{my_net_forward.1} parent=11 // pred_check_branch
          %317 = sbr.rel (%p315) target = $region20
        $region19: #{my_net_forward.1} parent=11 // pred_region
          %s319 = ssub.s32 16, 16
          %320 = vsyncadd [#allocation8], %s319
          %s322 = sshll.u32 [#allocation7], 4
          %s323 = int_to_ptr.vmem [resolvable:$true] %s322
          %325 = dma.hbm_to_vmem [thread:$0]  %s2, 16, %s323, [#allocation8]
        $region20: #{my_net_forward.1} parent=11 // pred_fallthru
          _
        // Predicated region
        $region21: #{my_net_forward.1} parent=11 // pred_check
          %p326 = pneg %p114
        $region22: #{my_net_forward.1} parent=11 // pred_check_branch
          %328 = sbr.rel (%p326) target = $region24
        $region23: #{my_net_forward.1} parent=11 // pred_region
          %s330 = ssub.s32 6144, 6144
          %331 = vsyncadd [#allocation8], %s330
          %s332 = sshll.u32 [#allocation9], 4
          %s333 = int_to_ptr.vmem [resolvable:$true] %s332
          %338 = dma.hbm_to_vmem [thread:$0]  %s3, 6144, %s333, [#allocation8], 128, 128, 8
        $region24: #{my_net_forward.1} parent=11 // pred_fallthru
          _
        // Predicated region
        $region25: #{my_net_forward.1} parent=11 // pred_check
          %p339 = pneg %p135
        $region26: #{my_net_forward.1} parent=11 // pred_check_branch
          %341 = sbr.rel (%p339) target = $region28
        $region27: #{my_net_forward.1} parent=11 // pred_region
          %s343 = ssub.s32 16, 16
          %344 = vsyncadd [#allocation11], %s343
          %s346 = sshll.u32 [#allocation10], 4
          %s347 = int_to_ptr.vmem [resolvable:$true] %s346
          %349 = dma.hbm_to_vmem [thread:$0]  %s4, 16, %s347, [#allocation11]
        $region28: #{my_net_forward.1} parent=11 // pred_fallthru
          _
        // Predicated region
        $region29: #{my_net_forward.1} parent=11 // pred_check
          %p350 = pneg %p156
        $region30: #{my_net_forward.1} parent=11 // pred_check_branch
          %352 = sbr.rel (%p350) target = $region32
        $region31: #{my_net_forward.1} parent=11 // pred_region
          %s354 = ssub.s32 49152, 49152
          %355 = vsyncadd [#allocation11], %s354
          %s356 = sshll.u32 [#allocation12], 4
          %s357 = int_to_ptr.vmem [resolvable:$true] %s356
          %362 = dma.hbm_to_vmem [thread:$0]  %s5, 49152, %s357, [#allocation11], 128, 128, 8
        $region32: #{my_net_forward.1} parent=11 // pred_fallthru
          _
        // Predicated region
        $region33: #{my_net_forward.1} parent=11 // pred_check
          %p363 = pneg %p177
        $region34: #{my_net_forward.1} parent=11 // pred_check_branch
          %365 = sbr.rel (%p363) target = $region36
        $region35: #{my_net_forward.1} parent=11 // pred_region
          %s367 = ssub.s32 128, 128
          %368 = vsyncadd [#allocation14], %s367
          %s370 = sshll.u32 [#allocation13], 4
          %s371 = int_to_ptr.vmem [resolvable:$true] %s370
          %373 = dma.hbm_to_vmem [thread:$0]  %s6, 128, %s371, [#allocation14]
        $region36: #{my_net_forward.1} parent=11 // pred_fallthru
          _
        // Predicated region
        $region37: #{my_net_forward.1} parent=11 // pred_check
          %p374 = pneg %p198
        $region38: #{my_net_forward.1} parent=11 // pred_check_branch
          %376 = sbr.rel (%p374) target = $region40
        $region39: #{my_net_forward.1} parent=11 // pred_region
          %s378 = ssub.s32 16384, 16384
          %379 = vsyncadd [#allocation14], %s378
          %s380 = sshll.u32 [#allocation15], 4
          %s381 = int_to_ptr.vmem [resolvable:$true] %s380
          %386 = dma.hbm_to_vmem [thread:$0]  %s7, 16384, %s381, [#allocation14], 128, 128, 8
        $region40: #{my_net_forward.1} parent=11 // pred_fallthru
          _
        // Predicated region
        $region41: #{my_net_forward.1} parent=11 // pred_check
          %p387 = pneg %p219
        $region42: #{my_net_forward.1} parent=11 // pred_check_branch
          %389 = sbr.rel (%p387) target = $region44
        $region43: #{my_net_forward.1} parent=11 // pred_region
          %s391 = ssub.s32 16, 16
          %392 = vsyncadd [#allocation17], %s391
          %s394 = sshll.u32 [#allocation16], 4
          %s395 = int_to_ptr.vmem [resolvable:$true] %s394
          %397 = dma.hbm_to_vmem [thread:$0]  %s8, 16, %s395, [#allocation17]
        $region44: #{my_net_forward.1} parent=11 // pred_fallthru
          _
        // Predicated region
        $region45: #{my_net_forward.1} parent=11 // pred_check
          %p398 = pneg %p240
        $region46: #{my_net_forward.1} parent=11 // pred_check_branch
          %400 = sbr.rel (%p398) target = $region48
        $region47: #{my_net_forward.1} parent=11 // pred_region
          _
        $region48: #{my_net_forward.1} parent=11 // pred_fallthru
          _
        // Predicated region
        $region49: #{my_net_forward.1} parent=11 // pred_check
          %p401 = pneg %p261
        $region50: #{my_net_forward.1} parent=11 // pred_check_branch
          %403 = sbr.rel (%p401) target = $region52
        $region51: #{my_net_forward.1} parent=11 // pred_region
          %s405 = ssub.s32 16, 16
          %406 = vsyncadd [#allocation17], %s405
          %s408 = sshll.u32 [#allocation18], 4
          %s409 = int_to_ptr.vmem [resolvable:$true] %s408
          %411 = dma.hbm_to_vmem [thread:$0]  %s10, 16, %s409, [#allocation17]
        $region52: #{my_net_forward.1} parent=11 // pred_fallthru
          _
      $region12: #{my_net_forward.1} parent=5 // pred_fallthru
        _
      %p412 = scmp.lt.s32.totalorder %s25, 2
      // Predicated region
      $region53: #{my_net_forward.1} parent=5 // pred_check
        %p413 = pneg %p412
      $region54: #{my_net_forward.1} parent=5 // pred_check_branch
        %415 = sbr.rel (%p413) target = $region56
      $region55: #{my_net_forward.1} parent=5 // pred_region
        // Predicated region
        $region57: #{my_net_forward.1} parent=55 // pred_check
          %p416 = pneg %p45
        $region58: #{my_net_forward.1} parent=55 // pred_check_branch
          %418 = sbr.rel (%p416) target = $region60
        $region59: #{my_net_forward.1} parent=55 // pred_region
          %p419 = scmp.lt.s32.totalorder %s25, 1
          %s420 = scalar_select %p419, %s25, 1
          %s421 = smul.addr %s420, 3
          %s422 = smul.addr %s421, 8
          %s423 = scalar_lea.vmem %s0, %s422
        $region60: #{my_net_forward.1} parent=55 // pred_fallthru
          _
      $region56: #{my_net_forward.1} parent=5 // pred_fallthru
        _
      %p424 = scmp.le.s32.totalorder 1, %s25
      %p425 = scmp.lt.s32.totalorder %s25, 3
      %p426 = pnand %p424, %p425
      %p427 = pneg %p426
      // Predicated region
      $region61: #{my_net_forward.1} parent=5 // pred_check
        _
      $region62: #{my_net_forward.1} parent=5 // pred_check_branch
        %429 = sbr.rel (%p426) target = $region64
      $region63: #{my_net_forward.1} parent=5 // pred_region
        %s430 = ssub.s32 %s25, 1
        // Predicated region
        $region65: #{my_net_forward.1} parent=63 // pred_check
          %p431 = pneg %p72
        $region66: #{my_net_forward.1} parent=63 // pred_check_branch
          %433 = sbr.rel (%p431) target = $region68
        $region67: #{my_net_forward.1} parent=63 // pred_region
          %434 = dma.done [#allocation5], 2304
        $region68: #{my_net_forward.1} parent=63 // pred_fallthru
          _
        // Predicated region
        $region69: #{my_net_forward.1} parent=63 // pred_check
          %p435 = pneg %p93
        $region70: #{my_net_forward.1} parent=63 // pred_check_branch
          %437 = sbr.rel (%p435) target = $region72
        $region71: #{my_net_forward.1} parent=63 // pred_region
          %438 = dma.done [#allocation8], 16
        $region72: #{my_net_forward.1} parent=63 // pred_fallthru
          _
        // Predicated region
        $region73: #{my_net_forward.1} parent=63 // pred_check
          %p439 = pneg %p114
        $region74: #{my_net_forward.1} parent=63 // pred_check_branch
          %441 = sbr.rel (%p439) target = $region76
        $region75: #{my_net_forward.1} parent=63 // pred_region
          %442 = dma.done [#allocation8], 6144
        $region76: #{my_net_forward.1} parent=63 // pred_fallthru
          _
        // Predicated region
        $region77: #{my_net_forward.1} parent=63 // pred_check
          %p443 = pneg %p135
        $region78: #{my_net_forward.1} parent=63 // pred_check_branch
          %445 = sbr.rel (%p443) target = $region80
        $region79: #{my_net_forward.1} parent=63 // pred_region
          %446 = dma.done [#allocation11], 16
        $region80: #{my_net_forward.1} parent=63 // pred_fallthru
          _
        // Predicated region
        $region81: #{my_net_forward.1} parent=63 // pred_check
          %p447 = pneg %p156
        $region82: #{my_net_forward.1} parent=63 // pred_check_branch
          %449 = sbr.rel (%p447) target = $region84
        $region83: #{my_net_forward.1} parent=63 // pred_region
          %450 = dma.done [#allocation11], 49152
        $region84: #{my_net_forward.1} parent=63 // pred_fallthru
          _
        // Predicated region
        $region85: #{my_net_forward.1} parent=63 // pred_check
          %p451 = pneg %p177
        $region86: #{my_net_forward.1} parent=63 // pred_check_branch
          %453 = sbr.rel (%p451) target = $region88
        $region87: #{my_net_forward.1} parent=63 // pred_region
          %454 = dma.done [#allocation14], 128
        $region88: #{my_net_forward.1} parent=63 // pred_fallthru
          _
        // Predicated region
        $region89: #{my_net_forward.1} parent=63 // pred_check
          %p455 = pneg %p198
        $region90: #{my_net_forward.1} parent=63 // pred_check_branch
          %457 = sbr.rel (%p455) target = $region92
        $region91: #{my_net_forward.1} parent=63 // pred_region
          %458 = dma.done [#allocation14], 16384
        $region92: #{my_net_forward.1} parent=63 // pred_fallthru
          _
        // Predicated region
        $region93: #{my_net_forward.1} parent=63 // pred_check
          %p459 = pneg %p219
        $region94: #{my_net_forward.1} parent=63 // pred_check_branch
          %461 = sbr.rel (%p459) target = $region96
        $region95: #{my_net_forward.1} parent=63 // pred_region
          %462 = dma.done [#allocation17], 16
        $region96: #{my_net_forward.1} parent=63 // pred_fallthru
          _
        // Predicated region
        $region97: #{my_net_forward.1} parent=63 // pred_check
          %p463 = pneg %p261
        $region98: #{my_net_forward.1} parent=63 // pred_check_branch
          %465 = sbr.rel (%p463) target = $region100
        $region99: #{my_net_forward.1} parent=63 // pred_region
          %466 = dma.done [#allocation17], 16
        $region100: #{my_net_forward.1} parent=63 // pred_fallthru
          _
        %p467 = scmp.lt.s32.totalorder %s30, 1
        %s468 = scalar_select %p467, %s30, 1
        %s469 = smul.addr %s468, 3
        %s470 = smul.addr %s469, 8
        %s471 = scalar_lea.vmem %s0, %s470
        %p472 = pneg %p51
        %p473 = pneg %p48
        %p474 = pneg %p72
        %p475 = pneg %p69
        %p476 = pneg %p93
        %p477 = pneg %p90
        %p478 = pneg %p114
        %p479 = pneg %p111
        %p480 = pneg %p135
        %p481 = pneg %p132
        %p482 = pneg %p156
        %p483 = pneg %p153
        %p484 = pneg %p177
        %p485 = pneg %p174
        %p486 = pneg %p198
        %p487 = pneg %p195
        %p488 = pneg %p219
        %p489 = pneg %p216
        %p490 = pneg %p240
        %p491 = pneg %p237
        %p492 = pneg %p261
        %p493 = pneg %p258
        %p494 = pneg %p287
        %p495 = pneg %p284
        %s496 = sand.u32 %s274, 1
        %s497 = scalar_lea.sflag [#allocation6], %s496
        %s498 = sand.u32 %s274, 1
        %s499 = smul.addr %s498, 16
        %s500 = scalar_lea.vmem [#allocation19], %s499
        %p501 = scmp.lt.s32.totalorder %s30, 1
        %s502 = scalar_select %p501, %s30, 1
        %s503 = smul.addr %s502, 3
        %s504 = smul.addr %s503, 8
        %s505 = scalar_lea.vmem %s0, %s504
        %506 = vst [vmem:[#allocation2] sm:$0xff] 0.0
        %507 = vst [vmem:[#allocation2 + $0x8] sm:$0x3] 0.0
        %v508 = vld [vmem:[#allocation7] sm:$0x1]
        %v509 = vld [vmem:[%s505] sm:$0x1]
        %v510 = vld [vmem:[#allocation4] sm:$0xff]
        %v511 = vld [vmem:[#allocation4 + $0x8] sm:$0xff]
        %v512 = vld [vmem:[#allocation4 + $0x10] sm:$0xff]
        %v513 = vld [vmem:[#allocation4 + $0x18] sm:$0xff]
        %v514 = vld [vmem:[#allocation4 + $0x20] sm:$0xff]
        %v515 = vld [vmem:[#allocation4 + $0x28] sm:$0xff]
        %vm516 = vcmask 392192
        %v518 = vsel %vm516, %v509, 0
        %520 = vmatprep.subr.mxu0 0.0
        %521 = vmatpush1.msra.mxu0 %v510
        %522 = vmatprep.subr.mxu0 0.0
        %523 = vmatpush1.msra.mxu0 %v511
        %524 = vmatprep.subr.mxu0 0.0
        %525 = vmatpush1.msra.mxu0 %v512
        %526 = vmatprep.subr.mxu0 0.0
        %527 = vmatpush1.msra.mxu0 %v513
        %528 = vmatprep.subr.mxu0 0.0
        %529 = vmatpush1.msra.mxu0 %v514
        %530 = vmatprep.subr.mxu0 0.0
        %531 = vmatpush1.msra.mxu0 %v515
        %532 = vmatprep.subr.mxu0 0.0
        %533 = vmatpush1.msra.mxu0 0.0
        %534 = vmatprep.subr.mxu0 0.0
        %535 = vmatpush1.msra.mxu0 0.0
        %536 = vmatprep.subr.mxu0 0.0
        %537 = vmatpush1.msra.mxu0 0.0
        %538 = vmatprep.subr.mxu0 0.0
        %539 = vmatpush1.msra.mxu0 0.0
        %540 = vmatprep.subr.mxu0 0.0
        %541 = vmatpush1.msra.mxu0 0.0
        %542 = vmatprep.subr.mxu0 0.0
        %543 = vmatpush1.msra.mxu0 0.0
        %544 = vmatprep.subr.mxu0 0.0
        %545 = vmatpush1.msra.mxu0 0.0
        %546 = vmatprep.subr.mxu0 0.0
        %547 = vmatpush1.msra.mxu0 0.0
        %548 = vmatprep.subr.mxu0 0.0
        %549 = vmatpush1.msra.mxu0 0.0
        %550 = vmatprep.subr.mxu0 0.0
        %551 = vmatpush1.msra.mxu0 0.0
        %552 = vmatprep.subr.mxu0 0.0
        %553 = vmatpush1.msra.mxu0 0.0
        %554 = vmatprep.subr.mxu0 0.0
        %555 = vmatpush1.msra.mxu0 0.0
        %556 = vmatprep.subr.mxu0 0.0
        %557 = vmatpush1.msra.mxu0 0.0
        %558 = vmatprep.subr.mxu0 0.0
        %559 = vmatpush1.msra.mxu0 0.0
        %560 = vmatprep.subr.mxu0 0.0
        %561 = vmatpush1.msra.mxu0 0.0
        %562 = vmatprep.subr.mxu0 0.0
        %563 = vmatpush1.msra.mxu0 0.0
        %564 = vmatprep.subr.mxu0 0.0
        %565 = vmatpush1.msra.mxu0 0.0
        %566 = vmatprep.subr.mxu0 0.0
        %567 = vmatpush1.msra.mxu0 0.0
        %568 = vmatprep.subr.mxu0 0.0
        %569 = vmatpush1.msra.mxu0 0.0
        %570 = vmatprep.subr.mxu0 0.0
        %571 = vmatpush1.msra.mxu0 0.0
        %572 = vmatprep.subr.mxu0 0.0
        %573 = vmatpush1.msra.mxu0 0.0
        %574 = vmatprep.subr.mxu0 0.0
        %575 = vmatpush1.msra.mxu0 0.0
        %576 = vmatprep.subr.mxu0 0.0
        %577 = vmatpush1.msra.mxu0 0.0
        %578 = vmatprep.subr.mxu0 0.0
        %579 = vmatpush1.msra.mxu0 0.0
        %580 = vmatprep.subr.mxu0 0.0
        %581 = vmatpush1.msra.mxu0 0.0
        %582 = vmatprep.subr.mxu0 0.0
        %583 = vmatpush1.msra.mxu0 0.0
        %584 = vmatprep.mubr.f32.mxu0 0.0
        %585 = vmatmul.mubr.f32.gmra.mrb[0].mxu0 %v518
        %v586 = vpop.f32.mrb[0].mxu0
        %v587 = vadd.f32 0.0, %v586
        %v588 = vpop.f32.mrb[0].mxu0
        %589 = vdwg.mxu0
        %v590 = vadd.f32 %v508, %v587
        %v591 = vld [vmem:[%s505 + $0x1] sm:$0x1]
        %s592 = scalar_lea.vmem [#allocation4], 48
        %v593 = vld [vmem:[%s592] sm:$0xff]
        %v594 = vld [vmem:[%s592 + $0x8] sm:$0xff]
        %v595 = vld [vmem:[%s592 + $0x10] sm:$0xff]
        %v596 = vld [vmem:[%s592 + $0x18] sm:$0xff]
        %v597 = vld [vmem:[%s592 + $0x20] sm:$0xff]
        %v598 = vld [vmem:[%s592 + $0x28] sm:$0xff]
        %v600 = vsel %vm516, %v591, 0
        %602 = vmatprep.subr.mxu0 0.0
        %603 = vmatpush1.msra.mxu0 %v593
        %604 = vmatprep.subr.mxu0 0.0
        %605 = vmatpush1.msra.mxu0 %v594
        %606 = vmatprep.subr.mxu0 0.0
        %607 = vmatpush1.msra.mxu0 %v595
        %608 = vmatprep.subr.mxu0 0.0
        %609 = vmatpush1.msra.mxu0 %v596
        %610 = vmatprep.subr.mxu0 0.0
        %611 = vmatpush1.msra.mxu0 %v597
        %612 = vmatprep.subr.mxu0 0.0
        %613 = vmatpush1.msra.mxu0 %v598
        %614 = vmatprep.subr.mxu0 0.0
        %615 = vmatpush1.msra.mxu0 0.0
        %616 = vmatprep.subr.mxu0 0.0
        %617 = vmatpush1.msra.mxu0 0.0
        %618 = vmatprep.subr.mxu0 0.0
        %619 = vmatpush1.msra.mxu0 0.0
        %620 = vmatprep.subr.mxu0 0.0
        %621 = vmatpush1.msra.mxu0 0.0
        %622 = vmatprep.subr.mxu0 0.0
        %623 = vmatpush1.msra.mxu0 0.0
        %624 = vmatprep.subr.mxu0 0.0
        %625 = vmatpush1.msra.mxu0 0.0
        %626 = vmatprep.subr.mxu0 0.0
        %627 = vmatpush1.msra.mxu0 0.0
        %628 = vmatprep.subr.mxu0 0.0
        %629 = vmatpush1.msra.mxu0 0.0
        %630 = vmatprep.subr.mxu0 0.0
        %631 = vmatpush1.msra.mxu0 0.0
        %632 = vmatprep.subr.mxu0 0.0
        %633 = vmatpush1.msra.mxu0 0.0
        %634 = vmatprep.subr.mxu0 0.0
        %635 = vmatpush1.msra.mxu0 0.0
        %636 = vmatprep.subr.mxu0 0.0
        %637 = vmatpush1.msra.mxu0 0.0
        %638 = vmatprep.subr.mxu0 0.0
        %639 = vmatpush1.msra.mxu0 0.0
        %640 = vmatprep.subr.mxu0 0.0
        %641 = vmatpush1.msra.mxu0 0.0
        %642 = vmatprep.subr.mxu0 0.0
        %643 = vmatpush1.msra.mxu0 0.0
        %644 = vmatprep.subr.mxu0 0.0
        %645 = vmatpush1.msra.mxu0 0.0
        %646 = vmatprep.subr.mxu0 0.0
        %647 = vmatpush1.msra.mxu0 0.0
        %648 = vmatprep.subr.mxu0 0.0
        %649 = vmatpush1.msra.mxu0 0.0
        %650 = vmatprep.subr.mxu0 0.0
        %651 = vmatpush1.msra.mxu0 0.0
        %652 = vmatprep.subr.mxu0 0.0
        %653 = vmatpush1.msra.mxu0 0.0
        %654 = vmatprep.subr.mxu0 0.0
        %655 = vmatpush1.msra.mxu0 0.0
        %656 = vmatprep.subr.mxu0 0.0
        %657 = vmatpush1.msra.mxu0 0.0
        %658 = vmatprep.subr.mxu0 0.0
        %659 = vmatpush1.msra.mxu0 0.0
        %660 = vmatprep.subr.mxu0 0.0
        %661 = vmatpush1.msra.mxu0 0.0
        %662 = vmatprep.subr.mxu0 0.0
        %663 = vmatpush1.msra.mxu0 0.0
        %664 = vmatprep.subr.mxu0 0.0
        %665 = vmatpush1.msra.mxu0 0.0
        %666 = vmatprep.mubr.f32.mxu0 0.0
        %667 = vmatmul.mubr.f32.gmra.mrb[0].mxu0 %v600
        %v668 = vpop.f32.mrb[0].mxu0
        %v669 = vadd.f32 0.0, %v668
        %v670 = vpop.f32.mrb[0].mxu0
        %671 = vdwg.mxu0
        %v672 = vadd.f32 %v590, %v669
        %v673 = vld [vmem:[%s505 + $0x2] sm:$0x1]
        %s674 = scalar_lea.vmem [#allocation4], 96
        %v675 = vld [vmem:[%s674] sm:$0xff]
        %v676 = vld [vmem:[%s674 + $0x8] sm:$0xff]
        %v677 = vld [vmem:[%s674 + $0x10] sm:$0xff]
        %v678 = vld [vmem:[%s674 + $0x18] sm:$0xff]
        %v679 = vld [vmem:[%s674 + $0x20] sm:$0xff]
        %v680 = vld [vmem:[%s674 + $0x28] sm:$0xff]
        %v682 = vsel %vm516, %v673, 0
        %684 = vmatprep.subr.mxu0 0.0
        %685 = vmatpush1.msra.mxu0 %v675
        %686 = vmatprep.subr.mxu0 0.0
        %687 = vmatpush1.msra.mxu0 %v676
        %688 = vmatprep.subr.mxu0 0.0
        %689 = vmatpush1.msra.mxu0 %v677
        %690 = vmatprep.subr.mxu0 0.0
        %691 = vmatpush1.msra.mxu0 %v678
        %692 = vmatprep.subr.mxu0 0.0
        %693 = vmatpush1.msra.mxu0 %v679
        %694 = vmatprep.subr.mxu0 0.0
        %695 = vmatpush1.msra.mxu0 %v680
        %696 = vmatprep.subr.mxu0 0.0
        %697 = vmatpush1.msra.mxu0 0.0
        %698 = vmatprep.subr.mxu0 0.0
        %699 = vmatpush1.msra.mxu0 0.0
        %700 = vmatprep.subr.mxu0 0.0
        %701 = vmatpush1.msra.mxu0 0.0
        %702 = vmatprep.subr.mxu0 0.0
        %703 = vmatpush1.msra.mxu0 0.0
        %704 = vmatprep.subr.mxu0 0.0
        %705 = vmatpush1.msra.mxu0 0.0
        %706 = vmatprep.subr.mxu0 0.0
        %707 = vmatpush1.msra.mxu0 0.0
        %708 = vmatprep.subr.mxu0 0.0
        %709 = vmatpush1.msra.mxu0 0.0
        %710 = vmatprep.subr.mxu0 0.0
        %711 = vmatpush1.msra.mxu0 0.0
        %712 = vmatprep.subr.mxu0 0.0
        %713 = vmatpush1.msra.mxu0 0.0
        %714 = vmatprep.subr.mxu0 0.0
        %715 = vmatpush1.msra.mxu0 0.0
        %716 = vmatprep.subr.mxu0 0.0
        %717 = vmatpush1.msra.mxu0 0.0
        %718 = vmatprep.subr.mxu0 0.0
        %719 = vmatpush1.msra.mxu0 0.0
        %720 = vmatprep.subr.mxu0 0.0
        %721 = vmatpush1.msra.mxu0 0.0
        %722 = vmatprep.subr.mxu0 0.0
        %723 = vmatpush1.msra.mxu0 0.0
        %724 = vmatprep.subr.mxu0 0.0
        %725 = vmatpush1.msra.mxu0 0.0
        %726 = vmatprep.subr.mxu0 0.0
        %727 = vmatpush1.msra.mxu0 0.0
        %728 = vmatprep.subr.mxu0 0.0
        %729 = vmatpush1.msra.mxu0 0.0
        %730 = vmatprep.subr.mxu0 0.0
        %731 = vmatpush1.msra.mxu0 0.0
        %732 = vmatprep.subr.mxu0 0.0
        %733 = vmatpush1.msra.mxu0 0.0
        %734 = vmatprep.subr.mxu0 0.0
        %735 = vmatpush1.msra.mxu0 0.0
        %736 = vmatprep.subr.mxu0 0.0
        %737 = vmatpush1.msra.mxu0 0.0
        %738 = vmatprep.subr.mxu0 0.0
        %739 = vmatpush1.msra.mxu0 0.0
        %740 = vmatprep.subr.mxu0 0.0
        %741 = vmatpush1.msra.mxu0 0.0
        %742 = vmatprep.subr.mxu0 0.0
        %743 = vmatpush1.msra.mxu0 0.0
        %744 = vmatprep.subr.mxu0 0.0
        %745 = vmatpush1.msra.mxu0 0.0
        %746 = vmatprep.subr.mxu0 0.0
        %747 = vmatpush1.msra.mxu0 0.0
        %748 = vmatprep.mubr.f32.mxu0 0.0
        %749 = vmatmul.mubr.f32.gmra.mrb[0].mxu0 %v682
        %v750 = vpop.f32.mrb[0].mxu0
        %v751 = vadd.f32 0.0, %v750
        %v752 = vpop.f32.mrb[0].mxu0
        %753 = vdwg.mxu0
        %v754 = vadd.f32 %v672, %v751
        %v755 = vmin.f32 %v754, 20.0
        %v756 = vmul.f32 %v755, 1.442695
        %v757 = vpow.pop %v756
        %v758 = vadd.f32 %v757, 2.0
        %v759 = vmul.f32 %v757, %v758
        %v760 = vadd.f32 %v759, 2.0
        %v761 = vrcp.pop %v760
        %v762 = vmul.f32 %v759, %v761
        %v763 = vmul.f32 %v754, %v762
        %764 = vst [vmem:[#allocation2 + $0x1] sm:$0x1] %v763
        %v765 = vld [vmem:[#allocation7] sm:$0x1]
        %v766 = vld [vmem:[%s505 + $0x2] sm:$0x1]
        %v767 = vld [vmem:[#allocation4] sm:$0xff]
        %v768 = vld [vmem:[#allocation4 + $0x8] sm:$0xff]
        %v769 = vld [vmem:[#allocation4 + $0x10] sm:$0xff]
        %v770 = vld [vmem:[#allocation4 + $0x18] sm:$0xff]
        %v771 = vld [vmem:[#allocation4 + $0x20] sm:$0xff]
        %v772 = vld [vmem:[#allocation4 + $0x28] sm:$0xff]
        %v774 = vsel %vm516, %v766, 0
        %776 = vmatprep.subr.mxu0 0.0
        %777 = vmatpush1.msra.mxu0 %v767
        %778 = vmatprep.subr.mxu0 0.0
        %779 = vmatpush1.msra.mxu0 %v768
        %780 = vmatprep.subr.mxu0 0.0
        %781 = vmatpush1.msra.mxu0 %v769
        %782 = vmatprep.subr.mxu0 0.0
        %783 = vmatpush1.msra.mxu0 %v770
        %784 = vmatprep.subr.mxu0 0.0
        %785 = vmatpush1.msra.mxu0 %v771
        %786 = vmatprep.subr.mxu0 0.0
        %787 = vmatpush1.msra.mxu0 %v772
        %788 = vmatprep.subr.mxu0 0.0
        %789 = vmatpush1.msra.mxu0 0.0
        %790 = vmatprep.subr.mxu0 0.0
        %791 = vmatpush1.msra.mxu0 0.0
        %792 = vmatprep.subr.mxu0 0.0
        %793 = vmatpush1.msra.mxu0 0.0
        %794 = vmatprep.subr.mxu0 0.0
        %795 = vmatpush1.msra.mxu0 0.0
        %796 = vmatprep.subr.mxu0 0.0
        %797 = vmatpush1.msra.mxu0 0.0
        %798 = vmatprep.subr.mxu0 0.0
        %799 = vmatpush1.msra.mxu0 0.0
        %800 = vmatprep.subr.mxu0 0.0
        %801 = vmatpush1.msra.mxu0 0.0
        %802 = vmatprep.subr.mxu0 0.0
        %803 = vmatpush1.msra.mxu0 0.0
        %804 = vmatprep.subr.mxu0 0.0
        %805 = vmatpush1.msra.mxu0 0.0
        %806 = vmatprep.subr.mxu0 0.0
        %807 = vmatpush1.msra.mxu0 0.0
        %808 = vmatprep.subr.mxu0 0.0
        %809 = vmatpush1.msra.mxu0 0.0
        %810 = vmatprep.subr.mxu0 0.0
        %811 = vmatpush1.msra.mxu0 0.0
        %812 = vmatprep.subr.mxu0 0.0
        %813 = vmatpush1.msra.mxu0 0.0
        %814 = vmatprep.subr.mxu0 0.0
        %815 = vmatpush1.msra.mxu0 0.0
        %816 = vmatprep.subr.mxu0 0.0
        %817 = vmatpush1.msra.mxu0 0.0
        %818 = vmatprep.subr.mxu0 0.0
        %819 = vmatpush1.msra.mxu0 0.0
        %820 = vmatprep.subr.mxu0 0.0
        %821 = vmatpush1.msra.mxu0 0.0
        %822 = vmatprep.subr.mxu0 0.0
        %823 = vmatpush1.msra.mxu0 0.0
        %824 = vmatprep.subr.mxu0 0.0
        %825 = vmatpush1.msra.mxu0 0.0
        %826 = vmatprep.subr.mxu0 0.0
        %827 = vmatpush1.msra.mxu0 0.0
        %828 = vmatprep.subr.mxu0 0.0
        %829 = vmatpush1.msra.mxu0 0.0
        %830 = vmatprep.subr.mxu0 0.0
        %831 = vmatpush1.msra.mxu0 0.0
        %832 = vmatprep.subr.mxu0 0.0
        %833 = vmatpush1.msra.mxu0 0.0
        %834 = vmatprep.subr.mxu0 0.0
        %835 = vmatpush1.msra.mxu0 0.0
        %836 = vmatprep.subr.mxu0 0.0
        %837 = vmatpush1.msra.mxu0 0.0
        %838 = vmatprep.subr.mxu0 0.0
        %839 = vmatpush1.msra.mxu0 0.0
        %840 = vmatprep.mubr.f32.mxu0 0.0
        %841 = vmatmul.mubr.f32.gmra.mrb[0].mxu0 %v774
        %v842 = vpop.f32.mrb[0].mxu0
        %v843 = vadd.f32 0.0, %v842
        %v844 = vpop.f32.mrb[0].mxu0
        %845 = vdwg.mxu0
        %v846 = vadd.f32 %v765, %v843
        %v847 = vld [vmem:[%s505 + $0x3] sm:$0x1]
        %v848 = vld [vmem:[%s592] sm:$0xff]
        %v849 = vld [vmem:[%s592 + $0x8] sm:$0xff]
        %v850 = vld [vmem:[%s592 + $0x10] sm:$0xff]
        %v851 = vld [vmem:[%s592 + $0x18] sm:$0xff]
        %v852 = vld [vmem:[%s592 + $0x20] sm:$0xff]
        %v853 = vld [vmem:[%s592 + $0x28] sm:$0xff]
        %v855 = vsel %vm516, %v847, 0
        %857 = vmatprep.subr.mxu0 0.0
        %858 = vmatpush1.msra.mxu0 %v848
        %859 = vmatprep.subr.mxu0 0.0
        %860 = vmatpush1.msra.mxu0 %v849
        %861 = vmatprep.subr.mxu0 0.0
        %862 = vmatpush1.msra.mxu0 %v850
        %863 = vmatprep.subr.mxu0 0.0
        %864 = vmatpush1.msra.mxu0 %v851
        %865 = vmatprep.subr.mxu0 0.0
        %866 = vmatpush1.msra.mxu0 %v852
        %867 = vmatprep.subr.mxu0 0.0
        %868 = vmatpush1.msra.mxu0 %v853
        %869 = vmatprep.subr.mxu0 0.0
        %870 = vmatpush1.msra.mxu0 0.0
        %871 = vmatprep.subr.mxu0 0.0
        %872 = vmatpush1.msra.mxu0 0.0
        %873 = vmatprep.subr.mxu0 0.0
        %874 = vmatpush1.msra.mxu0 0.0
        %875 = vmatprep.subr.mxu0 0.0
        %876 = vmatpush1.msra.mxu0 0.0
        %877 = vmatprep.subr.mxu0 0.0
        %878 = vmatpush1.msra.mxu0 0.0
        %879 = vmatprep.subr.mxu0 0.0
        %880 = vmatpush1.msra.mxu0 0.0
        %881 = vmatprep.subr.mxu0 0.0
        %882 = vmatpush1.msra.mxu0 0.0
        %883 = vmatprep.subr.mxu0 0.0
        %884 = vmatpush1.msra.mxu0 0.0
        %885 = vmatprep.subr.mxu0 0.0
        %886 = vmatpush1.msra.mxu0 0.0
        %887 = vmatprep.subr.mxu0 0.0
        %888 = vmatpush1.msra.mxu0 0.0
        %889 = vmatprep.subr.mxu0 0.0
        %890 = vmatpush1.msra.mxu0 0.0
        %891 = vmatprep.subr.mxu0 0.0
        %892 = vmatpush1.msra.mxu0 0.0
        %893 = vmatprep.subr.mxu0 0.0
        %894 = vmatpush1.msra.mxu0 0.0
        %895 = vmatprep.subr.mxu0 0.0
        %896 = vmatpush1.msra.mxu0 0.0
        %897 = vmatprep.subr.mxu0 0.0
        %898 = vmatpush1.msra.mxu0 0.0
        %899 = vmatprep.subr.mxu0 0.0
        %900 = vmatpush1.msra.mxu0 0.0
        %901 = vmatprep.subr.mxu0 0.0
        %902 = vmatpush1.msra.mxu0 0.0
        %903 = vmatprep.subr.mxu0 0.0
        %904 = vmatpush1.msra.mxu0 0.0
        %905 = vmatprep.subr.mxu0 0.0
        %906 = vmatpush1.msra.mxu0 0.0
        %907 = vmatprep.subr.mxu0 0.0
        %908 = vmatpush1.msra.mxu0 0.0
        %909 = vmatprep.subr.mxu0 0.0
        %910 = vmatpush1.msra.mxu0 0.0
        %911 = vmatprep.subr.mxu0 0.0
        %912 = vmatpush1.msra.mxu0 0.0
        %913 = vmatprep.subr.mxu0 0.0
        %914 = vmatpush1.msra.mxu0 0.0
        %915 = vmatprep.subr.mxu0 0.0
        %916 = vmatpush1.msra.mxu0 0.0
        %917 = vmatprep.subr.mxu0 0.0
        %918 = vmatpush1.msra.mxu0 0.0
        %919 = vmatprep.subr.mxu0 0.0
        %920 = vmatpush1.msra.mxu0 0.0
        %921 = vmatprep.mubr.f32.mxu0 0.0
        %922 = vmatmul.mubr.f32.gmra.mrb[0].mxu0 %v855
        %v923 = vpop.f32.mrb[0].mxu0
        %v924 = vadd.f32 0.0, %v923
        %v925 = vpop.f32.mrb[0].mxu0
        %926 = vdwg.mxu0
        %v927 = vadd.f32 %v846, %v924
        %v928 = vld [vmem:[%s505 + $0x4] sm:$0x1]
        %v929 = vld [vmem:[%s674] sm:$0xff]
        %v930 = vld [vmem:[%s674 + $0x8] sm:$0xff]
        %v931 = vld [vmem:[%s674 + $0x10] sm:$0xff]
        %v932 = vld [vmem:[%s674 + $0x18] sm:$0xff]
        %v933 = vld [vmem:[%s674 + $0x20] sm:$0xff]
        %v934 = vld [vmem:[%s674 + $0x28] sm:$0xff]
        %v936 = vsel %vm516, %v928, 0
        %938 = vmatprep.subr.mxu0 0.0
        %939 = vmatpush1.msra.mxu0 %v929
        %940 = vmatprep.subr.mxu0 0.0
        %941 = vmatpush1.msra.mxu0 %v930
        %942 = vmatprep.subr.mxu0 0.0
        %943 = vmatpush1.msra.mxu0 %v931
        %944 = vmatprep.subr.mxu0 0.0
        %945 = vmatpush1.msra.mxu0 %v932
        %946 = vmatprep.subr.mxu0 0.0
        %947 = vmatpush1.msra.mxu0 %v933
        %948 = vmatprep.subr.mxu0 0.0
        %949 = vmatpush1.msra.mxu0 %v934
        %950 = vmatprep.subr.mxu0 0.0
        %951 = vmatpush1.msra.mxu0 0.0
        %952 = vmatprep.subr.mxu0 0.0
        %953 = vmatpush1.msra.mxu0 0.0
        %954 = vmatprep.subr.mxu0 0.0
        %955 = vmatpush1.msra.mxu0 0.0
        %956 = vmatprep.subr.mxu0 0.0
        %957 = vmatpush1.msra.mxu0 0.0
        %958 = vmatprep.subr.mxu0 0.0
        %959 = vmatpush1.msra.mxu0 0.0
        %960 = vmatprep.subr.mxu0 0.0
        %961 = vmatpush1.msra.mxu0 0.0
        %962 = vmatprep.subr.mxu0 0.0
        %963 = vmatpush1.msra.mxu0 0.0
        %964 = vmatprep.subr.mxu0 0.0
        %965 = vmatpush1.msra.mxu0 0.0
        %966 = vmatprep.subr.mxu0 0.0
        %967 = vmatpush1.msra.mxu0 0.0
        %968 = vmatprep.subr.mxu0 0.0
        %969 = vmatpush1.msra.mxu0 0.0
        %970 = vmatprep.subr.mxu0 0.0
        %971 = vmatpush1.msra.mxu0 0.0
        %972 = vmatprep.subr.mxu0 0.0
        %973 = vmatpush1.msra.mxu0 0.0
        %974 = vmatprep.subr.mxu0 0.0
        %975 = vmatpush1.msra.mxu0 0.0
        %976 = vmatprep.subr.mxu0 0.0
        %977 = vmatpush1.msra.mxu0 0.0
        %978 = vmatprep.subr.mxu0 0.0
        %979 = vmatpush1.msra.mxu0 0.0
        %980 = vmatprep.subr.mxu0 0.0
        %981 = vmatpush1.msra.mxu0 0.0
        %982 = vmatprep.subr.mxu0 0.0
        %983 = vmatpush1.msra.mxu0 0.0
        %984 = vmatprep.subr.mxu0 0.0
        %985 = vmatpush1.msra.mxu0 0.0
        %986 = vmatprep.subr.mxu0 0.0
        %987 = vmatpush1.msra.mxu0 0.0
        %988 = vmatprep.subr.mxu0 0.0
        %989 = vmatpush1.msra.mxu0 0.0
        %990 = vmatprep.subr.mxu0 0.0
        %991 = vmatpush1.msra.mxu0 0.0
        %992 = vmatprep.subr.mxu0 0.0
        %993 = vmatpush1.msra.mxu0 0.0
        %994 = vmatprep.subr.mxu0 0.0
        %995 = vmatpush1.msra.mxu0 0.0
        %996 = vmatprep.subr.mxu0 0.0
        %997 = vmatpush1.msra.mxu0 0.0
        %998 = vmatprep.subr.mxu0 0.0
        %999 = vmatpush1.msra.mxu0 0.0
        %1000 = vmatprep.subr.mxu0 0.0
        %1001 = vmatpush1.msra.mxu0 0.0
        %1002 = vmatprep.mubr.f32.mxu0 0.0
        %1003 = vmatmul.mubr.f32.gmra.mrb[0].mxu0 %v936
        %v1004 = vpop.f32.mrb[0].mxu0
        %v1005 = vadd.f32 0.0, %v1004
        %v1006 = vpop.f32.mrb[0].mxu0
        %1007 = vdwg.mxu0
        %v1008 = vadd.f32 %v927, %v1005
        %v1009 = vmin.f32 %v1008, 20.0
        %v1010 = vmul.f32 %v1009, 1.442695
        %v1011 = vpow.pop %v1010
        %v1012 = vadd.f32 %v1011, 2.0
        %v1013 = vmul.f32 %v1011, %v1012
        %v1014 = vadd.f32 %v1013, 2.0
        %v1015 = vrcp.pop %v1014
        %v1016 = vmul.f32 %v1013, %v1015
        %v1017 = vmul.f32 %v1008, %v1016
        %1018 = vst [vmem:[#allocation2 + $0x2] sm:$0x1] %v1017
        %v1019 = vld [vmem:[#allocation7] sm:$0x1]
        %v1020 = vld [vmem:[%s505 + $0x4] sm:$0x1]
        %v1021 = vld [vmem:[#allocation4] sm:$0xff]
        %v1022 = vld [vmem:[#allocation4 + $0x8] sm:$0xff]
        %v1023 = vld [vmem:[#allocation4 + $0x10] sm:$0xff]
        %v1024 = vld [vmem:[#allocation4 + $0x18] sm:$0xff]
        %v1025 = vld [vmem:[#allocation4 + $0x20] sm:$0xff]
        %v1026 = vld [vmem:[#allocation4 + $0x28] sm:$0xff]
        %v1028 = vsel %vm516, %v1020, 0
        %1030 = vmatprep.subr.mxu0 0.0
        %1031 = vmatpush1.msra.mxu0 %v1021
        %1032 = vmatprep.subr.mxu0 0.0
        %1033 = vmatpush1.msra.mxu0 %v1022
        %1034 = vmatprep.subr.mxu0 0.0
        %1035 = vmatpush1.msra.mxu0 %v1023
        %1036 = vmatprep.subr.mxu0 0.0
        %1037 = vmatpush1.msra.mxu0 %v1024
        %1038 = vmatprep.subr.mxu0 0.0
        %1039 = vmatpush1.msra.mxu0 %v1025
        %1040 = vmatprep.subr.mxu0 0.0
        %1041 = vmatpush1.msra.mxu0 %v1026
        %1042 = vmatprep.subr.mxu0 0.0
        %1043 = vmatpush1.msra.mxu0 0.0
        %1044 = vmatprep.subr.mxu0 0.0
        %1045 = vmatpush1.msra.mxu0 0.0
        %1046 = vmatprep.subr.mxu0 0.0
        %1047 = vmatpush1.msra.mxu0 0.0
        %1048 = vmatprep.subr.mxu0 0.0
        %1049 = vmatpush1.msra.mxu0 0.0
        %1050 = vmatprep.subr.mxu0 0.0
        %1051 = vmatpush1.msra.mxu0 0.0
        %1052 = vmatprep.subr.mxu0 0.0
        %1053 = vmatpush1.msra.mxu0 0.0
        %1054 = vmatprep.subr.mxu0 0.0
        %1055 = vmatpush1.msra.mxu0 0.0
        %1056 = vmatprep.subr.mxu0 0.0
        %1057 = vmatpush1.msra.mxu0 0.0
        %1058 = vmatprep.subr.mxu0 0.0
        %1059 = vmatpush1.msra.mxu0 0.0
        %1060 = vmatprep.subr.mxu0 0.0
        %1061 = vmatpush1.msra.mxu0 0.0
        %1062 = vmatprep.subr.mxu0 0.0
        %1063 = vmatpush1.msra.mxu0 0.0
        %1064 = vmatprep.subr.mxu0 0.0
        %1065 = vmatpush1.msra.mxu0 0.0
        %1066 = vmatprep.subr.mxu0 0.0
        %1067 = vmatpush1.msra.mxu0 0.0
        %1068 = vmatprep.subr.mxu0 0.0
        %1069 = vmatpush1.msra.mxu0 0.0
        %1070 = vmatprep.subr.mxu0 0.0
        %1071 = vmatpush1.msra.mxu0 0.0
        %1072 = vmatprep.subr.mxu0 0.0
        %1073 = vmatpush1.msra.mxu0 0.0
        %1074 = vmatprep.subr.mxu0 0.0
        %1075 = vmatpush1.msra.mxu0 0.0
        %1076 = vmatprep.subr.mxu0 0.0
        %1077 = vmatpush1.msra.mxu0 0.0
        %1078 = vmatprep.subr.mxu0 0.0
        %1079 = vmatpush1.msra.mxu0 0.0
        %1080 = vmatprep.subr.mxu0 0.0
        %1081 = vmatpush1.msra.mxu0 0.0
        %1082 = vmatprep.subr.mxu0 0.0
        %1083 = vmatpush1.msra.mxu0 0.0
        %1084 = vmatprep.subr.mxu0 0.0
        %1085 = vmatpush1.msra.mxu0 0.0
        %1086 = vmatprep.subr.mxu0 0.0
        %1087 = vmatpush1.msra.mxu0 0.0
        %1088 = vmatprep.subr.mxu0 0.0
        %1089 = vmatpush1.msra.mxu0 0.0
        %1090 = vmatprep.subr.mxu0 0.0
        %1091 = vmatpush1.msra.mxu0 0.0
        %1092 = vmatprep.subr.mxu0 0.0
        %1093 = vmatpush1.msra.mxu0 0.0
        %1094 = vmatprep.mubr.f32.mxu0 0.0
        %1095 = vmatmul.mubr.f32.gmra.mrb[0].mxu0 %v1028
        %v1096 = vpop.f32.mrb[0].mxu0
        %v1097 = vadd.f32 0.0, %v1096
        %v1098 = vpop.f32.mrb[0].mxu0
        %1099 = vdwg.mxu0
        %v1100 = vadd.f32 %v1019, %v1097
        %v1101 = vld [vmem:[%s505 + $0x5] sm:$0x1]
        %v1102 = vld [vmem:[%s592] sm:$0xff]
        %v1103 = vld [vmem:[%s592 + $0x8] sm:$0xff]
        %v1104 = vld [vmem:[%s592 + $0x10] sm:$0xff]
        %v1105 = vld [vmem:[%s592 + $0x18] sm:$0xff]
        %v1106 = vld [vmem:[%s592 + $0x20] sm:$0xff]
        %v1107 = vld [vmem:[%s592 + $0x28] sm:$0xff]
        %v1109 = vsel %vm516, %v1101, 0
        %1111 = vmatprep.subr.mxu0 0.0
        %1112 = vmatpush1.msra.mxu0 %v1102
        %1113 = vmatprep.subr.mxu0 0.0
        %1114 = vmatpush1.msra.mxu0 %v1103
        %1115 = vmatprep.subr.mxu0 0.0
        %1116 = vmatpush1.msra.mxu0 %v1104
        %1117 = vmatprep.subr.mxu0 0.0
        %1118 = vmatpush1.msra.mxu0 %v1105
        %1119 = vmatprep.subr.mxu0 0.0
        %1120 = vmatpush1.msra.mxu0 %v1106
        %1121 = vmatprep.subr.mxu0 0.0
        %1122 = vmatpush1.msra.mxu0 %v1107
        %1123 = vmatprep.subr.mxu0 0.0
        %1124 = vmatpush1.msra.mxu0 0.0
        %1125 = vmatprep.subr.mxu0 0.0
        %1126 = vmatpush1.msra.mxu0 0.0
        %1127 = vmatprep.subr.mxu0 0.0
        %1128 = vmatpush1.msra.mxu0 0.0
        %1129 = vmatprep.subr.mxu0 0.0
        %1130 = vmatpush1.msra.mxu0 0.0
        %1131 = vmatprep.subr.mxu0 0.0
        %1132 = vmatpush1.msra.mxu0 0.0
        %1133 = vmatprep.subr.mxu0 0.0
        %1134 = vmatpush1.msra.mxu0 0.0
        %1135 = vmatprep.subr.mxu0 0.0
        %1136 = vmatpush1.msra.mxu0 0.0
        %1137 = vmatprep.subr.mxu0 0.0
        %1138 = vmatpush1.msra.mxu0 0.0
        %1139 = vmatprep.subr.mxu0 0.0
        %1140 = vmatpush1.msra.mxu0 0.0
        %1141 = vmatprep.subr.mxu0 0.0
        %1142 = vmatpush1.msra.mxu0 0.0
        %1143 = vmatprep.subr.mxu0 0.0
        %1144 = vmatpush1.msra.mxu0 0.0
        %1145 = vmatprep.subr.mxu0 0.0
        %1146 = vmatpush1.msra.mxu0 0.0
        %1147 = vmatprep.subr.mxu0 0.0
        %1148 = vmatpush1.msra.mxu0 0.0
        %1149 = vmatprep.subr.mxu0 0.0
        %1150 = vmatpush1.msra.mxu0 0.0
        %1151 = vmatprep.subr.mxu0 0.0
        %1152 = vmatpush1.msra.mxu0 0.0
        %1153 = vmatprep.subr.mxu0 0.0
        %1154 = vmatpush1.msra.mxu0 0.0
        %1155 = vmatprep.subr.mxu0 0.0
        %1156 = vmatpush1.msra.mxu0 0.0
        %1157 = vmatprep.subr.mxu0 0.0
        %1158 = vmatpush1.msra.mxu0 0.0
        %1159 = vmatprep.subr.mxu0 0.0
        %1160 = vmatpush1.msra.mxu0 0.0
        %1161 = vmatprep.subr.mxu0 0.0
        %1162 = vmatpush1.msra.mxu0 0.0
        %1163 = vmatprep.subr.mxu0 0.0
        %1164 = vmatpush1.msra.mxu0 0.0
        %1165 = vmatprep.subr.mxu0 0.0
        %1166 = vmatpush1.msra.mxu0 0.0
        %1167 = vmatprep.subr.mxu0 0.0
        %1168 = vmatpush1.msra.mxu0 0.0
        %1169 = vmatprep.subr.mxu0 0.0
        %1170 = vmatpush1.msra.mxu0 0.0
        %1171 = vmatprep.subr.mxu0 0.0
        %1172 = vmatpush1.msra.mxu0 0.0
        %1173 = vmatprep.subr.mxu0 0.0
        %1174 = vmatpush1.msra.mxu0 0.0
        %1175 = vmatprep.mubr.f32.mxu0 0.0
        %1176 = vmatmul.mubr.f32.gmra.mrb[0].mxu0 %v1109
        %v1177 = vpop.f32.mrb[0].mxu0
        %v1178 = vadd.f32 0.0, %v1177
        %v1179 = vpop.f32.mrb[0].mxu0
        %1180 = vdwg.mxu0
        %v1181 = vadd.f32 %v1100, %v1178
        %v1182 = vld [vmem:[%s505 + $0x6] sm:$0x1]
        %v1183 = vld [vmem:[%s674] sm:$0xff]
        %v1184 = vld [vmem:[%s674 + $0x8] sm:$0xff]
        %v1185 = vld [vmem:[%s674 + $0x10] sm:$0xff]
        %v1186 = vld [vmem:[%s674 + $0x18] sm:$0xff]
        %v1187 = vld [vmem:[%s674 + $0x20] sm:$0xff]
        %v1188 = vld [vmem:[%s674 + $0x28] sm:$0xff]
        %v1190 = vsel %vm516, %v1182, 0
        %1192 = vmatprep.subr.mxu0 0.0
        %1193 = vmatpush1.msra.mxu0 %v1183
        %1194 = vmatprep.subr.mxu0 0.0
        %1195 = vmatpush1.msra.mxu0 %v1184
        %1196 = vmatprep.subr.mxu0 0.0
        %1197 = vmatpush1.msra.mxu0 %v1185
        %1198 = vmatprep.subr.mxu0 0.0
        %1199 = vmatpush1.msra.mxu0 %v1186
        %1200 = vmatprep.subr.mxu0 0.0
        %1201 = vmatpush1.msra.mxu0 %v1187
        %1202 = vmatprep.subr.mxu0 0.0
        %1203 = vmatpush1.msra.mxu0 %v1188
        %1204 = vmatprep.subr.mxu0 0.0
        %1205 = vmatpush1.msra.mxu0 0.0
        %1206 = vmatprep.subr.mxu0 0.0
        %1207 = vmatpush1.msra.mxu0 0.0
        %1208 = vmatprep.subr.mxu0 0.0
        %1209 = vmatpush1.msra.mxu0 0.0
        %1210 = vmatprep.subr.mxu0 0.0
        %1211 = vmatpush1.msra.mxu0 0.0
        %1212 = vmatprep.subr.mxu0 0.0
        %1213 = vmatpush1.msra.mxu0 0.0
        %1214 = vmatprep.subr.mxu0 0.0
        %1215 = vmatpush1.msra.mxu0 0.0
        %1216 = vmatprep.subr.mxu0 0.0
        %1217 = vmatpush1.msra.mxu0 0.0
        %1218 = vmatprep.subr.mxu0 0.0
        %1219 = vmatpush1.msra.mxu0 0.0
        %1220 = vmatprep.subr.mxu0 0.0
        %1221 = vmatpush1.msra.mxu0 0.0
        %1222 = vmatprep.subr.mxu0 0.0
        %1223 = vmatpush1.msra.mxu0 0.0
        %1224 = vmatprep.subr.mxu0 0.0
        %1225 = vmatpush1.msra.mxu0 0.0
        %1226 = vmatprep.subr.mxu0 0.0
        %1227 = vmatpush1.msra.mxu0 0.0
        %1228 = vmatprep.subr.mxu0 0.0
        %1229 = vmatpush1.msra.mxu0 0.0
        %1230 = vmatprep.subr.mxu0 0.0
        %1231 = vmatpush1.msra.mxu0 0.0
        %1232 = vmatprep.subr.mxu0 0.0
        %1233 = vmatpush1.msra.mxu0 0.0
        %1234 = vmatprep.subr.mxu0 0.0
        %1235 = vmatpush1.msra.mxu0 0.0
        %1236 = vmatprep.subr.mxu0 0.0
        %1237 = vmatpush1.msra.mxu0 0.0
        %1238 = vmatprep.subr.mxu0 0.0
        %1239 = vmatpush1.msra.mxu0 0.0
        %1240 = vmatprep.subr.mxu0 0.0
        %1241 = vmatpush1.msra.mxu0 0.0
        %1242 = vmatprep.subr.mxu0 0.0
        %1243 = vmatpush1.msra.mxu0 0.0
        %1244 = vmatprep.subr.mxu0 0.0
        %1245 = vmatpush1.msra.mxu0 0.0
        %1246 = vmatprep.subr.mxu0 0.0
        %1247 = vmatpush1.msra.mxu0 0.0
        %1248 = vmatprep.subr.mxu0 0.0
        %1249 = vmatpush1.msra.mxu0 0.0
        %1250 = vmatprep.subr.mxu0 0.0
        %1251 = vmatpush1.msra.mxu0 0.0
        %1252 = vmatprep.subr.mxu0 0.0
        %1253 = vmatpush1.msra.mxu0 0.0
        %1254 = vmatprep.subr.mxu0 0.0
        %1255 = vmatpush1.msra.mxu0 0.0
        %1256 = vmatprep.mubr.f32.mxu0 0.0
        %1257 = vmatmul.mubr.f32.gmra.mrb[0].mxu0 %v1190
        %v1258 = vpop.f32.mrb[0].mxu0
        %v1259 = vadd.f32 0.0, %v1258
        %v1260 = vpop.f32.mrb[0].mxu0
        %1261 = vdwg.mxu0
        %v1262 = vadd.f32 %v1181, %v1259
        %v1263 = vmin.f32 %v1262, 20.0
        %v1264 = vmul.f32 %v1263, 1.442695
        %v1265 = vpow.pop %v1264
        %v1266 = vadd.f32 %v1265, 2.0
        %v1267 = vmul.f32 %v1265, %v1266
        %v1268 = vadd.f32 %v1267, 2.0
        %v1269 = vrcp.pop %v1268
        %v1270 = vmul.f32 %v1267, %v1269
        %v1271 = vmul.f32 %v1262, %v1270
        %1272 = vst [vmem:[#allocation2 + $0x3] sm:$0x1] %v1271
        %v1273 = vld [vmem:[#allocation7] sm:$0x1]
        %v1274 = vld [vmem:[%s505 + $0x6] sm:$0x1]
        %v1275 = vld [vmem:[#allocation4] sm:$0xff]
        %v1276 = vld [vmem:[#allocation4 + $0x8] sm:$0xff]
        %v1277 = vld [vmem:[#allocation4 + $0x10] sm:$0xff]
        %v1278 = vld [vmem:[#allocation4 + $0x18] sm:$0xff]
        %v1279 = vld [vmem:[#allocation4 + $0x20] sm:$0xff]
        %v1280 = vld [vmem:[#allocation4 + $0x28] sm:$0xff]
        %v1282 = vsel %vm516, %v1274, 0
        %1284 = vmatprep.subr.mxu0 0.0
        %1285 = vmatpush1.msra.mxu0 %v1275
        %1286 = vmatprep.subr.mxu0 0.0
        %1287 = vmatpush1.msra.mxu0 %v1276
        %1288 = vmatprep.subr.mxu0 0.0
        %1289 = vmatpush1.msra.mxu0 %v1277
        %1290 = vmatprep.subr.mxu0 0.0
        %1291 = vmatpush1.msra.mxu0 %v1278
        %1292 = vmatprep.subr.mxu0 0.0
        %1293 = vmatpush1.msra.mxu0 %v1279
        %1294 = vmatprep.subr.mxu0 0.0
        %1295 = vmatpush1.msra.mxu0 %v1280
        %1296 = vmatprep.subr.mxu0 0.0
        %1297 = vmatpush1.msra.mxu0 0.0
        %1298 = vmatprep.subr.mxu0 0.0
        %1299 = vmatpush1.msra.mxu0 0.0
        %1300 = vmatprep.subr.mxu0 0.0
        %1301 = vmatpush1.msra.mxu0 0.0
        %1302 = vmatprep.subr.mxu0 0.0
        %1303 = vmatpush1.msra.mxu0 0.0
        %1304 = vmatprep.subr.mxu0 0.0
        %1305 = vmatpush1.msra.mxu0 0.0
        %1306 = vmatprep.subr.mxu0 0.0
        %1307 = vmatpush1.msra.mxu0 0.0
        %1308 = vmatprep.subr.mxu0 0.0
        %1309 = vmatpush1.msra.mxu0 0.0
        %1310 = vmatprep.subr.mxu0 0.0
        %1311 = vmatpush1.msra.mxu0 0.0
        %1312 = vmatprep.subr.mxu0 0.0
        %1313 = vmatpush1.msra.mxu0 0.0
        %1314 = vmatprep.subr.mxu0 0.0
        %1315 = vmatpush1.msra.mxu0 0.0
        %1316 = vmatprep.subr.mxu0 0.0
        %1317 = vmatpush1.msra.mxu0 0.0
        %1318 = vmatprep.subr.mxu0 0.0
        %1319 = vmatpush1.msra.mxu0 0.0
        %1320 = vmatprep.subr.mxu0 0.0
        %1321 = vmatpush1.msra.mxu0 0.0
        %1322 = vmatprep.subr.mxu0 0.0
        %1323 = vmatpush1.msra.mxu0 0.0
        %1324 = vmatprep.subr.mxu0 0.0
        %1325 = vmatpush1.msra.mxu0 0.0
        %1326 = vmatprep.subr.mxu0 0.0
        %1327 = vmatpush1.msra.mxu0 0.0
        %1328 = vmatprep.subr.mxu0 0.0
        %1329 = vmatpush1.msra.mxu0 0.0
        %1330 = vmatprep.subr.mxu0 0.0
        %1331 = vmatpush1.msra.mxu0 0.0
        %1332 = vmatprep.subr.mxu0 0.0
        %1333 = vmatpush1.msra.mxu0 0.0
        %1334 = vmatprep.subr.mxu0 0.0
        %1335 = vmatpush1.msra.mxu0 0.0
        %1336 = vmatprep.subr.mxu0 0.0
        %1337 = vmatpush1.msra.mxu0 0.0
        %1338 = vmatprep.subr.mxu0 0.0
        %1339 = vmatpush1.msra.mxu0 0.0
        %1340 = vmatprep.subr.mxu0 0.0
        %1341 = vmatpush1.msra.mxu0 0.0
        %1342 = vmatprep.subr.mxu0 0.0
        %1343 = vmatpush1.msra.mxu0 0.0
        %1344 = vmatprep.subr.mxu0 0.0
        %1345 = vmatpush1.msra.mxu0 0.0
        %1346 = vmatprep.subr.mxu0 0.0
        %1347 = vmatpush1.msra.mxu0 0.0
        %1348 = vmatprep.mubr.f32.mxu0 0.0
        %1349 = vmatmul.mubr.f32.gmra.mrb[0].mxu0 %v1282
        %v1350 = vpop.f32.mrb[0].mxu0
        %v1351 = vadd.f32 0.0, %v1350
        %v1352 = vpop.f32.mrb[0].mxu0
        %1353 = vdwg.mxu0
        %v1354 = vadd.f32 %v1273, %v1351
        %v1355 = vld [vmem:[%s505 + $0x7] sm:$0x1]
        %v1356 = vld [vmem:[%s592] sm:$0xff]
        %v1357 = vld [vmem:[%s592 + $0x8] sm:$0xff]
        %v1358 = vld [vmem:[%s592 + $0x10] sm:$0xff]
        %v1359 = vld [vmem:[%s592 + $0x18] sm:$0xff]
        %v1360 = vld [vmem:[%s592 + $0x20] sm:$0xff]
        %v1361 = vld [vmem:[%s592 + $0x28] sm:$0xff]
        %v1363 = vsel %vm516, %v1355, 0
        %1365 = vmatprep.subr.mxu0 0.0
        %1366 = vmatpush1.msra.mxu0 %v1356
        %1367 = vmatprep.subr.mxu0 0.0
        %1368 = vmatpush1.msra.mxu0 %v1357
        %1369 = vmatprep.subr.mxu0 0.0
        %1370 = vmatpush1.msra.mxu0 %v1358
        %1371 = vmatprep.subr.mxu0 0.0
        %1372 = vmatpush1.msra.mxu0 %v1359
        %1373 = vmatprep.subr.mxu0 0.0
        %1374 = vmatpush1.msra.mxu0 %v1360
        %1375 = vmatprep.subr.mxu0 0.0
        %1376 = vmatpush1.msra.mxu0 %v1361
        %1377 = vmatprep.subr.mxu0 0.0
        %1378 = vmatpush1.msra.mxu0 0.0
        %1379 = vmatprep.subr.mxu0 0.0
        %1380 = vmatpush1.msra.mxu0 0.0
        %1381 = vmatprep.subr.mxu0 0.0
        %1382 = vmatpush1.msra.mxu0 0.0
        %1383 = vmatprep.subr.mxu0 0.0
        %1384 = vmatpush1.msra.mxu0 0.0
        %1385 = vmatprep.subr.mxu0 0.0
        %1386 = vmatpush1.msra.mxu0 0.0
        %1387 = vmatprep.subr.mxu0 0.0
        %1388 = vmatpush1.msra.mxu0 0.0
        %1389 = vmatprep.subr.mxu0 0.0
        %1390 = vmatpush1.msra.mxu0 0.0
        %1391 = vmatprep.subr.mxu0 0.0
        %1392 = vmatpush1.msra.mxu0 0.0
        %1393 = vmatprep.subr.mxu0 0.0
        %1394 = vmatpush1.msra.mxu0 0.0
        %1395 = vmatprep.subr.mxu0 0.0
        %1396 = vmatpush1.msra.mxu0 0.0
        %1397 = vmatprep.subr.mxu0 0.0
        %1398 = vmatpush1.msra.mxu0 0.0
        %1399 = vmatprep.subr.mxu0 0.0
        %1400 = vmatpush1.msra.mxu0 0.0
        %1401 = vmatprep.subr.mxu0 0.0
        %1402 = vmatpush1.msra.mxu0 0.0
        %1403 = vmatprep.subr.mxu0 0.0
        %1404 = vmatpush1.msra.mxu0 0.0
        %1405 = vmatprep.subr.mxu0 0.0
        %1406 = vmatpush1.msra.mxu0 0.0
        %1407 = vmatprep.subr.mxu0 0.0
        %1408 = vmatpush1.msra.mxu0 0.0
        %1409 = vmatprep.subr.mxu0 0.0
        %1410 = vmatpush1.msra.mxu0 0.0
        %1411 = vmatprep.subr.mxu0 0.0
        %1412 = vmatpush1.msra.mxu0 0.0
        %1413 = vmatprep.subr.mxu0 0.0
        %1414 = vmatpush1.msra.mxu0 0.0
        %1415 = vmatprep.subr.mxu0 0.0
        %1416 = vmatpush1.msra.mxu0 0.0
        %1417 = vmatprep.subr.mxu0 0.0
        %1418 = vmatpush1.msra.mxu0 0.0
        %1419 = vmatprep.subr.mxu0 0.0
        %1420 = vmatpush1.msra.mxu0 0.0
        %1421 = vmatprep.subr.mxu0 0.0
        %1422 = vmatpush1.msra.mxu0 0.0
        %1423 = vmatprep.subr.mxu0 0.0
        %1424 = vmatpush1.msra.mxu0 0.0
        %1425 = vmatprep.subr.mxu0 0.0
        %1426 = vmatpush1.msra.mxu0 0.0
        %1427 = vmatprep.subr.mxu0 0.0
        %1428 = vmatpush1.msra.mxu0 0.0
        %1429 = vmatprep.mubr.f32.mxu0 0.0
        %1430 = vmatmul.mubr.f32.gmra.mrb[0].mxu0 %v1363
        %v1431 = vpop.f32.mrb[0].mxu0
        %v1432 = vadd.f32 0.0, %v1431
        %v1433 = vpop.f32.mrb[0].mxu0
        %1434 = vdwg.mxu0
        %v1435 = vadd.f32 %v1354, %v1432
        %v1436 = vld [vmem:[%s505 + $0x8] sm:$0x1]
        %v1437 = vld [vmem:[%s674] sm:$0xff]
        %v1438 = vld [vmem:[%s674 + $0x8] sm:$0xff]
        %v1439 = vld [vmem:[%s674 + $0x10] sm:$0xff]
        %v1440 = vld [vmem:[%s674 + $0x18] sm:$0xff]
        %v1441 = vld [vmem:[%s674 + $0x20] sm:$0xff]
        %v1442 = vld [vmem:[%s674 + $0x28] sm:$0xff]
        %v1444 = vsel %vm516, %v1436, 0
        %1446 = vmatprep.subr.mxu0 0.0
        %1447 = vmatpush1.msra.mxu0 %v1437
        %1448 = vmatprep.subr.mxu0 0.0
        %1449 = vmatpush1.msra.mxu0 %v1438
        %1450 = vmatprep.subr.mxu0 0.0
        %1451 = vmatpush1.msra.mxu0 %v1439
        %1452 = vmatprep.subr.mxu0 0.0
        %1453 = vmatpush1.msra.mxu0 %v1440
        %1454 = vmatprep.subr.mxu0 0.0
        %1455 = vmatpush1.msra.mxu0 %v1441
        %1456 = vmatprep.subr.mxu0 0.0
        %1457 = vmatpush1.msra.mxu0 %v1442
        %1458 = vmatprep.subr.mxu0 0.0
        %1459 = vmatpush1.msra.mxu0 0.0
        %1460 = vmatprep.subr.mxu0 0.0
        %1461 = vmatpush1.msra.mxu0 0.0
        %1462 = vmatprep.subr.mxu0 0.0
        %1463 = vmatpush1.msra.mxu0 0.0
        %1464 = vmatprep.subr.mxu0 0.0
        %1465 = vmatpush1.msra.mxu0 0.0
        %1466 = vmatprep.subr.mxu0 0.0
        %1467 = vmatpush1.msra.mxu0 0.0
        %1468 = vmatprep.subr.mxu0 0.0
        %1469 = vmatpush1.msra.mxu0 0.0
        %1470 = vmatprep.subr.mxu0 0.0
        %1471 = vmatpush1.msra.mxu0 0.0
        %1472 = vmatprep.subr.mxu0 0.0
        %1473 = vmatpush1.msra.mxu0 0.0
        %1474 = vmatprep.subr.mxu0 0.0
        %1475 = vmatpush1.msra.mxu0 0.0
        %1476 = vmatprep.subr.mxu0 0.0
        %1477 = vmatpush1.msra.mxu0 0.0
        %1478 = vmatprep.subr.mxu0 0.0
        %1479 = vmatpush1.msra.mxu0 0.0
        %1480 = vmatprep.subr.mxu0 0.0
        %1481 = vmatpush1.msra.mxu0 0.0
        %1482 = vmatprep.subr.mxu0 0.0
        %1483 = vmatpush1.msra.mxu0 0.0
        %1484 = vmatprep.subr.mxu0 0.0
        %1485 = vmatpush1.msra.mxu0 0.0
        %1486 = vmatprep.subr.mxu0 0.0
        %1487 = vmatpush1.msra.mxu0 0.0
        %1488 = vmatprep.subr.mxu0 0.0
        %1489 = vmatpush1.msra.mxu0 0.0
        %1490 = vmatprep.subr.mxu0 0.0
        %1491 = vmatpush1.msra.mxu0 0.0
        %1492 = vmatprep.subr.mxu0 0.0
        %1493 = vmatpush1.msra.mxu0 0.0
        %1494 = vmatprep.subr.mxu0 0.0
        %1495 = vmatpush1.msra.mxu0 0.0
        %1496 = vmatprep.subr.mxu0 0.0
        %1497 = vmatpush1.msra.mxu0 0.0
        %1498 = vmatprep.subr.mxu0 0.0
        %1499 = vmatpush1.msra.mxu0 0.0
        %1500 = vmatprep.subr.mxu0 0.0
        %1501 = vmatpush1.msra.mxu0 0.0
        %1502 = vmatprep.subr.mxu0 0.0
        %1503 = vmatpush1.msra.mxu0 0.0
        %1504 = vmatprep.subr.mxu0 0.0
        %1505 = vmatpush1.msra.mxu0 0.0
        %1506 = vmatprep.subr.mxu0 0.0
        %1507 = vmatpush1.msra.mxu0 0.0
        %1508 = vmatprep.subr.mxu0 0.0
        %1509 = vmatpush1.msra.mxu0 0.0
        %1510 = vmatprep.mubr.f32.mxu0 0.0
        %1511 = vmatmul.mubr.f32.gmra.mrb[0].mxu0 %v1444
        %v1512 = vpop.f32.mrb[0].mxu0
        %v1513 = vadd.f32 0.0, %v1512
        %v1514 = vpop.f32.mrb[0].mxu0
        %1515 = vdwg.mxu0
        %v1516 = vadd.f32 %v1435, %v1513
        %v1517 = vmin.f32 %v1516, 20.0
        %v1518 = vmul.f32 %v1517, 1.442695
        %v1519 = vpow.pop %v1518
        %v1520 = vadd.f32 %v1519, 2.0
        %v1521 = vmul.f32 %v1519, %v1520
        %v1522 = vadd.f32 %v1521, 2.0
        %v1523 = vrcp.pop %v1522
        %v1524 = vmul.f32 %v1521, %v1523
        %v1525 = vmul.f32 %v1516, %v1524
        %1526 = vst [vmem:[#allocation2 + $0x4] sm:$0x1] %v1525
        %v1527 = vld [vmem:[#allocation7] sm:$0x1]
        %v1528 = vld [vmem:[%s505 + $0x8] sm:$0x1]
        %v1529 = vld [vmem:[#allocation4] sm:$0xff]
        %v1530 = vld [vmem:[#allocation4 + $0x8] sm:$0xff]
        %v1531 = vld [vmem:[#allocation4 + $0x10] sm:$0xff]
        %v1532 = vld [vmem:[#allocation4 + $0x18] sm:$0xff]
        %v1533 = vld [vmem:[#allocation4 + $0x20] sm:$0xff]
        %v1534 = vld [vmem:[#allocation4 + $0x28] sm:$0xff]
        %v1536 = vsel %vm516, %v1528, 0
        %1538 = vmatprep.subr.mxu0 0.0
        %1539 = vmatpush1.msra.mxu0 %v1529
        %1540 = vmatprep.subr.mxu0 0.0
        %1541 = vmatpush1.msra.mxu0 %v1530
        %1542 = vmatprep.subr.mxu0 0.0
        %1543 = vmatpush1.msra.mxu0 %v1531
        %1544 = vmatprep.subr.mxu0 0.0
        %1545 = vmatpush1.msra.mxu0 %v1532
        %1546 = vmatprep.subr.mxu0 0.0
        %1547 = vmatpush1.msra.mxu0 %v1533
        %1548 = vmatprep.subr.mxu0 0.0
        %1549 = vmatpush1.msra.mxu0 %v1534
        %1550 = vmatprep.subr.mxu0 0.0
        %1551 = vmatpush1.msra.mxu0 0.0
        %1552 = vmatprep.subr.mxu0 0.0
        %1553 = vmatpush1.msra.mxu0 0.0
        %1554 = vmatprep.subr.mxu0 0.0
        %1555 = vmatpush1.msra.mxu0 0.0
        %1556 = vmatprep.subr.mxu0 0.0
        %1557 = vmatpush1.msra.mxu0 0.0
        %1558 = vmatprep.subr.mxu0 0.0
        %1559 = vmatpush1.msra.mxu0 0.0
        %1560 = vmatprep.subr.mxu0 0.0
        %1561 = vmatpush1.msra.mxu0 0.0
        %1562 = vmatprep.subr.mxu0 0.0
        %1563 = vmatpush1.msra.mxu0 0.0
        %1564 = vmatprep.subr.mxu0 0.0
        %1565 = vmatpush1.msra.mxu0 0.0
        %1566 = vmatprep.subr.mxu0 0.0
        %1567 = vmatpush1.msra.mxu0 0.0
        %1568 = vmatprep.subr.mxu0 0.0
        %1569 = vmatpush1.msra.mxu0 0.0
        %1570 = vmatprep.subr.mxu0 0.0
        %1571 = vmatpush1.msra.mxu0 0.0
        %1572 = vmatprep.subr.mxu0 0.0
        %1573 = vmatpush1.msra.mxu0 0.0
        %1574 = vmatprep.subr.mxu0 0.0
        %1575 = vmatpush1.msra.mxu0 0.0
        %1576 = vmatprep.subr.mxu0 0.0
        %1577 = vmatpush1.msra.mxu0 0.0
        %1578 = vmatprep.subr.mxu0 0.0
        %1579 = vmatpush1.msra.mxu0 0.0
        %1580 = vmatprep.subr.mxu0 0.0
        %1581 = vmatpush1.msra.mxu0 0.0
        %1582 = vmatprep.subr.mxu0 0.0
        %1583 = vmatpush1.msra.mxu0 0.0
        %1584 = vmatprep.subr.mxu0 0.0
        %1585 = vmatpush1.msra.mxu0 0.0
        %1586 = vmatprep.subr.mxu0 0.0
        %1587 = vmatpush1.msra.mxu0 0.0
        %1588 = vmatprep.subr.mxu0 0.0
        %1589 = vmatpush1.msra.mxu0 0.0
        %1590 = vmatprep.subr.mxu0 0.0
        %1591 = vmatpush1.msra.mxu0 0.0
        %1592 = vmatprep.subr.mxu0 0.0
        %1593 = vmatpush1.msra.mxu0 0.0
        %1594 = vmatprep.subr.mxu0 0.0
        %1595 = vmatpush1.msra.mxu0 0.0
        %1596 = vmatprep.subr.mxu0 0.0
        %1597 = vmatpush1.msra.mxu0 0.0
        %1598 = vmatprep.subr.mxu0 0.0
        %1599 = vmatpush1.msra.mxu0 0.0
        %1600 = vmatprep.subr.mxu0 0.0
        %1601 = vmatpush1.msra.mxu0 0.0
        %1602 = vmatprep.mubr.f32.mxu0 0.0
        %1603 = vmatmul.mubr.f32.gmra.mrb[0].mxu0 %v1536
        %v1604 = vpop.f32.mrb[0].mxu0
        %v1605 = vadd.f32 0.0, %v1604
        %v1606 = vpop.f32.mrb[0].mxu0
        %1607 = vdwg.mxu0
        %v1608 = vadd.f32 %v1527, %v1605
        %v1609 = vld [vmem:[%s505 + $0x9] sm:$0x1]
        %v1610 = vld [vmem:[%s592] sm:$0xff]
        %v1611 = vld [vmem:[%s592 + $0x8] sm:$0xff]
        %v1612 = vld [vmem:[%s592 + $0x10] sm:$0xff]
        %v1613 = vld [vmem:[%s592 + $0x18] sm:$0xff]
        %v1614 = vld [vmem:[%s592 + $0x20] sm:$0xff]
        %v1615 = vld [vmem:[%s592 + $0x28] sm:$0xff]
        %v1617 = vsel %vm516, %v1609, 0
        %1619 = vmatprep.subr.mxu0 0.0
        %1620 = vmatpush1.msra.mxu0 %v1610
        %1621 = vmatprep.subr.mxu0 0.0
        %1622 = vmatpush1.msra.mxu0 %v1611
        %1623 = vmatprep.subr.mxu0 0.0
        %1624 = vmatpush1.msra.mxu0 %v1612
        %1625 = vmatprep.subr.mxu0 0.0
        %1626 = vmatpush1.msra.mxu0 %v1613
        %1627 = vmatprep.subr.mxu0 0.0
        %1628 = vmatpush1.msra.mxu0 %v1614
        %1629 = vmatprep.subr.mxu0 0.0
        %1630 = vmatpush1.msra.mxu0 %v1615
        %1631 = vmatprep.subr.mxu0 0.0
        %1632 = vmatpush1.msra.mxu0 0.0
        %1633 = vmatprep.subr.mxu0 0.0
        %1634 = vmatpush1.msra.mxu0 0.0
        %1635 = vmatprep.subr.mxu0 0.0
        %1636 = vmatpush1.msra.mxu0 0.0
        %1637 = vmatprep.subr.mxu0 0.0
        %1638 = vmatpush1.msra.mxu0 0.0
        %1639 = vmatprep.subr.mxu0 0.0
        %1640 = vmatpush1.msra.mxu0 0.0
        %1641 = vmatprep.subr.mxu0 0.0
        %1642 = vmatpush1.msra.mxu0 0.0
        %1643 = vmatprep.subr.mxu0 0.0
        %1644 = vmatpush1.msra.mxu0 0.0
        %1645 = vmatprep.subr.mxu0 0.0
        %1646 = vmatpush1.msra.mxu0 0.0
        %1647 = vmatprep.subr.mxu0 0.0
        %1648 = vmatpush1.msra.mxu0 0.0
        %1649 = vmatprep.subr.mxu0 0.0
        %1650 = vmatpush1.msra.mxu0 0.0
        %1651 = vmatprep.subr.mxu0 0.0
        %1652 = vmatpush1.msra.mxu0 0.0
        %1653 = vmatprep.subr.mxu0 0.0
        %1654 = vmatpush1.msra.mxu0 0.0
        %1655 = vmatprep.subr.mxu0 0.0
        %1656 = vmatpush1.msra.mxu0 0.0
        %1657 = vmatprep.subr.mxu0 0.0
        %1658 = vmatpush1.msra.mxu0 0.0
        %1659 = vmatprep.subr.mxu0 0.0
        %1660 = vmatpush1.msra.mxu0 0.0
        %1661 = vmatprep.subr.mxu0 0.0
        %1662 = vmatpush1.msra.mxu0 0.0
        %1663 = vmatprep.subr.mxu0 0.0
        %1664 = vmatpush1.msra.mxu0 0.0
        %1665 = vmatprep.subr.mxu0 0.0
        %1666 = vmatpush1.msra.mxu0 0.0
        %1667 = vmatprep.subr.mxu0 0.0
        %1668 = vmatpush1.msra.mxu0 0.0
        %1669 = vmatprep.subr.mxu0 0.0
        %1670 = vmatpush1.msra.mxu0 0.0
        %1671 = vmatprep.subr.mxu0 0.0
        %1672 = vmatpush1.msra.mxu0 0.0
        %1673 = vmatprep.subr.mxu0 0.0
        %1674 = vmatpush1.msra.mxu0 0.0
        %1675 = vmatprep.subr.mxu0 0.0
        %1676 = vmatpush1.msra.mxu0 0.0
        %1677 = vmatprep.subr.mxu0 0.0
        %1678 = vmatpush1.msra.mxu0 0.0
        %1679 = vmatprep.subr.mxu0 0.0
        %1680 = vmatpush1.msra.mxu0 0.0
        %1681 = vmatprep.subr.mxu0 0.0
        %1682 = vmatpush1.msra.mxu0 0.0
        %1683 = vmatprep.mubr.f32.mxu0 0.0
        %1684 = vmatmul.mubr.f32.gmra.mrb[0].mxu0 %v1617
        %v1685 = vpop.f32.mrb[0].mxu0
        %v1686 = vadd.f32 0.0, %v1685
        %v1687 = vpop.f32.mrb[0].mxu0
        %1688 = vdwg.mxu0
        %v1689 = vadd.f32 %v1608, %v1686
        %v1690 = vld [vmem:[%s505 + $0xa] sm:$0x1]
        %v1691 = vld [vmem:[%s674] sm:$0xff]
        %v1692 = vld [vmem:[%s674 + $0x8] sm:$0xff]
        %v1693 = vld [vmem:[%s674 + $0x10] sm:$0xff]
        %v1694 = vld [vmem:[%s674 + $0x18] sm:$0xff]
        %v1695 = vld [vmem:[%s674 + $0x20] sm:$0xff]
        %v1696 = vld [vmem:[%s674 + $0x28] sm:$0xff]
        %v1698 = vsel %vm516, %v1690, 0
        %1700 = vmatprep.subr.mxu0 0.0
        %1701 = vmatpush1.msra.mxu0 %v1691
        %1702 = vmatprep.subr.mxu0 0.0
        %1703 = vmatpush1.msra.mxu0 %v1692
        %1704 = vmatprep.subr.mxu0 0.0
        %1705 = vmatpush1.msra.mxu0 %v1693
        %1706 = vmatprep.subr.mxu0 0.0
        %1707 = vmatpush1.msra.mxu0 %v1694
        %1708 = vmatprep.subr.mxu0 0.0
        %1709 = vmatpush1.msra.mxu0 %v1695
        %1710 = vmatprep.subr.mxu0 0.0
        %1711 = vmatpush1.msra.mxu0 %v1696
        %1712 = vmatprep.subr.mxu0 0.0
        %1713 = vmatpush1.msra.mxu0 0.0
        %1714 = vmatprep.subr.mxu0 0.0
        %1715 = vmatpush1.msra.mxu0 0.0
        %1716 = vmatprep.subr.mxu0 0.0
        %1717 = vmatpush1.msra.mxu0 0.0
        %1718 = vmatprep.subr.mxu0 0.0
        %1719 = vmatpush1.msra.mxu0 0.0
        %1720 = vmatprep.subr.mxu0 0.0
        %1721 = vmatpush1.msra.mxu0 0.0
        %1722 = vmatprep.subr.mxu0 0.0
        %1723 = vmatpush1.msra.mxu0 0.0
        %1724 = vmatprep.subr.mxu0 0.0
        %1725 = vmatpush1.msra.mxu0 0.0
        %1726 = vmatprep.subr.mxu0 0.0
        %1727 = vmatpush1.msra.mxu0 0.0
        %1728 = vmatprep.subr.mxu0 0.0
        %1729 = vmatpush1.msra.mxu0 0.0
        %1730 = vmatprep.subr.mxu0 0.0
        %1731 = vmatpush1.msra.mxu0 0.0
        %1732 = vmatprep.subr.mxu0 0.0
        %1733 = vmatpush1.msra.mxu0 0.0
        %1734 = vmatprep.subr.mxu0 0.0
        %1735 = vmatpush1.msra.mxu0 0.0
        %1736 = vmatprep.subr.mxu0 0.0
        %1737 = vmatpush1.msra.mxu0 0.0
        %1738 = vmatprep.subr.mxu0 0.0
        %1739 = vmatpush1.msra.mxu0 0.0
        %1740 = vmatprep.subr.mxu0 0.0
        %1741 = vmatpush1.msra.mxu0 0.0
        %1742 = vmatprep.subr.mxu0 0.0
        %1743 = vmatpush1.msra.mxu0 0.0
        %1744 = vmatprep.subr.mxu0 0.0
        %1745 = vmatpush1.msra.mxu0 0.0
        %1746 = vmatprep.subr.mxu0 0.0
        %1747 = vmatpush1.msra.mxu0 0.0
        %1748 = vmatprep.subr.mxu0 0.0
        %1749 = vmatpush1.msra.mxu0 0.0
        %1750 = vmatprep.subr.mxu0 0.0
        %1751 = vmatpush1.msra.mxu0 0.0
        %1752 = vmatprep.subr.mxu0 0.0
        %1753 = vmatpush1.msra.mxu0 0.0
        %1754 = vmatprep.subr.mxu0 0.0
        %1755 = vmatpush1.msra.mxu0 0.0
        %1756 = vmatprep.subr.mxu0 0.0
        %1757 = vmatpush1.msra.mxu0 0.0
        %1758 = vmatprep.subr.mxu0 0.0
        %1759 = vmatpush1.msra.mxu0 0.0
        %1760 = vmatprep.subr.mxu0 0.0
        %1761 = vmatpush1.msra.mxu0 0.0
        %1762 = vmatprep.subr.mxu0 0.0
        %1763 = vmatpush1.msra.mxu0 0.0
        %1764 = vmatprep.mubr.f32.mxu0 0.0
        %1765 = vmatmul.mubr.f32.gmra.mrb[0].mxu0 %v1698
        %v1766 = vpop.f32.mrb[0].mxu0
        %v1767 = vadd.f32 0.0, %v1766
        %v1768 = vpop.f32.mrb[0].mxu0
        %1769 = vdwg.mxu0
        %v1770 = vadd.f32 %v1689, %v1767
        %v1771 = vmin.f32 %v1770, 20.0
        %v1772 = vmul.f32 %v1771, 1.442695
        %v1773 = vpow.pop %v1772
        %v1774 = vadd.f32 %v1773, 2.0
        %v1775 = vmul.f32 %v1773, %v1774
        %v1776 = vadd.f32 %v1775, 2.0
        %v1777 = vrcp.pop %v1776
        %v1778 = vmul.f32 %v1775, %v1777
        %v1779 = vmul.f32 %v1770, %v1778
        %1780 = vst [vmem:[#allocation2 + $0x5] sm:$0x1] %v1779
        %v1781 = vld [vmem:[#allocation7] sm:$0x1]
        %v1782 = vld [vmem:[%s505 + $0xa] sm:$0x1]
        %v1783 = vld [vmem:[#allocation4] sm:$0xff]
        %v1784 = vld [vmem:[#allocation4 + $0x8] sm:$0xff]
        %v1785 = vld [vmem:[#allocation4 + $0x10] sm:$0xff]
        %v1786 = vld [vmem:[#allocation4 + $0x18] sm:$0xff]
        %v1787 = vld [vmem:[#allocation4 + $0x20] sm:$0xff]
        %v1788 = vld [vmem:[#allocation4 + $0x28] sm:$0xff]
        %v1790 = vsel %vm516, %v1782, 0
        %1792 = vmatprep.subr.mxu0 0.0
        %1793 = vmatpush1.msra.mxu0 %v1783
        %1794 = vmatprep.subr.mxu0 0.0
        %1795 = vmatpush1.msra.mxu0 %v1784
        %1796 = vmatprep.subr.mxu0 0.0
        %1797 = vmatpush1.msra.mxu0 %v1785
        %1798 = vmatprep.subr.mxu0 0.0
        %1799 = vmatpush1.msra.mxu0 %v1786
        %1800 = vmatprep.subr.mxu0 0.0
        %1801 = vmatpush1.msra.mxu0 %v1787
        %1802 = vmatprep.subr.mxu0 0.0
        %1803 = vmatpush1.msra.mxu0 %v1788
        %1804 = vmatprep.subr.mxu0 0.0
        %1805 = vmatpush1.msra.mxu0 0.0
        %1806 = vmatprep.subr.mxu0 0.0
        %1807 = vmatpush1.msra.mxu0 0.0
        %1808 = vmatprep.subr.mxu0 0.0
        %1809 = vmatpush1.msra.mxu0 0.0
        %1810 = vmatprep.subr.mxu0 0.0
        %1811 = vmatpush1.msra.mxu0 0.0
        %1812 = vmatprep.subr.mxu0 0.0
        %1813 = vmatpush1.msra.mxu0 0.0
        %1814 = vmatprep.subr.mxu0 0.0
        %1815 = vmatpush1.msra.mxu0 0.0
        %1816 = vmatprep.subr.mxu0 0.0
        %1817 = vmatpush1.msra.mxu0 0.0
        %1818 = vmatprep.subr.mxu0 0.0
        %1819 = vmatpush1.msra.mxu0 0.0
        %1820 = vmatprep.subr.mxu0 0.0
        %1821 = vmatpush1.msra.mxu0 0.0
        %1822 = vmatprep.subr.mxu0 0.0
        %1823 = vmatpush1.msra.mxu0 0.0
        %1824 = vmatprep.subr.mxu0 0.0
        %1825 = vmatpush1.msra.mxu0 0.0
        %1826 = vmatprep.subr.mxu0 0.0
        %1827 = vmatpush1.msra.mxu0 0.0
        %1828 = vmatprep.subr.mxu0 0.0
        %1829 = vmatpush1.msra.mxu0 0.0
        %1830 = vmatprep.subr.mxu0 0.0
        %1831 = vmatpush1.msra.mxu0 0.0
        %1832 = vmatprep.subr.mxu0 0.0
        %1833 = vmatpush1.msra.mxu0 0.0
        %1834 = vmatprep.subr.mxu0 0.0
        %1835 = vmatpush1.msra.mxu0 0.0
        %1836 = vmatprep.subr.mxu0 0.0
        %1837 = vmatpush1.msra.mxu0 0.0
        %1838 = vmatprep.subr.mxu0 0.0
        %1839 = vmatpush1.msra.mxu0 0.0
        %1840 = vmatprep.subr.mxu0 0.0
        %1841 = vmatpush1.msra.mxu0 0.0
        %1842 = vmatprep.subr.mxu0 0.0
        %1843 = vmatpush1.msra.mxu0 0.0
        %1844 = vmatprep.subr.mxu0 0.0
        %1845 = vmatpush1.msra.mxu0 0.0
        %1846 = vmatprep.subr.mxu0 0.0
        %1847 = vmatpush1.msra.mxu0 0.0
        %1848 = vmatprep.subr.mxu0 0.0
        %1849 = vmatpush1.msra.mxu0 0.0
        %1850 = vmatprep.subr.mxu0 0.0
        %1851 = vmatpush1.msra.mxu0 0.0
        %1852 = vmatprep.subr.mxu0 0.0
        %1853 = vmatpush1.msra.mxu0 0.0
        %1854 = vmatprep.subr.mxu0 0.0
        %1855 = vmatpush1.msra.mxu0 0.0
        %1856 = vmatprep.mubr.f32.mxu0 0.0
        %1857 = vmatmul.mubr.f32.gmra.mrb[0].mxu0 %v1790
        %v1858 = vpop.f32.mrb[0].mxu0
        %v1859 = vadd.f32 0.0, %v1858
        %v1860 = vpop.f32.mrb[0].mxu0
        %1861 = vdwg.mxu0
        %v1862 = vadd.f32 %v1781, %v1859
        %v1863 = vld [vmem:[%s505 + $0xb] sm:$0x1]
        %v1864 = vld [vmem:[%s592] sm:$0xff]
        %v1865 = vld [vmem:[%s592 + $0x8] sm:$0xff]
        %v1866 = vld [vmem:[%s592 + $0x10] sm:$0xff]
        %v1867 = vld [vmem:[%s592 + $0x18] sm:$0xff]
        %v1868 = vld [vmem:[%s592 + $0x20] sm:$0xff]
        %v1869 = vld [vmem:[%s592 + $0x28] sm:$0xff]
        %v1871 = vsel %vm516, %v1863, 0
        %1873 = vmatprep.subr.mxu0 0.0
        %1874 = vmatpush1.msra.mxu0 %v1864
        %1875 = vmatprep.subr.mxu0 0.0
        %1876 = vmatpush1.msra.mxu0 %v1865
        %1877 = vmatprep.subr.mxu0 0.0
        %1878 = vmatpush1.msra.mxu0 %v1866
        %1879 = vmatprep.subr.mxu0 0.0
        %1880 = vmatpush1.msra.mxu0 %v1867
        %1881 = vmatprep.subr.mxu0 0.0
        %1882 = vmatpush1.msra.mxu0 %v1868
        %1883 = vmatprep.subr.mxu0 0.0
        %1884 = vmatpush1.msra.mxu0 %v1869
        %1885 = vmatprep.subr.mxu0 0.0
        %1886 = vmatpush1.msra.mxu0 0.0
        %1887 = vmatprep.subr.mxu0 0.0
        %1888 = vmatpush1.msra.mxu0 0.0
        %1889 = vmatprep.subr.mxu0 0.0
        %1890 = vmatpush1.msra.mxu0 0.0
        %1891 = vmatprep.subr.mxu0 0.0
        %1892 = vmatpush1.msra.mxu0 0.0
        %1893 = vmatprep.subr.mxu0 0.0
        %1894 = vmatpush1.msra.mxu0 0.0
        %1895 = vmatprep.subr.mxu0 0.0
        %1896 = vmatpush1.msra.mxu0 0.0
        %1897 = vmatprep.subr.mxu0 0.0
        %1898 = vmatpush1.msra.mxu0 0.0
        %1899 = vmatprep.subr.mxu0 0.0
        %1900 = vmatpush1.msra.mxu0 0.0
        %1901 = vmatprep.subr.mxu0 0.0
        %1902 = vmatpush1.msra.mxu0 0.0
        %1903 = vmatprep.subr.mxu0 0.0
        %1904 = vmatpush1.msra.mxu0 0.0
        %1905 = vmatprep.subr.mxu0 0.0
        %1906 = vmatpush1.msra.mxu0 0.0
        %1907 = vmatprep.subr.mxu0 0.0
        %1908 = vmatpush1.msra.mxu0 0.0
        %1909 = vmatprep.subr.mxu0 0.0
        %1910 = vmatpush1.msra.mxu0 0.0
        %1911 = vmatprep.subr.mxu0 0.0
        %1912 = vmatpush1.msra.mxu0 0.0
        %1913 = vmatprep.subr.mxu0 0.0
        %1914 = vmatpush1.msra.mxu0 0.0
        %1915 = vmatprep.subr.mxu0 0.0
        %1916 = vmatpush1.msra.mxu0 0.0
        %1917 = vmatprep.subr.mxu0 0.0
        %1918 = vmatpush1.msra.mxu0 0.0
        %1919 = vmatprep.subr.mxu0 0.0
        %1920 = vmatpush1.msra.mxu0 0.0
        %1921 = vmatprep.subr.mxu0 0.0
        %1922 = vmatpush1.msra.mxu0 0.0
        %1923 = vmatprep.subr.mxu0 0.0
        %1924 = vmatpush1.msra.mxu0 0.0
        %1925 = vmatprep.subr.mxu0 0.0
        %1926 = vmatpush1.msra.mxu0 0.0
        %1927 = vmatprep.subr.mxu0 0.0
        %1928 = vmatpush1.msra.mxu0 0.0
        %1929 = vmatprep.subr.mxu0 0.0
        %1930 = vmatpush1.msra.mxu0 0.0
        %1931 = vmatprep.subr.mxu0 0.0
        %1932 = vmatpush1.msra.mxu0 0.0
        %1933 = vmatprep.subr.mxu0 0.0
        %1934 = vmatpush1.msra.mxu0 0.0
        %1935 = vmatprep.subr.mxu0 0.0
        %1936 = vmatpush1.msra.mxu0 0.0
        %1937 = vmatprep.mubr.f32.mxu0 0.0
        %1938 = vmatmul.mubr.f32.gmra.mrb[0].mxu0 %v1871
        %v1939 = vpop.f32.mrb[0].mxu0
        %v1940 = vadd.f32 0.0, %v1939
        %v1941 = vpop.f32.mrb[0].mxu0
        %1942 = vdwg.mxu0
        %v1943 = vadd.f32 %v1862, %v1940
        %v1944 = vld [vmem:[%s505 + $0xc] sm:$0x1]
        %v1945 = vld [vmem:[%s674] sm:$0xff]
        %v1946 = vld [vmem:[%s674 + $0x8] sm:$0xff]
        %v1947 = vld [vmem:[%s674 + $0x10] sm:$0xff]
        %v1948 = vld [vmem:[%s674 + $0x18] sm:$0xff]
        %v1949 = vld [vmem:[%s674 + $0x20] sm:$0xff]
        %v1950 = vld [vmem:[%s674 + $0x28] sm:$0xff]
        %v1952 = vsel %vm516, %v1944, 0
        %1954 = vmatprep.subr.mxu0 0.0
        %1955 = vmatpush1.msra.mxu0 %v1945
        %1956 = vmatprep.subr.mxu0 0.0
        %1957 = vmatpush1.msra.mxu0 %v1946
        %1958 = vmatprep.subr.mxu0 0.0
        %1959 = vmatpush1.msra.mxu0 %v1947
        %1960 = vmatprep.subr.mxu0 0.0
        %1961 = vmatpush1.msra.mxu0 %v1948
        %1962 = vmatprep.subr.mxu0 0.0
        %1963 = vmatpush1.msra.mxu0 %v1949
        %1964 = vmatprep.subr.mxu0 0.0
        %1965 = vmatpush1.msra.mxu0 %v1950
        %1966 = vmatprep.subr.mxu0 0.0
        %1967 = vmatpush1.msra.mxu0 0.0
        %1968 = vmatprep.subr.mxu0 0.0
        %1969 = vmatpush1.msra.mxu0 0.0
        %1970 = vmatprep.subr.mxu0 0.0
        %1971 = vmatpush1.msra.mxu0 0.0
        %1972 = vmatprep.subr.mxu0 0.0
        %1973 = vmatpush1.msra.mxu0 0.0
        %1974 = vmatprep.subr.mxu0 0.0
        %1975 = vmatpush1.msra.mxu0 0.0
        %1976 = vmatprep.subr.mxu0 0.0
        %1977 = vmatpush1.msra.mxu0 0.0
        %1978 = vmatprep.subr.mxu0 0.0
        %1979 = vmatpush1.msra.mxu0 0.0
        %1980 = vmatprep.subr.mxu0 0.0
        %1981 = vmatpush1.msra.mxu0 0.0
        %1982 = vmatprep.subr.mxu0 0.0
        %1983 = vmatpush1.msra.mxu0 0.0
        %1984 = vmatprep.subr.mxu0 0.0
        %1985 = vmatpush1.msra.mxu0 0.0
        %1986 = vmatprep.subr.mxu0 0.0
        %1987 = vmatpush1.msra.mxu0 0.0
        %1988 = vmatprep.subr.mxu0 0.0
        %1989 = vmatpush1.msra.mxu0 0.0
        %1990 = vmatprep.subr.mxu0 0.0
        %1991 = vmatpush1.msra.mxu0 0.0
        %1992 = vmatprep.subr.mxu0 0.0
        %1993 = vmatpush1.msra.mxu0 0.0
        %1994 = vmatprep.subr.mxu0 0.0
        %1995 = vmatpush1.msra.mxu0 0.0
        %1996 = vmatprep.subr.mxu0 0.0
        %1997 = vmatpush1.msra.mxu0 0.0
        %1998 = vmatprep.subr.mxu0 0.0
        %1999 = vmatpush1.msra.mxu0 0.0
        %2000 = vmatprep.subr.mxu0 0.0
        %2001 = vmatpush1.msra.mxu0 0.0
        %2002 = vmatprep.subr.mxu0 0.0
        %2003 = vmatpush1.msra.mxu0 0.0
        %2004 = vmatprep.subr.mxu0 0.0
        %2005 = vmatpush1.msra.mxu0 0.0
        %2006 = vmatprep.subr.mxu0 0.0
        %2007 = vmatpush1.msra.mxu0 0.0
        %2008 = vmatprep.subr.mxu0 0.0
        %2009 = vmatpush1.msra.mxu0 0.0
        %2010 = vmatprep.subr.mxu0 0.0
        %2011 = vmatpush1.msra.mxu0 0.0
        %2012 = vmatprep.subr.mxu0 0.0
        %2013 = vmatpush1.msra.mxu0 0.0
        %2014 = vmatprep.subr.mxu0 0.0
        %2015 = vmatpush1.msra.mxu0 0.0
        %2016 = vmatprep.subr.mxu0 0.0
        %2017 = vmatpush1.msra.mxu0 0.0
        %2018 = vmatprep.mubr.f32.mxu0 0.0
        %2019 = vmatmul.mubr.f32.gmra.mrb[0].mxu0 %v1952
        %v2020 = vpop.f32.mrb[0].mxu0
        %v2021 = vadd.f32 0.0, %v2020
        %v2022 = vpop.f32.mrb[0].mxu0
        %2023 = vdwg.mxu0
        %v2024 = vadd.f32 %v1943, %v2021
        %v2025 = vmin.f32 %v2024, 20.0
        %v2026 = vmul.f32 %v2025, 1.442695
        %v2027 = vpow.pop %v2026
        %v2028 = vadd.f32 %v2027, 2.0
        %v2029 = vmul.f32 %v2027, %v2028
        %v2030 = vadd.f32 %v2029, 2.0
        %v2031 = vrcp.pop %v2030
        %v2032 = vmul.f32 %v2029, %v2031
        %v2033 = vmul.f32 %v2024, %v2032
        %2034 = vst [vmem:[#allocation2 + $0x6] sm:$0x1] %v2033
        %v2035 = vld [vmem:[#allocation7] sm:$0x1]
        %v2036 = vld [vmem:[%s505 + $0xc] sm:$0x1]
        %v2037 = vld [vmem:[#allocation4] sm:$0xff]
        %v2038 = vld [vmem:[#allocation4 + $0x8] sm:$0xff]
        %v2039 = vld [vmem:[#allocation4 + $0x10] sm:$0xff]
        %v2040 = vld [vmem:[#allocation4 + $0x18] sm:$0xff]
        %v2041 = vld [vmem:[#allocation4 + $0x20] sm:$0xff]
        %v2042 = vld [vmem:[#allocation4 + $0x28] sm:$0xff]
        %v2044 = vsel %vm516, %v2036, 0
        %2046 = vmatprep.subr.mxu0 0.0
        %2047 = vmatpush1.msra.mxu0 %v2037
        %2048 = vmatprep.subr.mxu0 0.0
        %2049 = vmatpush1.msra.mxu0 %v2038
        %2050 = vmatprep.subr.mxu0 0.0
        %2051 = vmatpush1.msra.mxu0 %v2039
        %2052 = vmatprep.subr.mxu0 0.0
        %2053 = vmatpush1.msra.mxu0 %v2040
        %2054 = vmatprep.subr.mxu0 0.0
        %2055 = vmatpush1.msra.mxu0 %v2041
        %2056 = vmatprep.subr.mxu0 0.0
        %2057 = vmatpush1.msra.mxu0 %v2042
        %2058 = vmatprep.subr.mxu0 0.0
        %2059 = vmatpush1.msra.mxu0 0.0
        %2060 = vmatprep.subr.mxu0 0.0
        %2061 = vmatpush1.msra.mxu0 0.0
        %2062 = vmatprep.subr.mxu0 0.0
        %2063 = vmatpush1.msra.mxu0 0.0
        %2064 = vmatprep.subr.mxu0 0.0
        %2065 = vmatpush1.msra.mxu0 0.0
        %2066 = vmatprep.subr.mxu0 0.0
        %2067 = vmatpush1.msra.mxu0 0.0
        %2068 = vmatprep.subr.mxu0 0.0
        %2069 = vmatpush1.msra.mxu0 0.0
        %2070 = vmatprep.subr.mxu0 0.0
        %2071 = vmatpush1.msra.mxu0 0.0
        %2072 = vmatprep.subr.mxu0 0.0
        %2073 = vmatpush1.msra.mxu0 0.0
        %2074 = vmatprep.subr.mxu0 0.0
        %2075 = vmatpush1.msra.mxu0 0.0
        %2076 = vmatprep.subr.mxu0 0.0
        %2077 = vmatpush1.msra.mxu0 0.0
        %2078 = vmatprep.subr.mxu0 0.0
        %2079 = vmatpush1.msra.mxu0 0.0
        %2080 = vmatprep.subr.mxu0 0.0
        %2081 = vmatpush1.msra.mxu0 0.0
        %2082 = vmatprep.subr.mxu0 0.0
        %2083 = vmatpush1.msra.mxu0 0.0
        %2084 = vmatprep.subr.mxu0 0.0
        %2085 = vmatpush1.msra.mxu0 0.0
        %2086 = vmatprep.subr.mxu0 0.0
        %2087 = vmatpush1.msra.mxu0 0.0
        %2088 = vmatprep.subr.mxu0 0.0
        %2089 = vmatpush1.msra.mxu0 0.0
        %2090 = vmatprep.subr.mxu0 0.0
        %2091 = vmatpush1.msra.mxu0 0.0
        %2092 = vmatprep.subr.mxu0 0.0
        %2093 = vmatpush1.msra.mxu0 0.0
        %2094 = vmatprep.subr.mxu0 0.0
        %2095 = vmatpush1.msra.mxu0 0.0
        %2096 = vmatprep.subr.mxu0 0.0
        %2097 = vmatpush1.msra.mxu0 0.0
        %2098 = vmatprep.subr.mxu0 0.0
        %2099 = vmatpush1.msra.mxu0 0.0
        %2100 = vmatprep.subr.mxu0 0.0
        %2101 = vmatpush1.msra.mxu0 0.0
        %2102 = vmatprep.subr.mxu0 0.0
        %2103 = vmatpush1.msra.mxu0 0.0
        %2104 = vmatprep.subr.mxu0 0.0
        %2105 = vmatpush1.msra.mxu0 0.0
        %2106 = vmatprep.subr.mxu0 0.0
        %2107 = vmatpush1.msra.mxu0 0.0
        %2108 = vmatprep.subr.mxu0 0.0
        %2109 = vmatpush1.msra.mxu0 0.0
        %2110 = vmatprep.mubr.f32.mxu0 0.0
        %2111 = vmatmul.mubr.f32.gmra.mrb[0].mxu0 %v2044
        %v2112 = vpop.f32.mrb[0].mxu0
        %v2113 = vadd.f32 0.0, %v2112
        %v2114 = vpop.f32.mrb[0].mxu0
        %2115 = vdwg.mxu0
        %v2116 = vadd.f32 %v2035, %v2113
        %v2117 = vld [vmem:[%s505 + $0xd] sm:$0x1]
        %v2118 = vld [vmem:[%s592] sm:$0xff]
        %v2119 = vld [vmem:[%s592 + $0x8] sm:$0xff]
        %v2120 = vld [vmem:[%s592 + $0x10] sm:$0xff]
        %v2121 = vld [vmem:[%s592 + $0x18] sm:$0xff]
        %v2122 = vld [vmem:[%s592 + $0x20] sm:$0xff]
        %v2123 = vld [vmem:[%s592 + $0x28] sm:$0xff]
        %v2125 = vsel %vm516, %v2117, 0
        %2127 = vmatprep.subr.mxu0 0.0
        %2128 = vmatpush1.msra.mxu0 %v2118
        %2129 = vmatprep.subr.mxu0 0.0
        %2130 = vmatpush1.msra.mxu0 %v2119
        %2131 = vmatprep.subr.mxu0 0.0
        %2132 = vmatpush1.msra.mxu0 %v2120
        %2133 = vmatprep.subr.mxu0 0.0
        %2134 = vmatpush1.msra.mxu0 %v2121
        %2135 = vmatprep.subr.mxu0 0.0
        %2136 = vmatpush1.msra.mxu0 %v2122
        %2137 = vmatprep.subr.mxu0 0.0
        %2138 = vmatpush1.msra.mxu0 %v2123
        %2139 = vmatprep.subr.mxu0 0.0
        %2140 = vmatpush1.msra.mxu0 0.0
        %2141 = vmatprep.subr.mxu0 0.0
        %2142 = vmatpush1.msra.mxu0 0.0
        %2143 = vmatprep.subr.mxu0 0.0
        %2144 = vmatpush1.msra.mxu0 0.0
        %2145 = vmatprep.subr.mxu0 0.0
        %2146 = vmatpush1.msra.mxu0 0.0
        %2147 = vmatprep.subr.mxu0 0.0
        %2148 = vmatpush1.msra.mxu0 0.0
        %2149 = vmatprep.subr.mxu0 0.0
        %2150 = vmatpush1.msra.mxu0 0.0
        %2151 = vmatprep.subr.mxu0 0.0
        %2152 = vmatpush1.msra.mxu0 0.0
        %2153 = vmatprep.subr.mxu0 0.0
        %2154 = vmatpush1.msra.mxu0 0.0
        %2155 = vmatprep.subr.mxu0 0.0
        %2156 = vmatpush1.msra.mxu0 0.0
        %2157 = vmatprep.subr.mxu0 0.0
        %2158 = vmatpush1.msra.mxu0 0.0
        %2159 = vmatprep.subr.mxu0 0.0
        %2160 = vmatpush1.msra.mxu0 0.0
        %2161 = vmatprep.subr.mxu0 0.0
        %2162 = vmatpush1.msra.mxu0 0.0
        %2163 = vmatprep.subr.mxu0 0.0
        %2164 = vmatpush1.msra.mxu0 0.0
        %2165 = vmatprep.subr.mxu0 0.0
        %2166 = vmatpush1.msra.mxu0 0.0
        %2167 = vmatprep.subr.mxu0 0.0
        %2168 = vmatpush1.msra.mxu0 0.0
        %2169 = vmatprep.subr.mxu0 0.0
        %2170 = vmatpush1.msra.mxu0 0.0
        %2171 = vmatprep.subr.mxu0 0.0
        %2172 = vmatpush1.msra.mxu0 0.0
        %2173 = vmatprep.subr.mxu0 0.0
        %2174 = vmatpush1.msra.mxu0 0.0
        %2175 = vmatprep.subr.mxu0 0.0
        %2176 = vmatpush1.msra.mxu0 0.0
        %2177 = vmatprep.subr.mxu0 0.0
        %2178 = vmatpush1.msra.mxu0 0.0
        %2179 = vmatprep.subr.mxu0 0.0
        %2180 = vmatpush1.msra.mxu0 0.0
        %2181 = vmatprep.subr.mxu0 0.0
        %2182 = vmatpush1.msra.mxu0 0.0
        %2183 = vmatprep.subr.mxu0 0.0
        %2184 = vmatpush1.msra.mxu0 0.0
        %2185 = vmatprep.subr.mxu0 0.0
        %2186 = vmatpush1.msra.mxu0 0.0
        %2187 = vmatprep.subr.mxu0 0.0
        %2188 = vmatpush1.msra.mxu0 0.0
        %2189 = vmatprep.subr.mxu0 0.0
        %2190 = vmatpush1.msra.mxu0 0.0
        %2191 = vmatprep.mubr.f32.mxu0 0.0
        %2192 = vmatmul.mubr.f32.gmra.mrb[0].mxu0 %v2125
        %v2193 = vpop.f32.mrb[0].mxu0
        %v2194 = vadd.f32 0.0, %v2193
        %v2195 = vpop.f32.mrb[0].mxu0
        %2196 = vdwg.mxu0
        %v2197 = vadd.f32 %v2116, %v2194
        %v2198 = vld [vmem:[%s505 + $0xe] sm:$0x1]
        %v2199 = vld [vmem:[%s674] sm:$0xff]
        %v2200 = vld [vmem:[%s674 + $0x8] sm:$0xff]
        %v2201 = vld [vmem:[%s674 + $0x10] sm:$0xff]
        %v2202 = vld [vmem:[%s674 + $0x18] sm:$0xff]
        %v2203 = vld [vmem:[%s674 + $0x20] sm:$0xff]
        %v2204 = vld [vmem:[%s674 + $0x28] sm:$0xff]
        %v2206 = vsel %vm516, %v2198, 0
        %2208 = vmatprep.subr.mxu0 0.0
        %2209 = vmatpush1.msra.mxu0 %v2199
        %2210 = vmatprep.subr.mxu0 0.0
        %2211 = vmatpush1.msra.mxu0 %v2200
        %2212 = vmatprep.subr.mxu0 0.0
        %2213 = vmatpush1.msra.mxu0 %v2201
        %2214 = vmatprep.subr.mxu0 0.0
        %2215 = vmatpush1.msra.mxu0 %v2202
        %2216 = vmatprep.subr.mxu0 0.0
        %2217 = vmatpush1.msra.mxu0 %v2203
        %2218 = vmatprep.subr.mxu0 0.0
        %2219 = vmatpush1.msra.mxu0 %v2204
        %2220 = vmatprep.subr.mxu0 0.0
        %2221 = vmatpush1.msra.mxu0 0.0
        %2222 = vmatprep.subr.mxu0 0.0
        %2223 = vmatpush1.msra.mxu0 0.0
        %2224 = vmatprep.subr.mxu0 0.0
        %2225 = vmatpush1.msra.mxu0 0.0
        %2226 = vmatprep.subr.mxu0 0.0
        %2227 = vmatpush1.msra.mxu0 0.0
        %2228 = vmatprep.subr.mxu0 0.0
        %2229 = vmatpush1.msra.mxu0 0.0
        %2230 = vmatprep.subr.mxu0 0.0
        %2231 = vmatpush1.msra.mxu0 0.0
        %2232 = vmatprep.subr.mxu0 0.0
        %2233 = vmatpush1.msra.mxu0 0.0
        %2234 = vmatprep.subr.mxu0 0.0
        %2235 = vmatpush1.msra.mxu0 0.0
        %2236 = vmatprep.subr.mxu0 0.0
        %2237 = vmatpush1.msra.mxu0 0.0
        %2238 = vmatprep.subr.mxu0 0.0
        %2239 = vmatpush1.msra.mxu0 0.0
        %2240 = vmatprep.subr.mxu0 0.0
        %2241 = vmatpush1.msra.mxu0 0.0
        %2242 = vmatprep.subr.mxu0 0.0
        %2243 = vmatpush1.msra.mxu0 0.0
        %2244 = vmatprep.subr.mxu0 0.0
        %2245 = vmatpush1.msra.mxu0 0.0
        %2246 = vmatprep.subr.mxu0 0.0
        %2247 = vmatpush1.msra.mxu0 0.0
        %2248 = vmatprep.subr.mxu0 0.0
        %2249 = vmatpush1.msra.mxu0 0.0
        %2250 = vmatprep.subr.mxu0 0.0
        %2251 = vmatpush1.msra.mxu0 0.0
        %2252 = vmatprep.subr.mxu0 0.0
        %2253 = vmatpush1.msra.mxu0 0.0
        %2254 = vmatprep.subr.mxu0 0.0
        %2255 = vmatpush1.msra.mxu0 0.0
        %2256 = vmatprep.subr.mxu0 0.0
        %2257 = vmatpush1.msra.mxu0 0.0
        %2258 = vmatprep.subr.mxu0 0.0
        %2259 = vmatpush1.msra.mxu0 0.0
        %2260 = vmatprep.subr.mxu0 0.0
        %2261 = vmatpush1.msra.mxu0 0.0
        %2262 = vmatprep.subr.mxu0 0.0
        %2263 = vmatpush1.msra.mxu0 0.0
        %2264 = vmatprep.subr.mxu0 0.0
        %2265 = vmatpush1.msra.mxu0 0.0
        %2266 = vmatprep.subr.mxu0 0.0
        %2267 = vmatpush1.msra.mxu0 0.0
        %2268 = vmatprep.subr.mxu0 0.0
        %2269 = vmatpush1.msra.mxu0 0.0
        %2270 = vmatprep.subr.mxu0 0.0
        %2271 = vmatpush1.msra.mxu0 0.0
        %2272 = vmatprep.mubr.f32.mxu0 0.0
        %2273 = vmatmul.mubr.f32.gmra.mrb[0].mxu0 %v2206
        %v2274 = vpop.f32.mrb[0].mxu0
        %v2275 = vadd.f32 0.0, %v2274
        %v2276 = vpop.f32.mrb[0].mxu0
        %2277 = vdwg.mxu0
        %v2278 = vadd.f32 %v2197, %v2275
        %v2279 = vmin.f32 %v2278, 20.0
        %v2280 = vmul.f32 %v2279, 1.442695
        %v2281 = vpow.pop %v2280
        %v2282 = vadd.f32 %v2281, 2.0
        %v2283 = vmul.f32 %v2281, %v2282
        %v2284 = vadd.f32 %v2283, 2.0
        %v2285 = vrcp.pop %v2284
        %v2286 = vmul.f32 %v2283, %v2285
        %v2287 = vmul.f32 %v2278, %v2286
        %2288 = vst [vmem:[#allocation2 + $0x7] sm:$0x1] %v2287
        %v2289 = vld [vmem:[#allocation7] sm:$0x1]
        %v2290 = vld [vmem:[%s505 + $0xe] sm:$0x1]
        %v2291 = vld [vmem:[#allocation4] sm:$0xff]
        %v2292 = vld [vmem:[#allocation4 + $0x8] sm:$0xff]
        %v2293 = vld [vmem:[#allocation4 + $0x10] sm:$0xff]
        %v2294 = vld [vmem:[#allocation4 + $0x18] sm:$0xff]
        %v2295 = vld [vmem:[#allocation4 + $0x20] sm:$0xff]
        %v2296 = vld [vmem:[#allocation4 + $0x28] sm:$0xff]
        %v2298 = vsel %vm516, %v2290, 0
        %2300 = vmatprep.subr.mxu0 0.0
        %2301 = vmatpush1.msra.mxu0 %v2291
        %2302 = vmatprep.subr.mxu0 0.0
        %2303 = vmatpush1.msra.mxu0 %v2292
        %2304 = vmatprep.subr.mxu0 0.0
        %2305 = vmatpush1.msra.mxu0 %v2293
        %2306 = vmatprep.subr.mxu0 0.0
        %2307 = vmatpush1.msra.mxu0 %v2294
        %2308 = vmatprep.subr.mxu0 0.0
        %2309 = vmatpush1.msra.mxu0 %v2295
        %2310 = vmatprep.subr.mxu0 0.0
        %2311 = vmatpush1.msra.mxu0 %v2296
        %2312 = vmatprep.subr.mxu0 0.0
        %2313 = vmatpush1.msra.mxu0 0.0
        %2314 = vmatprep.subr.mxu0 0.0
        %2315 = vmatpush1.msra.mxu0 0.0
        %2316 = vmatprep.subr.mxu0 0.0
        %2317 = vmatpush1.msra.mxu0 0.0
        %2318 = vmatprep.subr.mxu0 0.0
        %2319 = vmatpush1.msra.mxu0 0.0
        %2320 = vmatprep.subr.mxu0 0.0
        %2321 = vmatpush1.msra.mxu0 0.0
        %2322 = vmatprep.subr.mxu0 0.0
        %2323 = vmatpush1.msra.mxu0 0.0
        %2324 = vmatprep.subr.mxu0 0.0
        %2325 = vmatpush1.msra.mxu0 0.0
        %2326 = vmatprep.subr.mxu0 0.0
        %2327 = vmatpush1.msra.mxu0 0.0
        %2328 = vmatprep.subr.mxu0 0.0
        %2329 = vmatpush1.msra.mxu0 0.0
        %2330 = vmatprep.subr.mxu0 0.0
        %2331 = vmatpush1.msra.mxu0 0.0
        %2332 = vmatprep.subr.mxu0 0.0
        %2333 = vmatpush1.msra.mxu0 0.0
        %2334 = vmatprep.subr.mxu0 0.0
        %2335 = vmatpush1.msra.mxu0 0.0
        %2336 = vmatprep.subr.mxu0 0.0
        %2337 = vmatpush1.msra.mxu0 0.0
        %2338 = vmatprep.subr.mxu0 0.0
        %2339 = vmatpush1.msra.mxu0 0.0
        %2340 = vmatprep.subr.mxu0 0.0
        %2341 = vmatpush1.msra.mxu0 0.0
        %2342 = vmatprep.subr.mxu0 0.0
        %2343 = vmatpush1.msra.mxu0 0.0
        %2344 = vmatprep.subr.mxu0 0.0
        %2345 = vmatpush1.msra.mxu0 0.0
        %2346 = vmatprep.subr.mxu0 0.0
        %2347 = vmatpush1.msra.mxu0 0.0
        %2348 = vmatprep.subr.mxu0 0.0
        %2349 = vmatpush1.msra.mxu0 0.0
        %2350 = vmatprep.subr.mxu0 0.0
        %2351 = vmatpush1.msra.mxu0 0.0
        %2352 = vmatprep.subr.mxu0 0.0
        %2353 = vmatpush1.msra.mxu0 0.0
        %2354 = vmatprep.subr.mxu0 0.0
        %2355 = vmatpush1.msra.mxu0 0.0
        %2356 = vmatprep.subr.mxu0 0.0
        %2357 = vmatpush1.msra.mxu0 0.0
        %2358 = vmatprep.subr.mxu0 0.0
        %2359 = vmatpush1.msra.mxu0 0.0
        %2360 = vmatprep.subr.mxu0 0.0
        %2361 = vmatpush1.msra.mxu0 0.0
        %2362 = vmatprep.subr.mxu0 0.0
        %2363 = vmatpush1.msra.mxu0 0.0
        %2364 = vmatprep.mubr.f32.mxu0 0.0
        %2365 = vmatmul.mubr.f32.gmra.mrb[0].mxu0 %v2298
        %v2366 = vpop.f32.mrb[0].mxu0
        %v2367 = vadd.f32 0.0, %v2366
        %v2368 = vpop.f32.mrb[0].mxu0
        %2369 = vdwg.mxu0
        %v2370 = vadd.f32 %v2289, %v2367
        %v2371 = vld [vmem:[%s505 + $0xf] sm:$0x1]
        %v2372 = vld [vmem:[%s592] sm:$0xff]
        %v2373 = vld [vmem:[%s592 + $0x8] sm:$0xff]
        %v2374 = vld [vmem:[%s592 + $0x10] sm:$0xff]
        %v2375 = vld [vmem:[%s592 + $0x18] sm:$0xff]
        %v2376 = vld [vmem:[%s592 + $0x20] sm:$0xff]
        %v2377 = vld [vmem:[%s592 + $0x28] sm:$0xff]
        %v2379 = vsel %vm516, %v2371, 0
        %2381 = vmatprep.subr.mxu0 0.0
        %2382 = vmatpush1.msra.mxu0 %v2372
        %2383 = vmatprep.subr.mxu0 0.0
        %2384 = vmatpush1.msra.mxu0 %v2373
        %2385 = vmatprep.subr.mxu0 0.0
        %2386 = vmatpush1.msra.mxu0 %v2374
        %2387 = vmatprep.subr.mxu0 0.0
        %2388 = vmatpush1.msra.mxu0 %v2375
        %2389 = vmatprep.subr.mxu0 0.0
        %2390 = vmatpush1.msra.mxu0 %v2376
        %2391 = vmatprep.subr.mxu0 0.0
        %2392 = vmatpush1.msra.mxu0 %v2377
        %2393 = vmatprep.subr.mxu0 0.0
        %2394 = vmatpush1.msra.mxu0 0.0
        %2395 = vmatprep.subr.mxu0 0.0
        %2396 = vmatpush1.msra.mxu0 0.0
        %2397 = vmatprep.subr.mxu0 0.0
        %2398 = vmatpush1.msra.mxu0 0.0
        %2399 = vmatprep.subr.mxu0 0.0
        %2400 = vmatpush1.msra.mxu0 0.0
        %2401 = vmatprep.subr.mxu0 0.0
        %2402 = vmatpush1.msra.mxu0 0.0
        %2403 = vmatprep.subr.mxu0 0.0
        %2404 = vmatpush1.msra.mxu0 0.0
        %2405 = vmatprep.subr.mxu0 0.0
        %2406 = vmatpush1.msra.mxu0 0.0
        %2407 = vmatprep.subr.mxu0 0.0
        %2408 = vmatpush1.msra.mxu0 0.0
        %2409 = vmatprep.subr.mxu0 0.0
        %2410 = vmatpush1.msra.mxu0 0.0
        %2411 = vmatprep.subr.mxu0 0.0
        %2412 = vmatpush1.msra.mxu0 0.0
        %2413 = vmatprep.subr.mxu0 0.0
        %2414 = vmatpush1.msra.mxu0 0.0
        %2415 = vmatprep.subr.mxu0 0.0
        %2416 = vmatpush1.msra.mxu0 0.0
        %2417 = vmatprep.subr.mxu0 0.0
        %2418 = vmatpush1.msra.mxu0 0.0
        %2419 = vmatprep.subr.mxu0 0.0
        %2420 = vmatpush1.msra.mxu0 0.0
        %2421 = vmatprep.subr.mxu0 0.0
        %2422 = vmatpush1.msra.mxu0 0.0
        %2423 = vmatprep.subr.mxu0 0.0
        %2424 = vmatpush1.msra.mxu0 0.0
        %2425 = vmatprep.subr.mxu0 0.0
        %2426 = vmatpush1.msra.mxu0 0.0
        %2427 = vmatprep.subr.mxu0 0.0
        %2428 = vmatpush1.msra.mxu0 0.0
        %2429 = vmatprep.subr.mxu0 0.0
        %2430 = vmatpush1.msra.mxu0 0.0
        %2431 = vmatprep.subr.mxu0 0.0
        %2432 = vmatpush1.msra.mxu0 0.0
        %2433 = vmatprep.subr.mxu0 0.0
        %2434 = vmatpush1.msra.mxu0 0.0
        %2435 = vmatprep.subr.mxu0 0.0
        %2436 = vmatpush1.msra.mxu0 0.0
        %2437 = vmatprep.subr.mxu0 0.0
        %2438 = vmatpush1.msra.mxu0 0.0
        %2439 = vmatprep.subr.mxu0 0.0
        %2440 = vmatpush1.msra.mxu0 0.0
        %2441 = vmatprep.subr.mxu0 0.0
        %2442 = vmatpush1.msra.mxu0 0.0
        %2443 = vmatprep.subr.mxu0 0.0
        %2444 = vmatpush1.msra.mxu0 0.0
        %2445 = vmatprep.mubr.f32.mxu0 0.0
        %2446 = vmatmul.mubr.f32.gmra.mrb[0].mxu0 %v2379
        %v2447 = vpop.f32.mrb[0].mxu0
        %v2448 = vadd.f32 0.0, %v2447
        %v2449 = vpop.f32.mrb[0].mxu0
        %2450 = vdwg.mxu0
        %v2451 = vadd.f32 %v2370, %v2448
        %v2452 = vld [vmem:[%s505 + $0x10] sm:$0x1]
        %v2453 = vld [vmem:[%s674] sm:$0xff]
        %v2454 = vld [vmem:[%s674 + $0x8] sm:$0xff]
        %v2455 = vld [vmem:[%s674 + $0x10] sm:$0xff]
        %v2456 = vld [vmem:[%s674 + $0x18] sm:$0xff]
        %v2457 = vld [vmem:[%s674 + $0x20] sm:$0xff]
        %v2458 = vld [vmem:[%s674 + $0x28] sm:$0xff]
        %v2460 = vsel %vm516, %v2452, 0
        %2462 = vmatprep.subr.mxu0 0.0
        %2463 = vmatpush1.msra.mxu0 %v2453
        %2464 = vmatprep.subr.mxu0 0.0
        %2465 = vmatpush1.msra.mxu0 %v2454
        %2466 = vmatprep.subr.mxu0 0.0
        %2467 = vmatpush1.msra.mxu0 %v2455
        %2468 = vmatprep.subr.mxu0 0.0
        %2469 = vmatpush1.msra.mxu0 %v2456
        %2470 = vmatprep.subr.mxu0 0.0
        %2471 = vmatpush1.msra.mxu0 %v2457
        %2472 = vmatprep.subr.mxu0 0.0
        %2473 = vmatpush1.msra.mxu0 %v2458
        %2474 = vmatprep.subr.mxu0 0.0
        %2475 = vmatpush1.msra.mxu0 0.0
        %2476 = vmatprep.subr.mxu0 0.0
        %2477 = vmatpush1.msra.mxu0 0.0
        %2478 = vmatprep.subr.mxu0 0.0
        %2479 = vmatpush1.msra.mxu0 0.0
        %2480 = vmatprep.subr.mxu0 0.0
        %2481 = vmatpush1.msra.mxu0 0.0
        %2482 = vmatprep.subr.mxu0 0.0
        %2483 = vmatpush1.msra.mxu0 0.0
        %2484 = vmatprep.subr.mxu0 0.0
        %2485 = vmatpush1.msra.mxu0 0.0
        %2486 = vmatprep.subr.mxu0 0.0
        %2487 = vmatpush1.msra.mxu0 0.0
        %2488 = vmatprep.subr.mxu0 0.0
        %2489 = vmatpush1.msra.mxu0 0.0
        %2490 = vmatprep.subr.mxu0 0.0
        %2491 = vmatpush1.msra.mxu0 0.0
        %2492 = vmatprep.subr.mxu0 0.0
        %2493 = vmatpush1.msra.mxu0 0.0
        %2494 = vmatprep.subr.mxu0 0.0
        %2495 = vmatpush1.msra.mxu0 0.0
        %2496 = vmatprep.subr.mxu0 0.0
        %2497 = vmatpush1.msra.mxu0 0.0
        %2498 = vmatprep.subr.mxu0 0.0
        %2499 = vmatpush1.msra.mxu0 0.0
        %2500 = vmatprep.subr.mxu0 0.0
        %2501 = vmatpush1.msra.mxu0 0.0
        %2502 = vmatprep.subr.mxu0 0.0
        %2503 = vmatpush1.msra.mxu0 0.0
        %2504 = vmatprep.subr.mxu0 0.0
        %2505 = vmatpush1.msra.mxu0 0.0
        %2506 = vmatprep.subr.mxu0 0.0
        %2507 = vmatpush1.msra.mxu0 0.0
        %2508 = vmatprep.subr.mxu0 0.0
        %2509 = vmatpush1.msra.mxu0 0.0
        %2510 = vmatprep.subr.mxu0 0.0
        %2511 = vmatpush1.msra.mxu0 0.0
        %2512 = vmatprep.subr.mxu0 0.0
        %2513 = vmatpush1.msra.mxu0 0.0
        %2514 = vmatprep.subr.mxu0 0.0
        %2515 = vmatpush1.msra.mxu0 0.0
        %2516 = vmatprep.subr.mxu0 0.0
        %2517 = vmatpush1.msra.mxu0 0.0
        %2518 = vmatprep.subr.mxu0 0.0
        %2519 = vmatpush1.msra.mxu0 0.0
        %2520 = vmatprep.subr.mxu0 0.0
        %2521 = vmatpush1.msra.mxu0 0.0
        %2522 = vmatprep.subr.mxu0 0.0
        %2523 = vmatpush1.msra.mxu0 0.0
        %2524 = vmatprep.subr.mxu0 0.0
        %2525 = vmatpush1.msra.mxu0 0.0
        %2526 = vmatprep.mubr.f32.mxu0 0.0
        %2527 = vmatmul.mubr.f32.gmra.mrb[0].mxu0 %v2460
        %v2528 = vpop.f32.mrb[0].mxu0
        %v2529 = vadd.f32 0.0, %v2528
        %v2530 = vpop.f32.mrb[0].mxu0
        %2531 = vdwg.mxu0
        %v2532 = vadd.f32 %v2451, %v2529
        %v2533 = vmin.f32 %v2532, 20.0
        %v2534 = vmul.f32 %v2533, 1.442695
        %v2535 = vpow.pop %v2534
        %v2536 = vadd.f32 %v2535, 2.0
        %v2537 = vmul.f32 %v2535, %v2536
        %v2538 = vadd.f32 %v2537, 2.0
        %v2539 = vrcp.pop %v2538
        %v2540 = vmul.f32 %v2537, %v2539
        %v2541 = vmul.f32 %v2532, %v2540
        %2542 = vst [vmem:[#allocation2 + $0x8] sm:$0x1] %v2541
        %2543 = vst [vmem:[#allocation3] sm:$0x3f] 0.0
        %v2544 = vld [vmem:[#allocation10] sm:$0x1]
        %v2545 = vld [vmem:[#allocation2] sm:$0x1]
        %v2546 = vld [vmem:[#allocation9] sm:$0xff]
        %v2547 = vld [vmem:[#allocation9 + $0x8] sm:$0xff]
        %v2548 = vld [vmem:[#allocation9 + $0x10] sm:$0xff]
        %v2549 = vld [vmem:[#allocation9 + $0x18] sm:$0xff]
        %v2550 = vld [vmem:[#allocation9 + $0x20] sm:$0xff]
        %v2551 = vld [vmem:[#allocation9 + $0x28] sm:$0xff]
        %v2552 = vld [vmem:[#allocation9 + $0x30] sm:$0xff]
        %v2553 = vld [vmem:[#allocation9 + $0x38] sm:$0xff]
        %v2554 = vld [vmem:[#allocation9 + $0x40] sm:$0xff]
        %v2555 = vld [vmem:[#allocation9 + $0x48] sm:$0xff]
        %v2556 = vld [vmem:[#allocation9 + $0x50] sm:$0xff]
        %v2557 = vld [vmem:[#allocation9 + $0x58] sm:$0xff]
        %v2558 = vld [vmem:[#allocation9 + $0x60] sm:$0xff]
        %v2559 = vld [vmem:[#allocation9 + $0x68] sm:$0xff]
        %v2560 = vld [vmem:[#allocation9 + $0x70] sm:$0xff]
        %v2561 = vld [vmem:[#allocation9 + $0x78] sm:$0xff]
        %2562 = vmatprep.subr.mxu0 0.0
        %2563 = vmatpush1.msra.mxu0 %v2546
        %2564 = vmatprep.subr.mxu0 0.0
        %2565 = vmatpush1.msra.mxu0 %v2547
        %2566 = vmatprep.subr.mxu0 0.0
        %2567 = vmatpush1.msra.mxu0 %v2548
        %2568 = vmatprep.subr.mxu0 0.0
        %2569 = vmatpush1.msra.mxu0 %v2549
        %2570 = vmatprep.subr.mxu0 0.0
        %2571 = vmatpush1.msra.mxu0 %v2550
        %2572 = vmatprep.subr.mxu0 0.0
        %2573 = vmatpush1.msra.mxu0 %v2551
        %2574 = vmatprep.subr.mxu0 0.0
        %2575 = vmatpush1.msra.mxu0 %v2552
        %2576 = vmatprep.subr.mxu0 0.0
        %2577 = vmatpush1.msra.mxu0 %v2553
        %2578 = vmatprep.subr.mxu0 0.0
        %2579 = vmatpush1.msra.mxu0 %v2554
        %2580 = vmatprep.subr.mxu0 0.0
        %2581 = vmatpush1.msra.mxu0 %v2555
        %2582 = vmatprep.subr.mxu0 0.0
        %2583 = vmatpush1.msra.mxu0 %v2556
        %2584 = vmatprep.subr.mxu0 0.0
        %2585 = vmatpush1.msra.mxu0 %v2557
        %2586 = vmatprep.subr.mxu0 0.0
        %2587 = vmatpush1.msra.mxu0 %v2558
        %2588 = vmatprep.subr.mxu0 0.0
        %2589 = vmatpush1.msra.mxu0 %v2559
        %2590 = vmatprep.subr.mxu0 0.0
        %2591 = vmatpush1.msra.mxu0 %v2560
        %2592 = vmatprep.subr.mxu0 0.0
        %2593 = vmatpush1.msra.mxu0 %v2561
        %2594 = vmatprep.subr.mxu0 0.0
        %2595 = vmatpush1.msra.mxu0 0.0
        %2596 = vmatprep.subr.mxu0 0.0
        %2597 = vmatpush1.msra.mxu0 0.0
        %2598 = vmatprep.subr.mxu0 0.0
        %2599 = vmatpush1.msra.mxu0 0.0
        %2600 = vmatprep.subr.mxu0 0.0
        %2601 = vmatpush1.msra.mxu0 0.0
        %2602 = vmatprep.subr.mxu0 0.0
        %2603 = vmatpush1.msra.mxu0 0.0
        %2604 = vmatprep.subr.mxu0 0.0
        %2605 = vmatpush1.msra.mxu0 0.0
        %2606 = vmatprep.subr.mxu0 0.0
        %2607 = vmatpush1.msra.mxu0 0.0
        %2608 = vmatprep.subr.mxu0 0.0
        %2609 = vmatpush1.msra.mxu0 0.0
        %2610 = vmatprep.subr.mxu0 0.0
        %2611 = vmatpush1.msra.mxu0 0.0
        %2612 = vmatprep.subr.mxu0 0.0
        %2613 = vmatpush1.msra.mxu0 0.0
        %2614 = vmatprep.subr.mxu0 0.0
        %2615 = vmatpush1.msra.mxu0 0.0
        %2616 = vmatprep.subr.mxu0 0.0
        %2617 = vmatpush1.msra.mxu0 0.0
        %2618 = vmatprep.subr.mxu0 0.0
        %2619 = vmatpush1.msra.mxu0 0.0
        %2620 = vmatprep.subr.mxu0 0.0
        %2621 = vmatpush1.msra.mxu0 0.0
        %2622 = vmatprep.subr.mxu0 0.0
        %2623 = vmatpush1.msra.mxu0 0.0
        %2624 = vmatprep.subr.mxu0 0.0
        %2625 = vmatpush1.msra.mxu0 0.0
        %2626 = vmatprep.mubr.f32.mxu0 0.0
        %2627 = vmatmul.mubr.f32.gmra.mrb[0].mxu0 %v2545
        %v2628 = vpop.f32.mrb[0].mxu0
        %v2629 = vadd.f32 0.0, %v2628
        %v2630 = vpop.f32.mrb[0].mxu0
        %2631 = vdwg.mxu0
        %v2632 = vadd.f32 %v2544, %v2629
        %v2633 = vld [vmem:[#allocation2 + $0x1] sm:$0x1]
        %s2634 = scalar_lea.vmem [#allocation9], 128
        %v2635 = vld [vmem:[%s2634] sm:$0xff]
        %v2636 = vld [vmem:[%s2634 + $0x8] sm:$0xff]
        %v2637 = vld [vmem:[%s2634 + $0x10] sm:$0xff]
        %v2638 = vld [vmem:[%s2634 + $0x18] sm:$0xff]
        %v2639 = vld [vmem:[%s2634 + $0x20] sm:$0xff]
        %v2640 = vld [vmem:[%s2634 + $0x28] sm:$0xff]
        %v2641 = vld [vmem:[%s2634 + $0x30] sm:$0xff]
        %v2642 = vld [vmem:[%s2634 + $0x38] sm:$0xff]
        %v2643 = vld [vmem:[%s2634 + $0x40] sm:$0xff]
        %v2644 = vld [vmem:[%s2634 + $0x48] sm:$0xff]
        %v2645 = vld [vmem:[%s2634 + $0x50] sm:$0xff]
        %v2646 = vld [vmem:[%s2634 + $0x58] sm:$0xff]
        %v2647 = vld [vmem:[%s2634 + $0x60] sm:$0xff]
        %v2648 = vld [vmem:[%s2634 + $0x68] sm:$0xff]
        %v2649 = vld [vmem:[%s2634 + $0x70] sm:$0xff]
        %v2650 = vld [vmem:[%s2634 + $0x78] sm:$0xff]
        %2651 = vmatprep.subr.mxu0 0.0
        %2652 = vmatpush1.msra.mxu0 %v2635
        %2653 = vmatprep.subr.mxu0 0.0
        %2654 = vmatpush1.msra.mxu0 %v2636
        %2655 = vmatprep.subr.mxu0 0.0
        %2656 = vmatpush1.msra.mxu0 %v2637
        %2657 = vmatprep.subr.mxu0 0.0
        %2658 = vmatpush1.msra.mxu0 %v2638
        %2659 = vmatprep.subr.mxu0 0.0
        %2660 = vmatpush1.msra.mxu0 %v2639
        %2661 = vmatprep.subr.mxu0 0.0
        %2662 = vmatpush1.msra.mxu0 %v2640
        %2663 = vmatprep.subr.mxu0 0.0
        %2664 = vmatpush1.msra.mxu0 %v2641
        %2665 = vmatprep.subr.mxu0 0.0
        %2666 = vmatpush1.msra.mxu0 %v2642
        %2667 = vmatprep.subr.mxu0 0.0
        %2668 = vmatpush1.msra.mxu0 %v2643
        %2669 = vmatprep.subr.mxu0 0.0
        %2670 = vmatpush1.msra.mxu0 %v2644
        %2671 = vmatprep.subr.mxu0 0.0
        %2672 = vmatpush1.msra.mxu0 %v2645
        %2673 = vmatprep.subr.mxu0 0.0
        %2674 = vmatpush1.msra.mxu0 %v2646
        %2675 = vmatprep.subr.mxu0 0.0
        %2676 = vmatpush1.msra.mxu0 %v2647
        %2677 = vmatprep.subr.mxu0 0.0
        %2678 = vmatpush1.msra.mxu0 %v2648
        %2679 = vmatprep.subr.mxu0 0.0
        %2680 = vmatpush1.msra.mxu0 %v2649
        %2681 = vmatprep.subr.mxu0 0.0
        %2682 = vmatpush1.msra.mxu0 %v2650
        %2683 = vmatprep.subr.mxu0 0.0
        %2684 = vmatpush1.msra.mxu0 0.0
        %2685 = vmatprep.subr.mxu0 0.0
        %2686 = vmatpush1.msra.mxu0 0.0
        %2687 = vmatprep.subr.mxu0 0.0
        %2688 = vmatpush1.msra.mxu0 0.0
        %2689 = vmatprep.subr.mxu0 0.0
        %2690 = vmatpush1.msra.mxu0 0.0
        %2691 = vmatprep.subr.mxu0 0.0
        %2692 = vmatpush1.msra.mxu0 0.0
        %2693 = vmatprep.subr.mxu0 0.0
        %2694 = vmatpush1.msra.mxu0 0.0
        %2695 = vmatprep.subr.mxu0 0.0
        %2696 = vmatpush1.msra.mxu0 0.0
        %2697 = vmatprep.subr.mxu0 0.0
        %2698 = vmatpush1.msra.mxu0 0.0
        %2699 = vmatprep.subr.mxu0 0.0
        %2700 = vmatpush1.msra.mxu0 0.0
        %2701 = vmatprep.subr.mxu0 0.0
        %2702 = vmatpush1.msra.mxu0 0.0
        %2703 = vmatprep.subr.mxu0 0.0
        %2704 = vmatpush1.msra.mxu0 0.0
        %2705 = vmatprep.subr.mxu0 0.0
        %2706 = vmatpush1.msra.mxu0 0.0
        %2707 = vmatprep.subr.mxu0 0.0
        %2708 = vmatpush1.msra.mxu0 0.0
        %2709 = vmatprep.subr.mxu0 0.0
        %2710 = vmatpush1.msra.mxu0 0.0
        %2711 = vmatprep.subr.mxu0 0.0
        %2712 = vmatpush1.msra.mxu0 0.0
        %2713 = vmatprep.subr.mxu0 0.0
        %2714 = vmatpush1.msra.mxu0 0.0
        %2715 = vmatprep.mubr.f32.mxu0 0.0
        %2716 = vmatmul.mubr.f32.gmra.mrb[0].mxu0 %v2633
        %v2717 = vpop.f32.mrb[0].mxu0
        %v2718 = vadd.f32 0.0, %v2717
        %v2719 = vpop.f32.mrb[0].mxu0
        %2720 = vdwg.mxu0
        %v2721 = vadd.f32 %v2632, %v2718
        %v2722 = vld [vmem:[#allocation2 + $0x2] sm:$0x1]
        %s2723 = scalar_lea.vmem [#allocation9], 256
        %v2724 = vld [vmem:[%s2723] sm:$0xff]
        %v2725 = vld [vmem:[%s2723 + $0x8] sm:$0xff]
        %v2726 = vld [vmem:[%s2723 + $0x10] sm:$0xff]
        %v2727 = vld [vmem:[%s2723 + $0x18] sm:$0xff]
        %v2728 = vld [vmem:[%s2723 + $0x20] sm:$0xff]
        %v2729 = vld [vmem:[%s2723 + $0x28] sm:$0xff]
        %v2730 = vld [vmem:[%s2723 + $0x30] sm:$0xff]
        %v2731 = vld [vmem:[%s2723 + $0x38] sm:$0xff]
        %v2732 = vld [vmem:[%s2723 + $0x40] sm:$0xff]
        %v2733 = vld [vmem:[%s2723 + $0x48] sm:$0xff]
        %v2734 = vld [vmem:[%s2723 + $0x50] sm:$0xff]
        %v2735 = vld [vmem:[%s2723 + $0x58] sm:$0xff]
        %v2736 = vld [vmem:[%s2723 + $0x60] sm:$0xff]
        %v2737 = vld [vmem:[%s2723 + $0x68] sm:$0xff]
        %v2738 = vld [vmem:[%s2723 + $0x70] sm:$0xff]
        %v2739 = vld [vmem:[%s2723 + $0x78] sm:$0xff]
        %2740 = vmatprep.subr.mxu0 0.0
        %2741 = vmatpush1.msra.mxu0 %v2724
        %2742 = vmatprep.subr.mxu0 0.0
        %2743 = vmatpush1.msra.mxu0 %v2725
        %2744 = vmatprep.subr.mxu0 0.0
        %2745 = vmatpush1.msra.mxu0 %v2726
        %2746 = vmatprep.subr.mxu0 0.0
        %2747 = vmatpush1.msra.mxu0 %v2727
        %2748 = vmatprep.subr.mxu0 0.0
        %2749 = vmatpush1.msra.mxu0 %v2728
        %2750 = vmatprep.subr.mxu0 0.0
        %2751 = vmatpush1.msra.mxu0 %v2729
        %2752 = vmatprep.subr.mxu0 0.0
        %2753 = vmatpush1.msra.mxu0 %v2730
        %2754 = vmatprep.subr.mxu0 0.0
        %2755 = vmatpush1.msra.mxu0 %v2731
        %2756 = vmatprep.subr.mxu0 0.0
        %2757 = vmatpush1.msra.mxu0 %v2732
        %2758 = vmatprep.subr.mxu0 0.0
        %2759 = vmatpush1.msra.mxu0 %v2733
        %2760 = vmatprep.subr.mxu0 0.0
        %2761 = vmatpush1.msra.mxu0 %v2734
        %2762 = vmatprep.subr.mxu0 0.0
        %2763 = vmatpush1.msra.mxu0 %v2735
        %2764 = vmatprep.subr.mxu0 0.0
        %2765 = vmatpush1.msra.mxu0 %v2736
        %2766 = vmatprep.subr.mxu0 0.0
        %2767 = vmatpush1.msra.mxu0 %v2737
        %2768 = vmatprep.subr.mxu0 0.0
        %2769 = vmatpush1.msra.mxu0 %v2738
        %2770 = vmatprep.subr.mxu0 0.0
        %2771 = vmatpush1.msra.mxu0 %v2739
        %2772 = vmatprep.subr.mxu0 0.0
        %2773 = vmatpush1.msra.mxu0 0.0
        %2774 = vmatprep.subr.mxu0 0.0
        %2775 = vmatpush1.msra.mxu0 0.0
        %2776 = vmatprep.subr.mxu0 0.0
        %2777 = vmatpush1.msra.mxu0 0.0
        %2778 = vmatprep.subr.mxu0 0.0
        %2779 = vmatpush1.msra.mxu0 0.0
        %2780 = vmatprep.subr.mxu0 0.0
        %2781 = vmatpush1.msra.mxu0 0.0
        %2782 = vmatprep.subr.mxu0 0.0
        %2783 = vmatpush1.msra.mxu0 0.0
        %2784 = vmatprep.subr.mxu0 0.0
        %2785 = vmatpush1.msra.mxu0 0.0
        %2786 = vmatprep.subr.mxu0 0.0
        %2787 = vmatpush1.msra.mxu0 0.0
        %2788 = vmatprep.subr.mxu0 0.0
        %2789 = vmatpush1.msra.mxu0 0.0
        %2790 = vmatprep.subr.mxu0 0.0
        %2791 = vmatpush1.msra.mxu0 0.0
        %2792 = vmatprep.subr.mxu0 0.0
        %2793 = vmatpush1.msra.mxu0 0.0
        %2794 = vmatprep.subr.mxu0 0.0
        %2795 = vmatpush1.msra.mxu0 0.0
        %2796 = vmatprep.subr.mxu0 0.0
        %2797 = vmatpush1.msra.mxu0 0.0
        %2798 = vmatprep.subr.mxu0 0.0
        %2799 = vmatpush1.msra.mxu0 0.0
        %2800 = vmatprep.subr.mxu0 0.0
        %2801 = vmatpush1.msra.mxu0 0.0
        %2802 = vmatprep.subr.mxu0 0.0
        %2803 = vmatpush1.msra.mxu0 0.0
        %2804 = vmatprep.mubr.f32.mxu0 0.0
        %2805 = vmatmul.mubr.f32.gmra.mrb[0].mxu0 %v2722
        %v2806 = vpop.f32.mrb[0].mxu0
        %v2807 = vadd.f32 0.0, %v2806
        %v2808 = vpop.f32.mrb[0].mxu0
        %2809 = vdwg.mxu0
        %v2810 = vadd.f32 %v2721, %v2807
        %v2811 = vmin.f32 %v2810, 20.0
        %v2812 = vmul.f32 %v2811, 1.442695
        %v2813 = vpow.pop %v2812
        %v2814 = vadd.f32 %v2813, 2.0
        %v2815 = vmul.f32 %v2813, %v2814
        %v2816 = vadd.f32 %v2815, 2.0
        %v2817 = vrcp.pop %v2816
        %v2818 = vmul.f32 %v2815, %v2817
        %v2819 = vmul.f32 %v2810, %v2818
        %2820 = vst [vmem:[#allocation3 + $0x1] sm:$0x1] %v2819
        %v2821 = vld [vmem:[#allocation10] sm:$0x1]
        %v2822 = vld [vmem:[#allocation2 + $0x2] sm:$0x1]
        %v2823 = vld [vmem:[#allocation9] sm:$0xff]
        %v2824 = vld [vmem:[#allocation9 + $0x8] sm:$0xff]
        %v2825 = vld [vmem:[#allocation9 + $0x10] sm:$0xff]
        %v2826 = vld [vmem:[#allocation9 + $0x18] sm:$0xff]
        %v2827 = vld [vmem:[#allocation9 + $0x20] sm:$0xff]
        %v2828 = vld [vmem:[#allocation9 + $0x28] sm:$0xff]
        %v2829 = vld [vmem:[#allocation9 + $0x30] sm:$0xff]
        %v2830 = vld [vmem:[#allocation9 + $0x38] sm:$0xff]
        %v2831 = vld [vmem:[#allocation9 + $0x40] sm:$0xff]
        %v2832 = vld [vmem:[#allocation9 + $0x48] sm:$0xff]
        %v2833 = vld [vmem:[#allocation9 + $0x50] sm:$0xff]
        %v2834 = vld [vmem:[#allocation9 + $0x58] sm:$0xff]
        %v2835 = vld [vmem:[#allocation9 + $0x60] sm:$0xff]
        %v2836 = vld [vmem:[#allocation9 + $0x68] sm:$0xff]
        %v2837 = vld [vmem:[#allocation9 + $0x70] sm:$0xff]
        %v2838 = vld [vmem:[#allocation9 + $0x78] sm:$0xff]
        %2839 = vmatprep.subr.mxu0 0.0
        %2840 = vmatpush1.msra.mxu0 %v2823
        %2841 = vmatprep.subr.mxu0 0.0
        %2842 = vmatpush1.msra.mxu0 %v2824
        %2843 = vmatprep.subr.mxu0 0.0
        %2844 = vmatpush1.msra.mxu0 %v2825
        %2845 = vmatprep.subr.mxu0 0.0
        %2846 = vmatpush1.msra.mxu0 %v2826
        %2847 = vmatprep.subr.mxu0 0.0
        %2848 = vmatpush1.msra.mxu0 %v2827
        %2849 = vmatprep.subr.mxu0 0.0
        %2850 = vmatpush1.msra.mxu0 %v2828
        %2851 = vmatprep.subr.mxu0 0.0
        %2852 = vmatpush1.msra.mxu0 %v2829
        %2853 = vmatprep.subr.mxu0 0.0
        %2854 = vmatpush1.msra.mxu0 %v2830
        %2855 = vmatprep.subr.mxu0 0.0
        %2856 = vmatpush1.msra.mxu0 %v2831
        %2857 = vmatprep.subr.mxu0 0.0
        %2858 = vmatpush1.msra.mxu0 %v2832
        %2859 = vmatprep.subr.mxu0 0.0
        %2860 = vmatpush1.msra.mxu0 %v2833
        %2861 = vmatprep.subr.mxu0 0.0
        %2862 = vmatpush1.msra.mxu0 %v2834
        %2863 = vmatprep.subr.mxu0 0.0
        %2864 = vmatpush1.msra.mxu0 %v2835
        %2865 = vmatprep.subr.mxu0 0.0
        %2866 = vmatpush1.msra.mxu0 %v2836
        %2867 = vmatprep.subr.mxu0 0.0
        %2868 = vmatpush1.msra.mxu0 %v2837
        %2869 = vmatprep.subr.mxu0 0.0
        %2870 = vmatpush1.msra.mxu0 %v2838
        %2871 = vmatprep.subr.mxu0 0.0
        %2872 = vmatpush1.msra.mxu0 0.0
        %2873 = vmatprep.subr.mxu0 0.0
        %2874 = vmatpush1.msra.mxu0 0.0
        %2875 = vmatprep.subr.mxu0 0.0
        %2876 = vmatpush1.msra.mxu0 0.0
        %2877 = vmatprep.subr.mxu0 0.0
        %2878 = vmatpush1.msra.mxu0 0.0
        %2879 = vmatprep.subr.mxu0 0.0
        %2880 = vmatpush1.msra.mxu0 0.0
        %2881 = vmatprep.subr.mxu0 0.0
        %2882 = vmatpush1.msra.mxu0 0.0
        %2883 = vmatprep.subr.mxu0 0.0
        %2884 = vmatpush1.msra.mxu0 0.0
        %2885 = vmatprep.subr.mxu0 0.0
        %2886 = vmatpush1.msra.mxu0 0.0
        %2887 = vmatprep.subr.mxu0 0.0
        %2888 = vmatpush1.msra.mxu0 0.0
        %2889 = vmatprep.subr.mxu0 0.0
        %2890 = vmatpush1.msra.mxu0 0.0
        %2891 = vmatprep.subr.mxu0 0.0
        %2892 = vmatpush1.msra.mxu0 0.0
        %2893 = vmatprep.subr.mxu0 0.0
        %2894 = vmatpush1.msra.mxu0 0.0
        %2895 = vmatprep.subr.mxu0 0.0
        %2896 = vmatpush1.msra.mxu0 0.0
        %2897 = vmatprep.subr.mxu0 0.0
        %2898 = vmatpush1.msra.mxu0 0.0
        %2899 = vmatprep.subr.mxu0 0.0
        %2900 = vmatpush1.msra.mxu0 0.0
        %2901 = vmatprep.subr.mxu0 0.0
        %2902 = vmatpush1.msra.mxu0 0.0
        %2903 = vmatprep.mubr.f32.mxu0 0.0
        %2904 = vmatmul.mubr.f32.gmra.mrb[0].mxu0 %v2822
        %v2905 = vpop.f32.mrb[0].mxu0
        %v2906 = vadd.f32 0.0, %v2905
        %v2907 = vpop.f32.mrb[0].mxu0
        %2908 = vdwg.mxu0
        %v2909 = vadd.f32 %v2821, %v2906
        %v2910 = vld [vmem:[#allocation2 + $0x3] sm:$0x1]
        %v2911 = vld [vmem:[%s2634] sm:$0xff]
        %v2912 = vld [vmem:[%s2634 + $0x8] sm:$0xff]
        %v2913 = vld [vmem:[%s2634 + $0x10] sm:$0xff]
        %v2914 = vld [vmem:[%s2634 + $0x18] sm:$0xff]
        %v2915 = vld [vmem:[%s2634 + $0x20] sm:$0xff]
        %v2916 = vld [vmem:[%s2634 + $0x28] sm:$0xff]
        %v2917 = vld [vmem:[%s2634 + $0x30] sm:$0xff]
        %v2918 = vld [vmem:[%s2634 + $0x38] sm:$0xff]
        %v2919 = vld [vmem:[%s2634 + $0x40] sm:$0xff]
        %v2920 = vld [vmem:[%s2634 + $0x48] sm:$0xff]
        %v2921 = vld [vmem:[%s2634 + $0x50] sm:$0xff]
        %v2922 = vld [vmem:[%s2634 + $0x58] sm:$0xff]
        %v2923 = vld [vmem:[%s2634 + $0x60] sm:$0xff]
        %v2924 = vld [vmem:[%s2634 + $0x68] sm:$0xff]
        %v2925 = vld [vmem:[%s2634 + $0x70] sm:$0xff]
        %v2926 = vld [vmem:[%s2634 + $0x78] sm:$0xff]
        %2927 = vmatprep.subr.mxu0 0.0
        %2928 = vmatpush1.msra.mxu0 %v2911
        %2929 = vmatprep.subr.mxu0 0.0
        %2930 = vmatpush1.msra.mxu0 %v2912
        %2931 = vmatprep.subr.mxu0 0.0
        %2932 = vmatpush1.msra.mxu0 %v2913
        %2933 = vmatprep.subr.mxu0 0.0
        %2934 = vmatpush1.msra.mxu0 %v2914
        %2935 = vmatprep.subr.mxu0 0.0
        %2936 = vmatpush1.msra.mxu0 %v2915
        %2937 = vmatprep.subr.mxu0 0.0
        %2938 = vmatpush1.msra.mxu0 %v2916
        %2939 = vmatprep.subr.mxu0 0.0
        %2940 = vmatpush1.msra.mxu0 %v2917
        %2941 = vmatprep.subr.mxu0 0.0
        %2942 = vmatpush1.msra.mxu0 %v2918
        %2943 = vmatprep.subr.mxu0 0.0
        %2944 = vmatpush1.msra.mxu0 %v2919
        %2945 = vmatprep.subr.mxu0 0.0
        %2946 = vmatpush1.msra.mxu0 %v2920
        %2947 = vmatprep.subr.mxu0 0.0
        %2948 = vmatpush1.msra.mxu0 %v2921
        %2949 = vmatprep.subr.mxu0 0.0
        %2950 = vmatpush1.msra.mxu0 %v2922
        %2951 = vmatprep.subr.mxu0 0.0
        %2952 = vmatpush1.msra.mxu0 %v2923
        %2953 = vmatprep.subr.mxu0 0.0
        %2954 = vmatpush1.msra.mxu0 %v2924
        %2955 = vmatprep.subr.mxu0 0.0
        %2956 = vmatpush1.msra.mxu0 %v2925
        %2957 = vmatprep.subr.mxu0 0.0
        %2958 = vmatpush1.msra.mxu0 %v2926
        %2959 = vmatprep.subr.mxu0 0.0
        %2960 = vmatpush1.msra.mxu0 0.0
        %2961 = vmatprep.subr.mxu0 0.0
        %2962 = vmatpush1.msra.mxu0 0.0
        %2963 = vmatprep.subr.mxu0 0.0
        %2964 = vmatpush1.msra.mxu0 0.0
        %2965 = vmatprep.subr.mxu0 0.0
        %2966 = vmatpush1.msra.mxu0 0.0
        %2967 = vmatprep.subr.mxu0 0.0
        %2968 = vmatpush1.msra.mxu0 0.0
        %2969 = vmatprep.subr.mxu0 0.0
        %2970 = vmatpush1.msra.mxu0 0.0
        %2971 = vmatprep.subr.mxu0 0.0
        %2972 = vmatpush1.msra.mxu0 0.0
        %2973 = vmatprep.subr.mxu0 0.0
        %2974 = vmatpush1.msra.mxu0 0.0
        %2975 = vmatprep.subr.mxu0 0.0
        %2976 = vmatpush1.msra.mxu0 0.0
        %2977 = vmatprep.subr.mxu0 0.0
        %2978 = vmatpush1.msra.mxu0 0.0
        %2979 = vmatprep.subr.mxu0 0.0
        %2980 = vmatpush1.msra.mxu0 0.0
        %2981 = vmatprep.subr.mxu0 0.0
        %2982 = vmatpush1.msra.mxu0 0.0
        %2983 = vmatprep.subr.mxu0 0.0
        %2984 = vmatpush1.msra.mxu0 0.0
        %2985 = vmatprep.subr.mxu0 0.0
        %2986 = vmatpush1.msra.mxu0 0.0
        %2987 = vmatprep.subr.mxu0 0.0
        %2988 = vmatpush1.msra.mxu0 0.0
        %2989 = vmatprep.subr.mxu0 0.0
        %2990 = vmatpush1.msra.mxu0 0.0
        %2991 = vmatprep.mubr.f32.mxu0 0.0
        %2992 = vmatmul.mubr.f32.gmra.mrb[0].mxu0 %v2910
        %v2993 = vpop.f32.mrb[0].mxu0
        %v2994 = vadd.f32 0.0, %v2993
        %v2995 = vpop.f32.mrb[0].mxu0
        %2996 = vdwg.mxu0
        %v2997 = vadd.f32 %v2909, %v2994
        %v2998 = vld [vmem:[#allocation2 + $0x4] sm:$0x1]
        %v2999 = vld [vmem:[%s2723] sm:$0xff]
        %v3000 = vld [vmem:[%s2723 + $0x8] sm:$0xff]
        %v3001 = vld [vmem:[%s2723 + $0x10] sm:$0xff]
        %v3002 = vld [vmem:[%s2723 + $0x18] sm:$0xff]
        %v3003 = vld [vmem:[%s2723 + $0x20] sm:$0xff]
        %v3004 = vld [vmem:[%s2723 + $0x28] sm:$0xff]
        %v3005 = vld [vmem:[%s2723 + $0x30] sm:$0xff]
        %v3006 = vld [vmem:[%s2723 + $0x38] sm:$0xff]
        %v3007 = vld [vmem:[%s2723 + $0x40] sm:$0xff]
        %v3008 = vld [vmem:[%s2723 + $0x48] sm:$0xff]
        %v3009 = vld [vmem:[%s2723 + $0x50] sm:$0xff]
        %v3010 = vld [vmem:[%s2723 + $0x58] sm:$0xff]
        %v3011 = vld [vmem:[%s2723 + $0x60] sm:$0xff]
        %v3012 = vld [vmem:[%s2723 + $0x68] sm:$0xff]
        %v3013 = vld [vmem:[%s2723 + $0x70] sm:$0xff]
        %v3014 = vld [vmem:[%s2723 + $0x78] sm:$0xff]
        %3015 = vmatprep.subr.mxu0 0.0
        %3016 = vmatpush1.msra.mxu0 %v2999
        %3017 = vmatprep.subr.mxu0 0.0
        %3018 = vmatpush1.msra.mxu0 %v3000
        %3019 = vmatprep.subr.mxu0 0.0
        %3020 = vmatpush1.msra.mxu0 %v3001
        %3021 = vmatprep.subr.mxu0 0.0
        %3022 = vmatpush1.msra.mxu0 %v3002
        %3023 = vmatprep.subr.mxu0 0.0
        %3024 = vmatpush1.msra.mxu0 %v3003
        %3025 = vmatprep.subr.mxu0 0.0
        %3026 = vmatpush1.msra.mxu0 %v3004
        %3027 = vmatprep.subr.mxu0 0.0
        %3028 = vmatpush1.msra.mxu0 %v3005
        %3029 = vmatprep.subr.mxu0 0.0
        %3030 = vmatpush1.msra.mxu0 %v3006
        %3031 = vmatprep.subr.mxu0 0.0
        %3032 = vmatpush1.msra.mxu0 %v3007
        %3033 = vmatprep.subr.mxu0 0.0
        %3034 = vmatpush1.msra.mxu0 %v3008
        %3035 = vmatprep.subr.mxu0 0.0
        %3036 = vmatpush1.msra.mxu0 %v3009
        %3037 = vmatprep.subr.mxu0 0.0
        %3038 = vmatpush1.msra.mxu0 %v3010
        %3039 = vmatprep.subr.mxu0 0.0
        %3040 = vmatpush1.msra.mxu0 %v3011
        %3041 = vmatprep.subr.mxu0 0.0
        %3042 = vmatpush1.msra.mxu0 %v3012
        %3043 = vmatprep.subr.mxu0 0.0
        %3044 = vmatpush1.msra.mxu0 %v3013
        %3045 = vmatprep.subr.mxu0 0.0
        %3046 = vmatpush1.msra.mxu0 %v3014
        %3047 = vmatprep.subr.mxu0 0.0
        %3048 = vmatpush1.msra.mxu0 0.0
        %3049 = vmatprep.subr.mxu0 0.0
        %3050 = vmatpush1.msra.mxu0 0.0
        %3051 = vmatprep.subr.mxu0 0.0
        %3052 = vmatpush1.msra.mxu0 0.0
        %3053 = vmatprep.subr.mxu0 0.0
        %3054 = vmatpush1.msra.mxu0 0.0
        %3055 = vmatprep.subr.mxu0 0.0
        %3056 = vmatpush1.msra.mxu0 0.0
        %3057 = vmatprep.subr.mxu0 0.0
        %3058 = vmatpush1.msra.mxu0 0.0
        %3059 = vmatprep.subr.mxu0 0.0
        %3060 = vmatpush1.msra.mxu0 0.0
        %3061 = vmatprep.subr.mxu0 0.0
        %3062 = vmatpush1.msra.mxu0 0.0
        %3063 = vmatprep.subr.mxu0 0.0
        %3064 = vmatpush1.msra.mxu0 0.0
        %3065 = vmatprep.subr.mxu0 0.0
        %3066 = vmatpush1.msra.mxu0 0.0
        %3067 = vmatprep.subr.mxu0 0.0
        %3068 = vmatpush1.msra.mxu0 0.0
        %3069 = vmatprep.subr.mxu0 0.0
        %3070 = vmatpush1.msra.mxu0 0.0
        %3071 = vmatprep.subr.mxu0 0.0
        %3072 = vmatpush1.msra.mxu0 0.0
        %3073 = vmatprep.subr.mxu0 0.0
        %3074 = vmatpush1.msra.mxu0 0.0
        %3075 = vmatprep.subr.mxu0 0.0
        %3076 = vmatpush1.msra.mxu0 0.0
        %3077 = vmatprep.subr.mxu0 0.0
        %3078 = vmatpush1.msra.mxu0 0.0
        %3079 = vmatprep.mubr.f32.mxu0 0.0
        %3080 = vmatmul.mubr.f32.gmra.mrb[0].mxu0 %v2998
        %v3081 = vpop.f32.mrb[0].mxu0
        %v3082 = vadd.f32 0.0, %v3081
        %v3083 = vpop.f32.mrb[0].mxu0
        %3084 = vdwg.mxu0
        %v3085 = vadd.f32 %v2997, %v3082
        %v3086 = vmin.f32 %v3085, 20.0
        %v3087 = vmul.f32 %v3086, 1.442695
        %v3088 = vpow.pop %v3087
        %v3089 = vadd.f32 %v3088, 2.0
        %v3090 = vmul.f32 %v3088, %v3089
        %v3091 = vadd.f32 %v3090, 2.0
        %v3092 = vrcp.pop %v3091
        %v3093 = vmul.f32 %v3090, %v3092
        %v3094 = vmul.f32 %v3085, %v3093
        %3095 = vst [vmem:[#allocation3 + $0x2] sm:$0x1] %v3094
        %v3096 = vld [vmem:[#allocation10] sm:$0x1]
        %v3097 = vld [vmem:[#allocation2 + $0x4] sm:$0x1]
        %v3098 = vld [vmem:[#allocation9] sm:$0xff]
        %v3099 = vld [vmem:[#allocation9 + $0x8] sm:$0xff]
        %v3100 = vld [vmem:[#allocation9 + $0x10] sm:$0xff]
        %v3101 = vld [vmem:[#allocation9 + $0x18] sm:$0xff]
        %v3102 = vld [vmem:[#allocation9 + $0x20] sm:$0xff]
        %v3103 = vld [vmem:[#allocation9 + $0x28] sm:$0xff]
        %v3104 = vld [vmem:[#allocation9 + $0x30] sm:$0xff]
        %v3105 = vld [vmem:[#allocation9 + $0x38] sm:$0xff]
        %v3106 = vld [vmem:[#allocation9 + $0x40] sm:$0xff]
        %v3107 = vld [vmem:[#allocation9 + $0x48] sm:$0xff]
        %v3108 = vld [vmem:[#allocation9 + $0x50] sm:$0xff]
        %v3109 = vld [vmem:[#allocation9 + $0x58] sm:$0xff]
        %v3110 = vld [vmem:[#allocation9 + $0x60] sm:$0xff]
        %v3111 = vld [vmem:[#allocation9 + $0x68] sm:$0xff]
        %v3112 = vld [vmem:[#allocation9 + $0x70] sm:$0xff]
        %v3113 = vld [vmem:[#allocation9 + $0x78] sm:$0xff]
        %3114 = vmatprep.subr.mxu0 0.0
        %3115 = vmatpush1.msra.mxu0 %v3098
        %3116 = vmatprep.subr.mxu0 0.0
        %3117 = vmatpush1.msra.mxu0 %v3099
        %3118 = vmatprep.subr.mxu0 0.0
        %3119 = vmatpush1.msra.mxu0 %v3100
        %3120 = vmatprep.subr.mxu0 0.0
        %3121 = vmatpush1.msra.mxu0 %v3101
        %3122 = vmatprep.subr.mxu0 0.0
        %3123 = vmatpush1.msra.mxu0 %v3102
        %3124 = vmatprep.subr.mxu0 0.0
        %3125 = vmatpush1.msra.mxu0 %v3103
        %3126 = vmatprep.subr.mxu0 0.0
        %3127 = vmatpush1.msra.mxu0 %v3104
        %3128 = vmatprep.subr.mxu0 0.0
        %3129 = vmatpush1.msra.mxu0 %v3105
        %3130 = vmatprep.subr.mxu0 0.0
        %3131 = vmatpush1.msra.mxu0 %v3106
        %3132 = vmatprep.subr.mxu0 0.0
        %3133 = vmatpush1.msra.mxu0 %v3107
        %3134 = vmatprep.subr.mxu0 0.0
        %3135 = vmatpush1.msra.mxu0 %v3108
        %3136 = vmatprep.subr.mxu0 0.0
        %3137 = vmatpush1.msra.mxu0 %v3109
        %3138 = vmatprep.subr.mxu0 0.0
        %3139 = vmatpush1.msra.mxu0 %v3110
        %3140 = vmatprep.subr.mxu0 0.0
        %3141 = vmatpush1.msra.mxu0 %v3111
        %3142 = vmatprep.subr.mxu0 0.0
        %3143 = vmatpush1.msra.mxu0 %v3112
        %3144 = vmatprep.subr.mxu0 0.0
        %3145 = vmatpush1.msra.mxu0 %v3113
        %3146 = vmatprep.subr.mxu0 0.0
        %3147 = vmatpush1.msra.mxu0 0.0
        %3148 = vmatprep.subr.mxu0 0.0
        %3149 = vmatpush1.msra.mxu0 0.0
        %3150 = vmatprep.subr.mxu0 0.0
        %3151 = vmatpush1.msra.mxu0 0.0
        %3152 = vmatprep.subr.mxu0 0.0
        %3153 = vmatpush1.msra.mxu0 0.0
        %3154 = vmatprep.subr.mxu0 0.0
        %3155 = vmatpush1.msra.mxu0 0.0
        %3156 = vmatprep.subr.mxu0 0.0
        %3157 = vmatpush1.msra.mxu0 0.0
        %3158 = vmatprep.subr.mxu0 0.0
        %3159 = vmatpush1.msra.mxu0 0.0
        %3160 = vmatprep.subr.mxu0 0.0
        %3161 = vmatpush1.msra.mxu0 0.0
        %3162 = vmatprep.subr.mxu0 0.0
        %3163 = vmatpush1.msra.mxu0 0.0
        %3164 = vmatprep.subr.mxu0 0.0
        %3165 = vmatpush1.msra.mxu0 0.0
        %3166 = vmatprep.subr.mxu0 0.0
        %3167 = vmatpush1.msra.mxu0 0.0
        %3168 = vmatprep.subr.mxu0 0.0
        %3169 = vmatpush1.msra.mxu0 0.0
        %3170 = vmatprep.subr.mxu0 0.0
        %3171 = vmatpush1.msra.mxu0 0.0
        %3172 = vmatprep.subr.mxu0 0.0
        %3173 = vmatpush1.msra.mxu0 0.0
        %3174 = vmatprep.subr.mxu0 0.0
        %3175 = vmatpush1.msra.mxu0 0.0
        %3176 = vmatprep.subr.mxu0 0.0
        %3177 = vmatpush1.msra.mxu0 0.0
        %3178 = vmatprep.mubr.f32.mxu0 0.0
        %3179 = vmatmul.mubr.f32.gmra.mrb[0].mxu0 %v3097
        %v3180 = vpop.f32.mrb[0].mxu0
        %v3181 = vadd.f32 0.0, %v3180
        %v3182 = vpop.f32.mrb[0].mxu0
        %3183 = vdwg.mxu0
        %v3184 = vadd.f32 %v3096, %v3181
        %v3185 = vld [vmem:[#allocation2 + $0x5] sm:$0x1]
        %v3186 = vld [vmem:[%s2634] sm:$0xff]
        %v3187 = vld [vmem:[%s2634 + $0x8] sm:$0xff]
        %v3188 = vld [vmem:[%s2634 + $0x10] sm:$0xff]
        %v3189 = vld [vmem:[%s2634 + $0x18] sm:$0xff]
        %v3190 = vld [vmem:[%s2634 + $0x20] sm:$0xff]
        %v3191 = vld [vmem:[%s2634 + $0x28] sm:$0xff]
        %v3192 = vld [vmem:[%s2634 + $0x30] sm:$0xff]
        %v3193 = vld [vmem:[%s2634 + $0x38] sm:$0xff]
        %v3194 = vld [vmem:[%s2634 + $0x40] sm:$0xff]
        %v3195 = vld [vmem:[%s2634 + $0x48] sm:$0xff]
        %v3196 = vld [vmem:[%s2634 + $0x50] sm:$0xff]
        %v3197 = vld [vmem:[%s2634 + $0x58] sm:$0xff]
        %v3198 = vld [vmem:[%s2634 + $0x60] sm:$0xff]
        %v3199 = vld [vmem:[%s2634 + $0x68] sm:$0xff]
        %v3200 = vld [vmem:[%s2634 + $0x70] sm:$0xff]
        %v3201 = vld [vmem:[%s2634 + $0x78] sm:$0xff]
        %3202 = vmatprep.subr.mxu0 0.0
        %3203 = vmatpush1.msra.mxu0 %v3186
        %3204 = vmatprep.subr.mxu0 0.0
        %3205 = vmatpush1.msra.mxu0 %v3187
        %3206 = vmatprep.subr.mxu0 0.0
        %3207 = vmatpush1.msra.mxu0 %v3188
        %3208 = vmatprep.subr.mxu0 0.0
        %3209 = vmatpush1.msra.mxu0 %v3189
        %3210 = vmatprep.subr.mxu0 0.0
        %3211 = vmatpush1.msra.mxu0 %v3190
        %3212 = vmatprep.subr.mxu0 0.0
        %3213 = vmatpush1.msra.mxu0 %v3191
        %3214 = vmatprep.subr.mxu0 0.0
        %3215 = vmatpush1.msra.mxu0 %v3192
        %3216 = vmatprep.subr.mxu0 0.0
        %3217 = vmatpush1.msra.mxu0 %v3193
        %3218 = vmatprep.subr.mxu0 0.0
        %3219 = vmatpush1.msra.mxu0 %v3194
        %3220 = vmatprep.subr.mxu0 0.0
        %3221 = vmatpush1.msra.mxu0 %v3195
        %3222 = vmatprep.subr.mxu0 0.0
        %3223 = vmatpush1.msra.mxu0 %v3196
        %3224 = vmatprep.subr.mxu0 0.0
        %3225 = vmatpush1.msra.mxu0 %v3197
        %3226 = vmatprep.subr.mxu0 0.0
        %3227 = vmatpush1.msra.mxu0 %v3198
        %3228 = vmatprep.subr.mxu0 0.0
        %3229 = vmatpush1.msra.mxu0 %v3199
        %3230 = vmatprep.subr.mxu0 0.0
        %3231 = vmatpush1.msra.mxu0 %v3200
        %3232 = vmatprep.subr.mxu0 0.0
        %3233 = vmatpush1.msra.mxu0 %v3201
        %3234 = vmatprep.subr.mxu0 0.0
        %3235 = vmatpush1.msra.mxu0 0.0
        %3236 = vmatprep.subr.mxu0 0.0
        %3237 = vmatpush1.msra.mxu0 0.0
        %3238 = vmatprep.subr.mxu0 0.0
        %3239 = vmatpush1.msra.mxu0 0.0
        %3240 = vmatprep.subr.mxu0 0.0
        %3241 = vmatpush1.msra.mxu0 0.0
        %3242 = vmatprep.subr.mxu0 0.0
        %3243 = vmatpush1.msra.mxu0 0.0
        %3244 = vmatprep.subr.mxu0 0.0
        %3245 = vmatpush1.msra.mxu0 0.0
        %3246 = vmatprep.subr.mxu0 0.0
        %3247 = vmatpush1.msra.mxu0 0.0
        %3248 = vmatprep.subr.mxu0 0.0
        %3249 = vmatpush1.msra.mxu0 0.0
        %3250 = vmatprep.subr.mxu0 0.0
        %3251 = vmatpush1.msra.mxu0 0.0
        %3252 = vmatprep.subr.mxu0 0.0
        %3253 = vmatpush1.msra.mxu0 0.0
        %3254 = vmatprep.subr.mxu0 0.0
        %3255 = vmatpush1.msra.mxu0 0.0
        %3256 = vmatprep.subr.mxu0 0.0
        %3257 = vmatpush1.msra.mxu0 0.0
        %3258 = vmatprep.subr.mxu0 0.0
        %3259 = vmatpush1.msra.mxu0 0.0
        %3260 = vmatprep.subr.mxu0 0.0
        %3261 = vmatpush1.msra.mxu0 0.0
        %3262 = vmatprep.subr.mxu0 0.0
        %3263 = vmatpush1.msra.mxu0 0.0
        %3264 = vmatprep.subr.mxu0 0.0
        %3265 = vmatpush1.msra.mxu0 0.0
        %3266 = vmatprep.mubr.f32.mxu0 0.0
        %3267 = vmatmul.mubr.f32.gmra.mrb[0].mxu0 %v3185
        %v3268 = vpop.f32.mrb[0].mxu0
        %v3269 = vadd.f32 0.0, %v3268
        %v3270 = vpop.f32.mrb[0].mxu0
        %3271 = vdwg.mxu0
        %v3272 = vadd.f32 %v3184, %v3269
        %v3273 = vld [vmem:[#allocation2 + $0x6] sm:$0x1]
        %v3274 = vld [vmem:[%s2723] sm:$0xff]
        %v3275 = vld [vmem:[%s2723 + $0x8] sm:$0xff]
        %v3276 = vld [vmem:[%s2723 + $0x10] sm:$0xff]
        %v3277 = vld [vmem:[%s2723 + $0x18] sm:$0xff]
        %v3278 = vld [vmem:[%s2723 + $0x20] sm:$0xff]
        %v3279 = vld [vmem:[%s2723 + $0x28] sm:$0xff]
        %v3280 = vld [vmem:[%s2723 + $0x30] sm:$0xff]
        %v3281 = vld [vmem:[%s2723 + $0x38] sm:$0xff]
        %v3282 = vld [vmem:[%s2723 + $0x40] sm:$0xff]
        %v3283 = vld [vmem:[%s2723 + $0x48] sm:$0xff]
        %v3284 = vld [vmem:[%s2723 + $0x50] sm:$0xff]
        %v3285 = vld [vmem:[%s2723 + $0x58] sm:$0xff]
        %v3286 = vld [vmem:[%s2723 + $0x60] sm:$0xff]
        %v3287 = vld [vmem:[%s2723 + $0x68] sm:$0xff]
        %v3288 = vld [vmem:[%s2723 + $0x70] sm:$0xff]
        %v3289 = vld [vmem:[%s2723 + $0x78] sm:$0xff]
        %3290 = vmatprep.subr.mxu0 0.0
        %3291 = vmatpush1.msra.mxu0 %v3274
        %3292 = vmatprep.subr.mxu0 0.0
        %3293 = vmatpush1.msra.mxu0 %v3275
        %3294 = vmatprep.subr.mxu0 0.0
        %3295 = vmatpush1.msra.mxu0 %v3276
        %3296 = vmatprep.subr.mxu0 0.0
        %3297 = vmatpush1.msra.mxu0 %v3277
        %3298 = vmatprep.subr.mxu0 0.0
        %3299 = vmatpush1.msra.mxu0 %v3278
        %3300 = vmatprep.subr.mxu0 0.0
        %3301 = vmatpush1.msra.mxu0 %v3279
        %3302 = vmatprep.subr.mxu0 0.0
        %3303 = vmatpush1.msra.mxu0 %v3280
        %3304 = vmatprep.subr.mxu0 0.0
        %3305 = vmatpush1.msra.mxu0 %v3281
        %3306 = vmatprep.subr.mxu0 0.0
        %3307 = vmatpush1.msra.mxu0 %v3282
        %3308 = vmatprep.subr.mxu0 0.0
        %3309 = vmatpush1.msra.mxu0 %v3283
        %3310 = vmatprep.subr.mxu0 0.0
        %3311 = vmatpush1.msra.mxu0 %v3284
        %3312 = vmatprep.subr.mxu0 0.0
        %3313 = vmatpush1.msra.mxu0 %v3285
        %3314 = vmatprep.subr.mxu0 0.0
        %3315 = vmatpush1.msra.mxu0 %v3286
        %3316 = vmatprep.subr.mxu0 0.0
        %3317 = vmatpush1.msra.mxu0 %v3287
        %3318 = vmatprep.subr.mxu0 0.0
        %3319 = vmatpush1.msra.mxu0 %v3288
        %3320 = vmatprep.subr.mxu0 0.0
        %3321 = vmatpush1.msra.mxu0 %v3289
        %3322 = vmatprep.subr.mxu0 0.0
        %3323 = vmatpush1.msra.mxu0 0.0
        %3324 = vmatprep.subr.mxu0 0.0
        %3325 = vmatpush1.msra.mxu0 0.0
        %3326 = vmatprep.subr.mxu0 0.0
        %3327 = vmatpush1.msra.mxu0 0.0
        %3328 = vmatprep.subr.mxu0 0.0
        %3329 = vmatpush1.msra.mxu0 0.0
        %3330 = vmatprep.subr.mxu0 0.0
        %3331 = vmatpush1.msra.mxu0 0.0
        %3332 = vmatprep.subr.mxu0 0.0
        %3333 = vmatpush1.msra.mxu0 0.0
        %3334 = vmatprep.subr.mxu0 0.0
        %3335 = vmatpush1.msra.mxu0 0.0
        %3336 = vmatprep.subr.mxu0 0.0
        %3337 = vmatpush1.msra.mxu0 0.0
        %3338 = vmatprep.subr.mxu0 0.0
        %3339 = vmatpush1.msra.mxu0 0.0
        %3340 = vmatprep.subr.mxu0 0.0
        %3341 = vmatpush1.msra.mxu0 0.0
        %3342 = vmatprep.subr.mxu0 0.0
        %3343 = vmatpush1.msra.mxu0 0.0
        %3344 = vmatprep.subr.mxu0 0.0
        %3345 = vmatpush1.msra.mxu0 0.0
        %3346 = vmatprep.subr.mxu0 0.0
        %3347 = vmatpush1.msra.mxu0 0.0
        %3348 = vmatprep.subr.mxu0 0.0
        %3349 = vmatpush1.msra.mxu0 0.0
        %3350 = vmatprep.subr.mxu0 0.0
        %3351 = vmatpush1.msra.mxu0 0.0
        %3352 = vmatprep.subr.mxu0 0.0
        %3353 = vmatpush1.msra.mxu0 0.0
        %3354 = vmatprep.mubr.f32.mxu0 0.0
        %3355 = vmatmul.mubr.f32.gmra.mrb[0].mxu0 %v3273
        %v3356 = vpop.f32.mrb[0].mxu0
        %v3357 = vadd.f32 0.0, %v3356
        %v3358 = vpop.f32.mrb[0].mxu0
        %3359 = vdwg.mxu0
        %v3360 = vadd.f32 %v3272, %v3357
        %v3361 = vmin.f32 %v3360, 20.0
        %v3362 = vmul.f32 %v3361, 1.442695
        %v3363 = vpow.pop %v3362
        %v3364 = vadd.f32 %v3363, 2.0
        %v3365 = vmul.f32 %v3363, %v3364
        %v3366 = vadd.f32 %v3365, 2.0
        %v3367 = vrcp.pop %v3366
        %v3368 = vmul.f32 %v3365, %v3367
        %v3369 = vmul.f32 %v3360, %v3368
        %3370 = vst [vmem:[#allocation3 + $0x3] sm:$0x1] %v3369
        %v3371 = vld [vmem:[#allocation10] sm:$0x1]
        %v3372 = vld [vmem:[#allocation2 + $0x6] sm:$0x1]
        %v3373 = vld [vmem:[#allocation9] sm:$0xff]
        %v3374 = vld [vmem:[#allocation9 + $0x8] sm:$0xff]
        %v3375 = vld [vmem:[#allocation9 + $0x10] sm:$0xff]
        %v3376 = vld [vmem:[#allocation9 + $0x18] sm:$0xff]
        %v3377 = vld [vmem:[#allocation9 + $0x20] sm:$0xff]
        %v3378 = vld [vmem:[#allocation9 + $0x28] sm:$0xff]
        %v3379 = vld [vmem:[#allocation9 + $0x30] sm:$0xff]
        %v3380 = vld [vmem:[#allocation9 + $0x38] sm:$0xff]
        %v3381 = vld [vmem:[#allocation9 + $0x40] sm:$0xff]
        %v3382 = vld [vmem:[#allocation9 + $0x48] sm:$0xff]
        %v3383 = vld [vmem:[#allocation9 + $0x50] sm:$0xff]
        %v3384 = vld [vmem:[#allocation9 + $0x58] sm:$0xff]
        %v3385 = vld [vmem:[#allocation9 + $0x60] sm:$0xff]
        %v3386 = vld [vmem:[#allocation9 + $0x68] sm:$0xff]
        %v3387 = vld [vmem:[#allocation9 + $0x70] sm:$0xff]
        %v3388 = vld [vmem:[#allocation9 + $0x78] sm:$0xff]
        %3389 = vmatprep.subr.mxu0 0.0
        %3390 = vmatpush1.msra.mxu0 %v3373
        %3391 = vmatprep.subr.mxu0 0.0
        %3392 = vmatpush1.msra.mxu0 %v3374
        %3393 = vmatprep.subr.mxu0 0.0
        %3394 = vmatpush1.msra.mxu0 %v3375
        %3395 = vmatprep.subr.mxu0 0.0
        %3396 = vmatpush1.msra.mxu0 %v3376
        %3397 = vmatprep.subr.mxu0 0.0
        %3398 = vmatpush1.msra.mxu0 %v3377
        %3399 = vmatprep.subr.mxu0 0.0
        %3400 = vmatpush1.msra.mxu0 %v3378
        %3401 = vmatprep.subr.mxu0 0.0
        %3402 = vmatpush1.msra.mxu0 %v3379
        %3403 = vmatprep.subr.mxu0 0.0
        %3404 = vmatpush1.msra.mxu0 %v3380
        %3405 = vmatprep.subr.mxu0 0.0
        %3406 = vmatpush1.msra.mxu0 %v3381
        %3407 = vmatprep.subr.mxu0 0.0
        %3408 = vmatpush1.msra.mxu0 %v3382
        %3409 = vmatprep.subr.mxu0 0.0
        %3410 = vmatpush1.msra.mxu0 %v3383
        %3411 = vmatprep.subr.mxu0 0.0
        %3412 = vmatpush1.msra.mxu0 %v3384
        %3413 = vmatprep.subr.mxu0 0.0
        %3414 = vmatpush1.msra.mxu0 %v3385
        %3415 = vmatprep.subr.mxu0 0.0
        %3416 = vmatpush1.msra.mxu0 %v3386
        %3417 = vmatprep.subr.mxu0 0.0
        %3418 = vmatpush1.msra.mxu0 %v3387
        %3419 = vmatprep.subr.mxu0 0.0
        %3420 = vmatpush1.msra.mxu0 %v3388
        %3421 = vmatprep.subr.mxu0 0.0
        %3422 = vmatpush1.msra.mxu0 0.0
        %3423 = vmatprep.subr.mxu0 0.0
        %3424 = vmatpush1.msra.mxu0 0.0
        %3425 = vmatprep.subr.mxu0 0.0
        %3426 = vmatpush1.msra.mxu0 0.0
        %3427 = vmatprep.subr.mxu0 0.0
        %3428 = vmatpush1.msra.mxu0 0.0
        %3429 = vmatprep.subr.mxu0 0.0
        %3430 = vmatpush1.msra.mxu0 0.0
        %3431 = vmatprep.subr.mxu0 0.0
        %3432 = vmatpush1.msra.mxu0 0.0
        %3433 = vmatprep.subr.mxu0 0.0
        %3434 = vmatpush1.msra.mxu0 0.0
        %3435 = vmatprep.subr.mxu0 0.0
        %3436 = vmatpush1.msra.mxu0 0.0
        %3437 = vmatprep.subr.mxu0 0.0
        %3438 = vmatpush1.msra.mxu0 0.0
        %3439 = vmatprep.subr.mxu0 0.0
        %3440 = vmatpush1.msra.mxu0 0.0
        %3441 = vmatprep.subr.mxu0 0.0
        %3442 = vmatpush1.msra.mxu0 0.0
        %3443 = vmatprep.subr.mxu0 0.0
        %3444 = vmatpush1.msra.mxu0 0.0
        %3445 = vmatprep.subr.mxu0 0.0
        %3446 = vmatpush1.msra.mxu0 0.0
        %3447 = vmatprep.subr.mxu0 0.0
        %3448 = vmatpush1.msra.mxu0 0.0
        %3449 = vmatprep.subr.mxu0 0.0
        %3450 = vmatpush1.msra.mxu0 0.0
        %3451 = vmatprep.subr.mxu0 0.0
        %3452 = vmatpush1.msra.mxu0 0.0
        %3453 = vmatprep.mubr.f32.mxu0 0.0
        %3454 = vmatmul.mubr.f32.gmra.mrb[0].mxu0 %v3372
        %v3455 = vpop.f32.mrb[0].mxu0
        %v3456 = vadd.f32 0.0, %v3455
        %v3457 = vpop.f32.mrb[0].mxu0
        %3458 = vdwg.mxu0
        %v3459 = vadd.f32 %v3371, %v3456
        %v3460 = vld [vmem:[#allocation2 + $0x7] sm:$0x1]
        %v3461 = vld [vmem:[%s2634] sm:$0xff]
        %v3462 = vld [vmem:[%s2634 + $0x8] sm:$0xff]
        %v3463 = vld [vmem:[%s2634 + $0x10] sm:$0xff]
        %v3464 = vld [vmem:[%s2634 + $0x18] sm:$0xff]
        %v3465 = vld [vmem:[%s2634 + $0x20] sm:$0xff]
        %v3466 = vld [vmem:[%s2634 + $0x28] sm:$0xff]
        %v3467 = vld [vmem:[%s2634 + $0x30] sm:$0xff]
        %v3468 = vld [vmem:[%s2634 + $0x38] sm:$0xff]
        %v3469 = vld [vmem:[%s2634 + $0x40] sm:$0xff]
        %v3470 = vld [vmem:[%s2634 + $0x48] sm:$0xff]
        %v3471 = vld [vmem:[%s2634 + $0x50] sm:$0xff]
        %v3472 = vld [vmem:[%s2634 + $0x58] sm:$0xff]
        %v3473 = vld [vmem:[%s2634 + $0x60] sm:$0xff]
        %v3474 = vld [vmem:[%s2634 + $0x68] sm:$0xff]
        %v3475 = vld [vmem:[%s2634 + $0x70] sm:$0xff]
        %v3476 = vld [vmem:[%s2634 + $0x78] sm:$0xff]
        %3477 = vmatprep.subr.mxu0 0.0
        %3478 = vmatpush1.msra.mxu0 %v3461
        %3479 = vmatprep.subr.mxu0 0.0
        %3480 = vmatpush1.msra.mxu0 %v3462
        %3481 = vmatprep.subr.mxu0 0.0
        %3482 = vmatpush1.msra.mxu0 %v3463
        %3483 = vmatprep.subr.mxu0 0.0
        %3484 = vmatpush1.msra.mxu0 %v3464
        %3485 = vmatprep.subr.mxu0 0.0
        %3486 = vmatpush1.msra.mxu0 %v3465
        %3487 = vmatprep.subr.mxu0 0.0
        %3488 = vmatpush1.msra.mxu0 %v3466
        %3489 = vmatprep.subr.mxu0 0.0
        %3490 = vmatpush1.msra.mxu0 %v3467
        %3491 = vmatprep.subr.mxu0 0.0
        %3492 = vmatpush1.msra.mxu0 %v3468
        %3493 = vmatprep.subr.mxu0 0.0
        %3494 = vmatpush1.msra.mxu0 %v3469
        %3495 = vmatprep.subr.mxu0 0.0
        %3496 = vmatpush1.msra.mxu0 %v3470
        %3497 = vmatprep.subr.mxu0 0.0
        %3498 = vmatpush1.msra.mxu0 %v3471
        %3499 = vmatprep.subr.mxu0 0.0
        %3500 = vmatpush1.msra.mxu0 %v3472
        %3501 = vmatprep.subr.mxu0 0.0
        %3502 = vmatpush1.msra.mxu0 %v3473
        %3503 = vmatprep.subr.mxu0 0.0
        %3504 = vmatpush1.msra.mxu0 %v3474
        %3505 = vmatprep.subr.mxu0 0.0
        %3506 = vmatpush1.msra.mxu0 %v3475
        %3507 = vmatprep.subr.mxu0 0.0
        %3508 = vmatpush1.msra.mxu0 %v3476
        %3509 = vmatprep.subr.mxu0 0.0
        %3510 = vmatpush1.msra.mxu0 0.0
        %3511 = vmatprep.subr.mxu0 0.0
        %3512 = vmatpush1.msra.mxu0 0.0
        %3513 = vmatprep.subr.mxu0 0.0
        %3514 = vmatpush1.msra.mxu0 0.0
        %3515 = vmatprep.subr.mxu0 0.0
        %3516 = vmatpush1.msra.mxu0 0.0
        %3517 = vmatprep.subr.mxu0 0.0
        %3518 = vmatpush1.msra.mxu0 0.0
        %3519 = vmatprep.subr.mxu0 0.0
        %3520 = vmatpush1.msra.mxu0 0.0
        %3521 = vmatprep.subr.mxu0 0.0
        %3522 = vmatpush1.msra.mxu0 0.0
        %3523 = vmatprep.subr.mxu0 0.0
        %3524 = vmatpush1.msra.mxu0 0.0
        %3525 = vmatprep.subr.mxu0 0.0
        %3526 = vmatpush1.msra.mxu0 0.0
        %3527 = vmatprep.subr.mxu0 0.0
        %3528 = vmatpush1.msra.mxu0 0.0
        %3529 = vmatprep.subr.mxu0 0.0
        %3530 = vmatpush1.msra.mxu0 0.0
        %3531 = vmatprep.subr.mxu0 0.0
        %3532 = vmatpush1.msra.mxu0 0.0
        %3533 = vmatprep.subr.mxu0 0.0
        %3534 = vmatpush1.msra.mxu0 0.0
        %3535 = vmatprep.subr.mxu0 0.0
        %3536 = vmatpush1.msra.mxu0 0.0
        %3537 = vmatprep.subr.mxu0 0.0
        %3538 = vmatpush1.msra.mxu0 0.0
        %3539 = vmatprep.subr.mxu0 0.0
        %3540 = vmatpush1.msra.mxu0 0.0
        %3541 = vmatprep.mubr.f32.mxu0 0.0
        %3542 = vmatmul.mubr.f32.gmra.mrb[0].mxu0 %v3460
        %v3543 = vpop.f32.mrb[0].mxu0
        %v3544 = vadd.f32 0.0, %v3543
        %v3545 = vpop.f32.mrb[0].mxu0
        %3546 = vdwg.mxu0
        %v3547 = vadd.f32 %v3459, %v3544
        %v3548 = vld [vmem:[#allocation2 + $0x8] sm:$0x1]
        %v3549 = vld [vmem:[%s2723] sm:$0xff]
        %v3550 = vld [vmem:[%s2723 + $0x8] sm:$0xff]
        %v3551 = vld [vmem:[%s2723 + $0x10] sm:$0xff]
        %v3552 = vld [vmem:[%s2723 + $0x18] sm:$0xff]
        %v3553 = vld [vmem:[%s2723 + $0x20] sm:$0xff]
        %v3554 = vld [vmem:[%s2723 + $0x28] sm:$0xff]
        %v3555 = vld [vmem:[%s2723 + $0x30] sm:$0xff]
        %v3556 = vld [vmem:[%s2723 + $0x38] sm:$0xff]
        %v3557 = vld [vmem:[%s2723 + $0x40] sm:$0xff]
        %v3558 = vld [vmem:[%s2723 + $0x48] sm:$0xff]
        %v3559 = vld [vmem:[%s2723 + $0x50] sm:$0xff]
        %v3560 = vld [vmem:[%s2723 + $0x58] sm:$0xff]
        %v3561 = vld [vmem:[%s2723 + $0x60] sm:$0xff]
        %v3562 = vld [vmem:[%s2723 + $0x68] sm:$0xff]
        %v3563 = vld [vmem:[%s2723 + $0x70] sm:$0xff]
        %v3564 = vld [vmem:[%s2723 + $0x78] sm:$0xff]
        %3565 = vmatprep.subr.mxu0 0.0
        %3566 = vmatpush1.msra.mxu0 %v3549
        %3567 = vmatprep.subr.mxu0 0.0
        %3568 = vmatpush1.msra.mxu0 %v3550
        %3569 = vmatprep.subr.mxu0 0.0
        %3570 = vmatpush1.msra.mxu0 %v3551
        %3571 = vmatprep.subr.mxu0 0.0
        %3572 = vmatpush1.msra.mxu0 %v3552
        %3573 = vmatprep.subr.mxu0 0.0
        %3574 = vmatpush1.msra.mxu0 %v3553
        %3575 = vmatprep.subr.mxu0 0.0
        %3576 = vmatpush1.msra.mxu0 %v3554
        %3577 = vmatprep.subr.mxu0 0.0
        %3578 = vmatpush1.msra.mxu0 %v3555
        %3579 = vmatprep.subr.mxu0 0.0
        %3580 = vmatpush1.msra.mxu0 %v3556
        %3581 = vmatprep.subr.mxu0 0.0
        %3582 = vmatpush1.msra.mxu0 %v3557
        %3583 = vmatprep.subr.mxu0 0.0
        %3584 = vmatpush1.msra.mxu0 %v3558
        %3585 = vmatprep.subr.mxu0 0.0
        %3586 = vmatpush1.msra.mxu0 %v3559
        %3587 = vmatprep.subr.mxu0 0.0
        %3588 = vmatpush1.msra.mxu0 %v3560
        %3589 = vmatprep.subr.mxu0 0.0
        %3590 = vmatpush1.msra.mxu0 %v3561
        %3591 = vmatprep.subr.mxu0 0.0
        %3592 = vmatpush1.msra.mxu0 %v3562
        %3593 = vmatprep.subr.mxu0 0.0
        %3594 = vmatpush1.msra.mxu0 %v3563
        %3595 = vmatprep.subr.mxu0 0.0
        %3596 = vmatpush1.msra.mxu0 %v3564
        %3597 = vmatprep.subr.mxu0 0.0
        %3598 = vmatpush1.msra.mxu0 0.0
        %3599 = vmatprep.subr.mxu0 0.0
        %3600 = vmatpush1.msra.mxu0 0.0
        %3601 = vmatprep.subr.mxu0 0.0
        %3602 = vmatpush1.msra.mxu0 0.0
        %3603 = vmatprep.subr.mxu0 0.0
        %3604 = vmatpush1.msra.mxu0 0.0
        %3605 = vmatprep.subr.mxu0 0.0
        %3606 = vmatpush1.msra.mxu0 0.0
        %3607 = vmatprep.subr.mxu0 0.0
        %3608 = vmatpush1.msra.mxu0 0.0
        %3609 = vmatprep.subr.mxu0 0.0
        %3610 = vmatpush1.msra.mxu0 0.0
        %3611 = vmatprep.subr.mxu0 0.0
        %3612 = vmatpush1.msra.mxu0 0.0
        %3613 = vmatprep.subr.mxu0 0.0
        %3614 = vmatpush1.msra.mxu0 0.0
        %3615 = vmatprep.subr.mxu0 0.0
        %3616 = vmatpush1.msra.mxu0 0.0
        %3617 = vmatprep.subr.mxu0 0.0
        %3618 = vmatpush1.msra.mxu0 0.0
        %3619 = vmatprep.subr.mxu0 0.0
        %3620 = vmatpush1.msra.mxu0 0.0
        %3621 = vmatprep.subr.mxu0 0.0
        %3622 = vmatpush1.msra.mxu0 0.0
        %3623 = vmatprep.subr.mxu0 0.0
        %3624 = vmatpush1.msra.mxu0 0.0
        %3625 = vmatprep.subr.mxu0 0.0
        %3626 = vmatpush1.msra.mxu0 0.0
        %3627 = vmatprep.subr.mxu0 0.0
        %3628 = vmatpush1.msra.mxu0 0.0
        %3629 = vmatprep.mubr.f32.mxu0 0.0
        %3630 = vmatmul.mubr.f32.gmra.mrb[0].mxu0 %v3548
        %v3631 = vpop.f32.mrb[0].mxu0
        %v3632 = vadd.f32 0.0, %v3631
        %v3633 = vpop.f32.mrb[0].mxu0
        %3634 = vdwg.mxu0
        %v3635 = vadd.f32 %v3547, %v3632
        %v3636 = vmin.f32 %v3635, 20.0
        %v3637 = vmul.f32 %v3636, 1.442695
        %v3638 = vpow.pop %v3637
        %v3639 = vadd.f32 %v3638, 2.0
        %v3640 = vmul.f32 %v3638, %v3639
        %v3641 = vadd.f32 %v3640, 2.0
        %v3642 = vrcp.pop %v3641
        %v3643 = vmul.f32 %v3640, %v3642
        %v3644 = vmul.f32 %v3635, %v3643
        %3645 = vst [vmem:[#allocation3 + $0x4] sm:$0x1] %v3644
        %v3646 = vld [vmem:[#allocation3 + $0x1] sm:$0xf]
        %v3647 = vld [vmem:[#allocation13] sm:$0x1]
        %v3648 = vlaneseq
        %v3649 = vshrl.u32 %v3648, 7
        %v3650 = vsub.s32 0, %v3649
        %v3651 = vrot.slane %v3647, %v3650
        %v3652 = vadd.f32 %v3651, 0.0
        %v3653 = vld [vmem:[#allocation3] sm:$0xf]
        %v3654 = vld [vmem:[#allocation12] sm:$0xff]
        %v3655 = vld [vmem:[#allocation12 + $0x8] sm:$0xff]
        %v3656 = vld [vmem:[#allocation12 + $0x10] sm:$0xff]
        %v3657 = vld [vmem:[#allocation12 + $0x18] sm:$0xff]
        %v3658 = vld [vmem:[#allocation12 + $0x20] sm:$0xff]
        %v3659 = vld [vmem:[#allocation12 + $0x28] sm:$0xff]
        %v3660 = vld [vmem:[#allocation12 + $0x30] sm:$0xff]
        %v3661 = vld [vmem:[#allocation12 + $0x38] sm:$0xff]
        %v3662 = vld [vmem:[#allocation12 + $0x40] sm:$0xff]
        %v3663 = vld [vmem:[#allocation12 + $0x48] sm:$0xff]
        %v3664 = vld [vmem:[#allocation12 + $0x50] sm:$0xff]
        %v3665 = vld [vmem:[#allocation12 + $0x58] sm:$0xff]
        %v3666 = vld [vmem:[#allocation12 + $0x60] sm:$0xff]
        %v3667 = vld [vmem:[#allocation12 + $0x68] sm:$0xff]
        %v3668 = vld [vmem:[#allocation12 + $0x70] sm:$0xff]
        %v3669 = vld [vmem:[#allocation12 + $0x78] sm:$0xff]
        %3670 = vmatprep.subr.mxu0 0.0
        %3671 = vmatpush1.msra.mxu0 %v3654
        %3672 = vmatprep.subr.mxu0 0.0
        %3673 = vmatpush1.msra.mxu0 %v3655
        %3674 = vmatprep.subr.mxu0 0.0
        %3675 = vmatpush1.msra.mxu0 %v3656
        %3676 = vmatprep.subr.mxu0 0.0
        %3677 = vmatpush1.msra.mxu0 %v3657
        %3678 = vmatprep.subr.mxu0 0.0
        %3679 = vmatpush1.msra.mxu0 %v3658
        %3680 = vmatprep.subr.mxu0 0.0
        %3681 = vmatpush1.msra.mxu0 %v3659
        %3682 = vmatprep.subr.mxu0 0.0
        %3683 = vmatpush1.msra.mxu0 %v3660
        %3684 = vmatprep.subr.mxu0 0.0
        %3685 = vmatpush1.msra.mxu0 %v3661
        %3686 = vmatprep.subr.mxu0 0.0
        %3687 = vmatpush1.msra.mxu0 %v3662
        %3688 = vmatprep.subr.mxu0 0.0
        %3689 = vmatpush1.msra.mxu0 %v3663
        %3690 = vmatprep.subr.mxu0 0.0
        %3691 = vmatpush1.msra.mxu0 %v3664
        %3692 = vmatprep.subr.mxu0 0.0
        %3693 = vmatpush1.msra.mxu0 %v3665
        %3694 = vmatprep.subr.mxu0 0.0
        %3695 = vmatpush1.msra.mxu0 %v3666
        %3696 = vmatprep.subr.mxu0 0.0
        %3697 = vmatpush1.msra.mxu0 %v3667
        %3698 = vmatprep.subr.mxu0 0.0
        %3699 = vmatpush1.msra.mxu0 %v3668
        %3700 = vmatprep.subr.mxu0 0.0
        %3701 = vmatpush1.msra.mxu0 %v3669
        %3702 = vmatprep.subr.mxu0 0.0
        %3703 = vmatpush1.msra.mxu0 0.0
        %3704 = vmatprep.subr.mxu0 0.0
        %3705 = vmatpush1.msra.mxu0 0.0
        %3706 = vmatprep.subr.mxu0 0.0
        %3707 = vmatpush1.msra.mxu0 0.0
        %3708 = vmatprep.subr.mxu0 0.0
        %3709 = vmatpush1.msra.mxu0 0.0
        %3710 = vmatprep.subr.mxu0 0.0
        %3711 = vmatpush1.msra.mxu0 0.0
        %3712 = vmatprep.subr.mxu0 0.0
        %3713 = vmatpush1.msra.mxu0 0.0
        %3714 = vmatprep.subr.mxu0 0.0
        %3715 = vmatpush1.msra.mxu0 0.0
        %3716 = vmatprep.subr.mxu0 0.0
        %3717 = vmatpush1.msra.mxu0 0.0
        %3718 = vmatprep.subr.mxu0 0.0
        %3719 = vmatpush1.msra.mxu0 0.0
        %3720 = vmatprep.subr.mxu0 0.0
        %3721 = vmatpush1.msra.mxu0 0.0
        %3722 = vmatprep.subr.mxu0 0.0
        %3723 = vmatpush1.msra.mxu0 0.0
        %3724 = vmatprep.subr.mxu0 0.0
        %3725 = vmatpush1.msra.mxu0 0.0
        %3726 = vmatprep.subr.mxu0 0.0
        %3727 = vmatpush1.msra.mxu0 0.0
        %3728 = vmatprep.subr.mxu0 0.0
        %3729 = vmatpush1.msra.mxu0 0.0
        %3730 = vmatprep.subr.mxu0 0.0
        %3731 = vmatpush1.msra.mxu0 0.0
        %3732 = vmatprep.subr.mxu0 0.0
        %3733 = vmatpush1.msra.mxu0 0.0
        %3734 = vmatprep.mubr.f32.mxu0 0.0
        %3735 = vmatmul.mubr.f32.gmra.mrb[0].mxu0 %v3653
        %v3736 = vpop.f32.mrb[0].mxu0
        %v3737 = vadd.f32 0.0, %v3736
        %v3738 = vpop.f32.mrb[0].mxu0
        %3739 = vdwg.mxu0
        %v3740 = vadd.f32 %v3652, %v3737
        %s3741 = scalar_lea.vmem [#allocation12], 128
        %v3742 = vld [vmem:[%s3741] sm:$0xff]
        %v3743 = vld [vmem:[%s3741 + $0x8] sm:$0xff]
        %v3744 = vld [vmem:[%s3741 + $0x10] sm:$0xff]
        %v3745 = vld [vmem:[%s3741 + $0x18] sm:$0xff]
        %v3746 = vld [vmem:[%s3741 + $0x20] sm:$0xff]
        %v3747 = vld [vmem:[%s3741 + $0x28] sm:$0xff]
        %v3748 = vld [vmem:[%s3741 + $0x30] sm:$0xff]
        %v3749 = vld [vmem:[%s3741 + $0x38] sm:$0xff]
        %v3750 = vld [vmem:[%s3741 + $0x40] sm:$0xff]
        %v3751 = vld [vmem:[%s3741 + $0x48] sm:$0xff]
        %v3752 = vld [vmem:[%s3741 + $0x50] sm:$0xff]
        %v3753 = vld [vmem:[%s3741 + $0x58] sm:$0xff]
        %v3754 = vld [vmem:[%s3741 + $0x60] sm:$0xff]
        %v3755 = vld [vmem:[%s3741 + $0x68] sm:$0xff]
        %v3756 = vld [vmem:[%s3741 + $0x70] sm:$0xff]
        %v3757 = vld [vmem:[%s3741 + $0x78] sm:$0xff]
        %3758 = vmatprep.subr.mxu0 0.0
        %3759 = vmatpush1.msra.mxu0 %v3742
        %3760 = vmatprep.subr.mxu0 0.0
        %3761 = vmatpush1.msra.mxu0 %v3743
        %3762 = vmatprep.subr.mxu0 0.0
        %3763 = vmatpush1.msra.mxu0 %v3744
        %3764 = vmatprep.subr.mxu0 0.0
        %3765 = vmatpush1.msra.mxu0 %v3745
        %3766 = vmatprep.subr.mxu0 0.0
        %3767 = vmatpush1.msra.mxu0 %v3746
        %3768 = vmatprep.subr.mxu0 0.0
        %3769 = vmatpush1.msra.mxu0 %v3747
        %3770 = vmatprep.subr.mxu0 0.0
        %3771 = vmatpush1.msra.mxu0 %v3748
        %3772 = vmatprep.subr.mxu0 0.0
        %3773 = vmatpush1.msra.mxu0 %v3749
        %3774 = vmatprep.subr.mxu0 0.0
        %3775 = vmatpush1.msra.mxu0 %v3750
        %3776 = vmatprep.subr.mxu0 0.0
        %3777 = vmatpush1.msra.mxu0 %v3751
        %3778 = vmatprep.subr.mxu0 0.0
        %3779 = vmatpush1.msra.mxu0 %v3752
        %3780 = vmatprep.subr.mxu0 0.0
        %3781 = vmatpush1.msra.mxu0 %v3753
        %3782 = vmatprep.subr.mxu0 0.0
        %3783 = vmatpush1.msra.mxu0 %v3754
        %3784 = vmatprep.subr.mxu0 0.0
        %3785 = vmatpush1.msra.mxu0 %v3755
        %3786 = vmatprep.subr.mxu0 0.0
        %3787 = vmatpush1.msra.mxu0 %v3756
        %3788 = vmatprep.subr.mxu0 0.0
        %3789 = vmatpush1.msra.mxu0 %v3757
        %3790 = vmatprep.subr.mxu0 0.0
        %3791 = vmatpush1.msra.mxu0 0.0
        %3792 = vmatprep.subr.mxu0 0.0
        %3793 = vmatpush1.msra.mxu0 0.0
        %3794 = vmatprep.subr.mxu0 0.0
        %3795 = vmatpush1.msra.mxu0 0.0
        %3796 = vmatprep.subr.mxu0 0.0
        %3797 = vmatpush1.msra.mxu0 0.0
        %3798 = vmatprep.subr.mxu0 0.0
        %3799 = vmatpush1.msra.mxu0 0.0
        %3800 = vmatprep.subr.mxu0 0.0
        %3801 = vmatpush1.msra.mxu0 0.0
        %3802 = vmatprep.subr.mxu0 0.0
        %3803 = vmatpush1.msra.mxu0 0.0
        %3804 = vmatprep.subr.mxu0 0.0
        %3805 = vmatpush1.msra.mxu0 0.0
        %3806 = vmatprep.subr.mxu0 0.0
        %3807 = vmatpush1.msra.mxu0 0.0
        %3808 = vmatprep.subr.mxu0 0.0
        %3809 = vmatpush1.msra.mxu0 0.0
        %3810 = vmatprep.subr.mxu0 0.0
        %3811 = vmatpush1.msra.mxu0 0.0
        %3812 = vmatprep.subr.mxu0 0.0
        %3813 = vmatpush1.msra.mxu0 0.0
        %3814 = vmatprep.subr.mxu0 0.0
        %3815 = vmatpush1.msra.mxu0 0.0
        %3816 = vmatprep.subr.mxu0 0.0
        %3817 = vmatpush1.msra.mxu0 0.0
        %3818 = vmatprep.subr.mxu0 0.0
        %3819 = vmatpush1.msra.mxu0 0.0
        %3820 = vmatprep.subr.mxu0 0.0
        %3821 = vmatpush1.msra.mxu0 0.0
        %3822 = vmatprep.mubr.f32.mxu0 0.0
        %3823 = vmatmul.mubr.f32.gmra.mrb[0].mxu0 %v3646
        %v3824 = vpop.f32.mrb[0].mxu0
        %v3825 = vadd.f32 0.0, %v3824
        %v3826 = vpop.f32.mrb[0].mxu0
        %3827 = vdwg.mxu0
        %v3828 = vadd.f32 %v3740, %v3825
        %v3829 = vld [vmem:[#allocation3 + $0x2] sm:$0xf]
        %s3830 = scalar_lea.vmem [#allocation12], 256
        %v3831 = vld [vmem:[%s3830] sm:$0xff]
        %v3832 = vld [vmem:[%s3830 + $0x8] sm:$0xff]
        %v3833 = vld [vmem:[%s3830 + $0x10] sm:$0xff]
        %v3834 = vld [vmem:[%s3830 + $0x18] sm:$0xff]
        %v3835 = vld [vmem:[%s3830 + $0x20] sm:$0xff]
        %v3836 = vld [vmem:[%s3830 + $0x28] sm:$0xff]
        %v3837 = vld [vmem:[%s3830 + $0x30] sm:$0xff]
        %v3838 = vld [vmem:[%s3830 + $0x38] sm:$0xff]
        %v3839 = vld [vmem:[%s3830 + $0x40] sm:$0xff]
        %v3840 = vld [vmem:[%s3830 + $0x48] sm:$0xff]
        %v3841 = vld [vmem:[%s3830 + $0x50] sm:$0xff]
        %v3842 = vld [vmem:[%s3830 + $0x58] sm:$0xff]
        %v3843 = vld [vmem:[%s3830 + $0x60] sm:$0xff]
        %v3844 = vld [vmem:[%s3830 + $0x68] sm:$0xff]
        %v3845 = vld [vmem:[%s3830 + $0x70] sm:$0xff]
        %v3846 = vld [vmem:[%s3830 + $0x78] sm:$0xff]
        %3847 = vmatprep.subr.mxu0 0.0
        %3848 = vmatpush1.msra.mxu0 %v3831
        %3849 = vmatprep.subr.mxu0 0.0
        %3850 = vmatpush1.msra.mxu0 %v3832
        %3851 = vmatprep.subr.mxu0 0.0
        %3852 = vmatpush1.msra.mxu0 %v3833
        %3853 = vmatprep.subr.mxu0 0.0
        %3854 = vmatpush1.msra.mxu0 %v3834
        %3855 = vmatprep.subr.mxu0 0.0
        %3856 = vmatpush1.msra.mxu0 %v3835
        %3857 = vmatprep.subr.mxu0 0.0
        %3858 = vmatpush1.msra.mxu0 %v3836
        %3859 = vmatprep.subr.mxu0 0.0
        %3860 = vmatpush1.msra.mxu0 %v3837
        %3861 = vmatprep.subr.mxu0 0.0
        %3862 = vmatpush1.msra.mxu0 %v3838
        %3863 = vmatprep.subr.mxu0 0.0
        %3864 = vmatpush1.msra.mxu0 %v3839
        %3865 = vmatprep.subr.mxu0 0.0
        %3866 = vmatpush1.msra.mxu0 %v3840
        %3867 = vmatprep.subr.mxu0 0.0
        %3868 = vmatpush1.msra.mxu0 %v3841
        %3869 = vmatprep.subr.mxu0 0.0
        %3870 = vmatpush1.msra.mxu0 %v3842
        %3871 = vmatprep.subr.mxu0 0.0
        %3872 = vmatpush1.msra.mxu0 %v3843
        %3873 = vmatprep.subr.mxu0 0.0
        %3874 = vmatpush1.msra.mxu0 %v3844
        %3875 = vmatprep.subr.mxu0 0.0
        %3876 = vmatpush1.msra.mxu0 %v3845
        %3877 = vmatprep.subr.mxu0 0.0
        %3878 = vmatpush1.msra.mxu0 %v3846
        %3879 = vmatprep.subr.mxu0 0.0
        %3880 = vmatpush1.msra.mxu0 0.0
        %3881 = vmatprep.subr.mxu0 0.0
        %3882 = vmatpush1.msra.mxu0 0.0
        %3883 = vmatprep.subr.mxu0 0.0
        %3884 = vmatpush1.msra.mxu0 0.0
        %3885 = vmatprep.subr.mxu0 0.0
        %3886 = vmatpush1.msra.mxu0 0.0
        %3887 = vmatprep.subr.mxu0 0.0
        %3888 = vmatpush1.msra.mxu0 0.0
        %3889 = vmatprep.subr.mxu0 0.0
        %3890 = vmatpush1.msra.mxu0 0.0
        %3891 = vmatprep.subr.mxu0 0.0
        %3892 = vmatpush1.msra.mxu0 0.0
        %3893 = vmatprep.subr.mxu0 0.0
        %3894 = vmatpush1.msra.mxu0 0.0
        %3895 = vmatprep.subr.mxu0 0.0
        %3896 = vmatpush1.msra.mxu0 0.0
        %3897 = vmatprep.subr.mxu0 0.0
        %3898 = vmatpush1.msra.mxu0 0.0
        %3899 = vmatprep.subr.mxu0 0.0
        %3900 = vmatpush1.msra.mxu0 0.0
        %3901 = vmatprep.subr.mxu0 0.0
        %3902 = vmatpush1.msra.mxu0 0.0
        %3903 = vmatprep.subr.mxu0 0.0
        %3904 = vmatpush1.msra.mxu0 0.0
        %3905 = vmatprep.subr.mxu0 0.0
        %3906 = vmatpush1.msra.mxu0 0.0
        %3907 = vmatprep.subr.mxu0 0.0
        %3908 = vmatpush1.msra.mxu0 0.0
        %3909 = vmatprep.subr.mxu0 0.0
        %3910 = vmatpush1.msra.mxu0 0.0
        %3911 = vmatprep.mubr.f32.mxu0 0.0
        %3912 = vmatmul.mubr.f32.gmra.mrb[0].mxu0 %v3829
        %v3913 = vpop.f32.mrb[0].mxu0
        %v3914 = vadd.f32 0.0, %v3913
        %v3915 = vpop.f32.mrb[0].mxu0
        %3916 = vdwg.mxu0
        %v3917 = vadd.f32 %v3828, %v3914
        %v3918 = vadd.f32 %v3917, %v3646
        %v3919 = vmin.f32 %v3918, 20.0
        %v3920 = vmul.f32 %v3919, 1.442695
        %v3921 = vpow.pop %v3920
        %v3922 = vadd.f32 %v3921, 2.0
        %v3923 = vmul.f32 %v3921, %v3922
        %v3924 = vadd.f32 %v3923, 2.0
        %v3925 = vrcp.pop %v3924
        %v3926 = vmul.f32 %v3923, %v3925
        %v3927 = vmul.f32 %v3918, %v3926
        %3928 = vst [vmem:[#allocation3 + $0x1] sm:$0xf] %v3927
        %v3929 = vld [vmem:[#allocation3 + $0x1] sm:$0xf]
        %v3930 = vld [vmem:[#allocation13 + $0x1] sm:$0x1]
        %v3931 = vlaneseq
        %v3932 = vshrl.u32 %v3931, 7
        %v3933 = vsub.s32 0, %v3932
        %v3934 = vrot.slane %v3930, %v3933
        %v3935 = vadd.f32 %v3934, 0.0
        %v3936 = vld [vmem:[#allocation3] sm:$0xf]
        %s3937 = scalar_lea.vmem [#allocation12], 384
        %v3938 = vld [vmem:[%s3937] sm:$0xff]
        %v3939 = vld [vmem:[%s3937 + $0x8] sm:$0xff]
        %v3940 = vld [vmem:[%s3937 + $0x10] sm:$0xff]
        %v3941 = vld [vmem:[%s3937 + $0x18] sm:$0xff]
        %v3942 = vld [vmem:[%s3937 + $0x20] sm:$0xff]
        %v3943 = vld [vmem:[%s3937 + $0x28] sm:$0xff]
        %v3944 = vld [vmem:[%s3937 + $0x30] sm:$0xff]
        %v3945 = vld [vmem:[%s3937 + $0x38] sm:$0xff]
        %v3946 = vld [vmem:[%s3937 + $0x40] sm:$0xff]
        %v3947 = vld [vmem:[%s3937 + $0x48] sm:$0xff]
        %v3948 = vld [vmem:[%s3937 + $0x50] sm:$0xff]
        %v3949 = vld [vmem:[%s3937 + $0x58] sm:$0xff]
        %v3950 = vld [vmem:[%s3937 + $0x60] sm:$0xff]
        %v3951 = vld [vmem:[%s3937 + $0x68] sm:$0xff]
        %v3952 = vld [vmem:[%s3937 + $0x70] sm:$0xff]
        %v3953 = vld [vmem:[%s3937 + $0x78] sm:$0xff]
        %3954 = vmatprep.subr.mxu0 0.0
        %3955 = vmatpush1.msra.mxu0 %v3938
        %3956 = vmatprep.subr.mxu0 0.0
        %3957 = vmatpush1.msra.mxu0 %v3939
        %3958 = vmatprep.subr.mxu0 0.0
        %3959 = vmatpush1.msra.mxu0 %v3940
        %3960 = vmatprep.subr.mxu0 0.0
        %3961 = vmatpush1.msra.mxu0 %v3941
        %3962 = vmatprep.subr.mxu0 0.0
        %3963 = vmatpush1.msra.mxu0 %v3942
        %3964 = vmatprep.subr.mxu0 0.0
        %3965 = vmatpush1.msra.mxu0 %v3943
        %3966 = vmatprep.subr.mxu0 0.0
        %3967 = vmatpush1.msra.mxu0 %v3944
        %3968 = vmatprep.subr.mxu0 0.0
        %3969 = vmatpush1.msra.mxu0 %v3945
        %3970 = vmatprep.subr.mxu0 0.0
        %3971 = vmatpush1.msra.mxu0 %v3946
        %3972 = vmatprep.subr.mxu0 0.0
        %3973 = vmatpush1.msra.mxu0 %v3947
        %3974 = vmatprep.subr.mxu0 0.0
        %3975 = vmatpush1.msra.mxu0 %v3948
        %3976 = vmatprep.subr.mxu0 0.0
        %3977 = vmatpush1.msra.mxu0 %v3949
        %3978 = vmatprep.subr.mxu0 0.0
        %3979 = vmatpush1.msra.mxu0 %v3950
        %3980 = vmatprep.subr.mxu0 0.0
        %3981 = vmatpush1.msra.mxu0 %v3951
        %3982 = vmatprep.subr.mxu0 0.0
        %3983 = vmatpush1.msra.mxu0 %v3952
        %3984 = vmatprep.subr.mxu0 0.0
        %3985 = vmatpush1.msra.mxu0 %v3953
        %3986 = vmatprep.subr.mxu0 0.0
        %3987 = vmatpush1.msra.mxu0 0.0
        %3988 = vmatprep.subr.mxu0 0.0
        %3989 = vmatpush1.msra.mxu0 0.0
        %3990 = vmatprep.subr.mxu0 0.0
        %3991 = vmatpush1.msra.mxu0 0.0
        %3992 = vmatprep.subr.mxu0 0.0
        %3993 = vmatpush1.msra.mxu0 0.0
        %3994 = vmatprep.subr.mxu0 0.0
        %3995 = vmatpush1.msra.mxu0 0.0
        %3996 = vmatprep.subr.mxu0 0.0
        %3997 = vmatpush1.msra.mxu0 0.0
        %3998 = vmatprep.subr.mxu0 0.0
        %3999 = vmatpush1.msra.mxu0 0.0
        %4000 = vmatprep.subr.mxu0 0.0
        %4001 = vmatpush1.msra.mxu0 0.0
        %4002 = vmatprep.subr.mxu0 0.0
        %4003 = vmatpush1.msra.mxu0 0.0
        %4004 = vmatprep.subr.mxu0 0.0
        %4005 = vmatpush1.msra.mxu0 0.0
        %4006 = vmatprep.subr.mxu0 0.0
        %4007 = vmatpush1.msra.mxu0 0.0
        %4008 = vmatprep.subr.mxu0 0.0
        %4009 = vmatpush1.msra.mxu0 0.0
        %4010 = vmatprep.subr.mxu0 0.0
        %4011 = vmatpush1.msra.mxu0 0.0
        %4012 = vmatprep.subr.mxu0 0.0
        %4013 = vmatpush1.msra.mxu0 0.0
        %4014 = vmatprep.subr.mxu0 0.0
        %4015 = vmatpush1.msra.mxu0 0.0
        %4016 = vmatprep.subr.mxu0 0.0
        %4017 = vmatpush1.msra.mxu0 0.0
        %4018 = vmatprep.mubr.f32.mxu0 0.0
        %4019 = vmatmul.mubr.f32.gmra.mrb[0].mxu0 %v3936
        %v4020 = vpop.f32.mrb[0].mxu0
        %v4021 = vadd.f32 0.0, %v4020
        %v4022 = vpop.f32.mrb[0].mxu0
        %4023 = vdwg.mxu0
        %v4024 = vadd.f32 %v3935, %v4021
        %s4025 = scalar_lea.vmem [#allocation12], 512
        %v4026 = vld [vmem:[%s4025] sm:$0xff]
        %v4027 = vld [vmem:[%s4025 + $0x8] sm:$0xff]
        %v4028 = vld [vmem:[%s4025 + $0x10] sm:$0xff]
        %v4029 = vld [vmem:[%s4025 + $0x18] sm:$0xff]
        %v4030 = vld [vmem:[%s4025 + $0x20] sm:$0xff]
        %v4031 = vld [vmem:[%s4025 + $0x28] sm:$0xff]
        %v4032 = vld [vmem:[%s4025 + $0x30] sm:$0xff]
        %v4033 = vld [vmem:[%s4025 + $0x38] sm:$0xff]
        %v4034 = vld [vmem:[%s4025 + $0x40] sm:$0xff]
        %v4035 = vld [vmem:[%s4025 + $0x48] sm:$0xff]
        %v4036 = vld [vmem:[%s4025 + $0x50] sm:$0xff]
        %v4037 = vld [vmem:[%s4025 + $0x58] sm:$0xff]
        %v4038 = vld [vmem:[%s4025 + $0x60] sm:$0xff]
        %v4039 = vld [vmem:[%s4025 + $0x68] sm:$0xff]
        %v4040 = vld [vmem:[%s4025 + $0x70] sm:$0xff]
        %v4041 = vld [vmem:[%s4025 + $0x78] sm:$0xff]
        %4042 = vmatprep.subr.mxu0 0.0
        %4043 = vmatpush1.msra.mxu0 %v4026
        %4044 = vmatprep.subr.mxu0 0.0
        %4045 = vmatpush1.msra.mxu0 %v4027
        %4046 = vmatprep.subr.mxu0 0.0
        %4047 = vmatpush1.msra.mxu0 %v4028
        %4048 = vmatprep.subr.mxu0 0.0
        %4049 = vmatpush1.msra.mxu0 %v4029
        %4050 = vmatprep.subr.mxu0 0.0
        %4051 = vmatpush1.msra.mxu0 %v4030
        %4052 = vmatprep.subr.mxu0 0.0
        %4053 = vmatpush1.msra.mxu0 %v4031
        %4054 = vmatprep.subr.mxu0 0.0
        %4055 = vmatpush1.msra.mxu0 %v4032
        %4056 = vmatprep.subr.mxu0 0.0
        %4057 = vmatpush1.msra.mxu0 %v4033
        %4058 = vmatprep.subr.mxu0 0.0
        %4059 = vmatpush1.msra.mxu0 %v4034
        %4060 = vmatprep.subr.mxu0 0.0
        %4061 = vmatpush1.msra.mxu0 %v4035
        %4062 = vmatprep.subr.mxu0 0.0
        %4063 = vmatpush1.msra.mxu0 %v4036
        %4064 = vmatprep.subr.mxu0 0.0
        %4065 = vmatpush1.msra.mxu0 %v4037
        %4066 = vmatprep.subr.mxu0 0.0
        %4067 = vmatpush1.msra.mxu0 %v4038
        %4068 = vmatprep.subr.mxu0 0.0
        %4069 = vmatpush1.msra.mxu0 %v4039
        %4070 = vmatprep.subr.mxu0 0.0
        %4071 = vmatpush1.msra.mxu0 %v4040
        %4072 = vmatprep.subr.mxu0 0.0
        %4073 = vmatpush1.msra.mxu0 %v4041
        %4074 = vmatprep.subr.mxu0 0.0
        %4075 = vmatpush1.msra.mxu0 0.0
        %4076 = vmatprep.subr.mxu0 0.0
        %4077 = vmatpush1.msra.mxu0 0.0
        %4078 = vmatprep.subr.mxu0 0.0
        %4079 = vmatpush1.msra.mxu0 0.0
        %4080 = vmatprep.subr.mxu0 0.0
        %4081 = vmatpush1.msra.mxu0 0.0
        %4082 = vmatprep.subr.mxu0 0.0
        %4083 = vmatpush1.msra.mxu0 0.0
        %4084 = vmatprep.subr.mxu0 0.0
        %4085 = vmatpush1.msra.mxu0 0.0
        %4086 = vmatprep.subr.mxu0 0.0
        %4087 = vmatpush1.msra.mxu0 0.0
        %4088 = vmatprep.subr.mxu0 0.0
        %4089 = vmatpush1.msra.mxu0 0.0
        %4090 = vmatprep.subr.mxu0 0.0
        %4091 = vmatpush1.msra.mxu0 0.0
        %4092 = vmatprep.subr.mxu0 0.0
        %4093 = vmatpush1.msra.mxu0 0.0
        %4094 = vmatprep.subr.mxu0 0.0
        %4095 = vmatpush1.msra.mxu0 0.0
        %4096 = vmatprep.subr.mxu0 0.0
        %4097 = vmatpush1.msra.mxu0 0.0
        %4098 = vmatprep.subr.mxu0 0.0
        %4099 = vmatpush1.msra.mxu0 0.0
        %4100 = vmatprep.subr.mxu0 0.0
        %4101 = vmatpush1.msra.mxu0 0.0
        %4102 = vmatprep.subr.mxu0 0.0
        %4103 = vmatpush1.msra.mxu0 0.0
        %4104 = vmatprep.subr.mxu0 0.0
        %4105 = vmatpush1.msra.mxu0 0.0
        %4106 = vmatprep.mubr.f32.mxu0 0.0
        %4107 = vmatmul.mubr.f32.gmra.mrb[0].mxu0 %v3929
        %v4108 = vpop.f32.mrb[0].mxu0
        %v4109 = vadd.f32 0.0, %v4108
        %v4110 = vpop.f32.mrb[0].mxu0
        %4111 = vdwg.mxu0
        %v4112 = vadd.f32 %v4024, %v4109
        %v4113 = vld [vmem:[#allocation3 + $0x2] sm:$0xf]
        %s4114 = scalar_lea.vmem [#allocation12], 640
        %v4115 = vld [vmem:[%s4114] sm:$0xff]
        %v4116 = vld [vmem:[%s4114 + $0x8] sm:$0xff]
        %v4117 = vld [vmem:[%s4114 + $0x10] sm:$0xff]
        %v4118 = vld [vmem:[%s4114 + $0x18] sm:$0xff]
        %v4119 = vld [vmem:[%s4114 + $0x20] sm:$0xff]
        %v4120 = vld [vmem:[%s4114 + $0x28] sm:$0xff]
        %v4121 = vld [vmem:[%s4114 + $0x30] sm:$0xff]
        %v4122 = vld [vmem:[%s4114 + $0x38] sm:$0xff]
        %v4123 = vld [vmem:[%s4114 + $0x40] sm:$0xff]
        %v4124 = vld [vmem:[%s4114 + $0x48] sm:$0xff]
        %v4125 = vld [vmem:[%s4114 + $0x50] sm:$0xff]
        %v4126 = vld [vmem:[%s4114 + $0x58] sm:$0xff]
        %v4127 = vld [vmem:[%s4114 + $0x60] sm:$0xff]
        %v4128 = vld [vmem:[%s4114 + $0x68] sm:$0xff]
        %v4129 = vld [vmem:[%s4114 + $0x70] sm:$0xff]
        %v4130 = vld [vmem:[%s4114 + $0x78] sm:$0xff]
        %4131 = vmatprep.subr.mxu0 0.0
        %4132 = vmatpush1.msra.mxu0 %v4115
        %4133 = vmatprep.subr.mxu0 0.0
        %4134 = vmatpush1.msra.mxu0 %v4116
        %4135 = vmatprep.subr.mxu0 0.0
        %4136 = vmatpush1.msra.mxu0 %v4117
        %4137 = vmatprep.subr.mxu0 0.0
        %4138 = vmatpush1.msra.mxu0 %v4118
        %4139 = vmatprep.subr.mxu0 0.0
        %4140 = vmatpush1.msra.mxu0 %v4119
        %4141 = vmatprep.subr.mxu0 0.0
        %4142 = vmatpush1.msra.mxu0 %v4120
        %4143 = vmatprep.subr.mxu0 0.0
        %4144 = vmatpush1.msra.mxu0 %v4121
        %4145 = vmatprep.subr.mxu0 0.0
        %4146 = vmatpush1.msra.mxu0 %v4122
        %4147 = vmatprep.subr.mxu0 0.0
        %4148 = vmatpush1.msra.mxu0 %v4123
        %4149 = vmatprep.subr.mxu0 0.0
        %4150 = vmatpush1.msra.mxu0 %v4124
        %4151 = vmatprep.subr.mxu0 0.0
        %4152 = vmatpush1.msra.mxu0 %v4125
        %4153 = vmatprep.subr.mxu0 0.0
        %4154 = vmatpush1.msra.mxu0 %v4126
        %4155 = vmatprep.subr.mxu0 0.0
        %4156 = vmatpush1.msra.mxu0 %v4127
        %4157 = vmatprep.subr.mxu0 0.0
        %4158 = vmatpush1.msra.mxu0 %v4128
        %4159 = vmatprep.subr.mxu0 0.0
        %4160 = vmatpush1.msra.mxu0 %v4129
        %4161 = vmatprep.subr.mxu0 0.0
        %4162 = vmatpush1.msra.mxu0 %v4130
        %4163 = vmatprep.subr.mxu0 0.0
        %4164 = vmatpush1.msra.mxu0 0.0
        %4165 = vmatprep.subr.mxu0 0.0
        %4166 = vmatpush1.msra.mxu0 0.0
        %4167 = vmatprep.subr.mxu0 0.0
        %4168 = vmatpush1.msra.mxu0 0.0
        %4169 = vmatprep.subr.mxu0 0.0
        %4170 = vmatpush1.msra.mxu0 0.0
        %4171 = vmatprep.subr.mxu0 0.0
        %4172 = vmatpush1.msra.mxu0 0.0
        %4173 = vmatprep.subr.mxu0 0.0
        %4174 = vmatpush1.msra.mxu0 0.0
        %4175 = vmatprep.subr.mxu0 0.0
        %4176 = vmatpush1.msra.mxu0 0.0
        %4177 = vmatprep.subr.mxu0 0.0
        %4178 = vmatpush1.msra.mxu0 0.0
        %4179 = vmatprep.subr.mxu0 0.0
        %4180 = vmatpush1.msra.mxu0 0.0
        %4181 = vmatprep.subr.mxu0 0.0
        %4182 = vmatpush1.msra.mxu0 0.0
        %4183 = vmatprep.subr.mxu0 0.0
        %4184 = vmatpush1.msra.mxu0 0.0
        %4185 = vmatprep.subr.mxu0 0.0
        %4186 = vmatpush1.msra.mxu0 0.0
        %4187 = vmatprep.subr.mxu0 0.0
        %4188 = vmatpush1.msra.mxu0 0.0
        %4189 = vmatprep.subr.mxu0 0.0
        %4190 = vmatpush1.msra.mxu0 0.0
        %4191 = vmatprep.subr.mxu0 0.0
        %4192 = vmatpush1.msra.mxu0 0.0
        %4193 = vmatprep.subr.mxu0 0.0
        %4194 = vmatpush1.msra.mxu0 0.0
        %4195 = vmatprep.mubr.f32.mxu0 0.0
        %4196 = vmatmul.mubr.f32.gmra.mrb[0].mxu0 %v4113
        %v4197 = vpop.f32.mrb[0].mxu0
        %v4198 = vadd.f32 0.0, %v4197
        %v4199 = vpop.f32.mrb[0].mxu0
        %4200 = vdwg.mxu0
        %v4201 = vadd.f32 %v4112, %v4198
        %v4202 = vadd.f32 %v4201, %v3929
        %v4203 = vmin.f32 %v4202, 20.0
        %v4204 = vmul.f32 %v4203, 1.442695
        %v4205 = vpow.pop %v4204
        %v4206 = vadd.f32 %v4205, 2.0
        %v4207 = vmul.f32 %v4205, %v4206
        %v4208 = vadd.f32 %v4207, 2.0
        %v4209 = vrcp.pop %v4208
        %v4210 = vmul.f32 %v4207, %v4209
        %v4211 = vmul.f32 %v4202, %v4210
        %4212 = vst [vmem:[#allocation3 + $0x1] sm:$0xf] %v4211
        %v4213 = vld [vmem:[#allocation3 + $0x1] sm:$0xf]
        %v4214 = vld [vmem:[#allocation13 + $0x2] sm:$0x1]
        %v4215 = vlaneseq
        %v4216 = vshrl.u32 %v4215, 7
        %v4217 = vsub.s32 0, %v4216
        %v4218 = vrot.slane %v4214, %v4217
        %v4219 = vadd.f32 %v4218, 0.0
        %v4220 = vld [vmem:[#allocation3] sm:$0xf]
        %s4221 = scalar_lea.vmem [#allocation12], 768
        %v4222 = vld [vmem:[%s4221] sm:$0xff]
        %v4223 = vld [vmem:[%s4221 + $0x8] sm:$0xff]
        %v4224 = vld [vmem:[%s4221 + $0x10] sm:$0xff]
        %v4225 = vld [vmem:[%s4221 + $0x18] sm:$0xff]
        %v4226 = vld [vmem:[%s4221 + $0x20] sm:$0xff]
        %v4227 = vld [vmem:[%s4221 + $0x28] sm:$0xff]
        %v4228 = vld [vmem:[%s4221 + $0x30] sm:$0xff]
        %v4229 = vld [vmem:[%s4221 + $0x38] sm:$0xff]
        %v4230 = vld [vmem:[%s4221 + $0x40] sm:$0xff]
        %v4231 = vld [vmem:[%s4221 + $0x48] sm:$0xff]
        %v4232 = vld [vmem:[%s4221 + $0x50] sm:$0xff]
        %v4233 = vld [vmem:[%s4221 + $0x58] sm:$0xff]
        %v4234 = vld [vmem:[%s4221 + $0x60] sm:$0xff]
        %v4235 = vld [vmem:[%s4221 + $0x68] sm:$0xff]
        %v4236 = vld [vmem:[%s4221 + $0x70] sm:$0xff]
        %v4237 = vld [vmem:[%s4221 + $0x78] sm:$0xff]
        %4238 = vmatprep.subr.mxu0 0.0
        %4239 = vmatpush1.msra.mxu0 %v4222
        %4240 = vmatprep.subr.mxu0 0.0
        %4241 = vmatpush1.msra.mxu0 %v4223
        %4242 = vmatprep.subr.mxu0 0.0
        %4243 = vmatpush1.msra.mxu0 %v4224
        %4244 = vmatprep.subr.mxu0 0.0
        %4245 = vmatpush1.msra.mxu0 %v4225
        %4246 = vmatprep.subr.mxu0 0.0
        %4247 = vmatpush1.msra.mxu0 %v4226
        %4248 = vmatprep.subr.mxu0 0.0
        %4249 = vmatpush1.msra.mxu0 %v4227
        %4250 = vmatprep.subr.mxu0 0.0
        %4251 = vmatpush1.msra.mxu0 %v4228
        %4252 = vmatprep.subr.mxu0 0.0
        %4253 = vmatpush1.msra.mxu0 %v4229
        %4254 = vmatprep.subr.mxu0 0.0
        %4255 = vmatpush1.msra.mxu0 %v4230
        %4256 = vmatprep.subr.mxu0 0.0
        %4257 = vmatpush1.msra.mxu0 %v4231
        %4258 = vmatprep.subr.mxu0 0.0
        %4259 = vmatpush1.msra.mxu0 %v4232
        %4260 = vmatprep.subr.mxu0 0.0
        %4261 = vmatpush1.msra.mxu0 %v4233
        %4262 = vmatprep.subr.mxu0 0.0
        %4263 = vmatpush1.msra.mxu0 %v4234
        %4264 = vmatprep.subr.mxu0 0.0
        %4265 = vmatpush1.msra.mxu0 %v4235
        %4266 = vmatprep.subr.mxu0 0.0
        %4267 = vmatpush1.msra.mxu0 %v4236
        %4268 = vmatprep.subr.mxu0 0.0
        %4269 = vmatpush1.msra.mxu0 %v4237
        %4270 = vmatprep.subr.mxu0 0.0
        %4271 = vmatpush1.msra.mxu0 0.0
        %4272 = vmatprep.subr.mxu0 0.0
        %4273 = vmatpush1.msra.mxu0 0.0
        %4274 = vmatprep.subr.mxu0 0.0
        %4275 = vmatpush1.msra.mxu0 0.0
        %4276 = vmatprep.subr.mxu0 0.0
        %4277 = vmatpush1.msra.mxu0 0.0
        %4278 = vmatprep.subr.mxu0 0.0
        %4279 = vmatpush1.msra.mxu0 0.0
        %4280 = vmatprep.subr.mxu0 0.0
        %4281 = vmatpush1.msra.mxu0 0.0
        %4282 = vmatprep.subr.mxu0 0.0
        %4283 = vmatpush1.msra.mxu0 0.0
        %4284 = vmatprep.subr.mxu0 0.0
        %4285 = vmatpush1.msra.mxu0 0.0
        %4286 = vmatprep.subr.mxu0 0.0
        %4287 = vmatpush1.msra.mxu0 0.0
        %4288 = vmatprep.subr.mxu0 0.0
        %4289 = vmatpush1.msra.mxu0 0.0
        %4290 = vmatprep.subr.mxu0 0.0
        %4291 = vmatpush1.msra.mxu0 0.0
        %4292 = vmatprep.subr.mxu0 0.0
        %4293 = vmatpush1.msra.mxu0 0.0
        %4294 = vmatprep.subr.mxu0 0.0
        %4295 = vmatpush1.msra.mxu0 0.0
        %4296 = vmatprep.subr.mxu0 0.0
        %4297 = vmatpush1.msra.mxu0 0.0
        %4298 = vmatprep.subr.mxu0 0.0
        %4299 = vmatpush1.msra.mxu0 0.0
        %4300 = vmatprep.subr.mxu0 0.0
        %4301 = vmatpush1.msra.mxu0 0.0
        %4302 = vmatprep.mubr.f32.mxu0 0.0
        %4303 = vmatmul.mubr.f32.gmra.mrb[0].mxu0 %v4220
        %v4304 = vpop.f32.mrb[0].mxu0
        %v4305 = vadd.f32 0.0, %v4304
        %v4306 = vpop.f32.mrb[0].mxu0
        %4307 = vdwg.mxu0
        %v4308 = vadd.f32 %v4219, %v4305
        %s4309 = scalar_lea.vmem [#allocation12], 896
        %v4310 = vld [vmem:[%s4309] sm:$0xff]
        %v4311 = vld [vmem:[%s4309 + $0x8] sm:$0xff]
        %v4312 = vld [vmem:[%s4309 + $0x10] sm:$0xff]
        %v4313 = vld [vmem:[%s4309 + $0x18] sm:$0xff]
        %v4314 = vld [vmem:[%s4309 + $0x20] sm:$0xff]
        %v4315 = vld [vmem:[%s4309 + $0x28] sm:$0xff]
        %v4316 = vld [vmem:[%s4309 + $0x30] sm:$0xff]
        %v4317 = vld [vmem:[%s4309 + $0x38] sm:$0xff]
        %v4318 = vld [vmem:[%s4309 + $0x40] sm:$0xff]
        %v4319 = vld [vmem:[%s4309 + $0x48] sm:$0xff]
        %v4320 = vld [vmem:[%s4309 + $0x50] sm:$0xff]
        %v4321 = vld [vmem:[%s4309 + $0x58] sm:$0xff]
        %v4322 = vld [vmem:[%s4309 + $0x60] sm:$0xff]
        %v4323 = vld [vmem:[%s4309 + $0x68] sm:$0xff]
        %v4324 = vld [vmem:[%s4309 + $0x70] sm:$0xff]
        %v4325 = vld [vmem:[%s4309 + $0x78] sm:$0xff]
        %4326 = vmatprep.subr.mxu0 0.0
        %4327 = vmatpush1.msra.mxu0 %v4310
        %4328 = vmatprep.subr.mxu0 0.0
        %4329 = vmatpush1.msra.mxu0 %v4311
        %4330 = vmatprep.subr.mxu0 0.0
        %4331 = vmatpush1.msra.mxu0 %v4312
        %4332 = vmatprep.subr.mxu0 0.0
        %4333 = vmatpush1.msra.mxu0 %v4313
        %4334 = vmatprep.subr.mxu0 0.0
        %4335 = vmatpush1.msra.mxu0 %v4314
        %4336 = vmatprep.subr.mxu0 0.0
        %4337 = vmatpush1.msra.mxu0 %v4315
        %4338 = vmatprep.subr.mxu0 0.0
        %4339 = vmatpush1.msra.mxu0 %v4316
        %4340 = vmatprep.subr.mxu0 0.0
        %4341 = vmatpush1.msra.mxu0 %v4317
        %4342 = vmatprep.subr.mxu0 0.0
        %4343 = vmatpush1.msra.mxu0 %v4318
        %4344 = vmatprep.subr.mxu0 0.0
        %4345 = vmatpush1.msra.mxu0 %v4319
        %4346 = vmatprep.subr.mxu0 0.0
        %4347 = vmatpush1.msra.mxu0 %v4320
        %4348 = vmatprep.subr.mxu0 0.0
        %4349 = vmatpush1.msra.mxu0 %v4321
        %4350 = vmatprep.subr.mxu0 0.0
        %4351 = vmatpush1.msra.mxu0 %v4322
        %4352 = vmatprep.subr.mxu0 0.0
        %4353 = vmatpush1.msra.mxu0 %v4323
        %4354 = vmatprep.subr.mxu0 0.0
        %4355 = vmatpush1.msra.mxu0 %v4324
        %4356 = vmatprep.subr.mxu0 0.0
        %4357 = vmatpush1.msra.mxu0 %v4325
        %4358 = vmatprep.subr.mxu0 0.0
        %4359 = vmatpush1.msra.mxu0 0.0
        %4360 = vmatprep.subr.mxu0 0.0
        %4361 = vmatpush1.msra.mxu0 0.0
        %4362 = vmatprep.subr.mxu0 0.0
        %4363 = vmatpush1.msra.mxu0 0.0
        %4364 = vmatprep.subr.mxu0 0.0
        %4365 = vmatpush1.msra.mxu0 0.0
        %4366 = vmatprep.subr.mxu0 0.0
        %4367 = vmatpush1.msra.mxu0 0.0
        %4368 = vmatprep.subr.mxu0 0.0
        %4369 = vmatpush1.msra.mxu0 0.0
        %4370 = vmatprep.subr.mxu0 0.0
        %4371 = vmatpush1.msra.mxu0 0.0
        %4372 = vmatprep.subr.mxu0 0.0
        %4373 = vmatpush1.msra.mxu0 0.0
        %4374 = vmatprep.subr.mxu0 0.0
        %4375 = vmatpush1.msra.mxu0 0.0
        %4376 = vmatprep.subr.mxu0 0.0
        %4377 = vmatpush1.msra.mxu0 0.0
        %4378 = vmatprep.subr.mxu0 0.0
        %4379 = vmatpush1.msra.mxu0 0.0
        %4380 = vmatprep.subr.mxu0 0.0
        %4381 = vmatpush1.msra.mxu0 0.0
        %4382 = vmatprep.subr.mxu0 0.0
        %4383 = vmatpush1.msra.mxu0 0.0
        %4384 = vmatprep.subr.mxu0 0.0
        %4385 = vmatpush1.msra.mxu0 0.0
        %4386 = vmatprep.subr.mxu0 0.0
        %4387 = vmatpush1.msra.mxu0 0.0
        %4388 = vmatprep.subr.mxu0 0.0
        %4389 = vmatpush1.msra.mxu0 0.0
        %4390 = vmatprep.mubr.f32.mxu0 0.0
        %4391 = vmatmul.mubr.f32.gmra.mrb[0].mxu0 %v4213
        %v4392 = vpop.f32.mrb[0].mxu0
        %v4393 = vadd.f32 0.0, %v4392
        %v4394 = vpop.f32.mrb[0].mxu0
        %4395 = vdwg.mxu0
        %v4396 = vadd.f32 %v4308, %v4393
        %v4397 = vld [vmem:[#allocation3 + $0x2] sm:$0xf]
        %s4398 = scalar_lea.vmem [#allocation12], 1024
        %v4399 = vld [vmem:[%s4398] sm:$0xff]
        %v4400 = vld [vmem:[%s4398 + $0x8] sm:$0xff]
        %v4401 = vld [vmem:[%s4398 + $0x10] sm:$0xff]
        %v4402 = vld [vmem:[%s4398 + $0x18] sm:$0xff]
        %v4403 = vld [vmem:[%s4398 + $0x20] sm:$0xff]
        %v4404 = vld [vmem:[%s4398 + $0x28] sm:$0xff]
        %v4405 = vld [vmem:[%s4398 + $0x30] sm:$0xff]
        %v4406 = vld [vmem:[%s4398 + $0x38] sm:$0xff]
        %v4407 = vld [vmem:[%s4398 + $0x40] sm:$0xff]
        %v4408 = vld [vmem:[%s4398 + $0x48] sm:$0xff]
        %v4409 = vld [vmem:[%s4398 + $0x50] sm:$0xff]
        %v4410 = vld [vmem:[%s4398 + $0x58] sm:$0xff]
        %v4411 = vld [vmem:[%s4398 + $0x60] sm:$0xff]
        %v4412 = vld [vmem:[%s4398 + $0x68] sm:$0xff]
        %v4413 = vld [vmem:[%s4398 + $0x70] sm:$0xff]
        %v4414 = vld [vmem:[%s4398 + $0x78] sm:$0xff]
        %4415 = vmatprep.subr.mxu0 0.0
        %4416 = vmatpush1.msra.mxu0 %v4399
        %4417 = vmatprep.subr.mxu0 0.0
        %4418 = vmatpush1.msra.mxu0 %v4400
        %4419 = vmatprep.subr.mxu0 0.0
        %4420 = vmatpush1.msra.mxu0 %v4401
        %4421 = vmatprep.subr.mxu0 0.0
        %4422 = vmatpush1.msra.mxu0 %v4402
        %4423 = vmatprep.subr.mxu0 0.0
        %4424 = vmatpush1.msra.mxu0 %v4403
        %4425 = vmatprep.subr.mxu0 0.0
        %4426 = vmatpush1.msra.mxu0 %v4404
        %4427 = vmatprep.subr.mxu0 0.0
        %4428 = vmatpush1.msra.mxu0 %v4405
        %4429 = vmatprep.subr.mxu0 0.0
        %4430 = vmatpush1.msra.mxu0 %v4406
        %4431 = vmatprep.subr.mxu0 0.0
        %4432 = vmatpush1.msra.mxu0 %v4407
        %4433 = vmatprep.subr.mxu0 0.0
        %4434 = vmatpush1.msra.mxu0 %v4408
        %4435 = vmatprep.subr.mxu0 0.0
        %4436 = vmatpush1.msra.mxu0 %v4409
        %4437 = vmatprep.subr.mxu0 0.0
        %4438 = vmatpush1.msra.mxu0 %v4410
        %4439 = vmatprep.subr.mxu0 0.0
        %4440 = vmatpush1.msra.mxu0 %v4411
        %4441 = vmatprep.subr.mxu0 0.0
        %4442 = vmatpush1.msra.mxu0 %v4412
        %4443 = vmatprep.subr.mxu0 0.0
        %4444 = vmatpush1.msra.mxu0 %v4413
        %4445 = vmatprep.subr.mxu0 0.0
        %4446 = vmatpush1.msra.mxu0 %v4414
        %4447 = vmatprep.subr.mxu0 0.0
        %4448 = vmatpush1.msra.mxu0 0.0
        %4449 = vmatprep.subr.mxu0 0.0
        %4450 = vmatpush1.msra.mxu0 0.0
        %4451 = vmatprep.subr.mxu0 0.0
        %4452 = vmatpush1.msra.mxu0 0.0
        %4453 = vmatprep.subr.mxu0 0.0
        %4454 = vmatpush1.msra.mxu0 0.0
        %4455 = vmatprep.subr.mxu0 0.0
        %4456 = vmatpush1.msra.mxu0 0.0
        %4457 = vmatprep.subr.mxu0 0.0
        %4458 = vmatpush1.msra.mxu0 0.0
        %4459 = vmatprep.subr.mxu0 0.0
        %4460 = vmatpush1.msra.mxu0 0.0
        %4461 = vmatprep.subr.mxu0 0.0
        %4462 = vmatpush1.msra.mxu0 0.0
        %4463 = vmatprep.subr.mxu0 0.0
        %4464 = vmatpush1.msra.mxu0 0.0
        %4465 = vmatprep.subr.mxu0 0.0
        %4466 = vmatpush1.msra.mxu0 0.0
        %4467 = vmatprep.subr.mxu0 0.0
        %4468 = vmatpush1.msra.mxu0 0.0
        %4469 = vmatprep.subr.mxu0 0.0
        %4470 = vmatpush1.msra.mxu0 0.0
        %4471 = vmatprep.subr.mxu0 0.0
        %4472 = vmatpush1.msra.mxu0 0.0
        %4473 = vmatprep.subr.mxu0 0.0
        %4474 = vmatpush1.msra.mxu0 0.0
        %4475 = vmatprep.subr.mxu0 0.0
        %4476 = vmatpush1.msra.mxu0 0.0
        %4477 = vmatprep.subr.mxu0 0.0
        %4478 = vmatpush1.msra.mxu0 0.0
        %4479 = vmatprep.mubr.f32.mxu0 0.0
        %4480 = vmatmul.mubr.f32.gmra.mrb[0].mxu0 %v4397
        %v4481 = vpop.f32.mrb[0].mxu0
        %v4482 = vadd.f32 0.0, %v4481
        %v4483 = vpop.f32.mrb[0].mxu0
        %4484 = vdwg.mxu0
        %v4485 = vadd.f32 %v4396, %v4482
        %v4486 = vadd.f32 %v4485, %v4213
        %v4487 = vmin.f32 %v4486, 20.0
        %v4488 = vmul.f32 %v4487, 1.442695
        %v4489 = vpow.pop %v4488
        %v4490 = vadd.f32 %v4489, 2.0
        %v4491 = vmul.f32 %v4489, %v4490
        %v4492 = vadd.f32 %v4491, 2.0
        %v4493 = vrcp.pop %v4492
        %v4494 = vmul.f32 %v4491, %v4493
        %v4495 = vmul.f32 %v4486, %v4494
        %4496 = vst [vmem:[#allocation3 + $0x1] sm:$0xf] %v4495
        %v4497 = vld [vmem:[#allocation3 + $0x1] sm:$0xf]
        %v4498 = vld [vmem:[#allocation13 + $0x3] sm:$0x1]
        %v4499 = vlaneseq
        %v4500 = vshrl.u32 %v4499, 7
        %v4501 = vsub.s32 0, %v4500
        %v4502 = vrot.slane %v4498, %v4501
        %v4503 = vadd.f32 %v4502, 0.0
        %v4504 = vld [vmem:[#allocation3] sm:$0xf]
        %s4505 = scalar_lea.vmem [#allocation12], 1152
        %v4506 = vld [vmem:[%s4505] sm:$0xff]
        %v4507 = vld [vmem:[%s4505 + $0x8] sm:$0xff]
        %v4508 = vld [vmem:[%s4505 + $0x10] sm:$0xff]
        %v4509 = vld [vmem:[%s4505 + $0x18] sm:$0xff]
        %v4510 = vld [vmem:[%s4505 + $0x20] sm:$0xff]
        %v4511 = vld [vmem:[%s4505 + $0x28] sm:$0xff]
        %v4512 = vld [vmem:[%s4505 + $0x30] sm:$0xff]
        %v4513 = vld [vmem:[%s4505 + $0x38] sm:$0xff]
        %v4514 = vld [vmem:[%s4505 + $0x40] sm:$0xff]
        %v4515 = vld [vmem:[%s4505 + $0x48] sm:$0xff]
        %v4516 = vld [vmem:[%s4505 + $0x50] sm:$0xff]
        %v4517 = vld [vmem:[%s4505 + $0x58] sm:$0xff]
        %v4518 = vld [vmem:[%s4505 + $0x60] sm:$0xff]
        %v4519 = vld [vmem:[%s4505 + $0x68] sm:$0xff]
        %v4520 = vld [vmem:[%s4505 + $0x70] sm:$0xff]
        %v4521 = vld [vmem:[%s4505 + $0x78] sm:$0xff]
        %4522 = vmatprep.subr.mxu0 0.0
        %4523 = vmatpush1.msra.mxu0 %v4506
        %4524 = vmatprep.subr.mxu0 0.0
        %4525 = vmatpush1.msra.mxu0 %v4507
        %4526 = vmatprep.subr.mxu0 0.0
        %4527 = vmatpush1.msra.mxu0 %v4508
        %4528 = vmatprep.subr.mxu0 0.0
        %4529 = vmatpush1.msra.mxu0 %v4509
        %4530 = vmatprep.subr.mxu0 0.0
        %4531 = vmatpush1.msra.mxu0 %v4510
        %4532 = vmatprep.subr.mxu0 0.0
        %4533 = vmatpush1.msra.mxu0 %v4511
        %4534 = vmatprep.subr.mxu0 0.0
        %4535 = vmatpush1.msra.mxu0 %v4512
        %4536 = vmatprep.subr.mxu0 0.0
        %4537 = vmatpush1.msra.mxu0 %v4513
        %4538 = vmatprep.subr.mxu0 0.0
        %4539 = vmatpush1.msra.mxu0 %v4514
        %4540 = vmatprep.subr.mxu0 0.0
        %4541 = vmatpush1.msra.mxu0 %v4515
        %4542 = vmatprep.subr.mxu0 0.0
        %4543 = vmatpush1.msra.mxu0 %v4516
        %4544 = vmatprep.subr.mxu0 0.0
        %4545 = vmatpush1.msra.mxu0 %v4517
        %4546 = vmatprep.subr.mxu0 0.0
        %4547 = vmatpush1.msra.mxu0 %v4518
        %4548 = vmatprep.subr.mxu0 0.0
        %4549 = vmatpush1.msra.mxu0 %v4519
        %4550 = vmatprep.subr.mxu0 0.0
        %4551 = vmatpush1.msra.mxu0 %v4520
        %4552 = vmatprep.subr.mxu0 0.0
        %4553 = vmatpush1.msra.mxu0 %v4521
        %4554 = vmatprep.subr.mxu0 0.0
        %4555 = vmatpush1.msra.mxu0 0.0
        %4556 = vmatprep.subr.mxu0 0.0
        %4557 = vmatpush1.msra.mxu0 0.0
        %4558 = vmatprep.subr.mxu0 0.0
        %4559 = vmatpush1.msra.mxu0 0.0
        %4560 = vmatprep.subr.mxu0 0.0
        %4561 = vmatpush1.msra.mxu0 0.0
        %4562 = vmatprep.subr.mxu0 0.0
        %4563 = vmatpush1.msra.mxu0 0.0
        %4564 = vmatprep.subr.mxu0 0.0
        %4565 = vmatpush1.msra.mxu0 0.0
        %4566 = vmatprep.subr.mxu0 0.0
        %4567 = vmatpush1.msra.mxu0 0.0
        %4568 = vmatprep.subr.mxu0 0.0
        %4569 = vmatpush1.msra.mxu0 0.0
        %4570 = vmatprep.subr.mxu0 0.0
        %4571 = vmatpush1.msra.mxu0 0.0
        %4572 = vmatprep.subr.mxu0 0.0
        %4573 = vmatpush1.msra.mxu0 0.0
        %4574 = vmatprep.subr.mxu0 0.0
        %4575 = vmatpush1.msra.mxu0 0.0
        %4576 = vmatprep.subr.mxu0 0.0
        %4577 = vmatpush1.msra.mxu0 0.0
        %4578 = vmatprep.subr.mxu0 0.0
        %4579 = vmatpush1.msra.mxu0 0.0
        %4580 = vmatprep.subr.mxu0 0.0
        %4581 = vmatpush1.msra.mxu0 0.0
        %4582 = vmatprep.subr.mxu0 0.0
        %4583 = vmatpush1.msra.mxu0 0.0
        %4584 = vmatprep.subr.mxu0 0.0
        %4585 = vmatpush1.msra.mxu0 0.0
        %4586 = vmatprep.mubr.f32.mxu0 0.0
        %4587 = vmatmul.mubr.f32.gmra.mrb[0].mxu0 %v4504
        %v4588 = vpop.f32.mrb[0].mxu0
        %v4589 = vadd.f32 0.0, %v4588
        %v4590 = vpop.f32.mrb[0].mxu0
        %4591 = vdwg.mxu0
        %v4592 = vadd.f32 %v4503, %v4589
        %s4593 = scalar_lea.vmem [#allocation12], 1280
        %v4594 = vld [vmem:[%s4593] sm:$0xff]
        %v4595 = vld [vmem:[%s4593 + $0x8] sm:$0xff]
        %v4596 = vld [vmem:[%s4593 + $0x10] sm:$0xff]
        %v4597 = vld [vmem:[%s4593 + $0x18] sm:$0xff]
        %v4598 = vld [vmem:[%s4593 + $0x20] sm:$0xff]
        %v4599 = vld [vmem:[%s4593 + $0x28] sm:$0xff]
        %v4600 = vld [vmem:[%s4593 + $0x30] sm:$0xff]
        %v4601 = vld [vmem:[%s4593 + $0x38] sm:$0xff]
        %v4602 = vld [vmem:[%s4593 + $0x40] sm:$0xff]
        %v4603 = vld [vmem:[%s4593 + $0x48] sm:$0xff]
        %v4604 = vld [vmem:[%s4593 + $0x50] sm:$0xff]
        %v4605 = vld [vmem:[%s4593 + $0x58] sm:$0xff]
        %v4606 = vld [vmem:[%s4593 + $0x60] sm:$0xff]
        %v4607 = vld [vmem:[%s4593 + $0x68] sm:$0xff]
        %v4608 = vld [vmem:[%s4593 + $0x70] sm:$0xff]
        %v4609 = vld [vmem:[%s4593 + $0x78] sm:$0xff]
        %4610 = vmatprep.subr.mxu0 0.0
        %4611 = vmatpush1.msra.mxu0 %v4594
        %4612 = vmatprep.subr.mxu0 0.0
        %4613 = vmatpush1.msra.mxu0 %v4595
        %4614 = vmatprep.subr.mxu0 0.0
        %4615 = vmatpush1.msra.mxu0 %v4596
        %4616 = vmatprep.subr.mxu0 0.0
        %4617 = vmatpush1.msra.mxu0 %v4597
        %4618 = vmatprep.subr.mxu0 0.0
        %4619 = vmatpush1.msra.mxu0 %v4598
        %4620 = vmatprep.subr.mxu0 0.0
        %4621 = vmatpush1.msra.mxu0 %v4599
        %4622 = vmatprep.subr.mxu0 0.0
        %4623 = vmatpush1.msra.mxu0 %v4600
        %4624 = vmatprep.subr.mxu0 0.0
        %4625 = vmatpush1.msra.mxu0 %v4601
        %4626 = vmatprep.subr.mxu0 0.0
        %4627 = vmatpush1.msra.mxu0 %v4602
        %4628 = vmatprep.subr.mxu0 0.0
        %4629 = vmatpush1.msra.mxu0 %v4603
        %4630 = vmatprep.subr.mxu0 0.0
        %4631 = vmatpush1.msra.mxu0 %v4604
        %4632 = vmatprep.subr.mxu0 0.0
        %4633 = vmatpush1.msra.mxu0 %v4605
        %4634 = vmatprep.subr.mxu0 0.0
        %4635 = vmatpush1.msra.mxu0 %v4606
        %4636 = vmatprep.subr.mxu0 0.0
        %4637 = vmatpush1.msra.mxu0 %v4607
        %4638 = vmatprep.subr.mxu0 0.0
        %4639 = vmatpush1.msra.mxu0 %v4608
        %4640 = vmatprep.subr.mxu0 0.0
        %4641 = vmatpush1.msra.mxu0 %v4609
        %4642 = vmatprep.subr.mxu0 0.0
        %4643 = vmatpush1.msra.mxu0 0.0
        %4644 = vmatprep.subr.mxu0 0.0
        %4645 = vmatpush1.msra.mxu0 0.0
        %4646 = vmatprep.subr.mxu0 0.0
        %4647 = vmatpush1.msra.mxu0 0.0
        %4648 = vmatprep.subr.mxu0 0.0
        %4649 = vmatpush1.msra.mxu0 0.0
        %4650 = vmatprep.subr.mxu0 0.0
        %4651 = vmatpush1.msra.mxu0 0.0
        %4652 = vmatprep.subr.mxu0 0.0
        %4653 = vmatpush1.msra.mxu0 0.0
        %4654 = vmatprep.subr.mxu0 0.0
        %4655 = vmatpush1.msra.mxu0 0.0
        %4656 = vmatprep.subr.mxu0 0.0
        %4657 = vmatpush1.msra.mxu0 0.0
        %4658 = vmatprep.subr.mxu0 0.0
        %4659 = vmatpush1.msra.mxu0 0.0
        %4660 = vmatprep.subr.mxu0 0.0
        %4661 = vmatpush1.msra.mxu0 0.0
        %4662 = vmatprep.subr.mxu0 0.0
        %4663 = vmatpush1.msra.mxu0 0.0
        %4664 = vmatprep.subr.mxu0 0.0
        %4665 = vmatpush1.msra.mxu0 0.0
        %4666 = vmatprep.subr.mxu0 0.0
        %4667 = vmatpush1.msra.mxu0 0.0
        %4668 = vmatprep.subr.mxu0 0.0
        %4669 = vmatpush1.msra.mxu0 0.0
        %4670 = vmatprep.subr.mxu0 0.0
        %4671 = vmatpush1.msra.mxu0 0.0
        %4672 = vmatprep.subr.mxu0 0.0
        %4673 = vmatpush1.msra.mxu0 0.0
        %4674 = vmatprep.mubr.f32.mxu0 0.0
        %4675 = vmatmul.mubr.f32.gmra.mrb[0].mxu0 %v4497
        %v4676 = vpop.f32.mrb[0].mxu0
        %v4677 = vadd.f32 0.0, %v4676
        %v4678 = vpop.f32.mrb[0].mxu0
        %4679 = vdwg.mxu0
        %v4680 = vadd.f32 %v4592, %v4677
        %v4681 = vld [vmem:[#allocation3 + $0x2] sm:$0xf]
        %s4682 = scalar_lea.vmem [#allocation12], 1408
        %v4683 = vld [vmem:[%s4682] sm:$0xff]
        %v4684 = vld [vmem:[%s4682 + $0x8] sm:$0xff]
        %v4685 = vld [vmem:[%s4682 + $0x10] sm:$0xff]
        %v4686 = vld [vmem:[%s4682 + $0x18] sm:$0xff]
        %v4687 = vld [vmem:[%s4682 + $0x20] sm:$0xff]
        %v4688 = vld [vmem:[%s4682 + $0x28] sm:$0xff]
        %v4689 = vld [vmem:[%s4682 + $0x30] sm:$0xff]
        %v4690 = vld [vmem:[%s4682 + $0x38] sm:$0xff]
        %v4691 = vld [vmem:[%s4682 + $0x40] sm:$0xff]
        %v4692 = vld [vmem:[%s4682 + $0x48] sm:$0xff]
        %v4693 = vld [vmem:[%s4682 + $0x50] sm:$0xff]
        %v4694 = vld [vmem:[%s4682 + $0x58] sm:$0xff]
        %v4695 = vld [vmem:[%s4682 + $0x60] sm:$0xff]
        %v4696 = vld [vmem:[%s4682 + $0x68] sm:$0xff]
        %v4697 = vld [vmem:[%s4682 + $0x70] sm:$0xff]
        %v4698 = vld [vmem:[%s4682 + $0x78] sm:$0xff]
        %4699 = vmatprep.subr.mxu0 0.0
        %4700 = vmatpush1.msra.mxu0 %v4683
        %4701 = vmatprep.subr.mxu0 0.0
        %4702 = vmatpush1.msra.mxu0 %v4684
        %4703 = vmatprep.subr.mxu0 0.0
        %4704 = vmatpush1.msra.mxu0 %v4685
        %4705 = vmatprep.subr.mxu0 0.0
        %4706 = vmatpush1.msra.mxu0 %v4686
        %4707 = vmatprep.subr.mxu0 0.0
        %4708 = vmatpush1.msra.mxu0 %v4687
        %4709 = vmatprep.subr.mxu0 0.0
        %4710 = vmatpush1.msra.mxu0 %v4688
        %4711 = vmatprep.subr.mxu0 0.0
        %4712 = vmatpush1.msra.mxu0 %v4689
        %4713 = vmatprep.subr.mxu0 0.0
        %4714 = vmatpush1.msra.mxu0 %v4690
        %4715 = vmatprep.subr.mxu0 0.0
        %4716 = vmatpush1.msra.mxu0 %v4691
        %4717 = vmatprep.subr.mxu0 0.0
        %4718 = vmatpush1.msra.mxu0 %v4692
        %4719 = vmatprep.subr.mxu0 0.0
        %4720 = vmatpush1.msra.mxu0 %v4693
        %4721 = vmatprep.subr.mxu0 0.0
        %4722 = vmatpush1.msra.mxu0 %v4694
        %4723 = vmatprep.subr.mxu0 0.0
        %4724 = vmatpush1.msra.mxu0 %v4695
        %4725 = vmatprep.subr.mxu0 0.0
        %4726 = vmatpush1.msra.mxu0 %v4696
        %4727 = vmatprep.subr.mxu0 0.0
        %4728 = vmatpush1.msra.mxu0 %v4697
        %4729 = vmatprep.subr.mxu0 0.0
        %4730 = vmatpush1.msra.mxu0 %v4698
        %4731 = vmatprep.subr.mxu0 0.0
        %4732 = vmatpush1.msra.mxu0 0.0
        %4733 = vmatprep.subr.mxu0 0.0
        %4734 = vmatpush1.msra.mxu0 0.0
        %4735 = vmatprep.subr.mxu0 0.0
        %4736 = vmatpush1.msra.mxu0 0.0
        %4737 = vmatprep.subr.mxu0 0.0
        %4738 = vmatpush1.msra.mxu0 0.0
        %4739 = vmatprep.subr.mxu0 0.0
        %4740 = vmatpush1.msra.mxu0 0.0
        %4741 = vmatprep.subr.mxu0 0.0
        %4742 = vmatpush1.msra.mxu0 0.0
        %4743 = vmatprep.subr.mxu0 0.0
        %4744 = vmatpush1.msra.mxu0 0.0
        %4745 = vmatprep.subr.mxu0 0.0
        %4746 = vmatpush1.msra.mxu0 0.0
        %4747 = vmatprep.subr.mxu0 0.0
        %4748 = vmatpush1.msra.mxu0 0.0
        %4749 = vmatprep.subr.mxu0 0.0
        %4750 = vmatpush1.msra.mxu0 0.0
        %4751 = vmatprep.subr.mxu0 0.0
        %4752 = vmatpush1.msra.mxu0 0.0
        %4753 = vmatprep.subr.mxu0 0.0
        %4754 = vmatpush1.msra.mxu0 0.0
        %4755 = vmatprep.subr.mxu0 0.0
        %4756 = vmatpush1.msra.mxu0 0.0
        %4757 = vmatprep.subr.mxu0 0.0
        %4758 = vmatpush1.msra.mxu0 0.0
        %4759 = vmatprep.subr.mxu0 0.0
        %4760 = vmatpush1.msra.mxu0 0.0
        %4761 = vmatprep.subr.mxu0 0.0
        %4762 = vmatpush1.msra.mxu0 0.0
        %4763 = vmatprep.mubr.f32.mxu0 0.0
        %4764 = vmatmul.mubr.f32.gmra.mrb[0].mxu0 %v4681
        %v4765 = vpop.f32.mrb[0].mxu0
        %v4766 = vadd.f32 0.0, %v4765
        %v4767 = vpop.f32.mrb[0].mxu0
        %4768 = vdwg.mxu0
        %v4769 = vadd.f32 %v4680, %v4766
        %v4770 = vadd.f32 %v4769, %v4497
        %v4771 = vmin.f32 %v4770, 20.0
        %v4772 = vmul.f32 %v4771, 1.442695
        %v4773 = vpow.pop %v4772
        %v4774 = vadd.f32 %v4773, 2.0
        %v4775 = vmul.f32 %v4773, %v4774
        %v4776 = vadd.f32 %v4775, 2.0
        %v4777 = vrcp.pop %v4776
        %v4778 = vmul.f32 %v4775, %v4777
        %v4779 = vmul.f32 %v4770, %v4778
        %4780 = vst [vmem:[#allocation3 + $0x1] sm:$0xf] %v4779
        %v4781 = vld [vmem:[#allocation3 + $0x1] sm:$0xf]
        %v4782 = vld [vmem:[#allocation13 + $0x4] sm:$0x1]
        %v4783 = vlaneseq
        %v4784 = vshrl.u32 %v4783, 7
        %v4785 = vsub.s32 0, %v4784
        %v4786 = vrot.slane %v4782, %v4785
        %v4787 = vadd.f32 %v4786, 0.0
        %v4788 = vld [vmem:[#allocation3] sm:$0xf]
        %s4789 = scalar_lea.vmem [#allocation12], 1536
        %v4790 = vld [vmem:[%s4789] sm:$0xff]
        %v4791 = vld [vmem:[%s4789 + $0x8] sm:$0xff]
        %v4792 = vld [vmem:[%s4789 + $0x10] sm:$0xff]
        %v4793 = vld [vmem:[%s4789 + $0x18] sm:$0xff]
        %v4794 = vld [vmem:[%s4789 + $0x20] sm:$0xff]
        %v4795 = vld [vmem:[%s4789 + $0x28] sm:$0xff]
        %v4796 = vld [vmem:[%s4789 + $0x30] sm:$0xff]
        %v4797 = vld [vmem:[%s4789 + $0x38] sm:$0xff]
        %v4798 = vld [vmem:[%s4789 + $0x40] sm:$0xff]
        %v4799 = vld [vmem:[%s4789 + $0x48] sm:$0xff]
        %v4800 = vld [vmem:[%s4789 + $0x50] sm:$0xff]
        %v4801 = vld [vmem:[%s4789 + $0x58] sm:$0xff]
        %v4802 = vld [vmem:[%s4789 + $0x60] sm:$0xff]
        %v4803 = vld [vmem:[%s4789 + $0x68] sm:$0xff]
        %v4804 = vld [vmem:[%s4789 + $0x70] sm:$0xff]
        %v4805 = vld [vmem:[%s4789 + $0x78] sm:$0xff]
        %4806 = vmatprep.subr.mxu0 0.0
        %4807 = vmatpush1.msra.mxu0 %v4790
        %4808 = vmatprep.subr.mxu0 0.0
        %4809 = vmatpush1.msra.mxu0 %v4791
        %4810 = vmatprep.subr.mxu0 0.0
        %4811 = vmatpush1.msra.mxu0 %v4792
        %4812 = vmatprep.subr.mxu0 0.0
        %4813 = vmatpush1.msra.mxu0 %v4793
        %4814 = vmatprep.subr.mxu0 0.0
        %4815 = vmatpush1.msra.mxu0 %v4794
        %4816 = vmatprep.subr.mxu0 0.0
        %4817 = vmatpush1.msra.mxu0 %v4795
        %4818 = vmatprep.subr.mxu0 0.0
        %4819 = vmatpush1.msra.mxu0 %v4796
        %4820 = vmatprep.subr.mxu0 0.0
        %4821 = vmatpush1.msra.mxu0 %v4797
        %4822 = vmatprep.subr.mxu0 0.0
        %4823 = vmatpush1.msra.mxu0 %v4798
        %4824 = vmatprep.subr.mxu0 0.0
        %4825 = vmatpush1.msra.mxu0 %v4799
        %4826 = vmatprep.subr.mxu0 0.0
        %4827 = vmatpush1.msra.mxu0 %v4800
        %4828 = vmatprep.subr.mxu0 0.0
        %4829 = vmatpush1.msra.mxu0 %v4801
        %4830 = vmatprep.subr.mxu0 0.0
        %4831 = vmatpush1.msra.mxu0 %v4802
        %4832 = vmatprep.subr.mxu0 0.0
        %4833 = vmatpush1.msra.mxu0 %v4803
        %4834 = vmatprep.subr.mxu0 0.0
        %4835 = vmatpush1.msra.mxu0 %v4804
        %4836 = vmatprep.subr.mxu0 0.0
        %4837 = vmatpush1.msra.mxu0 %v4805
        %4838 = vmatprep.subr.mxu0 0.0
        %4839 = vmatpush1.msra.mxu0 0.0
        %4840 = vmatprep.subr.mxu0 0.0
        %4841 = vmatpush1.msra.mxu0 0.0
        %4842 = vmatprep.subr.mxu0 0.0
        %4843 = vmatpush1.msra.mxu0 0.0
        %4844 = vmatprep.subr.mxu0 0.0
        %4845 = vmatpush1.msra.mxu0 0.0
        %4846 = vmatprep.subr.mxu0 0.0
        %4847 = vmatpush1.msra.mxu0 0.0
        %4848 = vmatprep.subr.mxu0 0.0
        %4849 = vmatpush1.msra.mxu0 0.0
        %4850 = vmatprep.subr.mxu0 0.0
        %4851 = vmatpush1.msra.mxu0 0.0
        %4852 = vmatprep.subr.mxu0 0.0
        %4853 = vmatpush1.msra.mxu0 0.0
        %4854 = vmatprep.subr.mxu0 0.0
        %4855 = vmatpush1.msra.mxu0 0.0
        %4856 = vmatprep.subr.mxu0 0.0
        %4857 = vmatpush1.msra.mxu0 0.0
        %4858 = vmatprep.subr.mxu0 0.0
        %4859 = vmatpush1.msra.mxu0 0.0
        %4860 = vmatprep.subr.mxu0 0.0
        %4861 = vmatpush1.msra.mxu0 0.0
        %4862 = vmatprep.subr.mxu0 0.0
        %4863 = vmatpush1.msra.mxu0 0.0
        %4864 = vmatprep.subr.mxu0 0.0
        %4865 = vmatpush1.msra.mxu0 0.0
        %4866 = vmatprep.subr.mxu0 0.0
        %4867 = vmatpush1.msra.mxu0 0.0
        %4868 = vmatprep.subr.mxu0 0.0
        %4869 = vmatpush1.msra.mxu0 0.0
        %4870 = vmatprep.mubr.f32.mxu0 0.0
        %4871 = vmatmul.mubr.f32.gmra.mrb[0].mxu0 %v4788
        %v4872 = vpop.f32.mrb[0].mxu0
        %v4873 = vadd.f32 0.0, %v4872
        %v4874 = vpop.f32.mrb[0].mxu0
        %4875 = vdwg.mxu0
        %v4876 = vadd.f32 %v4787, %v4873
        %s4877 = scalar_lea.vmem [#allocation12], 1664
        %v4878 = vld [vmem:[%s4877] sm:$0xff]
        %v4879 = vld [vmem:[%s4877 + $0x8] sm:$0xff]
        %v4880 = vld [vmem:[%s4877 + $0x10] sm:$0xff]
        %v4881 = vld [vmem:[%s4877 + $0x18] sm:$0xff]
        %v4882 = vld [vmem:[%s4877 + $0x20] sm:$0xff]
        %v4883 = vld [vmem:[%s4877 + $0x28] sm:$0xff]
        %v4884 = vld [vmem:[%s4877 + $0x30] sm:$0xff]
        %v4885 = vld [vmem:[%s4877 + $0x38] sm:$0xff]
        %v4886 = vld [vmem:[%s4877 + $0x40] sm:$0xff]
        %v4887 = vld [vmem:[%s4877 + $0x48] sm:$0xff]
        %v4888 = vld [vmem:[%s4877 + $0x50] sm:$0xff]
        %v4889 = vld [vmem:[%s4877 + $0x58] sm:$0xff]
        %v4890 = vld [vmem:[%s4877 + $0x60] sm:$0xff]
        %v4891 = vld [vmem:[%s4877 + $0x68] sm:$0xff]
        %v4892 = vld [vmem:[%s4877 + $0x70] sm:$0xff]
        %v4893 = vld [vmem:[%s4877 + $0x78] sm:$0xff]
        %4894 = vmatprep.subr.mxu0 0.0
        %4895 = vmatpush1.msra.mxu0 %v4878
        %4896 = vmatprep.subr.mxu0 0.0
        %4897 = vmatpush1.msra.mxu0 %v4879
        %4898 = vmatprep.subr.mxu0 0.0
        %4899 = vmatpush1.msra.mxu0 %v4880
        %4900 = vmatprep.subr.mxu0 0.0
        %4901 = vmatpush1.msra.mxu0 %v4881
        %4902 = vmatprep.subr.mxu0 0.0
        %4903 = vmatpush1.msra.mxu0 %v4882
        %4904 = vmatprep.subr.mxu0 0.0
        %4905 = vmatpush1.msra.mxu0 %v4883
        %4906 = vmatprep.subr.mxu0 0.0
        %4907 = vmatpush1.msra.mxu0 %v4884
        %4908 = vmatprep.subr.mxu0 0.0
        %4909 = vmatpush1.msra.mxu0 %v4885
        %4910 = vmatprep.subr.mxu0 0.0
        %4911 = vmatpush1.msra.mxu0 %v4886
        %4912 = vmatprep.subr.mxu0 0.0
        %4913 = vmatpush1.msra.mxu0 %v4887
        %4914 = vmatprep.subr.mxu0 0.0
        %4915 = vmatpush1.msra.mxu0 %v4888
        %4916 = vmatprep.subr.mxu0 0.0
        %4917 = vmatpush1.msra.mxu0 %v4889
        %4918 = vmatprep.subr.mxu0 0.0
        %4919 = vmatpush1.msra.mxu0 %v4890
        %4920 = vmatprep.subr.mxu0 0.0
        %4921 = vmatpush1.msra.mxu0 %v4891
        %4922 = vmatprep.subr.mxu0 0.0
        %4923 = vmatpush1.msra.mxu0 %v4892
        %4924 = vmatprep.subr.mxu0 0.0
        %4925 = vmatpush1.msra.mxu0 %v4893
        %4926 = vmatprep.subr.mxu0 0.0
        %4927 = vmatpush1.msra.mxu0 0.0
        %4928 = vmatprep.subr.mxu0 0.0
        %4929 = vmatpush1.msra.mxu0 0.0
        %4930 = vmatprep.subr.mxu0 0.0
        %4931 = vmatpush1.msra.mxu0 0.0
        %4932 = vmatprep.subr.mxu0 0.0
        %4933 = vmatpush1.msra.mxu0 0.0
        %4934 = vmatprep.subr.mxu0 0.0
        %4935 = vmatpush1.msra.mxu0 0.0
        %4936 = vmatprep.subr.mxu0 0.0
        %4937 = vmatpush1.msra.mxu0 0.0
        %4938 = vmatprep.subr.mxu0 0.0
        %4939 = vmatpush1.msra.mxu0 0.0
        %4940 = vmatprep.subr.mxu0 0.0
        %4941 = vmatpush1.msra.mxu0 0.0
        %4942 = vmatprep.subr.mxu0 0.0
        %4943 = vmatpush1.msra.mxu0 0.0
        %4944 = vmatprep.subr.mxu0 0.0
        %4945 = vmatpush1.msra.mxu0 0.0
        %4946 = vmatprep.subr.mxu0 0.0
        %4947 = vmatpush1.msra.mxu0 0.0
        %4948 = vmatprep.subr.mxu0 0.0
        %4949 = vmatpush1.msra.mxu0 0.0
        %4950 = vmatprep.subr.mxu0 0.0
        %4951 = vmatpush1.msra.mxu0 0.0
        %4952 = vmatprep.subr.mxu0 0.0
        %4953 = vmatpush1.msra.mxu0 0.0
        %4954 = vmatprep.subr.mxu0 0.0
        %4955 = vmatpush1.msra.mxu0 0.0
        %4956 = vmatprep.subr.mxu0 0.0
        %4957 = vmatpush1.msra.mxu0 0.0
        %4958 = vmatprep.mubr.f32.mxu0 0.0
        %4959 = vmatmul.mubr.f32.gmra.mrb[0].mxu0 %v4781
        %v4960 = vpop.f32.mrb[0].mxu0
        %v4961 = vadd.f32 0.0, %v4960
        %v4962 = vpop.f32.mrb[0].mxu0
        %4963 = vdwg.mxu0
        %v4964 = vadd.f32 %v4876, %v4961
        %v4965 = vld [vmem:[#allocation3 + $0x2] sm:$0xf]
        %s4966 = scalar_lea.vmem [#allocation12], 1792
        %v4967 = vld [vmem:[%s4966] sm:$0xff]
        %v4968 = vld [vmem:[%s4966 + $0x8] sm:$0xff]
        %v4969 = vld [vmem:[%s4966 + $0x10] sm:$0xff]
        %v4970 = vld [vmem:[%s4966 + $0x18] sm:$0xff]
        %v4971 = vld [vmem:[%s4966 + $0x20] sm:$0xff]
        %v4972 = vld [vmem:[%s4966 + $0x28] sm:$0xff]
        %v4973 = vld [vmem:[%s4966 + $0x30] sm:$0xff]
        %v4974 = vld [vmem:[%s4966 + $0x38] sm:$0xff]
        %v4975 = vld [vmem:[%s4966 + $0x40] sm:$0xff]
        %v4976 = vld [vmem:[%s4966 + $0x48] sm:$0xff]
        %v4977 = vld [vmem:[%s4966 + $0x50] sm:$0xff]
        %v4978 = vld [vmem:[%s4966 + $0x58] sm:$0xff]
        %v4979 = vld [vmem:[%s4966 + $0x60] sm:$0xff]
        %v4980 = vld [vmem:[%s4966 + $0x68] sm:$0xff]
        %v4981 = vld [vmem:[%s4966 + $0x70] sm:$0xff]
        %v4982 = vld [vmem:[%s4966 + $0x78] sm:$0xff]
        %4983 = vmatprep.subr.mxu0 0.0
        %4984 = vmatpush1.msra.mxu0 %v4967
        %4985 = vmatprep.subr.mxu0 0.0
        %4986 = vmatpush1.msra.mxu0 %v4968
        %4987 = vmatprep.subr.mxu0 0.0
        %4988 = vmatpush1.msra.mxu0 %v4969
        %4989 = vmatprep.subr.mxu0 0.0
        %4990 = vmatpush1.msra.mxu0 %v4970
        %4991 = vmatprep.subr.mxu0 0.0
        %4992 = vmatpush1.msra.mxu0 %v4971
        %4993 = vmatprep.subr.mxu0 0.0
        %4994 = vmatpush1.msra.mxu0 %v4972
        %4995 = vmatprep.subr.mxu0 0.0
        %4996 = vmatpush1.msra.mxu0 %v4973
        %4997 = vmatprep.subr.mxu0 0.0
        %4998 = vmatpush1.msra.mxu0 %v4974
        %4999 = vmatprep.subr.mxu0 0.0
        %5000 = vmatpush1.msra.mxu0 %v4975
        %5001 = vmatprep.subr.mxu0 0.0
        %5002 = vmatpush1.msra.mxu0 %v4976
        %5003 = vmatprep.subr.mxu0 0.0
        %5004 = vmatpush1.msra.mxu0 %v4977
        %5005 = vmatprep.subr.mxu0 0.0
        %5006 = vmatpush1.msra.mxu0 %v4978
        %5007 = vmatprep.subr.mxu0 0.0
        %5008 = vmatpush1.msra.mxu0 %v4979
        %5009 = vmatprep.subr.mxu0 0.0
        %5010 = vmatpush1.msra.mxu0 %v4980
        %5011 = vmatprep.subr.mxu0 0.0
        %5012 = vmatpush1.msra.mxu0 %v4981
        %5013 = vmatprep.subr.mxu0 0.0
        %5014 = vmatpush1.msra.mxu0 %v4982
        %5015 = vmatprep.subr.mxu0 0.0
        %5016 = vmatpush1.msra.mxu0 0.0
        %5017 = vmatprep.subr.mxu0 0.0
        %5018 = vmatpush1.msra.mxu0 0.0
        %5019 = vmatprep.subr.mxu0 0.0
        %5020 = vmatpush1.msra.mxu0 0.0
        %5021 = vmatprep.subr.mxu0 0.0
        %5022 = vmatpush1.msra.mxu0 0.0
        %5023 = vmatprep.subr.mxu0 0.0
        %5024 = vmatpush1.msra.mxu0 0.0
        %5025 = vmatprep.subr.mxu0 0.0
        %5026 = vmatpush1.msra.mxu0 0.0
        %5027 = vmatprep.subr.mxu0 0.0
        %5028 = vmatpush1.msra.mxu0 0.0
        %5029 = vmatprep.subr.mxu0 0.0
        %5030 = vmatpush1.msra.mxu0 0.0
        %5031 = vmatprep.subr.mxu0 0.0
        %5032 = vmatpush1.msra.mxu0 0.0
        %5033 = vmatprep.subr.mxu0 0.0
        %5034 = vmatpush1.msra.mxu0 0.0
        %5035 = vmatprep.subr.mxu0 0.0
        %5036 = vmatpush1.msra.mxu0 0.0
        %5037 = vmatprep.subr.mxu0 0.0
        %5038 = vmatpush1.msra.mxu0 0.0
        %5039 = vmatprep.subr.mxu0 0.0
        %5040 = vmatpush1.msra.mxu0 0.0
        %5041 = vmatprep.subr.mxu0 0.0
        %5042 = vmatpush1.msra.mxu0 0.0
        %5043 = vmatprep.subr.mxu0 0.0
        %5044 = vmatpush1.msra.mxu0 0.0
        %5045 = vmatprep.subr.mxu0 0.0
        %5046 = vmatpush1.msra.mxu0 0.0
        %5047 = vmatprep.mubr.f32.mxu0 0.0
        %5048 = vmatmul.mubr.f32.gmra.mrb[0].mxu0 %v4965
        %v5049 = vpop.f32.mrb[0].mxu0
        %v5050 = vadd.f32 0.0, %v5049
        %v5051 = vpop.f32.mrb[0].mxu0
        %5052 = vdwg.mxu0
        %v5053 = vadd.f32 %v4964, %v5050
        %v5054 = vadd.f32 %v5053, %v4781
        %v5055 = vmin.f32 %v5054, 20.0
        %v5056 = vmul.f32 %v5055, 1.442695
        %v5057 = vpow.pop %v5056
        %v5058 = vadd.f32 %v5057, 2.0
        %v5059 = vmul.f32 %v5057, %v5058
        %v5060 = vadd.f32 %v5059, 2.0
        %v5061 = vrcp.pop %v5060
        %v5062 = vmul.f32 %v5059, %v5061
        %v5063 = vmul.f32 %v5054, %v5062
        %5064 = vst [vmem:[#allocation3 + $0x1] sm:$0xf] %v5063
        %v5065 = vld [vmem:[#allocation3 + $0x1] sm:$0xf]
        %v5066 = vld [vmem:[#allocation13 + $0x5] sm:$0x1]
        %v5067 = vlaneseq
        %v5068 = vshrl.u32 %v5067, 7
        %v5069 = vsub.s32 0, %v5068
        %v5070 = vrot.slane %v5066, %v5069
        %v5071 = vadd.f32 %v5070, 0.0
        %v5072 = vld [vmem:[#allocation3] sm:$0xf]
        %s5073 = scalar_lea.vmem [#allocation12], 1920
        %v5074 = vld [vmem:[%s5073] sm:$0xff]
        %v5075 = vld [vmem:[%s5073 + $0x8] sm:$0xff]
        %v5076 = vld [vmem:[%s5073 + $0x10] sm:$0xff]
        %v5077 = vld [vmem:[%s5073 + $0x18] sm:$0xff]
        %v5078 = vld [vmem:[%s5073 + $0x20] sm:$0xff]
        %v5079 = vld [vmem:[%s5073 + $0x28] sm:$0xff]
        %v5080 = vld [vmem:[%s5073 + $0x30] sm:$0xff]
        %v5081 = vld [vmem:[%s5073 + $0x38] sm:$0xff]
        %v5082 = vld [vmem:[%s5073 + $0x40] sm:$0xff]
        %v5083 = vld [vmem:[%s5073 + $0x48] sm:$0xff]
        %v5084 = vld [vmem:[%s5073 + $0x50] sm:$0xff]
        %v5085 = vld [vmem:[%s5073 + $0x58] sm:$0xff]
        %v5086 = vld [vmem:[%s5073 + $0x60] sm:$0xff]
        %v5087 = vld [vmem:[%s5073 + $0x68] sm:$0xff]
        %v5088 = vld [vmem:[%s5073 + $0x70] sm:$0xff]
        %v5089 = vld [vmem:[%s5073 + $0x78] sm:$0xff]
        %5090 = vmatprep.subr.mxu0 0.0
        %5091 = vmatpush1.msra.mxu0 %v5074
        %5092 = vmatprep.subr.mxu0 0.0
        %5093 = vmatpush1.msra.mxu0 %v5075
        %5094 = vmatprep.subr.mxu0 0.0
        %5095 = vmatpush1.msra.mxu0 %v5076
        %5096 = vmatprep.subr.mxu0 0.0
        %5097 = vmatpush1.msra.mxu0 %v5077
        %5098 = vmatprep.subr.mxu0 0.0
        %5099 = vmatpush1.msra.mxu0 %v5078
        %5100 = vmatprep.subr.mxu0 0.0
        %5101 = vmatpush1.msra.mxu0 %v5079
        %5102 = vmatprep.subr.mxu0 0.0
        %5103 = vmatpush1.msra.mxu0 %v5080
        %5104 = vmatprep.subr.mxu0 0.0
        %5105 = vmatpush1.msra.mxu0 %v5081
        %5106 = vmatprep.subr.mxu0 0.0
        %5107 = vmatpush1.msra.mxu0 %v5082
        %5108 = vmatprep.subr.mxu0 0.0
        %5109 = vmatpush1.msra.mxu0 %v5083
        %5110 = vmatprep.subr.mxu0 0.0
        %5111 = vmatpush1.msra.mxu0 %v5084
        %5112 = vmatprep.subr.mxu0 0.0
        %5113 = vmatpush1.msra.mxu0 %v5085
        %5114 = vmatprep.subr.mxu0 0.0
        %5115 = vmatpush1.msra.mxu0 %v5086
        %5116 = vmatprep.subr.mxu0 0.0
        %5117 = vmatpush1.msra.mxu0 %v5087
        %5118 = vmatprep.subr.mxu0 0.0
        %5119 = vmatpush1.msra.mxu0 %v5088
        %5120 = vmatprep.subr.mxu0 0.0
        %5121 = vmatpush1.msra.mxu0 %v5089
        %5122 = vmatprep.subr.mxu0 0.0
        %5123 = vmatpush1.msra.mxu0 0.0
        %5124 = vmatprep.subr.mxu0 0.0
        %5125 = vmatpush1.msra.mxu0 0.0
        %5126 = vmatprep.subr.mxu0 0.0
        %5127 = vmatpush1.msra.mxu0 0.0
        %5128 = vmatprep.subr.mxu0 0.0
        %5129 = vmatpush1.msra.mxu0 0.0
        %5130 = vmatprep.subr.mxu0 0.0
        %5131 = vmatpush1.msra.mxu0 0.0
        %5132 = vmatprep.subr.mxu0 0.0
        %5133 = vmatpush1.msra.mxu0 0.0
        %5134 = vmatprep.subr.mxu0 0.0
        %5135 = vmatpush1.msra.mxu0 0.0
        %5136 = vmatprep.subr.mxu0 0.0
        %5137 = vmatpush1.msra.mxu0 0.0
        %5138 = vmatprep.subr.mxu0 0.0
        %5139 = vmatpush1.msra.mxu0 0.0
        %5140 = vmatprep.subr.mxu0 0.0
        %5141 = vmatpush1.msra.mxu0 0.0
        %5142 = vmatprep.subr.mxu0 0.0
        %5143 = vmatpush1.msra.mxu0 0.0
        %5144 = vmatprep.subr.mxu0 0.0
        %5145 = vmatpush1.msra.mxu0 0.0
        %5146 = vmatprep.subr.mxu0 0.0
        %5147 = vmatpush1.msra.mxu0 0.0
        %5148 = vmatprep.subr.mxu0 0.0
        %5149 = vmatpush1.msra.mxu0 0.0
        %5150 = vmatprep.subr.mxu0 0.0
        %5151 = vmatpush1.msra.mxu0 0.0
        %5152 = vmatprep.subr.mxu0 0.0
        %5153 = vmatpush1.msra.mxu0 0.0
        %5154 = vmatprep.mubr.f32.mxu0 0.0
        %5155 = vmatmul.mubr.f32.gmra.mrb[0].mxu0 %v5072
        %v5156 = vpop.f32.mrb[0].mxu0
        %v5157 = vadd.f32 0.0, %v5156
        %v5158 = vpop.f32.mrb[0].mxu0
        %5159 = vdwg.mxu0
        %v5160 = vadd.f32 %v5071, %v5157
        %s5161 = scalar_lea.vmem [#allocation12], 2048
        %v5162 = vld [vmem:[%s5161] sm:$0xff]
        %v5163 = vld [vmem:[%s5161 + $0x8] sm:$0xff]
        %v5164 = vld [vmem:[%s5161 + $0x10] sm:$0xff]
        %v5165 = vld [vmem:[%s5161 + $0x18] sm:$0xff]
        %v5166 = vld [vmem:[%s5161 + $0x20] sm:$0xff]
        %v5167 = vld [vmem:[%s5161 + $0x28] sm:$0xff]
        %v5168 = vld [vmem:[%s5161 + $0x30] sm:$0xff]
        %v5169 = vld [vmem:[%s5161 + $0x38] sm:$0xff]
        %v5170 = vld [vmem:[%s5161 + $0x40] sm:$0xff]
        %v5171 = vld [vmem:[%s5161 + $0x48] sm:$0xff]
        %v5172 = vld [vmem:[%s5161 + $0x50] sm:$0xff]
        %v5173 = vld [vmem:[%s5161 + $0x58] sm:$0xff]
        %v5174 = vld [vmem:[%s5161 + $0x60] sm:$0xff]
        %v5175 = vld [vmem:[%s5161 + $0x68] sm:$0xff]
        %v5176 = vld [vmem:[%s5161 + $0x70] sm:$0xff]
        %v5177 = vld [vmem:[%s5161 + $0x78] sm:$0xff]
        %5178 = vmatprep.subr.mxu0 0.0
        %5179 = vmatpush1.msra.mxu0 %v5162
        %5180 = vmatprep.subr.mxu0 0.0
        %5181 = vmatpush1.msra.mxu0 %v5163
        %5182 = vmatprep.subr.mxu0 0.0
        %5183 = vmatpush1.msra.mxu0 %v5164
        %5184 = vmatprep.subr.mxu0 0.0
        %5185 = vmatpush1.msra.mxu0 %v5165
        %5186 = vmatprep.subr.mxu0 0.0
        %5187 = vmatpush1.msra.mxu0 %v5166
        %5188 = vmatprep.subr.mxu0 0.0
        %5189 = vmatpush1.msra.mxu0 %v5167
        %5190 = vmatprep.subr.mxu0 0.0
        %5191 = vmatpush1.msra.mxu0 %v5168
        %5192 = vmatprep.subr.mxu0 0.0
        %5193 = vmatpush1.msra.mxu0 %v5169
        %5194 = vmatprep.subr.mxu0 0.0
        %5195 = vmatpush1.msra.mxu0 %v5170
        %5196 = vmatprep.subr.mxu0 0.0
        %5197 = vmatpush1.msra.mxu0 %v5171
        %5198 = vmatprep.subr.mxu0 0.0
        %5199 = vmatpush1.msra.mxu0 %v5172
        %5200 = vmatprep.subr.mxu0 0.0
        %5201 = vmatpush1.msra.mxu0 %v5173
        %5202 = vmatprep.subr.mxu0 0.0
        %5203 = vmatpush1.msra.mxu0 %v5174
        %5204 = vmatprep.subr.mxu0 0.0
        %5205 = vmatpush1.msra.mxu0 %v5175
        %5206 = vmatprep.subr.mxu0 0.0
        %5207 = vmatpush1.msra.mxu0 %v5176
        %5208 = vmatprep.subr.mxu0 0.0
        %5209 = vmatpush1.msra.mxu0 %v5177
        %5210 = vmatprep.subr.mxu0 0.0
        %5211 = vmatpush1.msra.mxu0 0.0
        %5212 = vmatprep.subr.mxu0 0.0
        %5213 = vmatpush1.msra.mxu0 0.0
        %5214 = vmatprep.subr.mxu0 0.0
        %5215 = vmatpush1.msra.mxu0 0.0
        %5216 = vmatprep.subr.mxu0 0.0
        %5217 = vmatpush1.msra.mxu0 0.0
        %5218 = vmatprep.subr.mxu0 0.0
        %5219 = vmatpush1.msra.mxu0 0.0
        %5220 = vmatprep.subr.mxu0 0.0
        %5221 = vmatpush1.msra.mxu0 0.0
        %5222 = vmatprep.subr.mxu0 0.0
        %5223 = vmatpush1.msra.mxu0 0.0
        %5224 = vmatprep.subr.mxu0 0.0
        %5225 = vmatpush1.msra.mxu0 0.0
        %5226 = vmatprep.subr.mxu0 0.0
        %5227 = vmatpush1.msra.mxu0 0.0
        %5228 = vmatprep.subr.mxu0 0.0
        %5229 = vmatpush1.msra.mxu0 0.0
        %5230 = vmatprep.subr.mxu0 0.0
        %5231 = vmatpush1.msra.mxu0 0.0
        %5232 = vmatprep.subr.mxu0 0.0
        %5233 = vmatpush1.msra.mxu0 0.0
        %5234 = vmatprep.subr.mxu0 0.0
        %5235 = vmatpush1.msra.mxu0 0.0
        %5236 = vmatprep.subr.mxu0 0.0
        %5237 = vmatpush1.msra.mxu0 0.0
        %5238 = vmatprep.subr.mxu0 0.0
        %5239 = vmatpush1.msra.mxu0 0.0
        %5240 = vmatprep.subr.mxu0 0.0
        %5241 = vmatpush1.msra.mxu0 0.0
        %5242 = vmatprep.mubr.f32.mxu0 0.0
        %5243 = vmatmul.mubr.f32.gmra.mrb[0].mxu0 %v5065
        %v5244 = vpop.f32.mrb[0].mxu0
        %v5245 = vadd.f32 0.0, %v5244
        %v5246 = vpop.f32.mrb[0].mxu0
        %5247 = vdwg.mxu0
        %v5248 = vadd.f32 %v5160, %v5245
        %v5249 = vld [vmem:[#allocation3 + $0x2] sm:$0xf]
        %s5250 = scalar_lea.vmem [#allocation12], 2176
        %v5251 = vld [vmem:[%s5250] sm:$0xff]
        %v5252 = vld [vmem:[%s5250 + $0x8] sm:$0xff]
        %v5253 = vld [vmem:[%s5250 + $0x10] sm:$0xff]
        %v5254 = vld [vmem:[%s5250 + $0x18] sm:$0xff]
        %v5255 = vld [vmem:[%s5250 + $0x20] sm:$0xff]
        %v5256 = vld [vmem:[%s5250 + $0x28] sm:$0xff]
        %v5257 = vld [vmem:[%s5250 + $0x30] sm:$0xff]
        %v5258 = vld [vmem:[%s5250 + $0x38] sm:$0xff]
        %v5259 = vld [vmem:[%s5250 + $0x40] sm:$0xff]
        %v5260 = vld [vmem:[%s5250 + $0x48] sm:$0xff]
        %v5261 = vld [vmem:[%s5250 + $0x50] sm:$0xff]
        %v5262 = vld [vmem:[%s5250 + $0x58] sm:$0xff]
        %v5263 = vld [vmem:[%s5250 + $0x60] sm:$0xff]
        %v5264 = vld [vmem:[%s5250 + $0x68] sm:$0xff]
        %v5265 = vld [vmem:[%s5250 + $0x70] sm:$0xff]
        %v5266 = vld [vmem:[%s5250 + $0x78] sm:$0xff]
        %5267 = vmatprep.subr.mxu0 0.0
        %5268 = vmatpush1.msra.mxu0 %v5251
        %5269 = vmatprep.subr.mxu0 0.0
        %5270 = vmatpush1.msra.mxu0 %v5252
        %5271 = vmatprep.subr.mxu0 0.0
        %5272 = vmatpush1.msra.mxu0 %v5253
        %5273 = vmatprep.subr.mxu0 0.0
        %5274 = vmatpush1.msra.mxu0 %v5254
        %5275 = vmatprep.subr.mxu0 0.0
        %5276 = vmatpush1.msra.mxu0 %v5255
        %5277 = vmatprep.subr.mxu0 0.0
        %5278 = vmatpush1.msra.mxu0 %v5256
        %5279 = vmatprep.subr.mxu0 0.0
        %5280 = vmatpush1.msra.mxu0 %v5257
        %5281 = vmatprep.subr.mxu0 0.0
        %5282 = vmatpush1.msra.mxu0 %v5258
        %5283 = vmatprep.subr.mxu0 0.0
        %5284 = vmatpush1.msra.mxu0 %v5259
        %5285 = vmatprep.subr.mxu0 0.0
        %5286 = vmatpush1.msra.mxu0 %v5260
        %5287 = vmatprep.subr.mxu0 0.0
        %5288 = vmatpush1.msra.mxu0 %v5261
        %5289 = vmatprep.subr.mxu0 0.0
        %5290 = vmatpush1.msra.mxu0 %v5262
        %5291 = vmatprep.subr.mxu0 0.0
        %5292 = vmatpush1.msra.mxu0 %v5263
        %5293 = vmatprep.subr.mxu0 0.0
        %5294 = vmatpush1.msra.mxu0 %v5264
        %5295 = vmatprep.subr.mxu0 0.0
        %5296 = vmatpush1.msra.mxu0 %v5265
        %5297 = vmatprep.subr.mxu0 0.0
        %5298 = vmatpush1.msra.mxu0 %v5266
        %5299 = vmatprep.subr.mxu0 0.0
        %5300 = vmatpush1.msra.mxu0 0.0
        %5301 = vmatprep.subr.mxu0 0.0
        %5302 = vmatpush1.msra.mxu0 0.0
        %5303 = vmatprep.subr.mxu0 0.0
        %5304 = vmatpush1.msra.mxu0 0.0
        %5305 = vmatprep.subr.mxu0 0.0
        %5306 = vmatpush1.msra.mxu0 0.0
        %5307 = vmatprep.subr.mxu0 0.0
        %5308 = vmatpush1.msra.mxu0 0.0
        %5309 = vmatprep.subr.mxu0 0.0
        %5310 = vmatpush1.msra.mxu0 0.0
        %5311 = vmatprep.subr.mxu0 0.0
        %5312 = vmatpush1.msra.mxu0 0.0
        %5313 = vmatprep.subr.mxu0 0.0
        %5314 = vmatpush1.msra.mxu0 0.0
        %5315 = vmatprep.subr.mxu0 0.0
        %5316 = vmatpush1.msra.mxu0 0.0
        %5317 = vmatprep.subr.mxu0 0.0
        %5318 = vmatpush1.msra.mxu0 0.0
        %5319 = vmatprep.subr.mxu0 0.0
        %5320 = vmatpush1.msra.mxu0 0.0
        %5321 = vmatprep.subr.mxu0 0.0
        %5322 = vmatpush1.msra.mxu0 0.0
        %5323 = vmatprep.subr.mxu0 0.0
        %5324 = vmatpush1.msra.mxu0 0.0
        %5325 = vmatprep.subr.mxu0 0.0
        %5326 = vmatpush1.msra.mxu0 0.0
        %5327 = vmatprep.subr.mxu0 0.0
        %5328 = vmatpush1.msra.mxu0 0.0
        %5329 = vmatprep.subr.mxu0 0.0
        %5330 = vmatpush1.msra.mxu0 0.0
        %5331 = vmatprep.mubr.f32.mxu0 0.0
        %5332 = vmatmul.mubr.f32.gmra.mrb[0].mxu0 %v5249
        %v5333 = vpop.f32.mrb[0].mxu0
        %v5334 = vadd.f32 0.0, %v5333
        %v5335 = vpop.f32.mrb[0].mxu0
        %5336 = vdwg.mxu0
        %v5337 = vadd.f32 %v5248, %v5334
        %v5338 = vadd.f32 %v5337, %v5065
        %v5339 = vmin.f32 %v5338, 20.0
        %v5340 = vmul.f32 %v5339, 1.442695
        %v5341 = vpow.pop %v5340
        %v5342 = vadd.f32 %v5341, 2.0
        %v5343 = vmul.f32 %v5341, %v5342
        %v5344 = vadd.f32 %v5343, 2.0
        %v5345 = vrcp.pop %v5344
        %v5346 = vmul.f32 %v5343, %v5345
        %v5347 = vmul.f32 %v5338, %v5346
        %5348 = vst [vmem:[#allocation3 + $0x1] sm:$0xf] %v5347
        %v5349 = vld [vmem:[#allocation3 + $0x1] sm:$0xf]
        %v5350 = vld [vmem:[#allocation13 + $0x6] sm:$0x1]
        %v5351 = vlaneseq
        %v5352 = vshrl.u32 %v5351, 7
        %v5353 = vsub.s32 0, %v5352
        %v5354 = vrot.slane %v5350, %v5353
        %v5355 = vadd.f32 %v5354, 0.0
        %v5356 = vld [vmem:[#allocation3] sm:$0xf]
        %s5357 = scalar_lea.vmem [#allocation12], 2304
        %v5358 = vld [vmem:[%s5357] sm:$0xff]
        %v5359 = vld [vmem:[%s5357 + $0x8] sm:$0xff]
        %v5360 = vld [vmem:[%s5357 + $0x10] sm:$0xff]
        %v5361 = vld [vmem:[%s5357 + $0x18] sm:$0xff]
        %v5362 = vld [vmem:[%s5357 + $0x20] sm:$0xff]
        %v5363 = vld [vmem:[%s5357 + $0x28] sm:$0xff]
        %v5364 = vld [vmem:[%s5357 + $0x30] sm:$0xff]
        %v5365 = vld [vmem:[%s5357 + $0x38] sm:$0xff]
        %v5366 = vld [vmem:[%s5357 + $0x40] sm:$0xff]
        %v5367 = vld [vmem:[%s5357 + $0x48] sm:$0xff]
        %v5368 = vld [vmem:[%s5357 + $0x50] sm:$0xff]
        %v5369 = vld [vmem:[%s5357 + $0x58] sm:$0xff]
        %v5370 = vld [vmem:[%s5357 + $0x60] sm:$0xff]
        %v5371 = vld [vmem:[%s5357 + $0x68] sm:$0xff]
        %v5372 = vld [vmem:[%s5357 + $0x70] sm:$0xff]
        %v5373 = vld [vmem:[%s5357 + $0x78] sm:$0xff]
        %5374 = vmatprep.subr.mxu0 0.0
        %5375 = vmatpush1.msra.mxu0 %v5358
        %5376 = vmatprep.subr.mxu0 0.0
        %5377 = vmatpush1.msra.mxu0 %v5359
        %5378 = vmatprep.subr.mxu0 0.0
        %5379 = vmatpush1.msra.mxu0 %v5360
        %5380 = vmatprep.subr.mxu0 0.0
        %5381 = vmatpush1.msra.mxu0 %v5361
        %5382 = vmatprep.subr.mxu0 0.0
        %5383 = vmatpush1.msra.mxu0 %v5362
        %5384 = vmatprep.subr.mxu0 0.0
        %5385 = vmatpush1.msra.mxu0 %v5363
        %5386 = vmatprep.subr.mxu0 0.0
        %5387 = vmatpush1.msra.mxu0 %v5364
        %5388 = vmatprep.subr.mxu0 0.0
        %5389 = vmatpush1.msra.mxu0 %v5365
        %5390 = vmatprep.subr.mxu0 0.0
        %5391 = vmatpush1.msra.mxu0 %v5366
        %5392 = vmatprep.subr.mxu0 0.0
        %5393 = vmatpush1.msra.mxu0 %v5367
        %5394 = vmatprep.subr.mxu0 0.0
        %5395 = vmatpush1.msra.mxu0 %v5368
        %5396 = vmatprep.subr.mxu0 0.0
        %5397 = vmatpush1.msra.mxu0 %v5369
        %5398 = vmatprep.subr.mxu0 0.0
        %5399 = vmatpush1.msra.mxu0 %v5370
        %5400 = vmatprep.subr.mxu0 0.0
        %5401 = vmatpush1.msra.mxu0 %v5371
        %5402 = vmatprep.subr.mxu0 0.0
        %5403 = vmatpush1.msra.mxu0 %v5372
        %5404 = vmatprep.subr.mxu0 0.0
        %5405 = vmatpush1.msra.mxu0 %v5373
        %5406 = vmatprep.subr.mxu0 0.0
        %5407 = vmatpush1.msra.mxu0 0.0
        %5408 = vmatprep.subr.mxu0 0.0
        %5409 = vmatpush1.msra.mxu0 0.0
        %5410 = vmatprep.subr.mxu0 0.0
        %5411 = vmatpush1.msra.mxu0 0.0
        %5412 = vmatprep.subr.mxu0 0.0
        %5413 = vmatpush1.msra.mxu0 0.0
        %5414 = vmatprep.subr.mxu0 0.0
        %5415 = vmatpush1.msra.mxu0 0.0
        %5416 = vmatprep.subr.mxu0 0.0
        %5417 = vmatpush1.msra.mxu0 0.0
        %5418 = vmatprep.subr.mxu0 0.0
        %5419 = vmatpush1.msra.mxu0 0.0
        %5420 = vmatprep.subr.mxu0 0.0
        %5421 = vmatpush1.msra.mxu0 0.0
        %5422 = vmatprep.subr.mxu0 0.0
        %5423 = vmatpush1.msra.mxu0 0.0
        %5424 = vmatprep.subr.mxu0 0.0
        %5425 = vmatpush1.msra.mxu0 0.0
        %5426 = vmatprep.subr.mxu0 0.0
        %5427 = vmatpush1.msra.mxu0 0.0
        %5428 = vmatprep.subr.mxu0 0.0
        %5429 = vmatpush1.msra.mxu0 0.0
        %5430 = vmatprep.subr.mxu0 0.0
        %5431 = vmatpush1.msra.mxu0 0.0
        %5432 = vmatprep.subr.mxu0 0.0
        %5433 = vmatpush1.msra.mxu0 0.0
        %5434 = vmatprep.subr.mxu0 0.0
        %5435 = vmatpush1.msra.mxu0 0.0
        %5436 = vmatprep.subr.mxu0 0.0
        %5437 = vmatpush1.msra.mxu0 0.0
        %5438 = vmatprep.mubr.f32.mxu0 0.0
        %5439 = vmatmul.mubr.f32.gmra.mrb[0].mxu0 %v5356
        %v5440 = vpop.f32.mrb[0].mxu0
        %v5441 = vadd.f32 0.0, %v5440
        %v5442 = vpop.f32.mrb[0].mxu0
        %5443 = vdwg.mxu0
        %v5444 = vadd.f32 %v5355, %v5441
        %s5445 = scalar_lea.vmem [#allocation12], 2432
        %v5446 = vld [vmem:[%s5445] sm:$0xff]
        %v5447 = vld [vmem:[%s5445 + $0x8] sm:$0xff]
        %v5448 = vld [vmem:[%s5445 + $0x10] sm:$0xff]
        %v5449 = vld [vmem:[%s5445 + $0x18] sm:$0xff]
        %v5450 = vld [vmem:[%s5445 + $0x20] sm:$0xff]
        %v5451 = vld [vmem:[%s5445 + $0x28] sm:$0xff]
        %v5452 = vld [vmem:[%s5445 + $0x30] sm:$0xff]
        %v5453 = vld [vmem:[%s5445 + $0x38] sm:$0xff]
        %v5454 = vld [vmem:[%s5445 + $0x40] sm:$0xff]
        %v5455 = vld [vmem:[%s5445 + $0x48] sm:$0xff]
        %v5456 = vld [vmem:[%s5445 + $0x50] sm:$0xff]
        %v5457 = vld [vmem:[%s5445 + $0x58] sm:$0xff]
        %v5458 = vld [vmem:[%s5445 + $0x60] sm:$0xff]
        %v5459 = vld [vmem:[%s5445 + $0x68] sm:$0xff]
        %v5460 = vld [vmem:[%s5445 + $0x70] sm:$0xff]
        %v5461 = vld [vmem:[%s5445 + $0x78] sm:$0xff]
        %5462 = vmatprep.subr.mxu0 0.0
        %5463 = vmatpush1.msra.mxu0 %v5446
        %5464 = vmatprep.subr.mxu0 0.0
        %5465 = vmatpush1.msra.mxu0 %v5447
        %5466 = vmatprep.subr.mxu0 0.0
        %5467 = vmatpush1.msra.mxu0 %v5448
        %5468 = vmatprep.subr.mxu0 0.0
        %5469 = vmatpush1.msra.mxu0 %v5449
        %5470 = vmatprep.subr.mxu0 0.0
        %5471 = vmatpush1.msra.mxu0 %v5450
        %5472 = vmatprep.subr.mxu0 0.0
        %5473 = vmatpush1.msra.mxu0 %v5451
        %5474 = vmatprep.subr.mxu0 0.0
        %5475 = vmatpush1.msra.mxu0 %v5452
        %5476 = vmatprep.subr.mxu0 0.0
        %5477 = vmatpush1.msra.mxu0 %v5453
        %5478 = vmatprep.subr.mxu0 0.0
        %5479 = vmatpush1.msra.mxu0 %v5454
        %5480 = vmatprep.subr.mxu0 0.0
        %5481 = vmatpush1.msra.mxu0 %v5455
        %5482 = vmatprep.subr.mxu0 0.0
        %5483 = vmatpush1.msra.mxu0 %v5456
        %5484 = vmatprep.subr.mxu0 0.0
        %5485 = vmatpush1.msra.mxu0 %v5457
        %5486 = vmatprep.subr.mxu0 0.0
        %5487 = vmatpush1.msra.mxu0 %v5458
        %5488 = vmatprep.subr.mxu0 0.0
        %5489 = vmatpush1.msra.mxu0 %v5459
        %5490 = vmatprep.subr.mxu0 0.0
        %5491 = vmatpush1.msra.mxu0 %v5460
        %5492 = vmatprep.subr.mxu0 0.0
        %5493 = vmatpush1.msra.mxu0 %v5461
        %5494 = vmatprep.subr.mxu0 0.0
        %5495 = vmatpush1.msra.mxu0 0.0
        %5496 = vmatprep.subr.mxu0 0.0
        %5497 = vmatpush1.msra.mxu0 0.0
        %5498 = vmatprep.subr.mxu0 0.0
        %5499 = vmatpush1.msra.mxu0 0.0
        %5500 = vmatprep.subr.mxu0 0.0
        %5501 = vmatpush1.msra.mxu0 0.0
        %5502 = vmatprep.subr.mxu0 0.0
        %5503 = vmatpush1.msra.mxu0 0.0
        %5504 = vmatprep.subr.mxu0 0.0
        %5505 = vmatpush1.msra.mxu0 0.0
        %5506 = vmatprep.subr.mxu0 0.0
        %5507 = vmatpush1.msra.mxu0 0.0
        %5508 = vmatprep.subr.mxu0 0.0
        %5509 = vmatpush1.msra.mxu0 0.0
        %5510 = vmatprep.subr.mxu0 0.0
        %5511 = vmatpush1.msra.mxu0 0.0
        %5512 = vmatprep.subr.mxu0 0.0
        %5513 = vmatpush1.msra.mxu0 0.0
        %5514 = vmatprep.subr.mxu0 0.0
        %5515 = vmatpush1.msra.mxu0 0.0
        %5516 = vmatprep.subr.mxu0 0.0
        %5517 = vmatpush1.msra.mxu0 0.0
        %5518 = vmatprep.subr.mxu0 0.0
        %5519 = vmatpush1.msra.mxu0 0.0
        %5520 = vmatprep.subr.mxu0 0.0
        %5521 = vmatpush1.msra.mxu0 0.0
        %5522 = vmatprep.subr.mxu0 0.0
        %5523 = vmatpush1.msra.mxu0 0.0
        %5524 = vmatprep.subr.mxu0 0.0
        %5525 = vmatpush1.msra.mxu0 0.0
        %5526 = vmatprep.mubr.f32.mxu0 0.0
        %5527 = vmatmul.mubr.f32.gmra.mrb[0].mxu0 %v5349
        %v5528 = vpop.f32.mrb[0].mxu0
        %v5529 = vadd.f32 0.0, %v5528
        %v5530 = vpop.f32.mrb[0].mxu0
        %5531 = vdwg.mxu0
        %v5532 = vadd.f32 %v5444, %v5529
        %v5533 = vld [vmem:[#allocation3 + $0x2] sm:$0xf]
        %s5534 = scalar_lea.vmem [#allocation12], 2560
        %v5535 = vld [vmem:[%s5534] sm:$0xff]
        %v5536 = vld [vmem:[%s5534 + $0x8] sm:$0xff]
        %v5537 = vld [vmem:[%s5534 + $0x10] sm:$0xff]
        %v5538 = vld [vmem:[%s5534 + $0x18] sm:$0xff]
        %v5539 = vld [vmem:[%s5534 + $0x20] sm:$0xff]
        %v5540 = vld [vmem:[%s5534 + $0x28] sm:$0xff]
        %v5541 = vld [vmem:[%s5534 + $0x30] sm:$0xff]
        %v5542 = vld [vmem:[%s5534 + $0x38] sm:$0xff]
        %v5543 = vld [vmem:[%s5534 + $0x40] sm:$0xff]
        %v5544 = vld [vmem:[%s5534 + $0x48] sm:$0xff]
        %v5545 = vld [vmem:[%s5534 + $0x50] sm:$0xff]
        %v5546 = vld [vmem:[%s5534 + $0x58] sm:$0xff]
        %v5547 = vld [vmem:[%s5534 + $0x60] sm:$0xff]
        %v5548 = vld [vmem:[%s5534 + $0x68] sm:$0xff]
        %v5549 = vld [vmem:[%s5534 + $0x70] sm:$0xff]
        %v5550 = vld [vmem:[%s5534 + $0x78] sm:$0xff]
        %5551 = vmatprep.subr.mxu0 0.0
        %5552 = vmatpush1.msra.mxu0 %v5535
        %5553 = vmatprep.subr.mxu0 0.0
        %5554 = vmatpush1.msra.mxu0 %v5536
        %5555 = vmatprep.subr.mxu0 0.0
        %5556 = vmatpush1.msra.mxu0 %v5537
        %5557 = vmatprep.subr.mxu0 0.0
        %5558 = vmatpush1.msra.mxu0 %v5538
        %5559 = vmatprep.subr.mxu0 0.0
        %5560 = vmatpush1.msra.mxu0 %v5539
        %5561 = vmatprep.subr.mxu0 0.0
        %5562 = vmatpush1.msra.mxu0 %v5540
        %5563 = vmatprep.subr.mxu0 0.0
        %5564 = vmatpush1.msra.mxu0 %v5541
        %5565 = vmatprep.subr.mxu0 0.0
        %5566 = vmatpush1.msra.mxu0 %v5542
        %5567 = vmatprep.subr.mxu0 0.0
        %5568 = vmatpush1.msra.mxu0 %v5543
        %5569 = vmatprep.subr.mxu0 0.0
        %5570 = vmatpush1.msra.mxu0 %v5544
        %5571 = vmatprep.subr.mxu0 0.0
        %5572 = vmatpush1.msra.mxu0 %v5545
        %5573 = vmatprep.subr.mxu0 0.0
        %5574 = vmatpush1.msra.mxu0 %v5546
        %5575 = vmatprep.subr.mxu0 0.0
        %5576 = vmatpush1.msra.mxu0 %v5547
        %5577 = vmatprep.subr.mxu0 0.0
        %5578 = vmatpush1.msra.mxu0 %v5548
        %5579 = vmatprep.subr.mxu0 0.0
        %5580 = vmatpush1.msra.mxu0 %v5549
        %5581 = vmatprep.subr.mxu0 0.0
        %5582 = vmatpush1.msra.mxu0 %v5550
        %5583 = vmatprep.subr.mxu0 0.0
        %5584 = vmatpush1.msra.mxu0 0.0
        %5585 = vmatprep.subr.mxu0 0.0
        %5586 = vmatpush1.msra.mxu0 0.0
        %5587 = vmatprep.subr.mxu0 0.0
        %5588 = vmatpush1.msra.mxu0 0.0
        %5589 = vmatprep.subr.mxu0 0.0
        %5590 = vmatpush1.msra.mxu0 0.0
        %5591 = vmatprep.subr.mxu0 0.0
        %5592 = vmatpush1.msra.mxu0 0.0
        %5593 = vmatprep.subr.mxu0 0.0
        %5594 = vmatpush1.msra.mxu0 0.0
        %5595 = vmatprep.subr.mxu0 0.0
        %5596 = vmatpush1.msra.mxu0 0.0
        %5597 = vmatprep.subr.mxu0 0.0
        %5598 = vmatpush1.msra.mxu0 0.0
        %5599 = vmatprep.subr.mxu0 0.0
        %5600 = vmatpush1.msra.mxu0 0.0
        %5601 = vmatprep.subr.mxu0 0.0
        %5602 = vmatpush1.msra.mxu0 0.0
        %5603 = vmatprep.subr.mxu0 0.0
        %5604 = vmatpush1.msra.mxu0 0.0
        %5605 = vmatprep.subr.mxu0 0.0
        %5606 = vmatpush1.msra.mxu0 0.0
        %5607 = vmatprep.subr.mxu0 0.0
        %5608 = vmatpush1.msra.mxu0 0.0
        %5609 = vmatprep.subr.mxu0 0.0
        %5610 = vmatpush1.msra.mxu0 0.0
        %5611 = vmatprep.subr.mxu0 0.0
        %5612 = vmatpush1.msra.mxu0 0.0
        %5613 = vmatprep.subr.mxu0 0.0
        %5614 = vmatpush1.msra.mxu0 0.0
        %5615 = vmatprep.mubr.f32.mxu0 0.0
        %5616 = vmatmul.mubr.f32.gmra.mrb[0].mxu0 %v5533
        %v5617 = vpop.f32.mrb[0].mxu0
        %v5618 = vadd.f32 0.0, %v5617
        %v5619 = vpop.f32.mrb[0].mxu0
        %5620 = vdwg.mxu0
        %v5621 = vadd.f32 %v5532, %v5618
        %v5622 = vadd.f32 %v5621, %v5349
        %v5623 = vmin.f32 %v5622, 20.0
        %v5624 = vmul.f32 %v5623, 1.442695
        %v5625 = vpow.pop %v5624
        %v5626 = vadd.f32 %v5625, 2.0
        %v5627 = vmul.f32 %v5625, %v5626
        %v5628 = vadd.f32 %v5627, 2.0
        %v5629 = vrcp.pop %v5628
        %v5630 = vmul.f32 %v5627, %v5629
        %v5631 = vmul.f32 %v5622, %v5630
        %5632 = vst [vmem:[#allocation3 + $0x1] sm:$0xf] %v5631
        %v5633 = vld [vmem:[#allocation3 + $0x1] sm:$0xf]
        %v5634 = vld [vmem:[#allocation13 + $0x7] sm:$0x1]
        %v5635 = vlaneseq
        %v5636 = vshrl.u32 %v5635, 7
        %v5637 = vsub.s32 0, %v5636
        %v5638 = vrot.slane %v5634, %v5637
        %v5639 = vadd.f32 %v5638, 0.0
        %v5640 = vld [vmem:[#allocation3] sm:$0xf]
        %s5641 = scalar_lea.vmem [#allocation12], 2688
        %v5642 = vld [vmem:[%s5641] sm:$0xff]
        %v5643 = vld [vmem:[%s5641 + $0x8] sm:$0xff]
        %v5644 = vld [vmem:[%s5641 + $0x10] sm:$0xff]
        %v5645 = vld [vmem:[%s5641 + $0x18] sm:$0xff]
        %v5646 = vld [vmem:[%s5641 + $0x20] sm:$0xff]
        %v5647 = vld [vmem:[%s5641 + $0x28] sm:$0xff]
        %v5648 = vld [vmem:[%s5641 + $0x30] sm:$0xff]
        %v5649 = vld [vmem:[%s5641 + $0x38] sm:$0xff]
        %v5650 = vld [vmem:[%s5641 + $0x40] sm:$0xff]
        %v5651 = vld [vmem:[%s5641 + $0x48] sm:$0xff]
        %v5652 = vld [vmem:[%s5641 + $0x50] sm:$0xff]
        %v5653 = vld [vmem:[%s5641 + $0x58] sm:$0xff]
        %v5654 = vld [vmem:[%s5641 + $0x60] sm:$0xff]
        %v5655 = vld [vmem:[%s5641 + $0x68] sm:$0xff]
        %v5656 = vld [vmem:[%s5641 + $0x70] sm:$0xff]
        %v5657 = vld [vmem:[%s5641 + $0x78] sm:$0xff]
        %5658 = vmatprep.subr.mxu0 0.0
        %5659 = vmatpush1.msra.mxu0 %v5642
        %5660 = vmatprep.subr.mxu0 0.0
        %5661 = vmatpush1.msra.mxu0 %v5643
        %5662 = vmatprep.subr.mxu0 0.0
        %5663 = vmatpush1.msra.mxu0 %v5644
        %5664 = vmatprep.subr.mxu0 0.0
        %5665 = vmatpush1.msra.mxu0 %v5645
        %5666 = vmatprep.subr.mxu0 0.0
        %5667 = vmatpush1.msra.mxu0 %v5646
        %5668 = vmatprep.subr.mxu0 0.0
        %5669 = vmatpush1.msra.mxu0 %v5647
        %5670 = vmatprep.subr.mxu0 0.0
        %5671 = vmatpush1.msra.mxu0 %v5648
        %5672 = vmatprep.subr.mxu0 0.0
        %5673 = vmatpush1.msra.mxu0 %v5649
        %5674 = vmatprep.subr.mxu0 0.0
        %5675 = vmatpush1.msra.mxu0 %v5650
        %5676 = vmatprep.subr.mxu0 0.0
        %5677 = vmatpush1.msra.mxu0 %v5651
        %5678 = vmatprep.subr.mxu0 0.0
        %5679 = vmatpush1.msra.mxu0 %v5652
        %5680 = vmatprep.subr.mxu0 0.0
        %5681 = vmatpush1.msra.mxu0 %v5653
        %5682 = vmatprep.subr.mxu0 0.0
        %5683 = vmatpush1.msra.mxu0 %v5654
        %5684 = vmatprep.subr.mxu0 0.0
        %5685 = vmatpush1.msra.mxu0 %v5655
        %5686 = vmatprep.subr.mxu0 0.0
        %5687 = vmatpush1.msra.mxu0 %v5656
        %5688 = vmatprep.subr.mxu0 0.0
        %5689 = vmatpush1.msra.mxu0 %v5657
        %5690 = vmatprep.subr.mxu0 0.0
        %5691 = vmatpush1.msra.mxu0 0.0
        %5692 = vmatprep.subr.mxu0 0.0
        %5693 = vmatpush1.msra.mxu0 0.0
        %5694 = vmatprep.subr.mxu0 0.0
        %5695 = vmatpush1.msra.mxu0 0.0
        %5696 = vmatprep.subr.mxu0 0.0
        %5697 = vmatpush1.msra.mxu0 0.0
        %5698 = vmatprep.subr.mxu0 0.0
        %5699 = vmatpush1.msra.mxu0 0.0
        %5700 = vmatprep.subr.mxu0 0.0
        %5701 = vmatpush1.msra.mxu0 0.0
        %5702 = vmatprep.subr.mxu0 0.0
        %5703 = vmatpush1.msra.mxu0 0.0
        %5704 = vmatprep.subr.mxu0 0.0
        %5705 = vmatpush1.msra.mxu0 0.0
        %5706 = vmatprep.subr.mxu0 0.0
        %5707 = vmatpush1.msra.mxu0 0.0
        %5708 = vmatprep.subr.mxu0 0.0
        %5709 = vmatpush1.msra.mxu0 0.0
        %5710 = vmatprep.subr.mxu0 0.0
        %5711 = vmatpush1.msra.mxu0 0.0
        %5712 = vmatprep.subr.mxu0 0.0
        %5713 = vmatpush1.msra.mxu0 0.0
        %5714 = vmatprep.subr.mxu0 0.0
        %5715 = vmatpush1.msra.mxu0 0.0
        %5716 = vmatprep.subr.mxu0 0.0
        %5717 = vmatpush1.msra.mxu0 0.0
        %5718 = vmatprep.subr.mxu0 0.0
        %5719 = vmatpush1.msra.mxu0 0.0
        %5720 = vmatprep.subr.mxu0 0.0
        %5721 = vmatpush1.msra.mxu0 0.0
        %5722 = vmatprep.mubr.f32.mxu0 0.0
        %5723 = vmatmul.mubr.f32.gmra.mrb[0].mxu0 %v5640
        %v5724 = vpop.f32.mrb[0].mxu0
        %v5725 = vadd.f32 0.0, %v5724
        %v5726 = vpop.f32.mrb[0].mxu0
        %5727 = vdwg.mxu0
        %v5728 = vadd.f32 %v5639, %v5725
        %s5729 = scalar_lea.vmem [#allocation12], 2816
        %v5730 = vld [vmem:[%s5729] sm:$0xff]
        %v5731 = vld [vmem:[%s5729 + $0x8] sm:$0xff]
        %v5732 = vld [vmem:[%s5729 + $0x10] sm:$0xff]
        %v5733 = vld [vmem:[%s5729 + $0x18] sm:$0xff]
        %v5734 = vld [vmem:[%s5729 + $0x20] sm:$0xff]
        %v5735 = vld [vmem:[%s5729 + $0x28] sm:$0xff]
        %v5736 = vld [vmem:[%s5729 + $0x30] sm:$0xff]
        %v5737 = vld [vmem:[%s5729 + $0x38] sm:$0xff]
        %v5738 = vld [vmem:[%s5729 + $0x40] sm:$0xff]
        %v5739 = vld [vmem:[%s5729 + $0x48] sm:$0xff]
        %v5740 = vld [vmem:[%s5729 + $0x50] sm:$0xff]
        %v5741 = vld [vmem:[%s5729 + $0x58] sm:$0xff]
        %v5742 = vld [vmem:[%s5729 + $0x60] sm:$0xff]
        %v5743 = vld [vmem:[%s5729 + $0x68] sm:$0xff]
        %v5744 = vld [vmem:[%s5729 + $0x70] sm:$0xff]
        %v5745 = vld [vmem:[%s5729 + $0x78] sm:$0xff]
        %5746 = vmatprep.subr.mxu0 0.0
        %5747 = vmatpush1.msra.mxu0 %v5730
        %5748 = vmatprep.subr.mxu0 0.0
        %5749 = vmatpush1.msra.mxu0 %v5731
        %5750 = vmatprep.subr.mxu0 0.0
        %5751 = vmatpush1.msra.mxu0 %v5732
        %5752 = vmatprep.subr.mxu0 0.0
        %5753 = vmatpush1.msra.mxu0 %v5733
        %5754 = vmatprep.subr.mxu0 0.0
        %5755 = vmatpush1.msra.mxu0 %v5734
        %5756 = vmatprep.subr.mxu0 0.0
        %5757 = vmatpush1.msra.mxu0 %v5735
        %5758 = vmatprep.subr.mxu0 0.0
        %5759 = vmatpush1.msra.mxu0 %v5736
        %5760 = vmatprep.subr.mxu0 0.0
        %5761 = vmatpush1.msra.mxu0 %v5737
        %5762 = vmatprep.subr.mxu0 0.0
        %5763 = vmatpush1.msra.mxu0 %v5738
        %5764 = vmatprep.subr.mxu0 0.0
        %5765 = vmatpush1.msra.mxu0 %v5739
        %5766 = vmatprep.subr.mxu0 0.0
        %5767 = vmatpush1.msra.mxu0 %v5740
        %5768 = vmatprep.subr.mxu0 0.0
        %5769 = vmatpush1.msra.mxu0 %v5741
        %5770 = vmatprep.subr.mxu0 0.0
        %5771 = vmatpush1.msra.mxu0 %v5742
        %5772 = vmatprep.subr.mxu0 0.0
        %5773 = vmatpush1.msra.mxu0 %v5743
        %5774 = vmatprep.subr.mxu0 0.0
        %5775 = vmatpush1.msra.mxu0 %v5744
        %5776 = vmatprep.subr.mxu0 0.0
        %5777 = vmatpush1.msra.mxu0 %v5745
        %5778 = vmatprep.subr.mxu0 0.0
        %5779 = vmatpush1.msra.mxu0 0.0
        %5780 = vmatprep.subr.mxu0 0.0
        %5781 = vmatpush1.msra.mxu0 0.0
        %5782 = vmatprep.subr.mxu0 0.0
        %5783 = vmatpush1.msra.mxu0 0.0
        %5784 = vmatprep.subr.mxu0 0.0
        %5785 = vmatpush1.msra.mxu0 0.0
        %5786 = vmatprep.subr.mxu0 0.0
        %5787 = vmatpush1.msra.mxu0 0.0
        %5788 = vmatprep.subr.mxu0 0.0
        %5789 = vmatpush1.msra.mxu0 0.0
        %5790 = vmatprep.subr.mxu0 0.0
        %5791 = vmatpush1.msra.mxu0 0.0
        %5792 = vmatprep.subr.mxu0 0.0
        %5793 = vmatpush1.msra.mxu0 0.0
        %5794 = vmatprep.subr.mxu0 0.0
        %5795 = vmatpush1.msra.mxu0 0.0
        %5796 = vmatprep.subr.mxu0 0.0
        %5797 = vmatpush1.msra.mxu0 0.0
        %5798 = vmatprep.subr.mxu0 0.0
        %5799 = vmatpush1.msra.mxu0 0.0
        %5800 = vmatprep.subr.mxu0 0.0
        %5801 = vmatpush1.msra.mxu0 0.0
        %5802 = vmatprep.subr.mxu0 0.0
        %5803 = vmatpush1.msra.mxu0 0.0
        %5804 = vmatprep.subr.mxu0 0.0
        %5805 = vmatpush1.msra.mxu0 0.0
        %5806 = vmatprep.subr.mxu0 0.0
        %5807 = vmatpush1.msra.mxu0 0.0
        %5808 = vmatprep.subr.mxu0 0.0
        %5809 = vmatpush1.msra.mxu0 0.0
        %5810 = vmatprep.mubr.f32.mxu0 0.0
        %5811 = vmatmul.mubr.f32.gmra.mrb[0].mxu0 %v5633
        %v5812 = vpop.f32.mrb[0].mxu0
        %v5813 = vadd.f32 0.0, %v5812
        %v5814 = vpop.f32.mrb[0].mxu0
        %5815 = vdwg.mxu0
        %v5816 = vadd.f32 %v5728, %v5813
        %v5817 = vld [vmem:[#allocation3 + $0x2] sm:$0xf]
        %s5818 = scalar_lea.vmem [#allocation12], 2944
        %v5819 = vld [vmem:[%s5818] sm:$0xff]
        %v5820 = vld [vmem:[%s5818 + $0x8] sm:$0xff]
        %v5821 = vld [vmem:[%s5818 + $0x10] sm:$0xff]
        %v5822 = vld [vmem:[%s5818 + $0x18] sm:$0xff]
        %v5823 = vld [vmem:[%s5818 + $0x20] sm:$0xff]
        %v5824 = vld [vmem:[%s5818 + $0x28] sm:$0xff]
        %v5825 = vld [vmem:[%s5818 + $0x30] sm:$0xff]
        %v5826 = vld [vmem:[%s5818 + $0x38] sm:$0xff]
        %v5827 = vld [vmem:[%s5818 + $0x40] sm:$0xff]
        %v5828 = vld [vmem:[%s5818 + $0x48] sm:$0xff]
        %v5829 = vld [vmem:[%s5818 + $0x50] sm:$0xff]
        %v5830 = vld [vmem:[%s5818 + $0x58] sm:$0xff]
        %v5831 = vld [vmem:[%s5818 + $0x60] sm:$0xff]
        %v5832 = vld [vmem:[%s5818 + $0x68] sm:$0xff]
        %v5833 = vld [vmem:[%s5818 + $0x70] sm:$0xff]
        %v5834 = vld [vmem:[%s5818 + $0x78] sm:$0xff]
        %5835 = vmatprep.subr.mxu0 0.0
        %5836 = vmatpush1.msra.mxu0 %v5819
        %5837 = vmatprep.subr.mxu0 0.0
        %5838 = vmatpush1.msra.mxu0 %v5820
        %5839 = vmatprep.subr.mxu0 0.0
        %5840 = vmatpush1.msra.mxu0 %v5821
        %5841 = vmatprep.subr.mxu0 0.0
        %5842 = vmatpush1.msra.mxu0 %v5822
        %5843 = vmatprep.subr.mxu0 0.0
        %5844 = vmatpush1.msra.mxu0 %v5823
        %5845 = vmatprep.subr.mxu0 0.0
        %5846 = vmatpush1.msra.mxu0 %v5824
        %5847 = vmatprep.subr.mxu0 0.0
        %5848 = vmatpush1.msra.mxu0 %v5825
        %5849 = vmatprep.subr.mxu0 0.0
        %5850 = vmatpush1.msra.mxu0 %v5826
        %5851 = vmatprep.subr.mxu0 0.0
        %5852 = vmatpush1.msra.mxu0 %v5827
        %5853 = vmatprep.subr.mxu0 0.0
        %5854 = vmatpush1.msra.mxu0 %v5828
        %5855 = vmatprep.subr.mxu0 0.0
        %5856 = vmatpush1.msra.mxu0 %v5829
        %5857 = vmatprep.subr.mxu0 0.0
        %5858 = vmatpush1.msra.mxu0 %v5830
        %5859 = vmatprep.subr.mxu0 0.0
        %5860 = vmatpush1.msra.mxu0 %v5831
        %5861 = vmatprep.subr.mxu0 0.0
        %5862 = vmatpush1.msra.mxu0 %v5832
        %5863 = vmatprep.subr.mxu0 0.0
        %5864 = vmatpush1.msra.mxu0 %v5833
        %5865 = vmatprep.subr.mxu0 0.0
        %5866 = vmatpush1.msra.mxu0 %v5834
        %5867 = vmatprep.subr.mxu0 0.0
        %5868 = vmatpush1.msra.mxu0 0.0
        %5869 = vmatprep.subr.mxu0 0.0
        %5870 = vmatpush1.msra.mxu0 0.0
        %5871 = vmatprep.subr.mxu0 0.0
        %5872 = vmatpush1.msra.mxu0 0.0
        %5873 = vmatprep.subr.mxu0 0.0
        %5874 = vmatpush1.msra.mxu0 0.0
        %5875 = vmatprep.subr.mxu0 0.0
        %5876 = vmatpush1.msra.mxu0 0.0
        %5877 = vmatprep.subr.mxu0 0.0
        %5878 = vmatpush1.msra.mxu0 0.0
        %5879 = vmatprep.subr.mxu0 0.0
        %5880 = vmatpush1.msra.mxu0 0.0
        %5881 = vmatprep.subr.mxu0 0.0
        %5882 = vmatpush1.msra.mxu0 0.0
        %5883 = vmatprep.subr.mxu0 0.0
        %5884 = vmatpush1.msra.mxu0 0.0
        %5885 = vmatprep.subr.mxu0 0.0
        %5886 = vmatpush1.msra.mxu0 0.0
        %5887 = vmatprep.subr.mxu0 0.0
        %5888 = vmatpush1.msra.mxu0 0.0
        %5889 = vmatprep.subr.mxu0 0.0
        %5890 = vmatpush1.msra.mxu0 0.0
        %5891 = vmatprep.subr.mxu0 0.0
        %5892 = vmatpush1.msra.mxu0 0.0
        %5893 = vmatprep.subr.mxu0 0.0
        %5894 = vmatpush1.msra.mxu0 0.0
        %5895 = vmatprep.subr.mxu0 0.0
        %5896 = vmatpush1.msra.mxu0 0.0
        %5897 = vmatprep.subr.mxu0 0.0
        %5898 = vmatpush1.msra.mxu0 0.0
        %5899 = vmatprep.mubr.f32.mxu0 0.0
        %5900 = vmatmul.mubr.f32.gmra.mrb[0].mxu0 %v5817
        %v5901 = vpop.f32.mrb[0].mxu0
        %v5902 = vadd.f32 0.0, %v5901
        %v5903 = vpop.f32.mrb[0].mxu0
        %5904 = vdwg.mxu0
        %v5905 = vadd.f32 %v5816, %v5902
        %v5906 = vadd.f32 %v5905, %v5633
        %v5907 = vmin.f32 %v5906, 20.0
        %v5908 = vmul.f32 %v5907, 1.442695
        %v5909 = vpow.pop %v5908
        %v5910 = vadd.f32 %v5909, 2.0
        %v5911 = vmul.f32 %v5909, %v5910
        %v5912 = vadd.f32 %v5911, 2.0
        %v5913 = vrcp.pop %v5912
        %v5914 = vmul.f32 %v5911, %v5913
        %v5915 = vmul.f32 %v5906, %v5914
        %5916 = vst [vmem:[#allocation3 + $0x1] sm:$0xf] %v5915
        %v5917 = vld [vmem:[#allocation16] sm:$0x1]
        %v5919 = vlaneseq
        %v5920 = vshrl.u32 %v5919, 7
        %v5921 = vsub.s32 0, %v5920
        %v5922 = vrot.slane %v5917, %v5921
        %v5924 = vadd.f32 %v5922, 0.0
        %v5925 = vld [vmem:[#allocation3] sm:$0xf]
        %v5926 = vld [vmem:[#allocation15] sm:$0xff]
        %v5927 = vld [vmem:[#allocation15 + $0x8] sm:$0xff]
        %v5928 = vld [vmem:[#allocation15 + $0x10] sm:$0xff]
        %v5929 = vld [vmem:[#allocation15 + $0x18] sm:$0xff]
        %v5930 = vld [vmem:[#allocation15 + $0x20] sm:$0xff]
        %v5931 = vld [vmem:[#allocation15 + $0x28] sm:$0xff]
        %v5932 = vld [vmem:[#allocation15 + $0x30] sm:$0xff]
        %v5933 = vld [vmem:[#allocation15 + $0x38] sm:$0xff]
        %v5934 = vld [vmem:[#allocation15 + $0x40] sm:$0xff]
        %v5935 = vld [vmem:[#allocation15 + $0x48] sm:$0xff]
        %v5936 = vld [vmem:[#allocation15 + $0x50] sm:$0xff]
        %v5937 = vld [vmem:[#allocation15 + $0x58] sm:$0xff]
        %v5938 = vld [vmem:[#allocation15 + $0x60] sm:$0xff]
        %v5939 = vld [vmem:[#allocation15 + $0x68] sm:$0xff]
        %v5940 = vld [vmem:[#allocation15 + $0x70] sm:$0xff]
        %v5941 = vld [vmem:[#allocation15 + $0x78] sm:$0xff]
        %5942 = vmatprep.subr.mxu0 0.0
        %5943 = vmatpush1.msra.mxu0 %v5926
        %5944 = vmatprep.subr.mxu0 0.0
        %5945 = vmatpush1.msra.mxu0 %v5927
        %5946 = vmatprep.subr.mxu0 0.0
        %5947 = vmatpush1.msra.mxu0 %v5928
        %5948 = vmatprep.subr.mxu0 0.0
        %5949 = vmatpush1.msra.mxu0 %v5929
        %5950 = vmatprep.subr.mxu0 0.0
        %5951 = vmatpush1.msra.mxu0 %v5930
        %5952 = vmatprep.subr.mxu0 0.0
        %5953 = vmatpush1.msra.mxu0 %v5931
        %5954 = vmatprep.subr.mxu0 0.0
        %5955 = vmatpush1.msra.mxu0 %v5932
        %5956 = vmatprep.subr.mxu0 0.0
        %5957 = vmatpush1.msra.mxu0 %v5933
        %5958 = vmatprep.subr.mxu0 0.0
        %5959 = vmatpush1.msra.mxu0 %v5934
        %5960 = vmatprep.subr.mxu0 0.0
        %5961 = vmatpush1.msra.mxu0 %v5935
        %5962 = vmatprep.subr.mxu0 0.0
        %5963 = vmatpush1.msra.mxu0 %v5936
        %5964 = vmatprep.subr.mxu0 0.0
        %5965 = vmatpush1.msra.mxu0 %v5937
        %5966 = vmatprep.subr.mxu0 0.0
        %5967 = vmatpush1.msra.mxu0 %v5938
        %5968 = vmatprep.subr.mxu0 0.0
        %5969 = vmatpush1.msra.mxu0 %v5939
        %5970 = vmatprep.subr.mxu0 0.0
        %5971 = vmatpush1.msra.mxu0 %v5940
        %5972 = vmatprep.subr.mxu0 0.0
        %5973 = vmatpush1.msra.mxu0 %v5941
        %5974 = vmatprep.subr.mxu0 0.0
        %5975 = vmatpush1.msra.mxu0 0.0
        %5976 = vmatprep.subr.mxu0 0.0
        %5977 = vmatpush1.msra.mxu0 0.0
        %5978 = vmatprep.subr.mxu0 0.0
        %5979 = vmatpush1.msra.mxu0 0.0
        %5980 = vmatprep.subr.mxu0 0.0
        %5981 = vmatpush1.msra.mxu0 0.0
        %5982 = vmatprep.subr.mxu0 0.0
        %5983 = vmatpush1.msra.mxu0 0.0
        %5984 = vmatprep.subr.mxu0 0.0
        %5985 = vmatpush1.msra.mxu0 0.0
        %5986 = vmatprep.subr.mxu0 0.0
        %5987 = vmatpush1.msra.mxu0 0.0
        %5988 = vmatprep.subr.mxu0 0.0
        %5989 = vmatpush1.msra.mxu0 0.0
        %5990 = vmatprep.subr.mxu0 0.0
        %5991 = vmatpush1.msra.mxu0 0.0
        %5992 = vmatprep.subr.mxu0 0.0
        %5993 = vmatpush1.msra.mxu0 0.0
        %5994 = vmatprep.subr.mxu0 0.0
        %5995 = vmatpush1.msra.mxu0 0.0
        %5996 = vmatprep.subr.mxu0 0.0
        %5997 = vmatpush1.msra.mxu0 0.0
        %5998 = vmatprep.subr.mxu0 0.0
        %5999 = vmatpush1.msra.mxu0 0.0
        %6000 = vmatprep.subr.mxu0 0.0
        %6001 = vmatpush1.msra.mxu0 0.0
        %6002 = vmatprep.subr.mxu0 0.0
        %6003 = vmatpush1.msra.mxu0 0.0
        %6004 = vmatprep.subr.mxu0 0.0
        %6005 = vmatpush1.msra.mxu0 0.0
        %6006 = vmatprep.mubr.f32.mxu0 0.0
        %6007 = vmatmul.mubr.f32.gmra.mrb[0].mxu0 %v5925
        %v6008 = vpop.f32.mrb[0].mxu0
        %v6009 = vadd.f32 0.0, %v6008
        %v6010 = vpop.f32.mrb[0].mxu0
        %6011 = vdwg.mxu0
        %v6012 = vadd.f32 %v5924, %v6009
        %v6013 = vld [vmem:[#allocation3 + $0x1] sm:$0xf]
        %s6014 = scalar_lea.vmem [#allocation15], 128
        %v6015 = vld [vmem:[%s6014] sm:$0xff]
        %v6016 = vld [vmem:[%s6014 + $0x8] sm:$0xff]
        %v6017 = vld [vmem:[%s6014 + $0x10] sm:$0xff]
        %v6018 = vld [vmem:[%s6014 + $0x18] sm:$0xff]
        %v6019 = vld [vmem:[%s6014 + $0x20] sm:$0xff]
        %v6020 = vld [vmem:[%s6014 + $0x28] sm:$0xff]
        %v6021 = vld [vmem:[%s6014 + $0x30] sm:$0xff]
        %v6022 = vld [vmem:[%s6014 + $0x38] sm:$0xff]
        %v6023 = vld [vmem:[%s6014 + $0x40] sm:$0xff]
        %v6024 = vld [vmem:[%s6014 + $0x48] sm:$0xff]
        %v6025 = vld [vmem:[%s6014 + $0x50] sm:$0xff]
        %v6026 = vld [vmem:[%s6014 + $0x58] sm:$0xff]
        %v6027 = vld [vmem:[%s6014 + $0x60] sm:$0xff]
        %v6028 = vld [vmem:[%s6014 + $0x68] sm:$0xff]
        %v6029 = vld [vmem:[%s6014 + $0x70] sm:$0xff]
        %v6030 = vld [vmem:[%s6014 + $0x78] sm:$0xff]
        %6031 = vmatprep.subr.mxu0 0.0
        %6032 = vmatpush1.msra.mxu0 %v6015
        %6033 = vmatprep.subr.mxu0 0.0
        %6034 = vmatpush1.msra.mxu0 %v6016
        %6035 = vmatprep.subr.mxu0 0.0
        %6036 = vmatpush1.msra.mxu0 %v6017
        %6037 = vmatprep.subr.mxu0 0.0
        %6038 = vmatpush1.msra.mxu0 %v6018
        %6039 = vmatprep.subr.mxu0 0.0
        %6040 = vmatpush1.msra.mxu0 %v6019
        %6041 = vmatprep.subr.mxu0 0.0
        %6042 = vmatpush1.msra.mxu0 %v6020
        %6043 = vmatprep.subr.mxu0 0.0
        %6044 = vmatpush1.msra.mxu0 %v6021
        %6045 = vmatprep.subr.mxu0 0.0
        %6046 = vmatpush1.msra.mxu0 %v6022
        %6047 = vmatprep.subr.mxu0 0.0
        %6048 = vmatpush1.msra.mxu0 %v6023
        %6049 = vmatprep.subr.mxu0 0.0
        %6050 = vmatpush1.msra.mxu0 %v6024
        %6051 = vmatprep.subr.mxu0 0.0
        %6052 = vmatpush1.msra.mxu0 %v6025
        %6053 = vmatprep.subr.mxu0 0.0
        %6054 = vmatpush1.msra.mxu0 %v6026
        %6055 = vmatprep.subr.mxu0 0.0
        %6056 = vmatpush1.msra.mxu0 %v6027
        %6057 = vmatprep.subr.mxu0 0.0
        %6058 = vmatpush1.msra.mxu0 %v6028
        %6059 = vmatprep.subr.mxu0 0.0
        %6060 = vmatpush1.msra.mxu0 %v6029
        %6061 = vmatprep.subr.mxu0 0.0
        %6062 = vmatpush1.msra.mxu0 %v6030
        %6063 = vmatprep.subr.mxu0 0.0
        %6064 = vmatpush1.msra.mxu0 0.0
        %6065 = vmatprep.subr.mxu0 0.0
        %6066 = vmatpush1.msra.mxu0 0.0
        %6067 = vmatprep.subr.mxu0 0.0
        %6068 = vmatpush1.msra.mxu0 0.0
        %6069 = vmatprep.subr.mxu0 0.0
        %6070 = vmatpush1.msra.mxu0 0.0
        %6071 = vmatprep.subr.mxu0 0.0
        %6072 = vmatpush1.msra.mxu0 0.0
        %6073 = vmatprep.subr.mxu0 0.0
        %6074 = vmatpush1.msra.mxu0 0.0
        %6075 = vmatprep.subr.mxu0 0.0
        %6076 = vmatpush1.msra.mxu0 0.0
        %6077 = vmatprep.subr.mxu0 0.0
        %6078 = vmatpush1.msra.mxu0 0.0
        %6079 = vmatprep.subr.mxu0 0.0
        %6080 = vmatpush1.msra.mxu0 0.0
        %6081 = vmatprep.subr.mxu0 0.0
        %6082 = vmatpush1.msra.mxu0 0.0
        %6083 = vmatprep.subr.mxu0 0.0
        %6084 = vmatpush1.msra.mxu0 0.0
        %6085 = vmatprep.subr.mxu0 0.0
        %6086 = vmatpush1.msra.mxu0 0.0
        %6087 = vmatprep.subr.mxu0 0.0
        %6088 = vmatpush1.msra.mxu0 0.0
        %6089 = vmatprep.subr.mxu0 0.0
        %6090 = vmatpush1.msra.mxu0 0.0
        %6091 = vmatprep.subr.mxu0 0.0
        %6092 = vmatpush1.msra.mxu0 0.0
        %6093 = vmatprep.subr.mxu0 0.0
        %6094 = vmatpush1.msra.mxu0 0.0
        %6095 = vmatprep.mubr.f32.mxu0 0.0
        %6096 = vmatmul.mubr.f32.gmra.mrb[0].mxu0 %v6013
        %v6097 = vpop.f32.mrb[0].mxu0
        %v6098 = vadd.f32 0.0, %v6097
        %v6099 = vpop.f32.mrb[0].mxu0
        %6100 = vdwg.mxu0
        %v6101 = vadd.f32 %v6012, %v6098
        %s6102 = scalar_lea.vmem [#allocation15], 256
        %v6103 = vld [vmem:[%s6102] sm:$0xff]
        %v6104 = vld [vmem:[%s6102 + $0x8] sm:$0xff]
        %v6105 = vld [vmem:[%s6102 + $0x10] sm:$0xff]
        %v6106 = vld [vmem:[%s6102 + $0x18] sm:$0xff]
        %v6107 = vld [vmem:[%s6102 + $0x20] sm:$0xff]
        %v6108 = vld [vmem:[%s6102 + $0x28] sm:$0xff]
        %v6109 = vld [vmem:[%s6102 + $0x30] sm:$0xff]
        %v6110 = vld [vmem:[%s6102 + $0x38] sm:$0xff]
        %v6111 = vld [vmem:[%s6102 + $0x40] sm:$0xff]
        %v6112 = vld [vmem:[%s6102 + $0x48] sm:$0xff]
        %v6113 = vld [vmem:[%s6102 + $0x50] sm:$0xff]
        %v6114 = vld [vmem:[%s6102 + $0x58] sm:$0xff]
        %v6115 = vld [vmem:[%s6102 + $0x60] sm:$0xff]
        %v6116 = vld [vmem:[%s6102 + $0x68] sm:$0xff]
        %v6117 = vld [vmem:[%s6102 + $0x70] sm:$0xff]
        %v6118 = vld [vmem:[%s6102 + $0x78] sm:$0xff]
        %6119 = vmatprep.subr.mxu0 0.0
        %6120 = vmatpush1.msra.mxu0 %v6103
        %6121 = vmatprep.subr.mxu0 0.0
        %6122 = vmatpush1.msra.mxu0 %v6104
        %6123 = vmatprep.subr.mxu0 0.0
        %6124 = vmatpush1.msra.mxu0 %v6105
        %6125 = vmatprep.subr.mxu0 0.0
        %6126 = vmatpush1.msra.mxu0 %v6106
        %6127 = vmatprep.subr.mxu0 0.0
        %6128 = vmatpush1.msra.mxu0 %v6107
        %6129 = vmatprep.subr.mxu0 0.0
        %6130 = vmatpush1.msra.mxu0 %v6108
        %6131 = vmatprep.subr.mxu0 0.0
        %6132 = vmatpush1.msra.mxu0 %v6109
        %6133 = vmatprep.subr.mxu0 0.0
        %6134 = vmatpush1.msra.mxu0 %v6110
        %6135 = vmatprep.subr.mxu0 0.0
        %6136 = vmatpush1.msra.mxu0 %v6111
        %6137 = vmatprep.subr.mxu0 0.0
        %6138 = vmatpush1.msra.mxu0 %v6112
        %6139 = vmatprep.subr.mxu0 0.0
        %6140 = vmatpush1.msra.mxu0 %v6113
        %6141 = vmatprep.subr.mxu0 0.0
        %6142 = vmatpush1.msra.mxu0 %v6114
        %6143 = vmatprep.subr.mxu0 0.0
        %6144 = vmatpush1.msra.mxu0 %v6115
        %6145 = vmatprep.subr.mxu0 0.0
        %6146 = vmatpush1.msra.mxu0 %v6116
        %6147 = vmatprep.subr.mxu0 0.0
        %6148 = vmatpush1.msra.mxu0 %v6117
        %6149 = vmatprep.subr.mxu0 0.0
        %6150 = vmatpush1.msra.mxu0 %v6118
        %6151 = vmatprep.subr.mxu0 0.0
        %6152 = vmatpush1.msra.mxu0 0.0
        %6153 = vmatprep.subr.mxu0 0.0
        %6154 = vmatpush1.msra.mxu0 0.0
        %6155 = vmatprep.subr.mxu0 0.0
        %6156 = vmatpush1.msra.mxu0 0.0
        %6157 = vmatprep.subr.mxu0 0.0
        %6158 = vmatpush1.msra.mxu0 0.0
        %6159 = vmatprep.subr.mxu0 0.0
        %6160 = vmatpush1.msra.mxu0 0.0
        %6161 = vmatprep.subr.mxu0 0.0
        %6162 = vmatpush1.msra.mxu0 0.0
        %6163 = vmatprep.subr.mxu0 0.0
        %6164 = vmatpush1.msra.mxu0 0.0
        %6165 = vmatprep.subr.mxu0 0.0
        %6166 = vmatpush1.msra.mxu0 0.0
        %6167 = vmatprep.subr.mxu0 0.0
        %6168 = vmatpush1.msra.mxu0 0.0
        %6169 = vmatprep.subr.mxu0 0.0
        %6170 = vmatpush1.msra.mxu0 0.0
        %6171 = vmatprep.subr.mxu0 0.0
        %6172 = vmatpush1.msra.mxu0 0.0
        %6173 = vmatprep.subr.mxu0 0.0
        %6174 = vmatpush1.msra.mxu0 0.0
        %6175 = vmatprep.subr.mxu0 0.0
        %6176 = vmatpush1.msra.mxu0 0.0
        %6177 = vmatprep.subr.mxu0 0.0
        %6178 = vmatpush1.msra.mxu0 0.0
        %6179 = vmatprep.subr.mxu0 0.0
        %6180 = vmatpush1.msra.mxu0 0.0
        %6181 = vmatprep.subr.mxu0 0.0
        %6182 = vmatpush1.msra.mxu0 0.0
        %6183 = vmatprep.mubr.f32.mxu0 0.0
        %6184 = vmatmul.mubr.f32.gmra.mrb[0].mxu0 %v5925
        %v6185 = vpop.f32.mrb[0].mxu0
        %v6186 = vadd.f32 0.0, %v6185
        %v6187 = vpop.f32.mrb[0].mxu0
        %6188 = vdwg.mxu0
        %v6189 = vadd.f32 %v6101, %v6186
        %s6190 = scalar_lea.vmem [#allocation15], 384
        %v6191 = vld [vmem:[%s6190] sm:$0xff]
        %v6192 = vld [vmem:[%s6190 + $0x8] sm:$0xff]
        %v6193 = vld [vmem:[%s6190 + $0x10] sm:$0xff]
        %v6194 = vld [vmem:[%s6190 + $0x18] sm:$0xff]
        %v6195 = vld [vmem:[%s6190 + $0x20] sm:$0xff]
        %v6196 = vld [vmem:[%s6190 + $0x28] sm:$0xff]
        %v6197 = vld [vmem:[%s6190 + $0x30] sm:$0xff]
        %v6198 = vld [vmem:[%s6190 + $0x38] sm:$0xff]
        %v6199 = vld [vmem:[%s6190 + $0x40] sm:$0xff]
        %v6200 = vld [vmem:[%s6190 + $0x48] sm:$0xff]
        %v6201 = vld [vmem:[%s6190 + $0x50] sm:$0xff]
        %v6202 = vld [vmem:[%s6190 + $0x58] sm:$0xff]
        %v6203 = vld [vmem:[%s6190 + $0x60] sm:$0xff]
        %v6204 = vld [vmem:[%s6190 + $0x68] sm:$0xff]
        %v6205 = vld [vmem:[%s6190 + $0x70] sm:$0xff]
        %v6206 = vld [vmem:[%s6190 + $0x78] sm:$0xff]
        %6207 = vmatprep.subr.mxu0 0.0
        %6208 = vmatpush1.msra.mxu0 %v6191
        %6209 = vmatprep.subr.mxu0 0.0
        %6210 = vmatpush1.msra.mxu0 %v6192
        %6211 = vmatprep.subr.mxu0 0.0
        %6212 = vmatpush1.msra.mxu0 %v6193
        %6213 = vmatprep.subr.mxu0 0.0
        %6214 = vmatpush1.msra.mxu0 %v6194
        %6215 = vmatprep.subr.mxu0 0.0
        %6216 = vmatpush1.msra.mxu0 %v6195
        %6217 = vmatprep.subr.mxu0 0.0
        %6218 = vmatpush1.msra.mxu0 %v6196
        %6219 = vmatprep.subr.mxu0 0.0
        %6220 = vmatpush1.msra.mxu0 %v6197
        %6221 = vmatprep.subr.mxu0 0.0
        %6222 = vmatpush1.msra.mxu0 %v6198
        %6223 = vmatprep.subr.mxu0 0.0
        %6224 = vmatpush1.msra.mxu0 %v6199
        %6225 = vmatprep.subr.mxu0 0.0
        %6226 = vmatpush1.msra.mxu0 %v6200
        %6227 = vmatprep.subr.mxu0 0.0
        %6228 = vmatpush1.msra.mxu0 %v6201
        %6229 = vmatprep.subr.mxu0 0.0
        %6230 = vmatpush1.msra.mxu0 %v6202
        %6231 = vmatprep.subr.mxu0 0.0
        %6232 = vmatpush1.msra.mxu0 %v6203
        %6233 = vmatprep.subr.mxu0 0.0
        %6234 = vmatpush1.msra.mxu0 %v6204
        %6235 = vmatprep.subr.mxu0 0.0
        %6236 = vmatpush1.msra.mxu0 %v6205
        %6237 = vmatprep.subr.mxu0 0.0
        %6238 = vmatpush1.msra.mxu0 %v6206
        %6239 = vmatprep.subr.mxu0 0.0
        %6240 = vmatpush1.msra.mxu0 0.0
        %6241 = vmatprep.subr.mxu0 0.0
        %6242 = vmatpush1.msra.mxu0 0.0
        %6243 = vmatprep.subr.mxu0 0.0
        %6244 = vmatpush1.msra.mxu0 0.0
        %6245 = vmatprep.subr.mxu0 0.0
        %6246 = vmatpush1.msra.mxu0 0.0
        %6247 = vmatprep.subr.mxu0 0.0
        %6248 = vmatpush1.msra.mxu0 0.0
        %6249 = vmatprep.subr.mxu0 0.0
        %6250 = vmatpush1.msra.mxu0 0.0
        %6251 = vmatprep.subr.mxu0 0.0
        %6252 = vmatpush1.msra.mxu0 0.0
        %6253 = vmatprep.subr.mxu0 0.0
        %6254 = vmatpush1.msra.mxu0 0.0
        %6255 = vmatprep.subr.mxu0 0.0
        %6256 = vmatpush1.msra.mxu0 0.0
        %6257 = vmatprep.subr.mxu0 0.0
        %6258 = vmatpush1.msra.mxu0 0.0
        %6259 = vmatprep.subr.mxu0 0.0
        %6260 = vmatpush1.msra.mxu0 0.0
        %6261 = vmatprep.subr.mxu0 0.0
        %6262 = vmatpush1.msra.mxu0 0.0
        %6263 = vmatprep.subr.mxu0 0.0
        %6264 = vmatpush1.msra.mxu0 0.0
        %6265 = vmatprep.subr.mxu0 0.0
        %6266 = vmatpush1.msra.mxu0 0.0
        %6267 = vmatprep.subr.mxu0 0.0
        %6268 = vmatpush1.msra.mxu0 0.0
        %6269 = vmatprep.subr.mxu0 0.0
        %6270 = vmatpush1.msra.mxu0 0.0
        %6271 = vmatprep.mubr.f32.mxu0 0.0
        %6272 = vmatmul.mubr.f32.gmra.mrb[0].mxu0 %v6013
        %v6273 = vpop.f32.mrb[0].mxu0
        %v6274 = vadd.f32 0.0, %v6273
        %v6275 = vpop.f32.mrb[0].mxu0
        %6276 = vdwg.mxu0
        %v6277 = vadd.f32 %v6189, %v6274
        %v6278 = vmin.f32 %v6277, 20.0
        %v6279 = vmul.f32 %v6278, 1.442695
        %v6280 = vpow.pop %v6279
        %v6281 = vadd.f32 %v6280, 2.0
        %v6282 = vmul.f32 %v6280, %v6281
        %v6283 = vadd.f32 %v6282, 2.0
        %v6284 = vrcp.pop %v6283
        %v6285 = vmul.f32 %v6282, %v6284
        %v6286 = vmul.f32 %v6277, %v6285
        %6287 = vst [vmem:[#allocation2 + $0x1] sm:$0x1] %v6286
        %6288 = vst [vmem:[#allocation2 + $0x2] sm:$0x2] %v6286
        %6289 = vst [vmem:[#allocation2 + $0x3] sm:$0x4] %v6286
        %6290 = vst [vmem:[#allocation2 + $0x4] sm:$0x8] %v6286
        %v6291 = vld [vmem:[#allocation16] sm:$0x1]
        %v6293 = vlaneseq
        %v6294 = vshrl.u32 %v6293, 7
        %v6295 = vsub.s32 0, %v6294
        %v6296 = vrot.slane %v6291, %v6295
        %v6298 = vadd.f32 %v6296, 0.0
        %v6299 = vld [vmem:[#allocation3 + $0x1] sm:$0xf]
        %s6300 = scalar_lea.vmem [#allocation15], 512
        %v6301 = vld [vmem:[%s6300] sm:$0xff]
        %v6302 = vld [vmem:[%s6300 + $0x8] sm:$0xff]
        %v6303 = vld [vmem:[%s6300 + $0x10] sm:$0xff]
        %v6304 = vld [vmem:[%s6300 + $0x18] sm:$0xff]
        %v6305 = vld [vmem:[%s6300 + $0x20] sm:$0xff]
        %v6306 = vld [vmem:[%s6300 + $0x28] sm:$0xff]
        %v6307 = vld [vmem:[%s6300 + $0x30] sm:$0xff]
        %v6308 = vld [vmem:[%s6300 + $0x38] sm:$0xff]
        %v6309 = vld [vmem:[%s6300 + $0x40] sm:$0xff]
        %v6310 = vld [vmem:[%s6300 + $0x48] sm:$0xff]
        %v6311 = vld [vmem:[%s6300 + $0x50] sm:$0xff]
        %v6312 = vld [vmem:[%s6300 + $0x58] sm:$0xff]
        %v6313 = vld [vmem:[%s6300 + $0x60] sm:$0xff]
        %v6314 = vld [vmem:[%s6300 + $0x68] sm:$0xff]
        %v6315 = vld [vmem:[%s6300 + $0x70] sm:$0xff]
        %v6316 = vld [vmem:[%s6300 + $0x78] sm:$0xff]
        %6317 = vmatprep.subr.mxu0 0.0
        %6318 = vmatpush1.msra.mxu0 %v6301
        %6319 = vmatprep.subr.mxu0 0.0
        %6320 = vmatpush1.msra.mxu0 %v6302
        %6321 = vmatprep.subr.mxu0 0.0
        %6322 = vmatpush1.msra.mxu0 %v6303
        %6323 = vmatprep.subr.mxu0 0.0
        %6324 = vmatpush1.msra.mxu0 %v6304
        %6325 = vmatprep.subr.mxu0 0.0
        %6326 = vmatpush1.msra.mxu0 %v6305
        %6327 = vmatprep.subr.mxu0 0.0
        %6328 = vmatpush1.msra.mxu0 %v6306
        %6329 = vmatprep.subr.mxu0 0.0
        %6330 = vmatpush1.msra.mxu0 %v6307
        %6331 = vmatprep.subr.mxu0 0.0
        %6332 = vmatpush1.msra.mxu0 %v6308
        %6333 = vmatprep.subr.mxu0 0.0
        %6334 = vmatpush1.msra.mxu0 %v6309
        %6335 = vmatprep.subr.mxu0 0.0
        %6336 = vmatpush1.msra.mxu0 %v6310
        %6337 = vmatprep.subr.mxu0 0.0
        %6338 = vmatpush1.msra.mxu0 %v6311
        %6339 = vmatprep.subr.mxu0 0.0
        %6340 = vmatpush1.msra.mxu0 %v6312
        %6341 = vmatprep.subr.mxu0 0.0
        %6342 = vmatpush1.msra.mxu0 %v6313
        %6343 = vmatprep.subr.mxu0 0.0
        %6344 = vmatpush1.msra.mxu0 %v6314
        %6345 = vmatprep.subr.mxu0 0.0
        %6346 = vmatpush1.msra.mxu0 %v6315
        %6347 = vmatprep.subr.mxu0 0.0
        %6348 = vmatpush1.msra.mxu0 %v6316
        %6349 = vmatprep.subr.mxu0 0.0
        %6350 = vmatpush1.msra.mxu0 0.0
        %6351 = vmatprep.subr.mxu0 0.0
        %6352 = vmatpush1.msra.mxu0 0.0
        %6353 = vmatprep.subr.mxu0 0.0
        %6354 = vmatpush1.msra.mxu0 0.0
        %6355 = vmatprep.subr.mxu0 0.0
        %6356 = vmatpush1.msra.mxu0 0.0
        %6357 = vmatprep.subr.mxu0 0.0
        %6358 = vmatpush1.msra.mxu0 0.0
        %6359 = vmatprep.subr.mxu0 0.0
        %6360 = vmatpush1.msra.mxu0 0.0
        %6361 = vmatprep.subr.mxu0 0.0
        %6362 = vmatpush1.msra.mxu0 0.0
        %6363 = vmatprep.subr.mxu0 0.0
        %6364 = vmatpush1.msra.mxu0 0.0
        %6365 = vmatprep.subr.mxu0 0.0
        %6366 = vmatpush1.msra.mxu0 0.0
        %6367 = vmatprep.subr.mxu0 0.0
        %6368 = vmatpush1.msra.mxu0 0.0
        %6369 = vmatprep.subr.mxu0 0.0
        %6370 = vmatpush1.msra.mxu0 0.0
        %6371 = vmatprep.subr.mxu0 0.0
        %6372 = vmatpush1.msra.mxu0 0.0
        %6373 = vmatprep.subr.mxu0 0.0
        %6374 = vmatpush1.msra.mxu0 0.0
        %6375 = vmatprep.subr.mxu0 0.0
        %6376 = vmatpush1.msra.mxu0 0.0
        %6377 = vmatprep.subr.mxu0 0.0
        %6378 = vmatpush1.msra.mxu0 0.0
        %6379 = vmatprep.subr.mxu0 0.0
        %6380 = vmatpush1.msra.mxu0 0.0
        %6381 = vmatprep.mubr.f32.mxu0 0.0
        %6382 = vmatmul.mubr.f32.gmra.mrb[0].mxu0 %v6299
        %v6383 = vpop.f32.mrb[0].mxu0
        %v6384 = vadd.f32 0.0, %v6383
        %v6385 = vpop.f32.mrb[0].mxu0
        %6386 = vdwg.mxu0
        %v6387 = vadd.f32 %v6298, %v6384
        %v6388 = vld [vmem:[#allocation3 + $0x2] sm:$0xf]
        %s6389 = scalar_lea.vmem [#allocation15], 640
        %v6390 = vld [vmem:[%s6389] sm:$0xff]
        %v6391 = vld [vmem:[%s6389 + $0x8] sm:$0xff]
        %v6392 = vld [vmem:[%s6389 + $0x10] sm:$0xff]
        %v6393 = vld [vmem:[%s6389 + $0x18] sm:$0xff]
        %v6394 = vld [vmem:[%s6389 + $0x20] sm:$0xff]
        %v6395 = vld [vmem:[%s6389 + $0x28] sm:$0xff]
        %v6396 = vld [vmem:[%s6389 + $0x30] sm:$0xff]
        %v6397 = vld [vmem:[%s6389 + $0x38] sm:$0xff]
        %v6398 = vld [vmem:[%s6389 + $0x40] sm:$0xff]
        %v6399 = vld [vmem:[%s6389 + $0x48] sm:$0xff]
        %v6400 = vld [vmem:[%s6389 + $0x50] sm:$0xff]
        %v6401 = vld [vmem:[%s6389 + $0x58] sm:$0xff]
        %v6402 = vld [vmem:[%s6389 + $0x60] sm:$0xff]
        %v6403 = vld [vmem:[%s6389 + $0x68] sm:$0xff]
        %v6404 = vld [vmem:[%s6389 + $0x70] sm:$0xff]
        %v6405 = vld [vmem:[%s6389 + $0x78] sm:$0xff]
        %6406 = vmatprep.subr.mxu0 0.0
        %6407 = vmatpush1.msra.mxu0 %v6390
        %6408 = vmatprep.subr.mxu0 0.0
        %6409 = vmatpush1.msra.mxu0 %v6391
        %6410 = vmatprep.subr.mxu0 0.0
        %6411 = vmatpush1.msra.mxu0 %v6392
        %6412 = vmatprep.subr.mxu0 0.0
        %6413 = vmatpush1.msra.mxu0 %v6393
        %6414 = vmatprep.subr.mxu0 0.0
        %6415 = vmatpush1.msra.mxu0 %v6394
        %6416 = vmatprep.subr.mxu0 0.0
        %6417 = vmatpush1.msra.mxu0 %v6395
        %6418 = vmatprep.subr.mxu0 0.0
        %6419 = vmatpush1.msra.mxu0 %v6396
        %6420 = vmatprep.subr.mxu0 0.0
        %6421 = vmatpush1.msra.mxu0 %v6397
        %6422 = vmatprep.subr.mxu0 0.0
        %6423 = vmatpush1.msra.mxu0 %v6398
        %6424 = vmatprep.subr.mxu0 0.0
        %6425 = vmatpush1.msra.mxu0 %v6399
        %6426 = vmatprep.subr.mxu0 0.0
        %6427 = vmatpush1.msra.mxu0 %v6400
        %6428 = vmatprep.subr.mxu0 0.0
        %6429 = vmatpush1.msra.mxu0 %v6401
        %6430 = vmatprep.subr.mxu0 0.0
        %6431 = vmatpush1.msra.mxu0 %v6402
        %6432 = vmatprep.subr.mxu0 0.0
        %6433 = vmatpush1.msra.mxu0 %v6403
        %6434 = vmatprep.subr.mxu0 0.0
        %6435 = vmatpush1.msra.mxu0 %v6404
        %6436 = vmatprep.subr.mxu0 0.0
        %6437 = vmatpush1.msra.mxu0 %v6405
        %6438 = vmatprep.subr.mxu0 0.0
        %6439 = vmatpush1.msra.mxu0 0.0
        %6440 = vmatprep.subr.mxu0 0.0
        %6441 = vmatpush1.msra.mxu0 0.0
        %6442 = vmatprep.subr.mxu0 0.0
        %6443 = vmatpush1.msra.mxu0 0.0
        %6444 = vmatprep.subr.mxu0 0.0
        %6445 = vmatpush1.msra.mxu0 0.0
        %6446 = vmatprep.subr.mxu0 0.0
        %6447 = vmatpush1.msra.mxu0 0.0
        %6448 = vmatprep.subr.mxu0 0.0
        %6449 = vmatpush1.msra.mxu0 0.0
        %6450 = vmatprep.subr.mxu0 0.0
        %6451 = vmatpush1.msra.mxu0 0.0
        %6452 = vmatprep.subr.mxu0 0.0
        %6453 = vmatpush1.msra.mxu0 0.0
        %6454 = vmatprep.subr.mxu0 0.0
        %6455 = vmatpush1.msra.mxu0 0.0
        %6456 = vmatprep.subr.mxu0 0.0
        %6457 = vmatpush1.msra.mxu0 0.0
        %6458 = vmatprep.subr.mxu0 0.0
        %6459 = vmatpush1.msra.mxu0 0.0
        %6460 = vmatprep.subr.mxu0 0.0
        %6461 = vmatpush1.msra.mxu0 0.0
        %6462 = vmatprep.subr.mxu0 0.0
        %6463 = vmatpush1.msra.mxu0 0.0
        %6464 = vmatprep.subr.mxu0 0.0
        %6465 = vmatpush1.msra.mxu0 0.0
        %6466 = vmatprep.subr.mxu0 0.0
        %6467 = vmatpush1.msra.mxu0 0.0
        %6468 = vmatprep.subr.mxu0 0.0
        %6469 = vmatpush1.msra.mxu0 0.0
        %6470 = vmatprep.mubr.f32.mxu0 0.0
        %6471 = vmatmul.mubr.f32.gmra.mrb[0].mxu0 %v6388
        %v6472 = vpop.f32.mrb[0].mxu0
        %v6473 = vadd.f32 0.0, %v6472
        %v6474 = vpop.f32.mrb[0].mxu0
        %6475 = vdwg.mxu0
        %v6476 = vadd.f32 %v6387, %v6473
        %s6477 = scalar_lea.vmem [#allocation15], 768
        %v6478 = vld [vmem:[%s6477] sm:$0xff]
        %v6479 = vld [vmem:[%s6477 + $0x8] sm:$0xff]
        %v6480 = vld [vmem:[%s6477 + $0x10] sm:$0xff]
        %v6481 = vld [vmem:[%s6477 + $0x18] sm:$0xff]
        %v6482 = vld [vmem:[%s6477 + $0x20] sm:$0xff]
        %v6483 = vld [vmem:[%s6477 + $0x28] sm:$0xff]
        %v6484 = vld [vmem:[%s6477 + $0x30] sm:$0xff]
        %v6485 = vld [vmem:[%s6477 + $0x38] sm:$0xff]
        %v6486 = vld [vmem:[%s6477 + $0x40] sm:$0xff]
        %v6487 = vld [vmem:[%s6477 + $0x48] sm:$0xff]
        %v6488 = vld [vmem:[%s6477 + $0x50] sm:$0xff]
        %v6489 = vld [vmem:[%s6477 + $0x58] sm:$0xff]
        %v6490 = vld [vmem:[%s6477 + $0x60] sm:$0xff]
        %v6491 = vld [vmem:[%s6477 + $0x68] sm:$0xff]
        %v6492 = vld [vmem:[%s6477 + $0x70] sm:$0xff]
        %v6493 = vld [vmem:[%s6477 + $0x78] sm:$0xff]
        %6494 = vmatprep.subr.mxu0 0.0
        %6495 = vmatpush1.msra.mxu0 %v6478
        %6496 = vmatprep.subr.mxu0 0.0
        %6497 = vmatpush1.msra.mxu0 %v6479
        %6498 = vmatprep.subr.mxu0 0.0
        %6499 = vmatpush1.msra.mxu0 %v6480
        %6500 = vmatprep.subr.mxu0 0.0
        %6501 = vmatpush1.msra.mxu0 %v6481
        %6502 = vmatprep.subr.mxu0 0.0
        %6503 = vmatpush1.msra.mxu0 %v6482
        %6504 = vmatprep.subr.mxu0 0.0
        %6505 = vmatpush1.msra.mxu0 %v6483
        %6506 = vmatprep.subr.mxu0 0.0
        %6507 = vmatpush1.msra.mxu0 %v6484
        %6508 = vmatprep.subr.mxu0 0.0
        %6509 = vmatpush1.msra.mxu0 %v6485
        %6510 = vmatprep.subr.mxu0 0.0
        %6511 = vmatpush1.msra.mxu0 %v6486
        %6512 = vmatprep.subr.mxu0 0.0
        %6513 = vmatpush1.msra.mxu0 %v6487
        %6514 = vmatprep.subr.mxu0 0.0
        %6515 = vmatpush1.msra.mxu0 %v6488
        %6516 = vmatprep.subr.mxu0 0.0
        %6517 = vmatpush1.msra.mxu0 %v6489
        %6518 = vmatprep.subr.mxu0 0.0
        %6519 = vmatpush1.msra.mxu0 %v6490
        %6520 = vmatprep.subr.mxu0 0.0
        %6521 = vmatpush1.msra.mxu0 %v6491
        %6522 = vmatprep.subr.mxu0 0.0
        %6523 = vmatpush1.msra.mxu0 %v6492
        %6524 = vmatprep.subr.mxu0 0.0
        %6525 = vmatpush1.msra.mxu0 %v6493
        %6526 = vmatprep.subr.mxu0 0.0
        %6527 = vmatpush1.msra.mxu0 0.0
        %6528 = vmatprep.subr.mxu0 0.0
        %6529 = vmatpush1.msra.mxu0 0.0
        %6530 = vmatprep.subr.mxu0 0.0
        %6531 = vmatpush1.msra.mxu0 0.0
        %6532 = vmatprep.subr.mxu0 0.0
        %6533 = vmatpush1.msra.mxu0 0.0
        %6534 = vmatprep.subr.mxu0 0.0
        %6535 = vmatpush1.msra.mxu0 0.0
        %6536 = vmatprep.subr.mxu0 0.0
        %6537 = vmatpush1.msra.mxu0 0.0
        %6538 = vmatprep.subr.mxu0 0.0
        %6539 = vmatpush1.msra.mxu0 0.0
        %6540 = vmatprep.subr.mxu0 0.0
        %6541 = vmatpush1.msra.mxu0 0.0
        %6542 = vmatprep.subr.mxu0 0.0
        %6543 = vmatpush1.msra.mxu0 0.0
        %6544 = vmatprep.subr.mxu0 0.0
        %6545 = vmatpush1.msra.mxu0 0.0
        %6546 = vmatprep.subr.mxu0 0.0
        %6547 = vmatpush1.msra.mxu0 0.0
        %6548 = vmatprep.subr.mxu0 0.0
        %6549 = vmatpush1.msra.mxu0 0.0
        %6550 = vmatprep.subr.mxu0 0.0
        %6551 = vmatpush1.msra.mxu0 0.0
        %6552 = vmatprep.subr.mxu0 0.0
        %6553 = vmatpush1.msra.mxu0 0.0
        %6554 = vmatprep.subr.mxu0 0.0
        %6555 = vmatpush1.msra.mxu0 0.0
        %6556 = vmatprep.subr.mxu0 0.0
        %6557 = vmatpush1.msra.mxu0 0.0
        %6558 = vmatprep.mubr.f32.mxu0 0.0
        %6559 = vmatmul.mubr.f32.gmra.mrb[0].mxu0 %v6299
        %v6560 = vpop.f32.mrb[0].mxu0
        %v6561 = vadd.f32 0.0, %v6560
        %v6562 = vpop.f32.mrb[0].mxu0
        %6563 = vdwg.mxu0
        %v6564 = vadd.f32 %v6476, %v6561
        %s6565 = scalar_lea.vmem [#allocation15], 896
        %v6566 = vld [vmem:[%s6565] sm:$0xff]
        %v6567 = vld [vmem:[%s6565 + $0x8] sm:$0xff]
        %v6568 = vld [vmem:[%s6565 + $0x10] sm:$0xff]
        %v6569 = vld [vmem:[%s6565 + $0x18] sm:$0xff]
        %v6570 = vld [vmem:[%s6565 + $0x20] sm:$0xff]
        %v6571 = vld [vmem:[%s6565 + $0x28] sm:$0xff]
        %v6572 = vld [vmem:[%s6565 + $0x30] sm:$0xff]
        %v6573 = vld [vmem:[%s6565 + $0x38] sm:$0xff]
        %v6574 = vld [vmem:[%s6565 + $0x40] sm:$0xff]
        %v6575 = vld [vmem:[%s6565 + $0x48] sm:$0xff]
        %v6576 = vld [vmem:[%s6565 + $0x50] sm:$0xff]
        %v6577 = vld [vmem:[%s6565 + $0x58] sm:$0xff]
        %v6578 = vld [vmem:[%s6565 + $0x60] sm:$0xff]
        %v6579 = vld [vmem:[%s6565 + $0x68] sm:$0xff]
        %v6580 = vld [vmem:[%s6565 + $0x70] sm:$0xff]
        %v6581 = vld [vmem:[%s6565 + $0x78] sm:$0xff]
        %6582 = vmatprep.subr.mxu0 0.0
        %6583 = vmatpush1.msra.mxu0 %v6566
        %6584 = vmatprep.subr.mxu0 0.0
        %6585 = vmatpush1.msra.mxu0 %v6567
        %6586 = vmatprep.subr.mxu0 0.0
        %6587 = vmatpush1.msra.mxu0 %v6568
        %6588 = vmatprep.subr.mxu0 0.0
        %6589 = vmatpush1.msra.mxu0 %v6569
        %6590 = vmatprep.subr.mxu0 0.0
        %6591 = vmatpush1.msra.mxu0 %v6570
        %6592 = vmatprep.subr.mxu0 0.0
        %6593 = vmatpush1.msra.mxu0 %v6571
        %6594 = vmatprep.subr.mxu0 0.0
        %6595 = vmatpush1.msra.mxu0 %v6572
        %6596 = vmatprep.subr.mxu0 0.0
        %6597 = vmatpush1.msra.mxu0 %v6573
        %6598 = vmatprep.subr.mxu0 0.0
        %6599 = vmatpush1.msra.mxu0 %v6574
        %6600 = vmatprep.subr.mxu0 0.0
        %6601 = vmatpush1.msra.mxu0 %v6575
        %6602 = vmatprep.subr.mxu0 0.0
        %6603 = vmatpush1.msra.mxu0 %v6576
        %6604 = vmatprep.subr.mxu0 0.0
        %6605 = vmatpush1.msra.mxu0 %v6577
        %6606 = vmatprep.subr.mxu0 0.0
        %6607 = vmatpush1.msra.mxu0 %v6578
        %6608 = vmatprep.subr.mxu0 0.0
        %6609 = vmatpush1.msra.mxu0 %v6579
        %6610 = vmatprep.subr.mxu0 0.0
        %6611 = vmatpush1.msra.mxu0 %v6580
        %6612 = vmatprep.subr.mxu0 0.0
        %6613 = vmatpush1.msra.mxu0 %v6581
        %6614 = vmatprep.subr.mxu0 0.0
        %6615 = vmatpush1.msra.mxu0 0.0
        %6616 = vmatprep.subr.mxu0 0.0
        %6617 = vmatpush1.msra.mxu0 0.0
        %6618 = vmatprep.subr.mxu0 0.0
        %6619 = vmatpush1.msra.mxu0 0.0
        %6620 = vmatprep.subr.mxu0 0.0
        %6621 = vmatpush1.msra.mxu0 0.0
        %6622 = vmatprep.subr.mxu0 0.0
        %6623 = vmatpush1.msra.mxu0 0.0
        %6624 = vmatprep.subr.mxu0 0.0
        %6625 = vmatpush1.msra.mxu0 0.0
        %6626 = vmatprep.subr.mxu0 0.0
        %6627 = vmatpush1.msra.mxu0 0.0
        %6628 = vmatprep.subr.mxu0 0.0
        %6629 = vmatpush1.msra.mxu0 0.0
        %6630 = vmatprep.subr.mxu0 0.0
        %6631 = vmatpush1.msra.mxu0 0.0
        %6632 = vmatprep.subr.mxu0 0.0
        %6633 = vmatpush1.msra.mxu0 0.0
        %6634 = vmatprep.subr.mxu0 0.0
        %6635 = vmatpush1.msra.mxu0 0.0
        %6636 = vmatprep.subr.mxu0 0.0
        %6637 = vmatpush1.msra.mxu0 0.0
        %6638 = vmatprep.subr.mxu0 0.0
        %6639 = vmatpush1.msra.mxu0 0.0
        %6640 = vmatprep.subr.mxu0 0.0
        %6641 = vmatpush1.msra.mxu0 0.0
        %6642 = vmatprep.subr.mxu0 0.0
        %6643 = vmatpush1.msra.mxu0 0.0
        %6644 = vmatprep.subr.mxu0 0.0
        %6645 = vmatpush1.msra.mxu0 0.0
        %6646 = vmatprep.mubr.f32.mxu0 0.0
        %6647 = vmatmul.mubr.f32.gmra.mrb[0].mxu0 %v6388
        %v6648 = vpop.f32.mrb[0].mxu0
        %v6649 = vadd.f32 0.0, %v6648
        %v6650 = vpop.f32.mrb[0].mxu0
        %6651 = vdwg.mxu0
        %v6652 = vadd.f32 %v6564, %v6649
        %v6653 = vmin.f32 %v6652, 20.0
        %v6654 = vmul.f32 %v6653, 1.442695
        %v6655 = vpow.pop %v6654
        %v6656 = vadd.f32 %v6655, 2.0
        %v6657 = vmul.f32 %v6655, %v6656
        %v6658 = vadd.f32 %v6657, 2.0
        %v6659 = vrcp.pop %v6658
        %v6660 = vmul.f32 %v6657, %v6659
        %v6661 = vmul.f32 %v6652, %v6660
        %6662 = vst [vmem:[#allocation2 + $0x2] sm:$0x1] %v6661
        %6663 = vst [vmem:[#allocation2 + $0x3] sm:$0x2] %v6661
        %6664 = vst [vmem:[#allocation2 + $0x4] sm:$0x4] %v6661
        %6665 = vst [vmem:[#allocation2 + $0x5] sm:$0x8] %v6661
        %v6666 = vld [vmem:[#allocation18] sm:$0x1]
        %v6668 = vlaneseq
        %v6669 = vshrl.u32 %v6668, 7
        %v6670 = vsub.s32 0, %v6669
        %v6671 = vrot.slane %v6666, %v6670
        %v6673 = vadd.f32 %v6671, 0.0
        %v6674 = vld [vmem:[#allocation2] sm:$0xff]
        %v6675 = vld [vmem:[%s9] sm:$0xff]
        %v6676 = vld [vmem:[%s9 + $0x8] sm:$0xff]
        %v6677 = vld [vmem:[%s9 + $0x10] sm:$0xff]
        %v6678 = vld [vmem:[%s9 + $0x18] sm:$0xff]
        %v6679 = vld [vmem:[%s9 + $0x20] sm:$0xff]
        %v6680 = vld [vmem:[%s9 + $0x28] sm:$0xff]
        %v6681 = vld [vmem:[%s9 + $0x30] sm:$0xff]
        %v6682 = vld [vmem:[%s9 + $0x38] sm:$0xff]
        %v6683 = vld [vmem:[%s9 + $0x40] sm:$0xff]
        %v6684 = vld [vmem:[%s9 + $0x48] sm:$0xff]
        %v6685 = vld [vmem:[%s9 + $0x50] sm:$0xff]
        %v6686 = vld [vmem:[%s9 + $0x58] sm:$0xff]
        %v6687 = vld [vmem:[%s9 + $0x60] sm:$0xff]
        %v6688 = vld [vmem:[%s9 + $0x68] sm:$0xff]
        %v6689 = vld [vmem:[%s9 + $0x70] sm:$0xff]
        %v6690 = vld [vmem:[%s9 + $0x78] sm:$0xff]
        %6691 = vmatprep.subr.mxu0 0.0
        %6692 = vmatpush1.msra.mxu0 %v6675
        %6693 = vmatprep.subr.mxu0 0.0
        %6694 = vmatpush1.msra.mxu0 %v6676
        %6695 = vmatprep.subr.mxu0 0.0
        %6696 = vmatpush1.msra.mxu0 %v6677
        %6697 = vmatprep.subr.mxu0 0.0
        %6698 = vmatpush1.msra.mxu0 %v6678
        %6699 = vmatprep.subr.mxu0 0.0
        %6700 = vmatpush1.msra.mxu0 %v6679
        %6701 = vmatprep.subr.mxu0 0.0
        %6702 = vmatpush1.msra.mxu0 %v6680
        %6703 = vmatprep.subr.mxu0 0.0
        %6704 = vmatpush1.msra.mxu0 %v6681
        %6705 = vmatprep.subr.mxu0 0.0
        %6706 = vmatpush1.msra.mxu0 %v6682
        %6707 = vmatprep.subr.mxu0 0.0
        %6708 = vmatpush1.msra.mxu0 %v6683
        %6709 = vmatprep.subr.mxu0 0.0
        %6710 = vmatpush1.msra.mxu0 %v6684
        %6711 = vmatprep.subr.mxu0 0.0
        %6712 = vmatpush1.msra.mxu0 %v6685
        %6713 = vmatprep.subr.mxu0 0.0
        %6714 = vmatpush1.msra.mxu0 %v6686
        %6715 = vmatprep.subr.mxu0 0.0
        %6716 = vmatpush1.msra.mxu0 %v6687
        %6717 = vmatprep.subr.mxu0 0.0
        %6718 = vmatpush1.msra.mxu0 %v6688
        %6719 = vmatprep.subr.mxu0 0.0
        %6720 = vmatpush1.msra.mxu0 %v6689
        %6721 = vmatprep.subr.mxu0 0.0
        %6722 = vmatpush1.msra.mxu0 %v6690
        %6723 = vmatprep.subr.mxu0 0.0
        %6724 = vmatpush1.msra.mxu0 0.0
        %6725 = vmatprep.subr.mxu0 0.0
        %6726 = vmatpush1.msra.mxu0 0.0
        %6727 = vmatprep.subr.mxu0 0.0
        %6728 = vmatpush1.msra.mxu0 0.0
        %6729 = vmatprep.subr.mxu0 0.0
        %6730 = vmatpush1.msra.mxu0 0.0
        %6731 = vmatprep.subr.mxu0 0.0
        %6732 = vmatpush1.msra.mxu0 0.0
        %6733 = vmatprep.subr.mxu0 0.0
        %6734 = vmatpush1.msra.mxu0 0.0
        %6735 = vmatprep.subr.mxu0 0.0
        %6736 = vmatpush1.msra.mxu0 0.0
        %6737 = vmatprep.subr.mxu0 0.0
        %6738 = vmatpush1.msra.mxu0 0.0
        %6739 = vmatprep.subr.mxu0 0.0
        %6740 = vmatpush1.msra.mxu0 0.0
        %6741 = vmatprep.subr.mxu0 0.0
        %6742 = vmatpush1.msra.mxu0 0.0
        %6743 = vmatprep.subr.mxu0 0.0
        %6744 = vmatpush1.msra.mxu0 0.0
        %6745 = vmatprep.subr.mxu0 0.0
        %6746 = vmatpush1.msra.mxu0 0.0
        %6747 = vmatprep.subr.mxu0 0.0
        %6748 = vmatpush1.msra.mxu0 0.0
        %6749 = vmatprep.subr.mxu0 0.0
        %6750 = vmatpush1.msra.mxu0 0.0
        %6751 = vmatprep.subr.mxu0 0.0
        %6752 = vmatpush1.msra.mxu0 0.0
        %6753 = vmatprep.subr.mxu0 0.0
        %6754 = vmatpush1.msra.mxu0 0.0
        %6755 = vmatprep.mubr.f32.mxu0 0.0
        %6756 = vmatmul.mubr.f32.gmra.mrb[0].mxu0 %v6674
        %v6757 = vpop.f32.mrb[0].mxu0
        %v6758 = vadd.f32 0.0, %v6757
        %v6759 = vpop.f32.mrb[0].mxu0
        %6760 = vdwg.mxu0
        %v6761 = vadd.f32 %v6673, %v6758
        %v6762 = vld [vmem:[#allocation2 + $0x1] sm:$0xff]
        %s6763 = scalar_lea.vmem %s9, 128
        %v6764 = vld [vmem:[%s6763] sm:$0xff]
        %v6765 = vld [vmem:[%s6763 + $0x8] sm:$0xff]
        %v6766 = vld [vmem:[%s6763 + $0x10] sm:$0xff]
        %v6767 = vld [vmem:[%s6763 + $0x18] sm:$0xff]
        %v6768 = vld [vmem:[%s6763 + $0x20] sm:$0xff]
        %v6769 = vld [vmem:[%s6763 + $0x28] sm:$0xff]
        %v6770 = vld [vmem:[%s6763 + $0x30] sm:$0xff]
        %v6771 = vld [vmem:[%s6763 + $0x38] sm:$0xff]
        %v6772 = vld [vmem:[%s6763 + $0x40] sm:$0xff]
        %v6773 = vld [vmem:[%s6763 + $0x48] sm:$0xff]
        %v6774 = vld [vmem:[%s6763 + $0x50] sm:$0xff]
        %v6775 = vld [vmem:[%s6763 + $0x58] sm:$0xff]
        %v6776 = vld [vmem:[%s6763 + $0x60] sm:$0xff]
        %v6777 = vld [vmem:[%s6763 + $0x68] sm:$0xff]
        %v6778 = vld [vmem:[%s6763 + $0x70] sm:$0xff]
        %v6779 = vld [vmem:[%s6763 + $0x78] sm:$0xff]
        %6780 = vmatprep.subr.mxu0 0.0
        %6781 = vmatpush1.msra.mxu0 %v6764
        %6782 = vmatprep.subr.mxu0 0.0
        %6783 = vmatpush1.msra.mxu0 %v6765
        %6784 = vmatprep.subr.mxu0 0.0
        %6785 = vmatpush1.msra.mxu0 %v6766
        %6786 = vmatprep.subr.mxu0 0.0
        %6787 = vmatpush1.msra.mxu0 %v6767
        %6788 = vmatprep.subr.mxu0 0.0
        %6789 = vmatpush1.msra.mxu0 %v6768
        %6790 = vmatprep.subr.mxu0 0.0
        %6791 = vmatpush1.msra.mxu0 %v6769
        %6792 = vmatprep.subr.mxu0 0.0
        %6793 = vmatpush1.msra.mxu0 %v6770
        %6794 = vmatprep.subr.mxu0 0.0
        %6795 = vmatpush1.msra.mxu0 %v6771
        %6796 = vmatprep.subr.mxu0 0.0
        %6797 = vmatpush1.msra.mxu0 %v6772
        %6798 = vmatprep.subr.mxu0 0.0
        %6799 = vmatpush1.msra.mxu0 %v6773
        %6800 = vmatprep.subr.mxu0 0.0
        %6801 = vmatpush1.msra.mxu0 %v6774
        %6802 = vmatprep.subr.mxu0 0.0
        %6803 = vmatpush1.msra.mxu0 %v6775
        %6804 = vmatprep.subr.mxu0 0.0
        %6805 = vmatpush1.msra.mxu0 %v6776
        %6806 = vmatprep.subr.mxu0 0.0
        %6807 = vmatpush1.msra.mxu0 %v6777
        %6808 = vmatprep.subr.mxu0 0.0
        %6809 = vmatpush1.msra.mxu0 %v6778
        %6810 = vmatprep.subr.mxu0 0.0
        %6811 = vmatpush1.msra.mxu0 %v6779
        %6812 = vmatprep.subr.mxu0 0.0
        %6813 = vmatpush1.msra.mxu0 0.0
        %6814 = vmatprep.subr.mxu0 0.0
        %6815 = vmatpush1.msra.mxu0 0.0
        %6816 = vmatprep.subr.mxu0 0.0
        %6817 = vmatpush1.msra.mxu0 0.0
        %6818 = vmatprep.subr.mxu0 0.0
        %6819 = vmatpush1.msra.mxu0 0.0
        %6820 = vmatprep.subr.mxu0 0.0
        %6821 = vmatpush1.msra.mxu0 0.0
        %6822 = vmatprep.subr.mxu0 0.0
        %6823 = vmatpush1.msra.mxu0 0.0
        %6824 = vmatprep.subr.mxu0 0.0
        %6825 = vmatpush1.msra.mxu0 0.0
        %6826 = vmatprep.subr.mxu0 0.0
        %6827 = vmatpush1.msra.mxu0 0.0
        %6828 = vmatprep.subr.mxu0 0.0
        %6829 = vmatpush1.msra.mxu0 0.0
        %6830 = vmatprep.subr.mxu0 0.0
        %6831 = vmatpush1.msra.mxu0 0.0
        %6832 = vmatprep.subr.mxu0 0.0
        %6833 = vmatpush1.msra.mxu0 0.0
        %6834 = vmatprep.subr.mxu0 0.0
        %6835 = vmatpush1.msra.mxu0 0.0
        %6836 = vmatprep.subr.mxu0 0.0
        %6837 = vmatpush1.msra.mxu0 0.0
        %6838 = vmatprep.subr.mxu0 0.0
        %6839 = vmatpush1.msra.mxu0 0.0
        %6840 = vmatprep.subr.mxu0 0.0
        %6841 = vmatpush1.msra.mxu0 0.0
        %6842 = vmatprep.subr.mxu0 0.0
        %6843 = vmatpush1.msra.mxu0 0.0
        %6844 = vmatprep.mubr.f32.mxu0 0.0
        %6845 = vmatmul.mubr.f32.gmra.mrb[0].mxu0 %v6762
        %v6846 = vpop.f32.mrb[0].mxu0
        %v6847 = vadd.f32 0.0, %v6846
        %v6848 = vpop.f32.mrb[0].mxu0
        %6849 = vdwg.mxu0
        %v6850 = vadd.f32 %v6761, %v6847
        %s6851 = scalar_lea.vmem %s9, 256
        %v6852 = vld [vmem:[%s6851] sm:$0xff]
        %v6853 = vld [vmem:[%s6851 + $0x8] sm:$0xff]
        %v6854 = vld [vmem:[%s6851 + $0x10] sm:$0xff]
        %v6855 = vld [vmem:[%s6851 + $0x18] sm:$0xff]
        %v6856 = vld [vmem:[%s6851 + $0x20] sm:$0xff]
        %v6857 = vld [vmem:[%s6851 + $0x28] sm:$0xff]
        %v6858 = vld [vmem:[%s6851 + $0x30] sm:$0xff]
        %v6859 = vld [vmem:[%s6851 + $0x38] sm:$0xff]
        %v6860 = vld [vmem:[%s6851 + $0x40] sm:$0xff]
        %v6861 = vld [vmem:[%s6851 + $0x48] sm:$0xff]
        %v6862 = vld [vmem:[%s6851 + $0x50] sm:$0xff]
        %v6863 = vld [vmem:[%s6851 + $0x58] sm:$0xff]
        %v6864 = vld [vmem:[%s6851 + $0x60] sm:$0xff]
        %v6865 = vld [vmem:[%s6851 + $0x68] sm:$0xff]
        %v6866 = vld [vmem:[%s6851 + $0x70] sm:$0xff]
        %v6867 = vld [vmem:[%s6851 + $0x78] sm:$0xff]
        %6868 = vmatprep.subr.mxu0 0.0
        %6869 = vmatpush1.msra.mxu0 %v6852
        %6870 = vmatprep.subr.mxu0 0.0
        %6871 = vmatpush1.msra.mxu0 %v6853
        %6872 = vmatprep.subr.mxu0 0.0
        %6873 = vmatpush1.msra.mxu0 %v6854
        %6874 = vmatprep.subr.mxu0 0.0
        %6875 = vmatpush1.msra.mxu0 %v6855
        %6876 = vmatprep.subr.mxu0 0.0
        %6877 = vmatpush1.msra.mxu0 %v6856
        %6878 = vmatprep.subr.mxu0 0.0
        %6879 = vmatpush1.msra.mxu0 %v6857
        %6880 = vmatprep.subr.mxu0 0.0
        %6881 = vmatpush1.msra.mxu0 %v6858
        %6882 = vmatprep.subr.mxu0 0.0
        %6883 = vmatpush1.msra.mxu0 %v6859
        %6884 = vmatprep.subr.mxu0 0.0
        %6885 = vmatpush1.msra.mxu0 %v6860
        %6886 = vmatprep.subr.mxu0 0.0
        %6887 = vmatpush1.msra.mxu0 %v6861
        %6888 = vmatprep.subr.mxu0 0.0
        %6889 = vmatpush1.msra.mxu0 %v6862
        %6890 = vmatprep.subr.mxu0 0.0
        %6891 = vmatpush1.msra.mxu0 %v6863
        %6892 = vmatprep.subr.mxu0 0.0
        %6893 = vmatpush1.msra.mxu0 %v6864
        %6894 = vmatprep.subr.mxu0 0.0
        %6895 = vmatpush1.msra.mxu0 %v6865
        %6896 = vmatprep.subr.mxu0 0.0
        %6897 = vmatpush1.msra.mxu0 %v6866
        %6898 = vmatprep.subr.mxu0 0.0
        %6899 = vmatpush1.msra.mxu0 %v6867
        %6900 = vmatprep.subr.mxu0 0.0
        %6901 = vmatpush1.msra.mxu0 0.0
        %6902 = vmatprep.subr.mxu0 0.0
        %6903 = vmatpush1.msra.mxu0 0.0
        %6904 = vmatprep.subr.mxu0 0.0
        %6905 = vmatpush1.msra.mxu0 0.0
        %6906 = vmatprep.subr.mxu0 0.0
        %6907 = vmatpush1.msra.mxu0 0.0
        %6908 = vmatprep.subr.mxu0 0.0
        %6909 = vmatpush1.msra.mxu0 0.0
        %6910 = vmatprep.subr.mxu0 0.0
        %6911 = vmatpush1.msra.mxu0 0.0
        %6912 = vmatprep.subr.mxu0 0.0
        %6913 = vmatpush1.msra.mxu0 0.0
        %6914 = vmatprep.subr.mxu0 0.0
        %6915 = vmatpush1.msra.mxu0 0.0
        %6916 = vmatprep.subr.mxu0 0.0
        %6917 = vmatpush1.msra.mxu0 0.0
        %6918 = vmatprep.subr.mxu0 0.0
        %6919 = vmatpush1.msra.mxu0 0.0
        %6920 = vmatprep.subr.mxu0 0.0
        %6921 = vmatpush1.msra.mxu0 0.0
        %6922 = vmatprep.subr.mxu0 0.0
        %6923 = vmatpush1.msra.mxu0 0.0
        %6924 = vmatprep.subr.mxu0 0.0
        %6925 = vmatpush1.msra.mxu0 0.0
        %6926 = vmatprep.subr.mxu0 0.0
        %6927 = vmatpush1.msra.mxu0 0.0
        %6928 = vmatprep.subr.mxu0 0.0
        %6929 = vmatpush1.msra.mxu0 0.0
        %6930 = vmatprep.subr.mxu0 0.0
        %6931 = vmatpush1.msra.mxu0 0.0
        %6932 = vmatprep.mubr.f32.mxu0 0.0
        %6933 = vmatmul.mubr.f32.gmra.mrb[0].mxu0 %v6674
        %v6934 = vpop.f32.mrb[0].mxu0
        %v6935 = vadd.f32 0.0, %v6934
        %v6936 = vpop.f32.mrb[0].mxu0
        %6937 = vdwg.mxu0
        %v6938 = vadd.f32 %v6850, %v6935
        %s6939 = scalar_lea.vmem %s9, 384
        %v6940 = vld [vmem:[%s6939] sm:$0xff]
        %v6941 = vld [vmem:[%s6939 + $0x8] sm:$0xff]
        %v6942 = vld [vmem:[%s6939 + $0x10] sm:$0xff]
        %v6943 = vld [vmem:[%s6939 + $0x18] sm:$0xff]
        %v6944 = vld [vmem:[%s6939 + $0x20] sm:$0xff]
        %v6945 = vld [vmem:[%s6939 + $0x28] sm:$0xff]
        %v6946 = vld [vmem:[%s6939 + $0x30] sm:$0xff]
        %v6947 = vld [vmem:[%s6939 + $0x38] sm:$0xff]
        %v6948 = vld [vmem:[%s6939 + $0x40] sm:$0xff]
        %v6949 = vld [vmem:[%s6939 + $0x48] sm:$0xff]
        %v6950 = vld [vmem:[%s6939 + $0x50] sm:$0xff]
        %v6951 = vld [vmem:[%s6939 + $0x58] sm:$0xff]
        %v6952 = vld [vmem:[%s6939 + $0x60] sm:$0xff]
        %v6953 = vld [vmem:[%s6939 + $0x68] sm:$0xff]
        %v6954 = vld [vmem:[%s6939 + $0x70] sm:$0xff]
        %v6955 = vld [vmem:[%s6939 + $0x78] sm:$0xff]
        %6956 = vmatprep.subr.mxu0 0.0
        %6957 = vmatpush1.msra.mxu0 %v6940
        %6958 = vmatprep.subr.mxu0 0.0
        %6959 = vmatpush1.msra.mxu0 %v6941
        %6960 = vmatprep.subr.mxu0 0.0
        %6961 = vmatpush1.msra.mxu0 %v6942
        %6962 = vmatprep.subr.mxu0 0.0
        %6963 = vmatpush1.msra.mxu0 %v6943
        %6964 = vmatprep.subr.mxu0 0.0
        %6965 = vmatpush1.msra.mxu0 %v6944
        %6966 = vmatprep.subr.mxu0 0.0
        %6967 = vmatpush1.msra.mxu0 %v6945
        %6968 = vmatprep.subr.mxu0 0.0
        %6969 = vmatpush1.msra.mxu0 %v6946
        %6970 = vmatprep.subr.mxu0 0.0
        %6971 = vmatpush1.msra.mxu0 %v6947
        %6972 = vmatprep.subr.mxu0 0.0
        %6973 = vmatpush1.msra.mxu0 %v6948
        %6974 = vmatprep.subr.mxu0 0.0
        %6975 = vmatpush1.msra.mxu0 %v6949
        %6976 = vmatprep.subr.mxu0 0.0
        %6977 = vmatpush1.msra.mxu0 %v6950
        %6978 = vmatprep.subr.mxu0 0.0
        %6979 = vmatpush1.msra.mxu0 %v6951
        %6980 = vmatprep.subr.mxu0 0.0
        %6981 = vmatpush1.msra.mxu0 %v6952
        %6982 = vmatprep.subr.mxu0 0.0
        %6983 = vmatpush1.msra.mxu0 %v6953
        %6984 = vmatprep.subr.mxu0 0.0
        %6985 = vmatpush1.msra.mxu0 %v6954
        %6986 = vmatprep.subr.mxu0 0.0
        %6987 = vmatpush1.msra.mxu0 %v6955
        %6988 = vmatprep.subr.mxu0 0.0
        %6989 = vmatpush1.msra.mxu0 0.0
        %6990 = vmatprep.subr.mxu0 0.0
        %6991 = vmatpush1.msra.mxu0 0.0
        %6992 = vmatprep.subr.mxu0 0.0
        %6993 = vmatpush1.msra.mxu0 0.0
        %6994 = vmatprep.subr.mxu0 0.0
        %6995 = vmatpush1.msra.mxu0 0.0
        %6996 = vmatprep.subr.mxu0 0.0
        %6997 = vmatpush1.msra.mxu0 0.0
        %6998 = vmatprep.subr.mxu0 0.0
        %6999 = vmatpush1.msra.mxu0 0.0
        %7000 = vmatprep.subr.mxu0 0.0
        %7001 = vmatpush1.msra.mxu0 0.0
        %7002 = vmatprep.subr.mxu0 0.0
        %7003 = vmatpush1.msra.mxu0 0.0
        %7004 = vmatprep.subr.mxu0 0.0
        %7005 = vmatpush1.msra.mxu0 0.0
        %7006 = vmatprep.subr.mxu0 0.0
        %7007 = vmatpush1.msra.mxu0 0.0
        %7008 = vmatprep.subr.mxu0 0.0
        %7009 = vmatpush1.msra.mxu0 0.0
        %7010 = vmatprep.subr.mxu0 0.0
        %7011 = vmatpush1.msra.mxu0 0.0
        %7012 = vmatprep.subr.mxu0 0.0
        %7013 = vmatpush1.msra.mxu0 0.0
        %7014 = vmatprep.subr.mxu0 0.0
        %7015 = vmatpush1.msra.mxu0 0.0
        %7016 = vmatprep.subr.mxu0 0.0
        %7017 = vmatpush1.msra.mxu0 0.0
        %7018 = vmatprep.subr.mxu0 0.0
        %7019 = vmatpush1.msra.mxu0 0.0
        %7020 = vmatprep.mubr.f32.mxu0 0.0
        %7021 = vmatmul.mubr.f32.gmra.mrb[0].mxu0 %v6762
        %v7022 = vpop.f32.mrb[0].mxu0
        %v7023 = vadd.f32 0.0, %v7022
        %v7024 = vpop.f32.mrb[0].mxu0
        %7025 = vdwg.mxu0
        %v7026 = vadd.f32 %v6938, %v7023
        %vm7027 = vcmask 122880
        %7028 = vst.msk [vmem:[%s500] sm:$0x1] %vm7027, %v7026
        %vm7029 = vcmask 123905
        %7030 = vst.msk [vmem:[%s500 + $0x1] sm:$0x2] %vm7029, %v7026
        %vm7031 = vcmask 124930
        %7032 = vst.msk [vmem:[%s500 + $0x2] sm:$0x4] %vm7031, %v7026
        %vm7033 = vcmask 125955
        %7034 = vst.msk [vmem:[%s500 + $0x3] sm:$0x8] %vm7033, %v7026
        %vm7035 = vcmask 126980
        %7036 = vst.msk [vmem:[%s500 + $0x4] sm:$0x10] %vm7035, %v7026
        %vm7037 = vcmask 128005
        %7038 = vst.msk [vmem:[%s500 + $0x5] sm:$0x20] %vm7037, %v7026
        %vm7039 = vcmask 129030
        %7040 = vst.msk [vmem:[%s500 + $0x6] sm:$0x40] %vm7039, %v7026
        %vm7041 = vcmask 130055
        %7042 = vst.msk [vmem:[%s500 + $0x7] sm:$0x80] %vm7041, %v7026
        %v7043 = vld [vmem:[#allocation18] sm:$0x1]
        %v7045 = vlaneseq
        %v7046 = vshrl.u32 %v7045, 7
        %v7047 = vsub.s32 0, %v7046
        %v7048 = vrot.slane %v7043, %v7047
        %v7050 = vadd.f32 %v7048, 0.0
        %v7051 = vld [vmem:[#allocation2 + $0x1] sm:$0xff]
        %s7052 = scalar_lea.vmem %s9, 512
        %v7053 = vld [vmem:[%s7052] sm:$0xff]
        %v7054 = vld [vmem:[%s7052 + $0x8] sm:$0xff]
        %v7055 = vld [vmem:[%s7052 + $0x10] sm:$0xff]
        %v7056 = vld [vmem:[%s7052 + $0x18] sm:$0xff]
        %v7057 = vld [vmem:[%s7052 + $0x20] sm:$0xff]
        %v7058 = vld [vmem:[%s7052 + $0x28] sm:$0xff]
        %v7059 = vld [vmem:[%s7052 + $0x30] sm:$0xff]
        %v7060 = vld [vmem:[%s7052 + $0x38] sm:$0xff]
        %v7061 = vld [vmem:[%s7052 + $0x40] sm:$0xff]
        %v7062 = vld [vmem:[%s7052 + $0x48] sm:$0xff]
        %v7063 = vld [vmem:[%s7052 + $0x50] sm:$0xff]
        %v7064 = vld [vmem:[%s7052 + $0x58] sm:$0xff]
        %v7065 = vld [vmem:[%s7052 + $0x60] sm:$0xff]
        %v7066 = vld [vmem:[%s7052 + $0x68] sm:$0xff]
        %v7067 = vld [vmem:[%s7052 + $0x70] sm:$0xff]
        %v7068 = vld [vmem:[%s7052 + $0x78] sm:$0xff]
        %7069 = vmatprep.subr.mxu0 0.0
        %7070 = vmatpush1.msra.mxu0 %v7053
        %7071 = vmatprep.subr.mxu0 0.0
        %7072 = vmatpush1.msra.mxu0 %v7054
        %7073 = vmatprep.subr.mxu0 0.0
        %7074 = vmatpush1.msra.mxu0 %v7055
        %7075 = vmatprep.subr.mxu0 0.0
        %7076 = vmatpush1.msra.mxu0 %v7056
        %7077 = vmatprep.subr.mxu0 0.0
        %7078 = vmatpush1.msra.mxu0 %v7057
        %7079 = vmatprep.subr.mxu0 0.0
        %7080 = vmatpush1.msra.mxu0 %v7058
        %7081 = vmatprep.subr.mxu0 0.0
        %7082 = vmatpush1.msra.mxu0 %v7059
        %7083 = vmatprep.subr.mxu0 0.0
        %7084 = vmatpush1.msra.mxu0 %v7060
        %7085 = vmatprep.subr.mxu0 0.0
        %7086 = vmatpush1.msra.mxu0 %v7061
        %7087 = vmatprep.subr.mxu0 0.0
        %7088 = vmatpush1.msra.mxu0 %v7062
        %7089 = vmatprep.subr.mxu0 0.0
        %7090 = vmatpush1.msra.mxu0 %v7063
        %7091 = vmatprep.subr.mxu0 0.0
        %7092 = vmatpush1.msra.mxu0 %v7064
        %7093 = vmatprep.subr.mxu0 0.0
        %7094 = vmatpush1.msra.mxu0 %v7065
        %7095 = vmatprep.subr.mxu0 0.0
        %7096 = vmatpush1.msra.mxu0 %v7066
        %7097 = vmatprep.subr.mxu0 0.0
        %7098 = vmatpush1.msra.mxu0 %v7067
        %7099 = vmatprep.subr.mxu0 0.0
        %7100 = vmatpush1.msra.mxu0 %v7068
        %7101 = vmatprep.subr.mxu0 0.0
        %7102 = vmatpush1.msra.mxu0 0.0
        %7103 = vmatprep.subr.mxu0 0.0
        %7104 = vmatpush1.msra.mxu0 0.0
        %7105 = vmatprep.subr.mxu0 0.0
        %7106 = vmatpush1.msra.mxu0 0.0
        %7107 = vmatprep.subr.mxu0 0.0
        %7108 = vmatpush1.msra.mxu0 0.0
        %7109 = vmatprep.subr.mxu0 0.0
        %7110 = vmatpush1.msra.mxu0 0.0
        %7111 = vmatprep.subr.mxu0 0.0
        %7112 = vmatpush1.msra.mxu0 0.0
        %7113 = vmatprep.subr.mxu0 0.0
        %7114 = vmatpush1.msra.mxu0 0.0
        %7115 = vmatprep.subr.mxu0 0.0
        %7116 = vmatpush1.msra.mxu0 0.0
        %7117 = vmatprep.subr.mxu0 0.0
        %7118 = vmatpush1.msra.mxu0 0.0
        %7119 = vmatprep.subr.mxu0 0.0
        %7120 = vmatpush1.msra.mxu0 0.0
        %7121 = vmatprep.subr.mxu0 0.0
        %7122 = vmatpush1.msra.mxu0 0.0
        %7123 = vmatprep.subr.mxu0 0.0
        %7124 = vmatpush1.msra.mxu0 0.0
        %7125 = vmatprep.subr.mxu0 0.0
        %7126 = vmatpush1.msra.mxu0 0.0
        %7127 = vmatprep.subr.mxu0 0.0
        %7128 = vmatpush1.msra.mxu0 0.0
        %7129 = vmatprep.subr.mxu0 0.0
        %7130 = vmatpush1.msra.mxu0 0.0
        %7131 = vmatprep.subr.mxu0 0.0
        %7132 = vmatpush1.msra.mxu0 0.0
        %7133 = vmatprep.mubr.f32.mxu0 0.0
        %7134 = vmatmul.mubr.f32.gmra.mrb[0].mxu0 %v7051
        %v7135 = vpop.f32.mrb[0].mxu0
        %v7136 = vadd.f32 0.0, %v7135
        %v7137 = vpop.f32.mrb[0].mxu0
        %7138 = vdwg.mxu0
        %v7139 = vadd.f32 %v7050, %v7136
        %v7140 = vld [vmem:[#allocation2 + $0x2] sm:$0xff]
        %s7141 = scalar_lea.vmem %s9, 640
        %v7142 = vld [vmem:[%s7141] sm:$0xff]
        %v7143 = vld [vmem:[%s7141 + $0x8] sm:$0xff]
        %v7144 = vld [vmem:[%s7141 + $0x10] sm:$0xff]
        %v7145 = vld [vmem:[%s7141 + $0x18] sm:$0xff]
        %v7146 = vld [vmem:[%s7141 + $0x20] sm:$0xff]
        %v7147 = vld [vmem:[%s7141 + $0x28] sm:$0xff]
        %v7148 = vld [vmem:[%s7141 + $0x30] sm:$0xff]
        %v7149 = vld [vmem:[%s7141 + $0x38] sm:$0xff]
        %v7150 = vld [vmem:[%s7141 + $0x40] sm:$0xff]
        %v7151 = vld [vmem:[%s7141 + $0x48] sm:$0xff]
        %v7152 = vld [vmem:[%s7141 + $0x50] sm:$0xff]
        %v7153 = vld [vmem:[%s7141 + $0x58] sm:$0xff]
        %v7154 = vld [vmem:[%s7141 + $0x60] sm:$0xff]
        %v7155 = vld [vmem:[%s7141 + $0x68] sm:$0xff]
        %v7156 = vld [vmem:[%s7141 + $0x70] sm:$0xff]
        %v7157 = vld [vmem:[%s7141 + $0x78] sm:$0xff]
        %7158 = vmatprep.subr.mxu0 0.0
        %7159 = vmatpush1.msra.mxu0 %v7142
        %7160 = vmatprep.subr.mxu0 0.0
        %7161 = vmatpush1.msra.mxu0 %v7143
        %7162 = vmatprep.subr.mxu0 0.0
        %7163 = vmatpush1.msra.mxu0 %v7144
        %7164 = vmatprep.subr.mxu0 0.0
        %7165 = vmatpush1.msra.mxu0 %v7145
        %7166 = vmatprep.subr.mxu0 0.0
        %7167 = vmatpush1.msra.mxu0 %v7146
        %7168 = vmatprep.subr.mxu0 0.0
        %7169 = vmatpush1.msra.mxu0 %v7147
        %7170 = vmatprep.subr.mxu0 0.0
        %7171 = vmatpush1.msra.mxu0 %v7148
        %7172 = vmatprep.subr.mxu0 0.0
        %7173 = vmatpush1.msra.mxu0 %v7149
        %7174 = vmatprep.subr.mxu0 0.0
        %7175 = vmatpush1.msra.mxu0 %v7150
        %7176 = vmatprep.subr.mxu0 0.0
        %7177 = vmatpush1.msra.mxu0 %v7151
        %7178 = vmatprep.subr.mxu0 0.0
        %7179 = vmatpush1.msra.mxu0 %v7152
        %7180 = vmatprep.subr.mxu0 0.0
        %7181 = vmatpush1.msra.mxu0 %v7153
        %7182 = vmatprep.subr.mxu0 0.0
        %7183 = vmatpush1.msra.mxu0 %v7154
        %7184 = vmatprep.subr.mxu0 0.0
        %7185 = vmatpush1.msra.mxu0 %v7155
        %7186 = vmatprep.subr.mxu0 0.0
        %7187 = vmatpush1.msra.mxu0 %v7156
        %7188 = vmatprep.subr.mxu0 0.0
        %7189 = vmatpush1.msra.mxu0 %v7157
        %7190 = vmatprep.subr.mxu0 0.0
        %7191 = vmatpush1.msra.mxu0 0.0
        %7192 = vmatprep.subr.mxu0 0.0
        %7193 = vmatpush1.msra.mxu0 0.0
        %7194 = vmatprep.subr.mxu0 0.0
        %7195 = vmatpush1.msra.mxu0 0.0
        %7196 = vmatprep.subr.mxu0 0.0
        %7197 = vmatpush1.msra.mxu0 0.0
        %7198 = vmatprep.subr.mxu0 0.0
        %7199 = vmatpush1.msra.mxu0 0.0
        %7200 = vmatprep.subr.mxu0 0.0
        %7201 = vmatpush1.msra.mxu0 0.0
        %7202 = vmatprep.subr.mxu0 0.0
        %7203 = vmatpush1.msra.mxu0 0.0
        %7204 = vmatprep.subr.mxu0 0.0
        %7205 = vmatpush1.msra.mxu0 0.0
        %7206 = vmatprep.subr.mxu0 0.0
        %7207 = vmatpush1.msra.mxu0 0.0
        %7208 = vmatprep.subr.mxu0 0.0
        %7209 = vmatpush1.msra.mxu0 0.0
        %7210 = vmatprep.subr.mxu0 0.0
        %7211 = vmatpush1.msra.mxu0 0.0
        %7212 = vmatprep.subr.mxu0 0.0
        %7213 = vmatpush1.msra.mxu0 0.0
        %7214 = vmatprep.subr.mxu0 0.0
        %7215 = vmatpush1.msra.mxu0 0.0
        %7216 = vmatprep.subr.mxu0 0.0
        %7217 = vmatpush1.msra.mxu0 0.0
        %7218 = vmatprep.subr.mxu0 0.0
        %7219 = vmatpush1.msra.mxu0 0.0
        %7220 = vmatprep.subr.mxu0 0.0
        %7221 = vmatpush1.msra.mxu0 0.0
        %7222 = vmatprep.mubr.f32.mxu0 0.0
        %7223 = vmatmul.mubr.f32.gmra.mrb[0].mxu0 %v7140
        %v7224 = vpop.f32.mrb[0].mxu0
        %v7225 = vadd.f32 0.0, %v7224
        %v7226 = vpop.f32.mrb[0].mxu0
        %7227 = vdwg.mxu0
        %v7228 = vadd.f32 %v7139, %v7225
        %s7229 = scalar_lea.vmem %s9, 768
        %v7230 = vld [vmem:[%s7229] sm:$0xff]
        %v7231 = vld [vmem:[%s7229 + $0x8] sm:$0xff]
        %v7232 = vld [vmem:[%s7229 + $0x10] sm:$0xff]
        %v7233 = vld [vmem:[%s7229 + $0x18] sm:$0xff]
        %v7234 = vld [vmem:[%s7229 + $0x20] sm:$0xff]
        %v7235 = vld [vmem:[%s7229 + $0x28] sm:$0xff]
        %v7236 = vld [vmem:[%s7229 + $0x30] sm:$0xff]
        %v7237 = vld [vmem:[%s7229 + $0x38] sm:$0xff]
        %v7238 = vld [vmem:[%s7229 + $0x40] sm:$0xff]
        %v7239 = vld [vmem:[%s7229 + $0x48] sm:$0xff]
        %v7240 = vld [vmem:[%s7229 + $0x50] sm:$0xff]
        %v7241 = vld [vmem:[%s7229 + $0x58] sm:$0xff]
        %v7242 = vld [vmem:[%s7229 + $0x60] sm:$0xff]
        %v7243 = vld [vmem:[%s7229 + $0x68] sm:$0xff]
        %v7244 = vld [vmem:[%s7229 + $0x70] sm:$0xff]
        %v7245 = vld [vmem:[%s7229 + $0x78] sm:$0xff]
        %7246 = vmatprep.subr.mxu0 0.0
        %7247 = vmatpush1.msra.mxu0 %v7230
        %7248 = vmatprep.subr.mxu0 0.0
        %7249 = vmatpush1.msra.mxu0 %v7231
        %7250 = vmatprep.subr.mxu0 0.0
        %7251 = vmatpush1.msra.mxu0 %v7232
        %7252 = vmatprep.subr.mxu0 0.0
        %7253 = vmatpush1.msra.mxu0 %v7233
        %7254 = vmatprep.subr.mxu0 0.0
        %7255 = vmatpush1.msra.mxu0 %v7234
        %7256 = vmatprep.subr.mxu0 0.0
        %7257 = vmatpush1.msra.mxu0 %v7235
        %7258 = vmatprep.subr.mxu0 0.0
        %7259 = vmatpush1.msra.mxu0 %v7236
        %7260 = vmatprep.subr.mxu0 0.0
        %7261 = vmatpush1.msra.mxu0 %v7237
        %7262 = vmatprep.subr.mxu0 0.0
        %7263 = vmatpush1.msra.mxu0 %v7238
        %7264 = vmatprep.subr.mxu0 0.0
        %7265 = vmatpush1.msra.mxu0 %v7239
        %7266 = vmatprep.subr.mxu0 0.0
        %7267 = vmatpush1.msra.mxu0 %v7240
        %7268 = vmatprep.subr.mxu0 0.0
        %7269 = vmatpush1.msra.mxu0 %v7241
        %7270 = vmatprep.subr.mxu0 0.0
        %7271 = vmatpush1.msra.mxu0 %v7242
        %7272 = vmatprep.subr.mxu0 0.0
        %7273 = vmatpush1.msra.mxu0 %v7243
        %7274 = vmatprep.subr.mxu0 0.0
        %7275 = vmatpush1.msra.mxu0 %v7244
        %7276 = vmatprep.subr.mxu0 0.0
        %7277 = vmatpush1.msra.mxu0 %v7245
        %7278 = vmatprep.subr.mxu0 0.0
        %7279 = vmatpush1.msra.mxu0 0.0
        %7280 = vmatprep.subr.mxu0 0.0
        %7281 = vmatpush1.msra.mxu0 0.0
        %7282 = vmatprep.subr.mxu0 0.0
        %7283 = vmatpush1.msra.mxu0 0.0
        %7284 = vmatprep.subr.mxu0 0.0
        %7285 = vmatpush1.msra.mxu0 0.0
        %7286 = vmatprep.subr.mxu0 0.0
        %7287 = vmatpush1.msra.mxu0 0.0
        %7288 = vmatprep.subr.mxu0 0.0
        %7289 = vmatpush1.msra.mxu0 0.0
        %7290 = vmatprep.subr.mxu0 0.0
        %7291 = vmatpush1.msra.mxu0 0.0
        %7292 = vmatprep.subr.mxu0 0.0
        %7293 = vmatpush1.msra.mxu0 0.0
        %7294 = vmatprep.subr.mxu0 0.0
        %7295 = vmatpush1.msra.mxu0 0.0
        %7296 = vmatprep.subr.mxu0 0.0
        %7297 = vmatpush1.msra.mxu0 0.0
        %7298 = vmatprep.subr.mxu0 0.0
        %7299 = vmatpush1.msra.mxu0 0.0
        %7300 = vmatprep.subr.mxu0 0.0
        %7301 = vmatpush1.msra.mxu0 0.0
        %7302 = vmatprep.subr.mxu0 0.0
        %7303 = vmatpush1.msra.mxu0 0.0
        %7304 = vmatprep.subr.mxu0 0.0
        %7305 = vmatpush1.msra.mxu0 0.0
        %7306 = vmatprep.subr.mxu0 0.0
        %7307 = vmatpush1.msra.mxu0 0.0
        %7308 = vmatprep.subr.mxu0 0.0
        %7309 = vmatpush1.msra.mxu0 0.0
        %7310 = vmatprep.mubr.f32.mxu0 0.0
        %7311 = vmatmul.mubr.f32.gmra.mrb[0].mxu0 %v7051
        %v7312 = vpop.f32.mrb[0].mxu0
        %v7313 = vadd.f32 0.0, %v7312
        %v7314 = vpop.f32.mrb[0].mxu0
        %7315 = vdwg.mxu0
        %v7316 = vadd.f32 %v7228, %v7313
        %s7317 = scalar_lea.vmem %s9, 896
        %v7318 = vld [vmem:[%s7317] sm:$0xff]
        %v7319 = vld [vmem:[%s7317 + $0x8] sm:$0xff]
        %v7320 = vld [vmem:[%s7317 + $0x10] sm:$0xff]
        %v7321 = vld [vmem:[%s7317 + $0x18] sm:$0xff]
        %v7322 = vld [vmem:[%s7317 + $0x20] sm:$0xff]
        %v7323 = vld [vmem:[%s7317 + $0x28] sm:$0xff]
        %v7324 = vld [vmem:[%s7317 + $0x30] sm:$0xff]
        %v7325 = vld [vmem:[%s7317 + $0x38] sm:$0xff]
        %v7326 = vld [vmem:[%s7317 + $0x40] sm:$0xff]
        %v7327 = vld [vmem:[%s7317 + $0x48] sm:$0xff]
        %v7328 = vld [vmem:[%s7317 + $0x50] sm:$0xff]
        %v7329 = vld [vmem:[%s7317 + $0x58] sm:$0xff]
        %v7330 = vld [vmem:[%s7317 + $0x60] sm:$0xff]
        %v7331 = vld [vmem:[%s7317 + $0x68] sm:$0xff]
        %v7332 = vld [vmem:[%s7317 + $0x70] sm:$0xff]
        %v7333 = vld [vmem:[%s7317 + $0x78] sm:$0xff]
        %7334 = vmatprep.subr.mxu0 0.0
        %7335 = vmatpush1.msra.mxu0 %v7318
        %7336 = vmatprep.subr.mxu0 0.0
        %7337 = vmatpush1.msra.mxu0 %v7319
        %7338 = vmatprep.subr.mxu0 0.0
        %7339 = vmatpush1.msra.mxu0 %v7320
        %7340 = vmatprep.subr.mxu0 0.0
        %7341 = vmatpush1.msra.mxu0 %v7321
        %7342 = vmatprep.subr.mxu0 0.0
        %7343 = vmatpush1.msra.mxu0 %v7322
        %7344 = vmatprep.subr.mxu0 0.0
        %7345 = vmatpush1.msra.mxu0 %v7323
        %7346 = vmatprep.subr.mxu0 0.0
        %7347 = vmatpush1.msra.mxu0 %v7324
        %7348 = vmatprep.subr.mxu0 0.0
        %7349 = vmatpush1.msra.mxu0 %v7325
        %7350 = vmatprep.subr.mxu0 0.0
        %7351 = vmatpush1.msra.mxu0 %v7326
        %7352 = vmatprep.subr.mxu0 0.0
        %7353 = vmatpush1.msra.mxu0 %v7327
        %7354 = vmatprep.subr.mxu0 0.0
        %7355 = vmatpush1.msra.mxu0 %v7328
        %7356 = vmatprep.subr.mxu0 0.0
        %7357 = vmatpush1.msra.mxu0 %v7329
        %7358 = vmatprep.subr.mxu0 0.0
        %7359 = vmatpush1.msra.mxu0 %v7330
        %7360 = vmatprep.subr.mxu0 0.0
        %7361 = vmatpush1.msra.mxu0 %v7331
        %7362 = vmatprep.subr.mxu0 0.0
        %7363 = vmatpush1.msra.mxu0 %v7332
        %7364 = vmatprep.subr.mxu0 0.0
        %7365 = vmatpush1.msra.mxu0 %v7333
        %7366 = vmatprep.subr.mxu0 0.0
        %7367 = vmatpush1.msra.mxu0 0.0
        %7368 = vmatprep.subr.mxu0 0.0
        %7369 = vmatpush1.msra.mxu0 0.0
        %7370 = vmatprep.subr.mxu0 0.0
        %7371 = vmatpush1.msra.mxu0 0.0
        %7372 = vmatprep.subr.mxu0 0.0
        %7373 = vmatpush1.msra.mxu0 0.0
        %7374 = vmatprep.subr.mxu0 0.0
        %7375 = vmatpush1.msra.mxu0 0.0
        %7376 = vmatprep.subr.mxu0 0.0
        %7377 = vmatpush1.msra.mxu0 0.0
        %7378 = vmatprep.subr.mxu0 0.0
        %7379 = vmatpush1.msra.mxu0 0.0
        %7380 = vmatprep.subr.mxu0 0.0
        %7381 = vmatpush1.msra.mxu0 0.0
        %7382 = vmatprep.subr.mxu0 0.0
        %7383 = vmatpush1.msra.mxu0 0.0
        %7384 = vmatprep.subr.mxu0 0.0
        %7385 = vmatpush1.msra.mxu0 0.0
        %7386 = vmatprep.subr.mxu0 0.0
        %7387 = vmatpush1.msra.mxu0 0.0
        %7388 = vmatprep.subr.mxu0 0.0
        %7389 = vmatpush1.msra.mxu0 0.0
        %7390 = vmatprep.subr.mxu0 0.0
        %7391 = vmatpush1.msra.mxu0 0.0
        %7392 = vmatprep.subr.mxu0 0.0
        %7393 = vmatpush1.msra.mxu0 0.0
        %7394 = vmatprep.subr.mxu0 0.0
        %7395 = vmatpush1.msra.mxu0 0.0
        %7396 = vmatprep.subr.mxu0 0.0
        %7397 = vmatpush1.msra.mxu0 0.0
        %7398 = vmatprep.mubr.f32.mxu0 0.0
        %7399 = vmatmul.mubr.f32.gmra.mrb[0].mxu0 %v7140
        %v7400 = vpop.f32.mrb[0].mxu0
        %v7401 = vadd.f32 0.0, %v7400
        %v7402 = vpop.f32.mrb[0].mxu0
        %7403 = vdwg.mxu0
        %v7404 = vadd.f32 %v7316, %v7401
        %7405 = vst.msk [vmem:[%s500 + $0x1] sm:$0x1] %vm7027, %v7404
        %7406 = vst.msk [vmem:[%s500 + $0x2] sm:$0x2] %vm7029, %v7404
        %7407 = vst.msk [vmem:[%s500 + $0x3] sm:$0x4] %vm7031, %v7404
        %7408 = vst.msk [vmem:[%s500 + $0x4] sm:$0x8] %vm7033, %v7404
        %7409 = vst.msk [vmem:[%s500 + $0x5] sm:$0x10] %vm7035, %v7404
        %7410 = vst.msk [vmem:[%s500 + $0x6] sm:$0x20] %vm7037, %v7404
        %7411 = vst.msk [vmem:[%s500 + $0x7] sm:$0x40] %vm7039, %v7404
        %7412 = vst.msk [vmem:[%s500 + $0x8] sm:$0x80] %vm7041, %v7404
        %s7413 = sand.u32 %s274, 1
        %s7414 = scalar_lea.sflag [#allocation6], %s7413
        %s7415 = sand.u32 %s274, 1
        %s7416 = smul.addr %s7415, 16
        %s7417 = scalar_lea.vmem [#allocation19], %s7416
        // Predicated region
        $region101: #{my_net_forward.1} parent=63 // pred_check
          %p7418 = pneg %p284
        $region102: #{my_net_forward.1} parent=63 // pred_check_branch
          %7420 = sbr.rel (%p7418) target = $region104
        $region103: #{my_net_forward.1} parent=63 // pred_region
          %s7422 = ssub.s32 256, 256
          %7423 = vsyncadd %s7414, %s7422
          %s7424 = smul.addr %s30, 2
          %s7425 = smul.addr %s7424, 128
          %s7426 = scalar_lea.hbm %s11, %s7425
          %s7427 = sshll.u32 %s7417, 4
          %s7428 = int_to_ptr.vmem [resolvable:$true] %s7427
          %7433 = dma.vmem_to_hbm [thread:$0]  %s7428, 256, %s7426, %s7414, 128, 128, 8
        $region104: #{my_net_forward.1} parent=63 // pred_fallthru
          _
      $region64: #{my_net_forward.1} parent=5 // pred_fallthru
        _
      %p7434 = scmp.le.s32.totalorder 2, %s25
      // Predicated region
      $region105: #{my_net_forward.1} parent=5 // pred_check
        %p7435 = pneg %p7434
      $region106: #{my_net_forward.1} parent=5 // pred_check_branch
        %7437 = sbr.rel (%p7435) target = $region108
      $region107: #{my_net_forward.1} parent=5 // pred_region
        %s7438 = ssub.s32 %s25, 2
        // Predicated region
        $region109: #{my_net_forward.1} parent=107 // pred_check
          %p7439 = pneg %p290
        $region110: #{my_net_forward.1} parent=107 // pred_check_branch
          %7441 = sbr.rel (%p7439) target = $region112
        $region111: #{my_net_forward.1} parent=107 // pred_region
          %s7442 = sand.u32 %s275, 1
          %s7443 = scalar_lea.sflag [#allocation6], %s7442
          %s7444 = sand.u32 %s275, 1
          %s7445 = smul.addr %s7444, 16
          %s7446 = scalar_lea.vmem [#allocation19], %s7445
          %7447 = dma.done %s7443, 256
        $region112: #{my_net_forward.1} parent=107 // pred_fallthru
          _
      $region108: #{my_net_forward.1} parent=5 // pred_fallthru
        _
    $region6: #{my_net_forward.1} parent=1 // loop_footer
      %s29 = sadd.s32 1, %s25
    $region7: #{my_net_forward.1} parent=1 // loop_footer_branch
      %24 = sbr.rel target = $region3
    $region8: #{my_net_forward.1} parent=1 // loop_exit
      _
    %7448 = vsyncpa [#allocation5], 1
    %s7449 = scalar_lea.sflag [#allocation5], 1
    %7450 = vsyncpa %s7449, 1
    %7451 = vsyncpa [#allocation8], 1
    %7452 = vsyncpa [#allocation11], 1
    %7453 = vsyncpa [#allocation14], 1
    %7454 = vsyncpa [#allocation17], 1
    %7455 = vsyncpa [#allocation6], 1
    %s7456 = scalar_lea.sflag [#allocation6], 1
    %7457 = vsyncpa %s7456, 1

</llo_original>
